<compile_context>
chip_gen: v7x
topology: tpu7x:2x2x1
jax: 0.10.0
libtpu: 0.0.40
codegen_flags: <defaults>
</compile_context>

<pallas_src>
import numpy as np
import jax
import jax.numpy as jnp
from jax import lax
from jax.experimental import pallas as pl
from jax.experimental.pallas import tpu as pltpu

# Module constants (kept as in the PyTorch source).
N_FRAMES = 64          # n_samples // 256 = 16384 // 256
N_CLUSTERS = 512
MODEL_DIM = 128


# ----------------------------------------------------------------------------
# Shared math helpers.
# ----------------------------------------------------------------------------
def _lrelu(x):
    # leaky_relu with slope 0.2 (valid since 0 < 0.2 < 1)
    return jnp.maximum(x, 0.2 * x)


def _conv1d_same(x, w, b, dilation):
    """Reference-only 'same'-padded dilated conv1d in (T, C) layout (pure JAX)."""
    T = x.shape[0]
    K, Cin, Cout = w.shape
    p = dilation * (K // 2)
    zeros = jnp.zeros((p, Cin), jnp.float32)
    xp = jnp.concatenate([zeros, x, zeros], axis=0)          # (T + 2p, Cin)
    acc = jnp.zeros((T, Cout), jnp.float32)
    for k in range(K):
        xs = xp[k * dilation:k * dilation + T, :]            # (T, Cin)
        if Cin == 1:
            acc = acc + xs * w[k]
        else:
            acc = acc + jnp.dot(xs, w[k],
                                preferred_element_type=jnp.float32)
    return acc + b


# ----------------------------------------------------------------------------
# Pallas kernel: one grid step == one block of BBLK batch elements.
# ----------------------------------------------------------------------------
def step_and_conditioning_kernel(
        emb_ref, norms_ref,
        aw1_ref, ab1_ref, aw2_ref, ab2_ref, aw3_ref, ab3_ref,
        rw1_ref, rb1_ref, rw2_ref, rb2_ref, rw3_ref, rb3_ref,
        c1w_ref, c1b_ref, c2w_ref, c2b_ref, c3w_ref, c3b_ref,
        out_ref):
    T, D = N_FRAMES, MODEL_DIM
    bblk = out_ref.shape[0]
    M = bblk * T

    # Within-element time index (0..T-1, repeated per batch element).  Used to
    # zero out conv taps that fall outside a batch element's [0, T) window
    # (== 'same' zero padding) and to stop cross-batch-element leakage.
    t_idx = lax.broadcasted_iota(jnp.int32, (bblk, T, 1), 1).reshape(M, 1)

    # Hoisted per-offset validity masks (shared by EmbedAmp K=7 taps and all
    # dilated blocks).  fp32 (M, 1), eight of them -> a few vregs.
    masks = {}
    for o in (-9, -3, -2, -1, 1, 2, 3, 9):
        t_src = t_idx + o
        masks[o] = jnp.logical_and(t_src >= 0, t_src < T).astype(jnp.float32)

    def shift_rows(xf, offset):
        # xs[r] = xf[r + offset] if the source row lies inside the same batch
        # element's valid time range, else 0.  XLU rotate + one VPU multiply —
        # no padded buffers, no misaligned sublane slices.
        if offset == 0:
            return xf
        rolled = pltpu.roll(xf, shift=(-offset) % M, axis=0)
        return rolled * masks[offset]

    def im2col(xf, offsets):
        # Lane-concatenate the shifted views, then one bf16 cast for the MXU.
        cols = [shift_rows(xf, o) for o in offsets]
        return jnp.concatenate(cols, axis=-1).astype(jnp.bfloat16)

    # --- EmbedAmp: 3 x Conv1d(kernel=7, 'same' padding) ----------------------
    a = norms_ref[...].reshape(M, 1)                         # (M, 1) fp32
    # conv1 (Cin=1): per-tap broadcast multiplies on the VPU, fp32.
    aw1 = aw1_ref[...]                                       # (7, 1, 16)
    acc = ab1_ref[...]                                       # (1, 16) bias
    for k in range(7):                                       # static unroll
        acc = acc + shift_rows(a, k - 3) * aw1[k]            # (M,1)*(1,16)
    a = _lrelu(acc)                                          # (M, 16)
    # conv2: im2col-fused (M,112)@(112,32) bf16 matmul.
    a = _lrelu(jnp.dot(im2col(a, tuple(range(-3, 4))), aw2_ref[...],
                       preferred_element_type=jnp.float32) + ab2_ref[...])
    # conv3: im2col-fused (M,224)@(224,128) bf16 matmul.
    a = jnp.dot(im2col(a, tuple(range(-3, 4))), aw3_ref[...],
                preferred_element_type=jnp.float32) + ab3_ref[...]   # (M, D)

    # --- reduce: LinearOutputStack(dim, 2, in=2*dim, out=dim) ----------------
    # emb arrives pre-gathered (bf16); [emb, a] lane concat is 128-aligned.
    emb = emb_ref[...].reshape(M, D)                         # (M, D) bf16
    cat = jnp.concatenate([emb, a.astype(jnp.bfloat16)], axis=-1)  # (M, 2D)
    x = _lrelu(jnp.dot(cat, rw1_ref[...],
                       preferred_element_type=jnp.float32) + rb1_ref[...])
    x = _lrelu(jnp.dot(x.astype(jnp.bfloat16), rw2_ref[...],
                       preferred_element_type=jnp.float32) + rb2_ref[...])
    x = jnp.dot(x.astype(jnp.bfloat16), rw3_ref[...],
                preferred_element_type=jnp.float32) + rb3_ref[...]   # (M, D)

    # --- context: DilatedBlock(1), DilatedBlock(3), DilatedBlock(9) ----------
    # The 1x1 pointwise conv is pre-folded into the im2col dilated weight, so
    # each block is one (M,3D)@(3D,D) matmul + residual + leaky_relu.
    for dil, cw_ref, cb_ref in ((1, c1w_ref, c1b_ref),
                                (3, c2w_ref, c2b_ref),
                                (9, c3w_ref, c3b_ref)):
        y = jnp.dot(im2col(x, (-dil, 0, dil)), cw_ref[...],
                    preferred_element_type=jnp.float32) + cb_ref[...]
        x = _lrelu(y + x)

    out_ref[...] = x.reshape(bblk, T, D)


# ----------------------------------------------------------------------------
# Parameters (kept in PyTorch-like layout; packed for the kernel in a wrapper).
# ----------------------------------------------------------------------------
def init_params(key):
    keys = iter(jax.random.split(key, 64))

    def rnd(shape, scale=0.05):
        return jax.random.normal(next(keys), shape, jnp.float32) * scale

    p = {}
    p["emb_table"] = rnd((N_CLUSTERS, MODEL_DIM), 1.0)
    # EmbedAmp convs (K, Cin, Cout)
    p["aw1"], p["ab1"] = rnd((7, 1, 16)), rnd((1, 16))
    p["aw2"], p["ab2"] = rnd((7, 16, 32)), rnd((1, 32))
    p["aw3"], p["ab3"] = rnd((7, 32, MODEL_DIM)), rnd((1, MODEL_DIM))
    # reduce LinearOutputStack
    p["rw1"], p["rb1"] = rnd((2 * MODEL_DIM, MODEL_DIM)), rnd((1, MODEL_DIM))
    p["rw2"], p["rb2"] = rnd((MODEL_DIM, MODEL_DIM)), rnd((1, MODEL_DIM))
    p["rw3"], p["rb3"] = rnd((MODEL_DIM, MODEL_DIM)), rnd((1, MODEL_DIM))
    # context DilatedBlocks
    for i in (1, 2, 3):
        p[f"d{i}w"], p[f"d{i}b"] = rnd((3, MODEL_DIM, MODEL_DIM)), rnd((1, MODEL_DIM))
        p[f"p{i}w"], p[f"p{i}b"] = rnd((MODEL_DIM, MODEL_DIM)), rnd((1, MODEL_DIM))
    return p


def _pack_params(params):
    """Kernel-side weight layout.

    * EmbedAmp conv2/conv3 and the dilated convs are im2col-reshaped to
      (K*Cin, Cout).
    * Each DilatedBlock's 1x1 pointwise conv is folded into the dilated weight
      (float64 fold on the host): w_fold = dw2d @ pw, b_fold = db @ pw + pb.
    * All matmul weights are cast to bf16 (fp32 accumulation in-kernel);
      biases and the tiny Cin=1 conv stay fp32.
    """
    def np64(a):
        return np.asarray(a, dtype=np.float64)

    def bf16(a):
        return jnp.asarray(a, dtype=jnp.bfloat16)

    def f32(a):
        return jnp.asarray(a, dtype=jnp.float32)

    def im2col_w(w):                       # (K, Cin, Cout) -> (K*Cin, Cout)
        w = np.asarray(w)
        K, Cin, Cout = w.shape
        return w.reshape(K * Cin, Cout)

    packed = [
        f32(params["aw1"]), f32(params["ab1"]),
        bf16(im2col_w(params["aw2"])), f32(params["ab2"]),
        bf16(im2col_w(params["aw3"])), f32(params["ab3"]),
        bf16(params["rw1"]), f32(params["rb1"]),
        bf16(params["rw2"]), f32(params["rb2"]),
        bf16(params["rw3"]), f32(params["rb3"]),
    ]
    for i in (1, 2, 3):
        dw2d = np64(im2col_w(params[f"d{i}w"]))              # (3D, D)
        db = np64(params[f"d{i}b"])                          # (1, D)
        pw = np64(params[f"p{i}w"])                          # (D, D)
        pb = np64(params[f"p{i}b"])                          # (1, D)
        w_fold = dw2d @ pw                                   # (3D, D)
        b_fold = db @ pw + pb                                # (1, D)
        packed += [bf16(w_fold), f32(b_fold)]
    return packed


# ----------------------------------------------------------------------------
# Wrapper
# ----------------------------------------------------------------------------
def step_and_conditioning(params, indices, norms, *, block_b=16):
    """indices: (B, n_frames) int, norms: (B, n_frames) float.

    Returns (B, model_dim, n_frames) float32 (matching PyTorch's NCW output).
    """
    B = indices.shape[0]
    bblk = min(block_b, B)
    n_blocks = pl.cdiv(B, bblk)
    Bp = n_blocks * bblk

    # Embedding gather stays outside the kernel (plain XLA HBM gather); the
    # per-block result is streamed in through the BlockSpec pipeline as bf16.
    emb = jnp.take(params["emb_table"], indices.astype(jnp.int32), axis=0)
    emb = emb.astype(jnp.bfloat16)                           # (B, T, D)
    nrm3 = norms.reshape(B, N_FRAMES, 1).astype(jnp.float32)
    if Bp != B:                                  # pad batch to a block multiple
        pad = ((0, Bp - B), (0, 0), (0, 0))
        emb = jnp.pad(emb, pad)
        nrm3 = jnp.pad(nrm3, pad)

    flat_params = _pack_params(params)

    def _const_spec(shape):
        nd = len(shape)
        return pl.BlockSpec(shape, lambda b, _nd=nd: (0,) * _nd)

    in_specs = [
        pl.BlockSpec((bblk, N_FRAMES, MODEL_DIM), lambda b: (b, 0, 0)),  # emb
        pl.BlockSpec((bblk, N_FRAMES, 1), lambda b: (b, 0, 0)),          # norms
    ] + [_const_spec(p.shape) for p in flat_params]

    out = pl.pallas_call(
        step_and_conditioning_kernel,
        out_shape=jax.ShapeDtypeStruct((Bp, N_FRAMES, MODEL_DIM), jnp.float32),
        grid=(n_blocks,),
        in_specs=in_specs,
        out_specs=pl.BlockSpec((bblk, N_FRAMES, MODEL_DIM),
                               lambda b: (b, 0, 0)),
        compiler_params=pltpu.CompilerParams(
            dimension_semantics=("parallel",),   # batch axis: megacore-able
            vmem_limit_bytes=32 * 1024 * 1024),  # covers block_b=16+ on v5e too
    )(emb, nrm3, *flat_params)

    out = out[:B]
    # Kernel emits (B, n_frames, model_dim) lane-dense; NCW transpose outside.
    return jnp.transpose(out, (0, 2, 1))


# ----------------------------------------------------------------------------
# Pure-JAX reference (same math, fp32, unfolded) for a correctness check.
# ----------------------------------------------------------------------------
def reference_forward(params, indices, norms):
    B = indices.shape[0]
    emb = jnp.take(params["emb_table"], indices.astype(jnp.int32), axis=0)

    def conv_b(x, w, b, dil):
        return jax.vmap(lambda xb: _conv1d_same(xb, w, b, dil))(x)

    a = norms.reshape(B, N_FRAMES, 1).astype(jnp.float32)
    a = _lrelu(conv_b(a, params["aw1"], params["ab1"], 1))
    a = _lrelu(conv_b(a, params["aw2"], params["ab2"], 1))
    a = conv_b(a, params["aw3"], params["ab3"], 1)

    x = jnp.concatenate([emb, a], axis=-1)
    x = _lrelu(x @ params["rw1"] + params["rb1"])
    x = _lrelu(x @ params["rw2"] + params["rb2"])
    x = x @ params["rw3"] + params["rb3"]

    for i, dil in zip((1, 2, 3), (1, 3, 9)):
        orig = x
        y = conv_b(x, params[f"d{i}w"], params[f"d{i}b"], dil)
        y = y @ params[f"p{i}w"] + params[f"p{i}b"]
        x = _lrelu(y + orig)

    return jnp.transpose(x, (0, 2, 1))


if __name__ == "__main__":
    key = jax.random.PRNGKey(0)
    pkey, ikey, nkey = jax.random.split(key, 3)
    params = init_params(pkey)

    # B=5 with block_b=4 exercises batch blocking, batch padding, 2 grid steps.
    B = 5
    indices = jax.random.randint(ikey, (B, N_FRAMES), 0, N_CLUSTERS,
                                 dtype=jnp.int32)
    norms = jax.random.uniform(nkey, (B, N_FRAMES), jnp.float32)

    out = step_and_conditioning(params, indices, norms, block_b=4)
    out = jax.block_until_ready(out)
    assert out.shape == (B, MODEL_DIM, N_FRAMES), out.shape

    ref = reference_forward(params, indices, norms)
    # bf16 matmul operands (fp32 accumulation) => relaxed tolerance vs the
    # fp32 reference.
    np.testing.assert_allclose(np.asarray(out), np.asarray(ref),
                               rtol=2e-2, atol=2e-2)
    print("KERNEL_OK")
</pallas_src>

<mosaic_0001>
module attributes {stable_mosaic.version = 11 : i64} {
  func.func @step_and_conditioning_kernel(%arg0: i32, %arg1: memref<4x64x128xbf16, #tpu.memory_space<vmem>>, %arg2: memref<4x64x1xf32, #tpu.memory_space<vmem>>, %arg3: memref<7x1x16xf32, #tpu.memory_space<vmem>>, %arg4: memref<1x16xf32, #tpu.memory_space<vmem>>, %arg5: memref<112x32xbf16, #tpu.memory_space<vmem>>, %arg6: memref<1x32xf32, #tpu.memory_space<vmem>>, %arg7: memref<224x128xbf16, #tpu.memory_space<vmem>>, %arg8: memref<1x128xf32, #tpu.memory_space<vmem>>, %arg9: memref<256x128xbf16, #tpu.memory_space<vmem>>, %arg10: memref<1x128xf32, #tpu.memory_space<vmem>>, %arg11: memref<128x128xbf16, #tpu.memory_space<vmem>>, %arg12: memref<1x128xf32, #tpu.memory_space<vmem>>, %arg13: memref<128x128xbf16, #tpu.memory_space<vmem>>, %arg14: memref<1x128xf32, #tpu.memory_space<vmem>>, %arg15: memref<384x128xbf16, #tpu.memory_space<vmem>>, %arg16: memref<1x128xf32, #tpu.memory_space<vmem>>, %arg17: memref<384x128xbf16, #tpu.memory_space<vmem>>, %arg18: memref<1x128xf32, #tpu.memory_space<vmem>>, %arg19: memref<384x128xbf16, #tpu.memory_space<vmem>>, %arg20: memref<1x128xf32, #tpu.memory_space<vmem>>, %arg21: memref<4x64x128xf32, #tpu.memory_space<vmem>>) attributes {dimension_semantics = [#tpu.dimension_semantics<parallel>], iteration_bounds = array<i64: 2>, scalar_prefetch = 0 : i64, scratch_operands = 0 : i64, tpu.core_type = #tpu.core_type<tc>, window_params = [{transform_indices = @transform_0, window_bounds = array<i64: 4, 64, 128>}, {transform_indices = @transform_1, window_bounds = array<i64: 4, 64, 1>}, {pipeline_mode = #tpu.pipeline_mode<synchronous>, transform_indices = @transform_2, window_bounds = array<i64: 7, 1, 16>}, {pipeline_mode = #tpu.pipeline_mode<synchronous>, transform_indices = @transform_3, window_bounds = array<i64: 1, 16>}, {pipeline_mode = #tpu.pipeline_mode<synchronous>, transform_indices = @transform_4, window_bounds = array<i64: 112, 32>}, {pipeline_mode = #tpu.pipeline_mode<synchronous>, transform_indices = @transform_5, window_bounds = array<i64: 1, 32>}, {pipeline_mode = #tpu.pipeline_mode<synchronous>, transform_indices = @transform_6, window_bounds = array<i64: 224, 128>}, {pipeline_mode = #tpu.pipeline_mode<synchronous>, transform_indices = @transform_7, window_bounds = array<i64: 1, 128>}, {pipeline_mode = #tpu.pipeline_mode<synchronous>, transform_indices = @transform_8, window_bounds = array<i64: 256, 128>}, {pipeline_mode = #tpu.pipeline_mode<synchronous>, transform_indices = @transform_9, window_bounds = array<i64: 1, 128>}, {pipeline_mode = #tpu.pipeline_mode<synchronous>, transform_indices = @transform_10, window_bounds = array<i64: 128, 128>}, {pipeline_mode = #tpu.pipeline_mode<synchronous>, transform_indices = @transform_11, window_bounds = array<i64: 1, 128>}, {pipeline_mode = #tpu.pipeline_mode<synchronous>, transform_indices = @transform_12, window_bounds = array<i64: 128, 128>}, {pipeline_mode = #tpu.pipeline_mode<synchronous>, transform_indices = @transform_13, window_bounds = array<i64: 1, 128>}, {pipeline_mode = #tpu.pipeline_mode<synchronous>, transform_indices = @transform_14, window_bounds = array<i64: 384, 128>}, {pipeline_mode = #tpu.pipeline_mode<synchronous>, transform_indices = @transform_15, window_bounds = array<i64: 1, 128>}, {pipeline_mode = #tpu.pipeline_mode<synchronous>, transform_indices = @transform_16, window_bounds = array<i64: 384, 128>}, {pipeline_mode = #tpu.pipeline_mode<synchronous>, transform_indices = @transform_17, window_bounds = array<i64: 1, 128>}, {pipeline_mode = #tpu.pipeline_mode<synchronous>, transform_indices = @transform_18, window_bounds = array<i64: 384, 128>}, {pipeline_mode = #tpu.pipeline_mode<synchronous>, transform_indices = @transform_19, window_bounds = array<i64: 1, 128>}, {transform_indices = @transform_20, window_bounds = array<i64: 4, 64, 128>}]} {
    %0 = tpu.iota {dimensions = array<i32: 1>} : vector<4x64x1xi32>
    %1 = vector.shape_cast %0 : vector<4x64x1xi32> to vector<256x1xi32>
    %c-9_i32 = arith.constant -9 : i32
    %2 = vector.broadcast %c-9_i32 : i32 to vector<256x1xi32>
    %3 = arith.addi %1, %2 : vector<256x1xi32>
    %c0_i32 = arith.constant 0 : i32
    %4 = vector.broadcast %c0_i32 : i32 to vector<256x1xi32>
    %5 = arith.cmpi sge, %3, %4 : vector<256x1xi32>
    %c64_i32 = arith.constant 64 : i32
    %6 = vector.broadcast %c64_i32 : i32 to vector<256x1xi32>
    %7 = arith.cmpi slt, %3, %6 : vector<256x1xi32>
    %8 = arith.andi %5, %7 : vector<256x1xi1>
    %9 = arith.extui %8 : vector<256x1xi1> to vector<256x1xi32>
    %10 = arith.sitofp %9 : vector<256x1xi32> to vector<256x1xf32>
    %c-3_i32 = arith.constant -3 : i32
    %11 = vector.broadcast %c-3_i32 : i32 to vector<256x1xi32>
    %12 = arith.addi %1, %11 : vector<256x1xi32>
    %c0_i32_0 = arith.constant 0 : i32
    %13 = vector.broadcast %c0_i32_0 : i32 to vector<256x1xi32>
    %14 = arith.cmpi sge, %12, %13 : vector<256x1xi32>
    %c64_i32_1 = arith.constant 64 : i32
    %15 = vector.broadcast %c64_i32_1 : i32 to vector<256x1xi32>
    %16 = arith.cmpi slt, %12, %15 : vector<256x1xi32>
    %17 = arith.andi %14, %16 : vector<256x1xi1>
    %18 = arith.extui %17 : vector<256x1xi1> to vector<256x1xi32>
    %19 = arith.sitofp %18 : vector<256x1xi32> to vector<256x1xf32>
    %c-2_i32 = arith.constant -2 : i32
    %20 = vector.broadcast %c-2_i32 : i32 to vector<256x1xi32>
    %21 = arith.addi %1, %20 : vector<256x1xi32>
    %c0_i32_2 = arith.constant 0 : i32
    %22 = vector.broadcast %c0_i32_2 : i32 to vector<256x1xi32>
    %23 = arith.cmpi sge, %21, %22 : vector<256x1xi32>
    %c64_i32_3 = arith.constant 64 : i32
    %24 = vector.broadcast %c64_i32_3 : i32 to vector<256x1xi32>
    %25 = arith.cmpi slt, %21, %24 : vector<256x1xi32>
    %26 = arith.andi %23, %25 : vector<256x1xi1>
    %27 = arith.extui %26 : vector<256x1xi1> to vector<256x1xi32>
    %28 = arith.sitofp %27 : vector<256x1xi32> to vector<256x1xf32>
    %c-1_i32 = arith.constant -1 : i32
    %29 = vector.broadcast %c-1_i32 : i32 to vector<256x1xi32>
    %30 = arith.addi %1, %29 : vector<256x1xi32>
    %c0_i32_4 = arith.constant 0 : i32
    %31 = vector.broadcast %c0_i32_4 : i32 to vector<256x1xi32>
    %32 = arith.cmpi sge, %30, %31 : vector<256x1xi32>
    %c64_i32_5 = arith.constant 64 : i32
    %33 = vector.broadcast %c64_i32_5 : i32 to vector<256x1xi32>
    %34 = arith.cmpi slt, %30, %33 : vector<256x1xi32>
    %35 = arith.andi %32, %34 : vector<256x1xi1>
    %36 = arith.extui %35 : vector<256x1xi1> to vector<256x1xi32>
    %37 = arith.sitofp %36 : vector<256x1xi32> to vector<256x1xf32>
    %c1_i32 = arith.constant 1 : i32
    %38 = vector.broadcast %c1_i32 : i32 to vector<256x1xi32>
    %39 = arith.addi %1, %38 : vector<256x1xi32>
    %c0_i32_6 = arith.constant 0 : i32
    %40 = vector.broadcast %c0_i32_6 : i32 to vector<256x1xi32>
    %41 = arith.cmpi sge, %39, %40 : vector<256x1xi32>
    %c64_i32_7 = arith.constant 64 : i32
    %42 = vector.broadcast %c64_i32_7 : i32 to vector<256x1xi32>
    %43 = arith.cmpi slt, %39, %42 : vector<256x1xi32>
    %44 = arith.andi %41, %43 : vector<256x1xi1>
    %45 = arith.extui %44 : vector<256x1xi1> to vector<256x1xi32>
    %46 = arith.sitofp %45 : vector<256x1xi32> to vector<256x1xf32>
    %c2_i32 = arith.constant 2 : i32
    %47 = vector.broadcast %c2_i32 : i32 to vector<256x1xi32>
    %48 = arith.addi %1, %47 : vector<256x1xi32>
    %c0_i32_8 = arith.constant 0 : i32
    %49 = vector.broadcast %c0_i32_8 : i32 to vector<256x1xi32>
    %50 = arith.cmpi sge, %48, %49 : vector<256x1xi32>
    %c64_i32_9 = arith.constant 64 : i32
    %51 = vector.broadcast %c64_i32_9 : i32 to vector<256x1xi32>
    %52 = arith.cmpi slt, %48, %51 : vector<256x1xi32>
    %53 = arith.andi %50, %52 : vector<256x1xi1>
    %54 = arith.extui %53 : vector<256x1xi1> to vector<256x1xi32>
    %55 = arith.sitofp %54 : vector<256x1xi32> to vector<256x1xf32>
    %c3_i32 = arith.constant 3 : i32
    %56 = vector.broadcast %c3_i32 : i32 to vector<256x1xi32>
    %57 = arith.addi %1, %56 : vector<256x1xi32>
    %c0_i32_10 = arith.constant 0 : i32
    %58 = vector.broadcast %c0_i32_10 : i32 to vector<256x1xi32>
    %59 = arith.cmpi sge, %57, %58 : vector<256x1xi32>
    %c64_i32_11 = arith.constant 64 : i32
    %60 = vector.broadcast %c64_i32_11 : i32 to vector<256x1xi32>
    %61 = arith.cmpi slt, %57, %60 : vector<256x1xi32>
    %62 = arith.andi %59, %61 : vector<256x1xi1>
    %63 = arith.extui %62 : vector<256x1xi1> to vector<256x1xi32>
    %64 = arith.sitofp %63 : vector<256x1xi32> to vector<256x1xf32>
    %c9_i32 = arith.constant 9 : i32
    %65 = vector.broadcast %c9_i32 : i32 to vector<256x1xi32>
    %66 = arith.addi %1, %65 : vector<256x1xi32>
    %c0_i32_12 = arith.constant 0 : i32
    %67 = vector.broadcast %c0_i32_12 : i32 to vector<256x1xi32>
    %68 = arith.cmpi sge, %66, %67 : vector<256x1xi32>
    %c64_i32_13 = arith.constant 64 : i32
    %69 = vector.broadcast %c64_i32_13 : i32 to vector<256x1xi32>
    %70 = arith.cmpi slt, %66, %69 : vector<256x1xi32>
    %71 = arith.andi %68, %70 : vector<256x1xi1>
    %72 = arith.extui %71 : vector<256x1xi1> to vector<256x1xi32>
    %73 = arith.sitofp %72 : vector<256x1xi32> to vector<256x1xf32>
    %c0 = arith.constant 0 : index
    %c0_14 = arith.constant 0 : index
    %c0_15 = arith.constant 0 : index
    %74 = vector.load %arg2[%c0, %c0_14, %c0_15] : memref<4x64x1xf32, #tpu.memory_space<vmem>>, vector<4x64x1xf32>
    %75 = vector.shape_cast %74 : vector<4x64x1xf32> to vector<256x1xf32>
    %c0_16 = arith.constant 0 : index
    %c0_17 = arith.constant 0 : index
    %c0_18 = arith.constant 0 : index
    %76 = vector.load %arg3[%c0_16, %c0_17, %c0_18] : memref<7x1x16xf32, #tpu.memory_space<vmem>>, vector<7x1x16xf32>
    %c0_19 = arith.constant 0 : index
    %c0_20 = arith.constant 0 : index
    %77 = vector.load %arg4[%c0_19, %c0_20] : memref<1x16xf32, #tpu.memory_space<vmem>>, vector<1x16xf32>
    %c3_i32_21 = arith.constant 3 : i32
    %78 = tpu.dynamic_rotate %75 by %c3_i32_21 dim 0 : vector<256x1xf32>, i32 -> vector<256x1xf32>
    %79 = arith.mulf %78, %19 : vector<256x1xf32>
    %80 = vector.extract_strided_slice %76 {offsets = [0, 0, 0], sizes = [1, 1, 16], strides = [1, 1, 1]} : vector<7x1x16xf32> to vector<1x1x16xf32>
    %81 = vector.shape_cast %80 : vector<1x1x16xf32> to vector<1x16xf32>
    %82 = vector.broadcast %79 : vector<256x1xf32> to vector<256x16xf32>
    %83 = vector.broadcast %81 : vector<1x16xf32> to vector<256x16xf32>
    %84 = arith.mulf %82, %83 : vector<256x16xf32>
    %85 = vector.broadcast %77 : vector<1x16xf32> to vector<256x16xf32>
    %86 = arith.addf %85, %84 : vector<256x16xf32>
    %c2_i32_22 = arith.constant 2 : i32
    %87 = tpu.dynamic_rotate %75 by %c2_i32_22 dim 0 : vector<256x1xf32>, i32 -> vector<256x1xf32>
    %88 = arith.mulf %87, %28 : vector<256x1xf32>
    %89 = vector.extract_strided_slice %76 {offsets = [1, 0, 0], sizes = [1, 1, 16], strides = [1, 1, 1]} : vector<7x1x16xf32> to vector<1x1x16xf32>
    %90 = vector.shape_cast %89 : vector<1x1x16xf32> to vector<1x16xf32>
    %91 = vector.broadcast %88 : vector<256x1xf32> to vector<256x16xf32>
    %92 = vector.broadcast %90 : vector<1x16xf32> to vector<256x16xf32>
    %93 = arith.mulf %91, %92 : vector<256x16xf32>
    %94 = arith.addf %86, %93 : vector<256x16xf32>
    %c1_i32_23 = arith.constant 1 : i32
    %95 = tpu.dynamic_rotate %75 by %c1_i32_23 dim 0 : vector<256x1xf32>, i32 -> vector<256x1xf32>
    %96 = arith.mulf %95, %37 : vector<256x1xf32>
    %97 = vector.extract_strided_slice %76 {offsets = [2, 0, 0], sizes = [1, 1, 16], strides = [1, 1, 1]} : vector<7x1x16xf32> to vector<1x1x16xf32>
    %98 = vector.shape_cast %97 : vector<1x1x16xf32> to vector<1x16xf32>
    %99 = vector.broadcast %96 : vector<256x1xf32> to vector<256x16xf32>
    %100 = vector.broadcast %98 : vector<1x16xf32> to vector<256x16xf32>
    %101 = arith.mulf %99, %100 : vector<256x16xf32>
    %102 = arith.addf %94, %101 : vector<256x16xf32>
    %103 = vector.extract_strided_slice %76 {offsets = [3, 0, 0], sizes = [1, 1, 16], strides = [1, 1, 1]} : vector<7x1x16xf32> to vector<1x1x16xf32>
    %104 = vector.shape_cast %103 : vector<1x1x16xf32> to vector<1x16xf32>
    %105 = vector.broadcast %75 : vector<256x1xf32> to vector<256x16xf32>
    %106 = vector.broadcast %104 : vector<1x16xf32> to vector<256x16xf32>
    %107 = arith.mulf %105, %106 : vector<256x16xf32>
    %108 = arith.addf %102, %107 : vector<256x16xf32>
    %c255_i32 = arith.constant 255 : i32
    %109 = tpu.dynamic_rotate %75 by %c255_i32 dim 0 : vector<256x1xf32>, i32 -> vector<256x1xf32>
    %110 = arith.mulf %109, %46 : vector<256x1xf32>
    %111 = vector.extract_strided_slice %76 {offsets = [4, 0, 0], sizes = [1, 1, 16], strides = [1, 1, 1]} : vector<7x1x16xf32> to vector<1x1x16xf32>
    %112 = vector.shape_cast %111 : vector<1x1x16xf32> to vector<1x16xf32>
    %113 = vector.broadcast %110 : vector<256x1xf32> to vector<256x16xf32>
    %114 = vector.broadcast %112 : vector<1x16xf32> to vector<256x16xf32>
    %115 = arith.mulf %113, %114 : vector<256x16xf32>
    %116 = arith.addf %108, %115 : vector<256x16xf32>
    %c254_i32 = arith.constant 254 : i32
    %117 = tpu.dynamic_rotate %75 by %c254_i32 dim 0 : vector<256x1xf32>, i32 -> vector<256x1xf32>
    %118 = arith.mulf %117, %55 : vector<256x1xf32>
    %119 = vector.extract_strided_slice %76 {offsets = [5, 0, 0], sizes = [1, 1, 16], strides = [1, 1, 1]} : vector<7x1x16xf32> to vector<1x1x16xf32>
    %120 = vector.shape_cast %119 : vector<1x1x16xf32> to vector<1x16xf32>
    %121 = vector.broadcast %118 : vector<256x1xf32> to vector<256x16xf32>
    %122 = vector.broadcast %120 : vector<1x16xf32> to vector<256x16xf32>
    %123 = arith.mulf %121, %122 : vector<256x16xf32>
    %124 = arith.addf %116, %123 : vector<256x16xf32>
    %c253_i32 = arith.constant 253 : i32
    %125 = tpu.dynamic_rotate %75 by %c253_i32 dim 0 : vector<256x1xf32>, i32 -> vector<256x1xf32>
    %126 = arith.mulf %125, %64 : vector<256x1xf32>
    %127 = vector.extract_strided_slice %76 {offsets = [6, 0, 0], sizes = [1, 1, 16], strides = [1, 1, 1]} : vector<7x1x16xf32> to vector<1x1x16xf32>
    %128 = vector.shape_cast %127 : vector<1x1x16xf32> to vector<1x16xf32>
    %129 = vector.broadcast %126 : vector<256x1xf32> to vector<256x16xf32>
    %130 = vector.broadcast %128 : vector<1x16xf32> to vector<256x16xf32>
    %131 = arith.mulf %129, %130 : vector<256x16xf32>
    %132 = arith.addf %124, %131 : vector<256x16xf32>
    %cst = arith.constant 2.000000e-01 : f32
    %133 = vector.broadcast %cst : f32 to vector<256x16xf32>
    %134 = arith.mulf %133, %132 : vector<256x16xf32>
    %135 = arith.maximumf %132, %134 : vector<256x16xf32>
    %c3_i32_24 = arith.constant 3 : i32
    %136 = tpu.dynamic_rotate %135 by %c3_i32_24 dim 0 : vector<256x16xf32>, i32 -> vector<256x16xf32>
    %137 = vector.broadcast %19 : vector<256x1xf32> to vector<256x16xf32>
    %138 = arith.mulf %136, %137 : vector<256x16xf32>
    %c2_i32_25 = arith.constant 2 : i32
    %139 = tpu.dynamic_rotate %135 by %c2_i32_25 dim 0 : vector<256x16xf32>, i32 -> vector<256x16xf32>
    %140 = vector.broadcast %28 : vector<256x1xf32> to vector<256x16xf32>
    %141 = arith.mulf %139, %140 : vector<256x16xf32>
    %c1_i32_26 = arith.constant 1 : i32
    %142 = tpu.dynamic_rotate %135 by %c1_i32_26 dim 0 : vector<256x16xf32>, i32 -> vector<256x16xf32>
    %143 = vector.broadcast %37 : vector<256x1xf32> to vector<256x16xf32>
    %144 = arith.mulf %142, %143 : vector<256x16xf32>
    %c255_i32_27 = arith.constant 255 : i32
    %145 = tpu.dynamic_rotate %135 by %c255_i32_27 dim 0 : vector<256x16xf32>, i32 -> vector<256x16xf32>
    %146 = vector.broadcast %46 : vector<256x1xf32> to vector<256x16xf32>
    %147 = arith.mulf %145, %146 : vector<256x16xf32>
    %c254_i32_28 = arith.constant 254 : i32
    %148 = tpu.dynamic_rotate %135 by %c254_i32_28 dim 0 : vector<256x16xf32>, i32 -> vector<256x16xf32>
    %149 = vector.broadcast %55 : vector<256x1xf32> to vector<256x16xf32>
    %150 = arith.mulf %148, %149 : vector<256x16xf32>
    %c253_i32_29 = arith.constant 253 : i32
    %151 = tpu.dynamic_rotate %135 by %c253_i32_29 dim 0 : vector<256x16xf32>, i32 -> vector<256x16xf32>
    %152 = vector.broadcast %64 : vector<256x1xf32> to vector<256x16xf32>
    %153 = arith.mulf %151, %152 : vector<256x16xf32>
    %154 = tpu.concatenate %138, %141, %144, %135, %147, %150, %153 in 1 : vector<256x16xf32>, vector<256x16xf32>, vector<256x16xf32>, vector<256x16xf32>, vector<256x16xf32>, vector<256x16xf32>, vector<256x16xf32> -> vector<256x112xf32>
    %155 = arith.truncf %154 : vector<256x112xf32> to vector<256x112xbf16>
    %c0_30 = arith.constant 0 : index
    %c0_31 = arith.constant 0 : index
    %156 = vector.load %arg5[%c0_30, %c0_31] : memref<112x32xbf16, #tpu.memory_space<vmem>>, vector<112x32xbf16>
    %cst_32 = arith.constant dense<0.000000e+00> : vector<256x32xf32>
    %157 = tpu.matmul %155, %156, %cst_32 {dimension_numbers = #tpu.dot_dimension_numbers<[1], [0], [0], [1], [0, 0, 1, 1], [], []>} : vector<256x112xbf16>, vector<112x32xbf16>, vector<256x32xf32> -> vector<256x32xf32>
    %c0_33 = arith.constant 0 : index
    %c0_34 = arith.constant 0 : index
    %158 = vector.load %arg6[%c0_33, %c0_34] : memref<1x32xf32, #tpu.memory_space<vmem>>, vector<1x32xf32>
    %159 = vector.broadcast %158 : vector<1x32xf32> to vector<256x32xf32>
    %160 = arith.addf %157, %159 : vector<256x32xf32>
    %cst_35 = arith.constant 2.000000e-01 : f32
    %161 = vector.broadcast %cst_35 : f32 to vector<256x32xf32>
    %162 = arith.mulf %161, %160 : vector<256x32xf32>
    %163 = arith.maximumf %160, %162 : vector<256x32xf32>
    %c3_i32_36 = arith.constant 3 : i32
    %164 = tpu.dynamic_rotate %163 by %c3_i32_36 dim 0 : vector<256x32xf32>, i32 -> vector<256x32xf32>
    %165 = vector.broadcast %19 : vector<256x1xf32> to vector<256x32xf32>
    %166 = arith.mulf %164, %165 : vector<256x32xf32>
    %c2_i32_37 = arith.constant 2 : i32
    %167 = tpu.dynamic_rotate %163 by %c2_i32_37 dim 0 : vector<256x32xf32>, i32 -> vector<256x32xf32>
    %168 = vector.broadcast %28 : vector<256x1xf32> to vector<256x32xf32>
    %169 = arith.mulf %167, %168 : vector<256x32xf32>
    %c1_i32_38 = arith.constant 1 : i32
    %170 = tpu.dynamic_rotate %163 by %c1_i32_38 dim 0 : vector<256x32xf32>, i32 -> vector<256x32xf32>
    %171 = vector.broadcast %37 : vector<256x1xf32> to vector<256x32xf32>
    %172 = arith.mulf %170, %171 : vector<256x32xf32>
    %c255_i32_39 = arith.constant 255 : i32
    %173 = tpu.dynamic_rotate %163 by %c255_i32_39 dim 0 : vector<256x32xf32>, i32 -> vector<256x32xf32>
    %174 = vector.broadcast %46 : vector<256x1xf32> to vector<256x32xf32>
    %175 = arith.mulf %173, %174 : vector<256x32xf32>
    %c254_i32_40 = arith.constant 254 : i32
    %176 = tpu.dynamic_rotate %163 by %c254_i32_40 dim 0 : vector<256x32xf32>, i32 -> vector<256x32xf32>
    %177 = vector.broadcast %55 : vector<256x1xf32> to vector<256x32xf32>
    %178 = arith.mulf %176, %177 : vector<256x32xf32>
    %c253_i32_41 = arith.constant 253 : i32
    %179 = tpu.dynamic_rotate %163 by %c253_i32_41 dim 0 : vector<256x32xf32>, i32 -> vector<256x32xf32>
    %180 = vector.broadcast %64 : vector<256x1xf32> to vector<256x32xf32>
    %181 = arith.mulf %179, %180 : vector<256x32xf32>
    %182 = tpu.concatenate %166, %169, %172, %163, %175, %178, %181 in 1 : vector<256x32xf32>, vector<256x32xf32>, vector<256x32xf32>, vector<256x32xf32>, vector<256x32xf32>, vector<256x32xf32>, vector<256x32xf32> -> vector<256x224xf32>
    %183 = arith.truncf %182 : vector<256x224xf32> to vector<256x224xbf16>
    %c0_42 = arith.constant 0 : index
    %c0_43 = arith.constant 0 : index
    %184 = vector.load %arg7[%c0_42, %c0_43] : memref<224x128xbf16, #tpu.memory_space<vmem>>, vector<224x128xbf16>
    %cst_44 = arith.constant dense<0.000000e+00> : vector<256x128xf32>
    %185 = tpu.matmul %183, %184, %cst_44 {dimension_numbers = #tpu.dot_dimension_numbers<[1], [0], [0], [1], [0, 0, 1, 1], [], []>} : vector<256x224xbf16>, vector<224x128xbf16>, vector<256x128xf32> -> vector<256x128xf32>
    %c0_45 = arith.constant 0 : index
    %c0_46 = arith.constant 0 : index
    %186 = vector.load %arg8[%c0_45, %c0_46] : memref<1x128xf32, #tpu.memory_space<vmem>>, vector<1x128xf32>
    %187 = vector.broadcast %186 : vector<1x128xf32> to vector<256x128xf32>
    %188 = arith.addf %185, %187 : vector<256x128xf32>
    %c0_47 = arith.constant 0 : index
    %c0_48 = arith.constant 0 : index
    %c0_49 = arith.constant 0 : index
    %189 = vector.load %arg1[%c0_47, %c0_48, %c0_49] : memref<4x64x128xbf16, #tpu.memory_space<vmem>>, vector<4x64x128xbf16>
    %190 = vector.shape_cast %189 : vector<4x64x128xbf16> to vector<256x128xbf16>
    %191 = arith.truncf %188 : vector<256x128xf32> to vector<256x128xbf16>
    %192 = tpu.concatenate %190, %191 in 1 : vector<256x128xbf16>, vector<256x128xbf16> -> vector<256x256xbf16>
    %c0_50 = arith.constant 0 : index
    %c0_51 = arith.constant 0 : index
    %193 = vector.load %arg9[%c0_50, %c0_51] : memref<256x128xbf16, #tpu.memory_space<vmem>>, vector<256x128xbf16>
    %cst_52 = arith.constant dense<0.000000e+00> : vector<256x128xf32>
    %194 = tpu.matmul %192, %193, %cst_52 {dimension_numbers = #tpu.dot_dimension_numbers<[1], [0], [0], [1], [0, 0, 1, 1], [], []>} : vector<256x256xbf16>, vector<256x128xbf16>, vector<256x128xf32> -> vector<256x128xf32>
    %c0_53 = arith.constant 0 : index
    %c0_54 = arith.constant 0 : index
    %195 = vector.load %arg10[%c0_53, %c0_54] : memref<1x128xf32, #tpu.memory_space<vmem>>, vector<1x128xf32>
    %196 = vector.broadcast %195 : vector<1x128xf32> to vector<256x128xf32>
    %197 = arith.addf %194, %196 : vector<256x128xf32>
    %cst_55 = arith.constant 2.000000e-01 : f32
    %198 = vector.broadcast %cst_55 : f32 to vector<256x128xf32>
    %199 = arith.mulf %198, %197 : vector<256x128xf32>
    %200 = arith.maximumf %197, %199 : vector<256x128xf32>
    %201 = arith.truncf %200 : vector<256x128xf32> to vector<256x128xbf16>
    %c0_56 = arith.constant 0 : index
    %c0_57 = arith.constant 0 : index
    %202 = vector.load %arg11[%c0_56, %c0_57] : memref<128x128xbf16, #tpu.memory_space<vmem>>, vector<128x128xbf16>
    %cst_58 = arith.constant dense<0.000000e+00> : vector<256x128xf32>
    %203 = tpu.matmul %201, %202, %cst_58 {dimension_numbers = #tpu.dot_dimension_numbers<[1], [0], [0], [1], [0, 0, 1, 1], [], []>} : vector<256x128xbf16>, vector<128x128xbf16>, vector<256x128xf32> -> vector<256x128xf32>
    %c0_59 = arith.constant 0 : index
    %c0_60 = arith.constant 0 : index
    %204 = vector.load %arg12[%c0_59, %c0_60] : memref<1x128xf32, #tpu.memory_space<vmem>>, vector<1x128xf32>
    %205 = vector.broadcast %204 : vector<1x128xf32> to vector<256x128xf32>
    %206 = arith.addf %203, %205 : vector<256x128xf32>
    %cst_61 = arith.constant 2.000000e-01 : f32
    %207 = vector.broadcast %cst_61 : f32 to vector<256x128xf32>
    %208 = arith.mulf %207, %206 : vector<256x128xf32>
    %209 = arith.maximumf %206, %208 : vector<256x128xf32>
    %210 = arith.truncf %209 : vector<256x128xf32> to vector<256x128xbf16>
    %c0_62 = arith.constant 0 : index
    %c0_63 = arith.constant 0 : index
    %211 = vector.load %arg13[%c0_62, %c0_63] : memref<128x128xbf16, #tpu.memory_space<vmem>>, vector<128x128xbf16>
    %cst_64 = arith.constant dense<0.000000e+00> : vector<256x128xf32>
    %212 = tpu.matmul %210, %211, %cst_64 {dimension_numbers = #tpu.dot_dimension_numbers<[1], [0], [0], [1], [0, 0, 1, 1], [], []>} : vector<256x128xbf16>, vector<128x128xbf16>, vector<256x128xf32> -> vector<256x128xf32>
    %c0_65 = arith.constant 0 : index
    %c0_66 = arith.constant 0 : index
    %213 = vector.load %arg14[%c0_65, %c0_66] : memref<1x128xf32, #tpu.memory_space<vmem>>, vector<1x128xf32>
    %214 = vector.broadcast %213 : vector<1x128xf32> to vector<256x128xf32>
    %215 = arith.addf %212, %214 : vector<256x128xf32>
    %c1_i32_67 = arith.constant 1 : i32
    %216 = tpu.dynamic_rotate %215 by %c1_i32_67 dim 0 : vector<256x128xf32>, i32 -> vector<256x128xf32>
    %217 = vector.broadcast %37 : vector<256x1xf32> to vector<256x128xf32>
    %218 = arith.mulf %216, %217 : vector<256x128xf32>
    %c255_i32_68 = arith.constant 255 : i32
    %219 = tpu.dynamic_rotate %215 by %c255_i32_68 dim 0 : vector<256x128xf32>, i32 -> vector<256x128xf32>
    %220 = vector.broadcast %46 : vector<256x1xf32> to vector<256x128xf32>
    %221 = arith.mulf %219, %220 : vector<256x128xf32>
    %222 = tpu.concatenate %218, %215, %221 in 1 : vector<256x128xf32>, vector<256x128xf32>, vector<256x128xf32> -> vector<256x384xf32>
    %223 = arith.truncf %222 : vector<256x384xf32> to vector<256x384xbf16>
    %c0_69 = arith.constant 0 : index
    %c0_70 = arith.constant 0 : index
    %224 = vector.load %arg15[%c0_69, %c0_70] : memref<384x128xbf16, #tpu.memory_space<vmem>>, vector<384x128xbf16>
    %cst_71 = arith.constant dense<0.000000e+00> : vector<256x128xf32>
    %225 = tpu.matmul %223, %224, %cst_71 {dimension_numbers = #tpu.dot_dimension_numbers<[1], [0], [0], [1], [0, 0, 1, 1], [], []>} : vector<256x384xbf16>, vector<384x128xbf16>, vector<256x128xf32> -> vector<256x128xf32>
    %c0_72 = arith.constant 0 : index
    %c0_73 = arith.constant 0 : index
    %226 = vector.load %arg16[%c0_72, %c0_73] : memref<1x128xf32, #tpu.memory_space<vmem>>, vector<1x128xf32>
    %227 = vector.broadcast %226 : vector<1x128xf32> to vector<256x128xf32>
    %228 = arith.addf %225, %227 : vector<256x128xf32>
    %229 = arith.addf %228, %215 : vector<256x128xf32>
    %cst_74 = arith.constant 2.000000e-01 : f32
    %230 = vector.broadcast %cst_74 : f32 to vector<256x128xf32>
    %231 = arith.mulf %230, %229 : vector<256x128xf32>
    %232 = arith.maximumf %229, %231 : vector<256x128xf32>
    %c3_i32_75 = arith.constant 3 : i32
    %233 = tpu.dynamic_rotate %232 by %c3_i32_75 dim 0 : vector<256x128xf32>, i32 -> vector<256x128xf32>
    %234 = vector.broadcast %19 : vector<256x1xf32> to vector<256x128xf32>
    %235 = arith.mulf %233, %234 : vector<256x128xf32>
    %c253_i32_76 = arith.constant 253 : i32
    %236 = tpu.dynamic_rotate %232 by %c253_i32_76 dim 0 : vector<256x128xf32>, i32 -> vector<256x128xf32>
    %237 = vector.broadcast %64 : vector<256x1xf32> to vector<256x128xf32>
    %238 = arith.mulf %236, %237 : vector<256x128xf32>
    %239 = tpu.concatenate %235, %232, %238 in 1 : vector<256x128xf32>, vector<256x128xf32>, vector<256x128xf32> -> vector<256x384xf32>
    %240 = arith.truncf %239 : vector<256x384xf32> to vector<256x384xbf16>
    %c0_77 = arith.constant 0 : index
    %c0_78 = arith.constant 0 : index
    %241 = vector.load %arg17[%c0_77, %c0_78] : memref<384x128xbf16, #tpu.memory_space<vmem>>, vector<384x128xbf16>
    %cst_79 = arith.constant dense<0.000000e+00> : vector<256x128xf32>
    %242 = tpu.matmul %240, %241, %cst_79 {dimension_numbers = #tpu.dot_dimension_numbers<[1], [0], [0], [1], [0, 0, 1, 1], [], []>} : vector<256x384xbf16>, vector<384x128xbf16>, vector<256x128xf32> -> vector<256x128xf32>
    %c0_80 = arith.constant 0 : index
    %c0_81 = arith.constant 0 : index
    %243 = vector.load %arg18[%c0_80, %c0_81] : memref<1x128xf32, #tpu.memory_space<vmem>>, vector<1x128xf32>
    %244 = vector.broadcast %243 : vector<1x128xf32> to vector<256x128xf32>
    %245 = arith.addf %242, %244 : vector<256x128xf32>
    %246 = arith.addf %245, %232 : vector<256x128xf32>
    %cst_82 = arith.constant 2.000000e-01 : f32
    %247 = vector.broadcast %cst_82 : f32 to vector<256x128xf32>
    %248 = arith.mulf %247, %246 : vector<256x128xf32>
    %249 = arith.maximumf %246, %248 : vector<256x128xf32>
    %c9_i32_83 = arith.constant 9 : i32
    %250 = tpu.dynamic_rotate %249 by %c9_i32_83 dim 0 : vector<256x128xf32>, i32 -> vector<256x128xf32>
    %251 = vector.broadcast %10 : vector<256x1xf32> to vector<256x128xf32>
    %252 = arith.mulf %250, %251 : vector<256x128xf32>
    %c247_i32 = arith.constant 247 : i32
    %253 = tpu.dynamic_rotate %249 by %c247_i32 dim 0 : vector<256x128xf32>, i32 -> vector<256x128xf32>
    %254 = vector.broadcast %73 : vector<256x1xf32> to vector<256x128xf32>
    %255 = arith.mulf %253, %254 : vector<256x128xf32>
    %256 = tpu.concatenate %252, %249, %255 in 1 : vector<256x128xf32>, vector<256x128xf32>, vector<256x128xf32> -> vector<256x384xf32>
    %257 = arith.truncf %256 : vector<256x384xf32> to vector<256x384xbf16>
    %c0_84 = arith.constant 0 : index
    %c0_85 = arith.constant 0 : index
    %258 = vector.load %arg19[%c0_84, %c0_85] : memref<384x128xbf16, #tpu.memory_space<vmem>>, vector<384x128xbf16>
    %cst_86 = arith.constant dense<0.000000e+00> : vector<256x128xf32>
    %259 = tpu.matmul %257, %258, %cst_86 {dimension_numbers = #tpu.dot_dimension_numbers<[1], [0], [0], [1], [0, 0, 1, 1], [], []>} : vector<256x384xbf16>, vector<384x128xbf16>, vector<256x128xf32> -> vector<256x128xf32>
    %c0_87 = arith.constant 0 : index
    %c0_88 = arith.constant 0 : index
    %260 = vector.load %arg20[%c0_87, %c0_88] : memref<1x128xf32, #tpu.memory_space<vmem>>, vector<1x128xf32>
    %261 = vector.broadcast %260 : vector<1x128xf32> to vector<256x128xf32>
    %262 = arith.addf %259, %261 : vector<256x128xf32>
    %263 = arith.addf %262, %249 : vector<256x128xf32>
    %cst_89 = arith.constant 2.000000e-01 : f32
    %264 = vector.broadcast %cst_89 : f32 to vector<256x128xf32>
    %265 = arith.mulf %264, %263 : vector<256x128xf32>
    %266 = arith.maximumf %263, %265 : vector<256x128xf32>
    %267 = vector.shape_cast %266 : vector<256x128xf32> to vector<4x64x128xf32>
    %c0_90 = arith.constant 0 : index
    %c0_91 = arith.constant 0 : index
    %c0_92 = arith.constant 0 : index
    %268 = vector.load %arg21[%c0_90, %c0_91, %c0_92] : memref<4x64x128xf32, #tpu.memory_space<vmem>>, vector<4x64x128xf32>
    tpu.vector_store %arg21[%c0_90, %c0_91, %c0_92], %267 {strides = array<i32>} : memref<4x64x128xf32, #tpu.memory_space<vmem>>, vector<4x64x128xf32>,
    return
  }
  func.func @transform_0(%arg0: i32) -> (i32, i32, i32) {
    %c0_i32 = arith.constant 0 : i32
    %c0_i32_0 = arith.constant 0 : i32
    %c0_i32_1 = arith.constant 0 : i32
    return %arg0, %c0_i32, %c0_i32_0 : i32, i32, i32
  }
  func.func @transform_1(%arg0: i32) -> (i32, i32, i32) {
    %c0_i32 = arith.constant 0 : i32
    %c0_i32_0 = arith.constant 0 : i32
    %c0_i32_1 = arith.constant 0 : i32
    return %arg0, %c0_i32, %c0_i32_0 : i32, i32, i32
  }
  func.func @transform_2(%arg0: i32) -> (i32, i32, i32) {
    %c0_i32 = arith.constant 0 : i32
    %c0_i32_0 = arith.constant 0 : i32
    %c0_i32_1 = arith.constant 0 : i32
    %c0_i32_2 = arith.constant 0 : i32
    return %c0_i32, %c0_i32_0, %c0_i32_1 : i32, i32, i32
  }
  func.func @transform_3(%arg0: i32) -> (i32, i32) {
    %c0_i32 = arith.constant 0 : i32
    %c0_i32_0 = arith.constant 0 : i32
    %c0_i32_1 = arith.constant 0 : i32
    return %c0_i32, %c0_i32_0 : i32, i32
  }
  func.func @transform_4(%arg0: i32) -> (i32, i32) {
    %c0_i32 = arith.constant 0 : i32
    %c0_i32_0 = arith.constant 0 : i32
    %c0_i32_1 = arith.constant 0 : i32
    return %c0_i32, %c0_i32_0 : i32, i32
  }
  func.func @transform_5(%arg0: i32) -> (i32, i32) {
    %c0_i32 = arith.constant 0 : i32
    %c0_i32_0 = arith.constant 0 : i32
    %c0_i32_1 = arith.constant 0 : i32
    return %c0_i32, %c0_i32_0 : i32, i32
  }
  func.func @transform_6(%arg0: i32) -> (i32, i32) {
    %c0_i32 = arith.constant 0 : i32
    %c0_i32_0 = arith.constant 0 : i32
    %c0_i32_1 = arith.constant 0 : i32
    return %c0_i32, %c0_i32_0 : i32, i32
  }
  func.func @transform_7(%arg0: i32) -> (i32, i32) {
    %c0_i32 = arith.constant 0 : i32
    %c0_i32_0 = arith.constant 0 : i32
    %c0_i32_1 = arith.constant 0 : i32
    return %c0_i32, %c0_i32_0 : i32, i32
  }
  func.func @transform_8(%arg0: i32) -> (i32, i32) {
    %c0_i32 = arith.constant 0 : i32
    %c0_i32_0 = arith.constant 0 : i32
    %c0_i32_1 = arith.constant 0 : i32
    return %c0_i32, %c0_i32_0 : i32, i32
  }
  func.func @transform_9(%arg0: i32) -> (i32, i32) {
    %c0_i32 = arith.constant 0 : i32
    %c0_i32_0 = arith.constant 0 : i32
    %c0_i32_1 = arith.constant 0 : i32
    return %c0_i32, %c0_i32_0 : i32, i32
  }
  func.func @transform_10(%arg0: i32) -> (i32, i32) {
    %c0_i32 = arith.constant 0 : i32
    %c0_i32_0 = arith.constant 0 : i32
    %c0_i32_1 = arith.constant 0 : i32
    return %c0_i32, %c0_i32_0 : i32, i32
  }
  func.func @transform_11(%arg0: i32) -> (i32, i32) {
    %c0_i32 = arith.constant 0 : i32
    %c0_i32_0 = arith.constant 0 : i32
    %c0_i32_1 = arith.constant 0 : i32
    return %c0_i32, %c0_i32_0 : i32, i32
  }
  func.func @transform_12(%arg0: i32) -> (i32, i32) {
    %c0_i32 = arith.constant 0 : i32
    %c0_i32_0 = arith.constant 0 : i32
    %c0_i32_1 = arith.constant 0 : i32
    return %c0_i32, %c0_i32_0 : i32, i32
  }
  func.func @transform_13(%arg0: i32) -> (i32, i32) {
    %c0_i32 = arith.constant 0 : i32
    %c0_i32_0 = arith.constant 0 : i32
    %c0_i32_1 = arith.constant 0 : i32
    return %c0_i32, %c0_i32_0 : i32, i32
  }
  func.func @transform_14(%arg0: i32) -> (i32, i32) {
    %c0_i32 = arith.constant 0 : i32
    %c0_i32_0 = arith.constant 0 : i32
    %c0_i32_1 = arith.constant 0 : i32
    return %c0_i32, %c0_i32_0 : i32, i32
  }
  func.func @transform_15(%arg0: i32) -> (i32, i32) {
    %c0_i32 = arith.constant 0 : i32
    %c0_i32_0 = arith.constant 0 : i32
    %c0_i32_1 = arith.constant 0 : i32
    return %c0_i32, %c0_i32_0 : i32, i32
  }
  func.func @transform_16(%arg0: i32) -> (i32, i32) {
    %c0_i32 = arith.constant 0 : i32
    %c0_i32_0 = arith.constant 0 : i32
    %c0_i32_1 = arith.constant 0 : i32
    return %c0_i32, %c0_i32_0 : i32, i32
  }
  func.func @transform_17(%arg0: i32) -> (i32, i32) {
    %c0_i32 = arith.constant 0 : i32
    %c0_i32_0 = arith.constant 0 : i32
    %c0_i32_1 = arith.constant 0 : i32
    return %c0_i32, %c0_i32_0 : i32, i32
  }
  func.func @transform_18(%arg0: i32) -> (i32, i32) {
    %c0_i32 = arith.constant 0 : i32
    %c0_i32_0 = arith.constant 0 : i32
    %c0_i32_1 = arith.constant 0 : i32
    return %c0_i32, %c0_i32_0 : i32, i32
  }
  func.func @transform_19(%arg0: i32) -> (i32, i32) {
    %c0_i32 = arith.constant 0 : i32
    %c0_i32_0 = arith.constant 0 : i32
    %c0_i32_1 = arith.constant 0 : i32
    return %c0_i32, %c0_i32_0 : i32, i32
  }
  func.func @transform_20(%arg0: i32) -> (i32, i32, i32) {
    %c0_i32 = arith.constant 0 : i32
    %c0_i32_0 = arith.constant 0 : i32
    %c0_i32_1 = arith.constant 0 : i32
    return %arg0, %c0_i32, %c0_i32_0 : i32, i32, i32
  }
}

</mosaic_0001>

<llo_original>
// kernel: tpu_custom_call.1
$region0: #{tpu_custom_call.1}
  #allocation0 [shape = 'u32[]', space=smem, size = 0x4, offset = 0x4, fixed_abs, tag = 'smem constant byte address 0x4 - core index']
  #allocation1 [shape = 'u32[144,128]{1,0:T(1,128)}', space=vmem, size = 0x12000, scoped, tag = 'internal scratch']
  %s0 = inlined_call_operand.vmem [shape: bf16[8,64,128], index: 0, kind: input, shape index: {}]
  %s1 = inlined_call_operand.vmem [shape: f32[8,64,1], index: 1, kind: input, shape index: {}]
  %s2 = inlined_call_operand.hbm [shape: f32[7,1,16], index: 2, kind: input, shape index: {}]
  %s3 = inlined_call_operand.vmem [shape: f32[1,16], index: 3, kind: input, shape index: {}]
  %s4 = inlined_call_operand.vmem [shape: bf16[112,32], index: 4, kind: input, shape index: {}]
  %s5 = inlined_call_operand.vmem [shape: f32[1,32], index: 5, kind: input, shape index: {}]
  %s6 = inlined_call_operand.hbm [shape: bf16[224,128], index: 6, kind: input, shape index: {}]
  %s7 = inlined_call_operand.vmem [shape: f32[1,128], index: 7, kind: input, shape index: {}]
  %s8 = inlined_call_operand.hbm [shape: bf16[256,128], index: 8, kind: input, shape index: {}]
  %s9 = inlined_call_operand.vmem [shape: f32[1,128], index: 9, kind: input, shape index: {}]
  %s10 = inlined_call_operand.hbm [shape: bf16[128,128], index: 10, kind: input, shape index: {}]
  %s11 = inlined_call_operand.vmem [shape: f32[1,128], index: 11, kind: input, shape index: {}]
  %s12 = inlined_call_operand.hbm [shape: bf16[128,128], index: 12, kind: input, shape index: {}]
  %s13 = inlined_call_operand.hbm [shape: f32[1,128], index: 13, kind: input, shape index: {}]
  %s14 = inlined_call_operand.vmem [shape: bf16[384,128], index: 14, kind: input, shape index: {}]
  %s15 = inlined_call_operand.hbm [shape: f32[1,128], index: 15, kind: input, shape index: {}]
  %s16 = inlined_call_operand.vmem [shape: bf16[384,128], index: 16, kind: input, shape index: {}]
  %s17 = inlined_call_operand.vmem [shape: f32[1,128], index: 17, kind: input, shape index: {}]
  %s18 = inlined_call_operand.hbm [shape: bf16[384,128], index: 18, kind: input, shape index: {}]
  %s19 = inlined_call_operand.vmem [shape: f32[1,128], index: 19, kind: input, shape index: {}]
  %s20 = inlined_call_operand.hbm [shape: f32[8,64,128], index: 20, kind: output, shape index: {}]
  %s21 = sld [smem:[#allocation0]]
  $region145: #{tpu_custom_call.1} parent=0
    _
  %s23 = ssub.s32 1, %s21
  %s24 = scalar_select 0, %s23, %s21
  $region1: #{tpu_custom_call.1} parent=0
    #allocation2 [shape = 'u8[3584]{0}', space=vmem, size = 0x1000, scoped, tag = 'input window, operand 2, single buffered']
    #allocation3 [shape = 's32[2]{0}', space=sflag, size = 0x8, scoped, tag = 'scoped memory for tpu_custom_call.1']
    #allocation4 [shape = 's32[2]{0}', space=sflag, size = 0x8, scoped, tag = 'scoped memory for tpu_custom_call.1']
    #allocation5 [shape = 'u8[57344]{0}', space=vmem, size = 0xe000, scoped, tag = 'input window, operand 6, single buffered']
    #allocation6 [shape = 's32[1]{0}', space=sflag, size = 0x4, scoped, tag = 'scoped memory for tpu_custom_call.1']
    #allocation7 [shape = 'u8[65536]{0}', space=vmem, size = 0x10000, scoped, tag = 'input window, operand 8, single buffered']
    #allocation8 [shape = 'u8[32768]{0}', space=vmem, size = 0x8000, scoped, tag = 'input window, operand 10, single buffered']
    #allocation9 [shape = 's32[1]{0}', space=sflag, size = 0x4, scoped, tag = 'scoped memory for tpu_custom_call.1']
    #allocation10 [shape = 'u8[32768]{0}', space=vmem, size = 0x8000, scoped, tag = 'input window, operand 12, single buffered']
    #allocation11 [shape = 'u8[512]{0}', space=vmem, size = 0x400, scoped, tag = 'input window, operand 13, single buffered']
    #allocation12 [shape = 's32[1]{0}', space=sflag, size = 0x4, scoped, tag = 'scoped memory for tpu_custom_call.1']
    #allocation13 [shape = 'u8[512]{0}', space=vmem, size = 0x400, scoped, tag = 'input window, operand 15, single buffered']
    #allocation14 [shape = 'u8[98304]{0}', space=vmem, size = 0x18000, scoped, tag = 'input window, operand 18, single buffered']
    #allocation15 [shape = 's32[1]{0}', space=sflag, size = 0x4, scoped, tag = 'scoped memory for tpu_custom_call.1']
    #allocation16 [shape = 'u8[262144]{0}', space=vmem, size = 0x40000, scoped, tag = 'output window, operand 0']
    %25 = vsyncpa [#allocation3], 0
    %26 = vsyncpa [#allocation6], 0
    %27 = vsyncpa [#allocation9], 0
    %28 = vsyncpa [#allocation12], 0
    %29 = vsyncpa [#allocation15], 0
    %30 = vsyncpa [#allocation4], 0
    %s31 = scalar_lea.sflag [#allocation4], 1
    %32 = vsyncpa %s31, 0
    loop: start=0, step=1, limit=4
    $region2: #{tpu_custom_call.1} parent=1 // loop_pre_header
      _
    $region3: #{tpu_custom_call.1} parent=1 // loop_header
      %s34 = sphi 0, %s38
      %p35 = scmp.ge.s32.totalorder %s34, 4
      %s44 = sphi 0, %s46
      %s47 = sphi 0, %s44
      %s48 = sphi 0, %s47
      %s64 = sphi 0, %s48
      %s70 = sphi 0, %s72
      %s73 = sphi 0, %s70
      %s74 = sphi 0, %s73
      %s90 = sphi 0, %s74
      %s94 = sphi 0, %s94
      %s96 = sphi 0, %s94
      %s97 = sphi 0, %s96
      %s111 = sphi 0, %s97
      %s115 = sphi 0, %s115
      %s117 = sphi 0, %s115
      %s118 = sphi 0, %s117
      %s132 = sphi 0, %s118
      %s136 = sphi 0, %s136
      %s138 = sphi 0, %s136
      %s139 = sphi 0, %s138
      %s153 = sphi 0, %s139
      %s157 = sphi 0, %s157
      %s159 = sphi 0, %s157
      %s160 = sphi 0, %s159
      %s174 = sphi 0, %s160
      %s178 = sphi 0, %s178
      %s180 = sphi 0, %s178
      %s181 = sphi 0, %s180
      %s195 = sphi 0, %s181
      %s199 = sphi 0, %s199
      %s201 = sphi 0, %s199
      %s202 = sphi 0, %s201
      %s216 = sphi 0, %s202
      %s220 = sphi 0, %s220
      %s222 = sphi 0, %s220
      %s223 = sphi 0, %s222
      %s237 = sphi 0, %s223
      %s241 = sphi 0, %s241
      %s243 = sphi 0, %s241
      %s244 = sphi 0, %s243
      %s258 = sphi 0, %s244
      %s262 = sphi 0, %s262
      %s264 = sphi 0, %s262
      %s265 = sphi 0, %s264
      %s279 = sphi 0, %s265
      %s283 = sphi 0, %s283
      %s285 = sphi 0, %s283
      %s286 = sphi 0, %s285
      %s300 = sphi 0, %s286
      %s304 = sphi 0, %s304
      %s306 = sphi 0, %s304
      %s307 = sphi 0, %s306
      %s321 = sphi 0, %s307
      %s325 = sphi 0, %s325
      %s327 = sphi 0, %s325
      %s328 = sphi 0, %s327
      %s342 = sphi 0, %s328
      %s346 = sphi 0, %s346
      %s348 = sphi 0, %s346
      %s349 = sphi 0, %s348
      %s363 = sphi 0, %s349
      %s367 = sphi 0, %s367
      %s369 = sphi 0, %s367
      %s370 = sphi 0, %s369
      %s384 = sphi 0, %s370
      %s388 = sphi 0, %s388
      %s390 = sphi 0, %s388
      %s391 = sphi 0, %s390
      %s405 = sphi 0, %s391
      %s409 = sphi 0, %s409
      %s411 = sphi 0, %s409
      %s412 = sphi 0, %s411
      %s426 = sphi 0, %s412
      %s430 = sphi 0, %s430
      %s432 = sphi 0, %s430
      %s433 = sphi 0, %s432
      %s447 = sphi 0, %s433
      %s451 = sphi 0, %s451
      %s453 = sphi 0, %s451
      %s454 = sphi 0, %s453
      %s468 = sphi 0, %s454
      %s474 = sphi 0, %s476
      %s477 = sphi 0, %s474
      %s478 = sphi 0, %s477
      %s494 = sphi 0, %s478
    $region4: #{tpu_custom_call.1} parent=1 // loop_header_branch
      %37 = sbr.rel (%p35) target = $region8
    $region5: #{tpu_custom_call.1} parent=1 // loop_body
      %s39 = ssub.s32 %s34, 1
      %s40 = ssub.s32 %s34, 2
      %s41 = sadd.s32 %s34, 1
      %s42 = ssub.s32 %s34, %s41
      %p43 = scmp.eq.s32.totalorder %s42, 0
      %s45 = sadd.s32 %s44, 1
      %s46 = scalar_select %p43, %s44, %s45
      %p49 = pneg %p43
      %p50 = scmp.eq.s32.totalorder %s34, 1
      %p51 = por %p49, %p50
      %p52 = scmp.ne.s32.totalorder %s44, %s47
      %p53 = scmp.eq.s32.totalorder %s34, 0
      %p54 = por %p52, %p53
      %p55 = scmp.ne.s32.totalorder %s44, %s47
      %p56 = scmp.eq.s32.totalorder %s39, 1
      %p57 = por %p55, %p56
      %p58 = scmp.ne.s32.totalorder %s47, %s48
      %p59 = scmp.eq.s32.totalorder %s39, 0
      %p60 = por %p58, %p59
      %p61 = scmp.ne.s32.totalorder %s47, %s48
      %p62 = scmp.eq.s32.totalorder %s40, 1
      %p63 = por %p61, %p62
      %p65 = scmp.ne.s32.totalorder %s48, %s64
      %p66 = scmp.eq.s32.totalorder %s40, 0
      %p67 = por %p65, %p66
      %s68 = ssub.s32 %s34, %s41
      %p69 = scmp.eq.s32.totalorder %s68, 0
      %s71 = sadd.s32 %s70, 1
      %s72 = scalar_select %p69, %s70, %s71
      %p75 = pneg %p69
      %p76 = scmp.eq.s32.totalorder %s34, 1
      %p77 = por %p75, %p76
      %p78 = scmp.ne.s32.totalorder %s70, %s73
      %p79 = scmp.eq.s32.totalorder %s34, 0
      %p80 = por %p78, %p79
      %p81 = scmp.ne.s32.totalorder %s70, %s73
      %p82 = scmp.eq.s32.totalorder %s39, 1
      %p83 = por %p81, %p82
      %p84 = scmp.ne.s32.totalorder %s73, %s74
      %p85 = scmp.eq.s32.totalorder %s39, 0
      %p86 = por %p84, %p85
      %p87 = scmp.ne.s32.totalorder %s73, %s74
      %p88 = scmp.eq.s32.totalorder %s40, 1
      %p89 = por %p87, %p88
      %p91 = scmp.ne.s32.totalorder %s74, %s90
      %p92 = scmp.eq.s32.totalorder %s40, 0
      %p93 = por %p91, %p92
      %s95 = sadd.s32 %s94, 1
      %p98 = scmp.eq.s32.totalorder %s34, 1
      %p99 = scmp.ne.s32.totalorder %s94, %s96
      %p100 = scmp.eq.s32.totalorder %s34, 0
      %p101 = por %p99, %p100
      %p102 = scmp.ne.s32.totalorder %s94, %s96
      %p103 = scmp.eq.s32.totalorder %s39, 1
      %p104 = por %p102, %p103
      %p105 = scmp.ne.s32.totalorder %s96, %s97
      %p106 = scmp.eq.s32.totalorder %s39, 0
      %p107 = por %p105, %p106
      %p108 = scmp.ne.s32.totalorder %s96, %s97
      %p109 = scmp.eq.s32.totalorder %s40, 1
      %p110 = por %p108, %p109
      %p112 = scmp.ne.s32.totalorder %s97, %s111
      %p113 = scmp.eq.s32.totalorder %s40, 0
      %p114 = por %p112, %p113
      %s116 = sadd.s32 %s115, 1
      %p119 = scmp.eq.s32.totalorder %s34, 1
      %p120 = scmp.ne.s32.totalorder %s115, %s117
      %p121 = scmp.eq.s32.totalorder %s34, 0
      %p122 = por %p120, %p121
      %p123 = scmp.ne.s32.totalorder %s115, %s117
      %p124 = scmp.eq.s32.totalorder %s39, 1
      %p125 = por %p123, %p124
      %p126 = scmp.ne.s32.totalorder %s117, %s118
      %p127 = scmp.eq.s32.totalorder %s39, 0
      %p128 = por %p126, %p127
      %p129 = scmp.ne.s32.totalorder %s117, %s118
      %p130 = scmp.eq.s32.totalorder %s40, 1
      %p131 = por %p129, %p130
      %p133 = scmp.ne.s32.totalorder %s118, %s132
      %p134 = scmp.eq.s32.totalorder %s40, 0
      %p135 = por %p133, %p134
      %s137 = sadd.s32 %s136, 1
      %p140 = scmp.eq.s32.totalorder %s34, 1
      %p141 = scmp.ne.s32.totalorder %s136, %s138
      %p142 = scmp.eq.s32.totalorder %s34, 0
      %p143 = por %p141, %p142
      %p144 = scmp.ne.s32.totalorder %s136, %s138
      %p145 = scmp.eq.s32.totalorder %s39, 1
      %p146 = por %p144, %p145
      %p147 = scmp.ne.s32.totalorder %s138, %s139
      %p148 = scmp.eq.s32.totalorder %s39, 0
      %p149 = por %p147, %p148
      %p150 = scmp.ne.s32.totalorder %s138, %s139
      %p151 = scmp.eq.s32.totalorder %s40, 1
      %p152 = por %p150, %p151
      %p154 = scmp.ne.s32.totalorder %s139, %s153
      %p155 = scmp.eq.s32.totalorder %s40, 0
      %p156 = por %p154, %p155
      %s158 = sadd.s32 %s157, 1
      %p161 = scmp.eq.s32.totalorder %s34, 1
      %p162 = scmp.ne.s32.totalorder %s157, %s159
      %p163 = scmp.eq.s32.totalorder %s34, 0
      %p164 = por %p162, %p163
      %p165 = scmp.ne.s32.totalorder %s157, %s159
      %p166 = scmp.eq.s32.totalorder %s39, 1
      %p167 = por %p165, %p166
      %p168 = scmp.ne.s32.totalorder %s159, %s160
      %p169 = scmp.eq.s32.totalorder %s39, 0
      %p170 = por %p168, %p169
      %p171 = scmp.ne.s32.totalorder %s159, %s160
      %p172 = scmp.eq.s32.totalorder %s40, 1
      %p173 = por %p171, %p172
      %p175 = scmp.ne.s32.totalorder %s160, %s174
      %p176 = scmp.eq.s32.totalorder %s40, 0
      %p177 = por %p175, %p176
      %s179 = sadd.s32 %s178, 1
      %p182 = scmp.eq.s32.totalorder %s34, 1
      %p183 = scmp.ne.s32.totalorder %s178, %s180
      %p184 = scmp.eq.s32.totalorder %s34, 0
      %p185 = por %p183, %p184
      %p186 = scmp.ne.s32.totalorder %s178, %s180
      %p187 = scmp.eq.s32.totalorder %s39, 1
      %p188 = por %p186, %p187
      %p189 = scmp.ne.s32.totalorder %s180, %s181
      %p190 = scmp.eq.s32.totalorder %s39, 0
      %p191 = por %p189, %p190
      %p192 = scmp.ne.s32.totalorder %s180, %s181
      %p193 = scmp.eq.s32.totalorder %s40, 1
      %p194 = por %p192, %p193
      %p196 = scmp.ne.s32.totalorder %s181, %s195
      %p197 = scmp.eq.s32.totalorder %s40, 0
      %p198 = por %p196, %p197
      %s200 = sadd.s32 %s199, 1
      %p203 = scmp.eq.s32.totalorder %s34, 1
      %p204 = scmp.ne.s32.totalorder %s199, %s201
      %p205 = scmp.eq.s32.totalorder %s34, 0
      %p206 = por %p204, %p205
      %p207 = scmp.ne.s32.totalorder %s199, %s201
      %p208 = scmp.eq.s32.totalorder %s39, 1
      %p209 = por %p207, %p208
      %p210 = scmp.ne.s32.totalorder %s201, %s202
      %p211 = scmp.eq.s32.totalorder %s39, 0
      %p212 = por %p210, %p211
      %p213 = scmp.ne.s32.totalorder %s201, %s202
      %p214 = scmp.eq.s32.totalorder %s40, 1
      %p215 = por %p213, %p214
      %p217 = scmp.ne.s32.totalorder %s202, %s216
      %p218 = scmp.eq.s32.totalorder %s40, 0
      %p219 = por %p217, %p218
      %s221 = sadd.s32 %s220, 1
      %p224 = scmp.eq.s32.totalorder %s34, 1
      %p225 = scmp.ne.s32.totalorder %s220, %s222
      %p226 = scmp.eq.s32.totalorder %s34, 0
      %p227 = por %p225, %p226
      %p228 = scmp.ne.s32.totalorder %s220, %s222
      %p229 = scmp.eq.s32.totalorder %s39, 1
      %p230 = por %p228, %p229
      %p231 = scmp.ne.s32.totalorder %s222, %s223
      %p232 = scmp.eq.s32.totalorder %s39, 0
      %p233 = por %p231, %p232
      %p234 = scmp.ne.s32.totalorder %s222, %s223
      %p235 = scmp.eq.s32.totalorder %s40, 1
      %p236 = por %p234, %p235
      %p238 = scmp.ne.s32.totalorder %s223, %s237
      %p239 = scmp.eq.s32.totalorder %s40, 0
      %p240 = por %p238, %p239
      %s242 = sadd.s32 %s241, 1
      %p245 = scmp.eq.s32.totalorder %s34, 1
      %p246 = scmp.ne.s32.totalorder %s241, %s243
      %p247 = scmp.eq.s32.totalorder %s34, 0
      %p248 = por %p246, %p247
      %p249 = scmp.ne.s32.totalorder %s241, %s243
      %p250 = scmp.eq.s32.totalorder %s39, 1
      %p251 = por %p249, %p250
      %p252 = scmp.ne.s32.totalorder %s243, %s244
      %p253 = scmp.eq.s32.totalorder %s39, 0
      %p254 = por %p252, %p253
      %p255 = scmp.ne.s32.totalorder %s243, %s244
      %p256 = scmp.eq.s32.totalorder %s40, 1
      %p257 = por %p255, %p256
      %p259 = scmp.ne.s32.totalorder %s244, %s258
      %p260 = scmp.eq.s32.totalorder %s40, 0
      %p261 = por %p259, %p260
      %s263 = sadd.s32 %s262, 1
      %p266 = scmp.eq.s32.totalorder %s34, 1
      %p267 = scmp.ne.s32.totalorder %s262, %s264
      %p268 = scmp.eq.s32.totalorder %s34, 0
      %p269 = por %p267, %p268
      %p270 = scmp.ne.s32.totalorder %s262, %s264
      %p271 = scmp.eq.s32.totalorder %s39, 1
      %p272 = por %p270, %p271
      %p273 = scmp.ne.s32.totalorder %s264, %s265
      %p274 = scmp.eq.s32.totalorder %s39, 0
      %p275 = por %p273, %p274
      %p276 = scmp.ne.s32.totalorder %s264, %s265
      %p277 = scmp.eq.s32.totalorder %s40, 1
      %p278 = por %p276, %p277
      %p280 = scmp.ne.s32.totalorder %s265, %s279
      %p281 = scmp.eq.s32.totalorder %s40, 0
      %p282 = por %p280, %p281
      %s284 = sadd.s32 %s283, 1
      %p287 = scmp.eq.s32.totalorder %s34, 1
      %p288 = scmp.ne.s32.totalorder %s283, %s285
      %p289 = scmp.eq.s32.totalorder %s34, 0
      %p290 = por %p288, %p289
      %p291 = scmp.ne.s32.totalorder %s283, %s285
      %p292 = scmp.eq.s32.totalorder %s39, 1
      %p293 = por %p291, %p292
      %p294 = scmp.ne.s32.totalorder %s285, %s286
      %p295 = scmp.eq.s32.totalorder %s39, 0
      %p296 = por %p294, %p295
      %p297 = scmp.ne.s32.totalorder %s285, %s286
      %p298 = scmp.eq.s32.totalorder %s40, 1
      %p299 = por %p297, %p298
      %p301 = scmp.ne.s32.totalorder %s286, %s300
      %p302 = scmp.eq.s32.totalorder %s40, 0
      %p303 = por %p301, %p302
      %s305 = sadd.s32 %s304, 1
      %p308 = scmp.eq.s32.totalorder %s34, 1
      %p309 = scmp.ne.s32.totalorder %s304, %s306
      %p310 = scmp.eq.s32.totalorder %s34, 0
      %p311 = por %p309, %p310
      %p312 = scmp.ne.s32.totalorder %s304, %s306
      %p313 = scmp.eq.s32.totalorder %s39, 1
      %p314 = por %p312, %p313
      %p315 = scmp.ne.s32.totalorder %s306, %s307
      %p316 = scmp.eq.s32.totalorder %s39, 0
      %p317 = por %p315, %p316
      %p318 = scmp.ne.s32.totalorder %s306, %s307
      %p319 = scmp.eq.s32.totalorder %s40, 1
      %p320 = por %p318, %p319
      %p322 = scmp.ne.s32.totalorder %s307, %s321
      %p323 = scmp.eq.s32.totalorder %s40, 0
      %p324 = por %p322, %p323
      %s326 = sadd.s32 %s325, 1
      %p329 = scmp.eq.s32.totalorder %s34, 1
      %p330 = scmp.ne.s32.totalorder %s325, %s327
      %p331 = scmp.eq.s32.totalorder %s34, 0
      %p332 = por %p330, %p331
      %p333 = scmp.ne.s32.totalorder %s325, %s327
      %p334 = scmp.eq.s32.totalorder %s39, 1
      %p335 = por %p333, %p334
      %p336 = scmp.ne.s32.totalorder %s327, %s328
      %p337 = scmp.eq.s32.totalorder %s39, 0
      %p338 = por %p336, %p337
      %p339 = scmp.ne.s32.totalorder %s327, %s328
      %p340 = scmp.eq.s32.totalorder %s40, 1
      %p341 = por %p339, %p340
      %p343 = scmp.ne.s32.totalorder %s328, %s342
      %p344 = scmp.eq.s32.totalorder %s40, 0
      %p345 = por %p343, %p344
      %s347 = sadd.s32 %s346, 1
      %p350 = scmp.eq.s32.totalorder %s34, 1
      %p351 = scmp.ne.s32.totalorder %s346, %s348
      %p352 = scmp.eq.s32.totalorder %s34, 0
      %p353 = por %p351, %p352
      %p354 = scmp.ne.s32.totalorder %s346, %s348
      %p355 = scmp.eq.s32.totalorder %s39, 1
      %p356 = por %p354, %p355
      %p357 = scmp.ne.s32.totalorder %s348, %s349
      %p358 = scmp.eq.s32.totalorder %s39, 0
      %p359 = por %p357, %p358
      %p360 = scmp.ne.s32.totalorder %s348, %s349
      %p361 = scmp.eq.s32.totalorder %s40, 1
      %p362 = por %p360, %p361
      %p364 = scmp.ne.s32.totalorder %s349, %s363
      %p365 = scmp.eq.s32.totalorder %s40, 0
      %p366 = por %p364, %p365
      %s368 = sadd.s32 %s367, 1
      %p371 = scmp.eq.s32.totalorder %s34, 1
      %p372 = scmp.ne.s32.totalorder %s367, %s369
      %p373 = scmp.eq.s32.totalorder %s34, 0
      %p374 = por %p372, %p373
      %p375 = scmp.ne.s32.totalorder %s367, %s369
      %p376 = scmp.eq.s32.totalorder %s39, 1
      %p377 = por %p375, %p376
      %p378 = scmp.ne.s32.totalorder %s369, %s370
      %p379 = scmp.eq.s32.totalorder %s39, 0
      %p380 = por %p378, %p379
      %p381 = scmp.ne.s32.totalorder %s369, %s370
      %p382 = scmp.eq.s32.totalorder %s40, 1
      %p383 = por %p381, %p382
      %p385 = scmp.ne.s32.totalorder %s370, %s384
      %p386 = scmp.eq.s32.totalorder %s40, 0
      %p387 = por %p385, %p386
      %s389 = sadd.s32 %s388, 1
      %p392 = scmp.eq.s32.totalorder %s34, 1
      %p393 = scmp.ne.s32.totalorder %s388, %s390
      %p394 = scmp.eq.s32.totalorder %s34, 0
      %p395 = por %p393, %p394
      %p396 = scmp.ne.s32.totalorder %s388, %s390
      %p397 = scmp.eq.s32.totalorder %s39, 1
      %p398 = por %p396, %p397
      %p399 = scmp.ne.s32.totalorder %s390, %s391
      %p400 = scmp.eq.s32.totalorder %s39, 0
      %p401 = por %p399, %p400
      %p402 = scmp.ne.s32.totalorder %s390, %s391
      %p403 = scmp.eq.s32.totalorder %s40, 1
      %p404 = por %p402, %p403
      %p406 = scmp.ne.s32.totalorder %s391, %s405
      %p407 = scmp.eq.s32.totalorder %s40, 0
      %p408 = por %p406, %p407
      %s410 = sadd.s32 %s409, 1
      %p413 = scmp.eq.s32.totalorder %s34, 1
      %p414 = scmp.ne.s32.totalorder %s409, %s411
      %p415 = scmp.eq.s32.totalorder %s34, 0
      %p416 = por %p414, %p415
      %p417 = scmp.ne.s32.totalorder %s409, %s411
      %p418 = scmp.eq.s32.totalorder %s39, 1
      %p419 = por %p417, %p418
      %p420 = scmp.ne.s32.totalorder %s411, %s412
      %p421 = scmp.eq.s32.totalorder %s39, 0
      %p422 = por %p420, %p421
      %p423 = scmp.ne.s32.totalorder %s411, %s412
      %p424 = scmp.eq.s32.totalorder %s40, 1
      %p425 = por %p423, %p424
      %p427 = scmp.ne.s32.totalorder %s412, %s426
      %p428 = scmp.eq.s32.totalorder %s40, 0
      %p429 = por %p427, %p428
      %s431 = sadd.s32 %s430, 1
      %p434 = scmp.eq.s32.totalorder %s34, 1
      %p435 = scmp.ne.s32.totalorder %s430, %s432
      %p436 = scmp.eq.s32.totalorder %s34, 0
      %p437 = por %p435, %p436
      %p438 = scmp.ne.s32.totalorder %s430, %s432
      %p439 = scmp.eq.s32.totalorder %s39, 1
      %p440 = por %p438, %p439
      %p441 = scmp.ne.s32.totalorder %s432, %s433
      %p442 = scmp.eq.s32.totalorder %s39, 0
      %p443 = por %p441, %p442
      %p444 = scmp.ne.s32.totalorder %s432, %s433
      %p445 = scmp.eq.s32.totalorder %s40, 1
      %p446 = por %p444, %p445
      %p448 = scmp.ne.s32.totalorder %s433, %s447
      %p449 = scmp.eq.s32.totalorder %s40, 0
      %p450 = por %p448, %p449
      %s452 = sadd.s32 %s451, 1
      %p455 = scmp.eq.s32.totalorder %s34, 1
      %p456 = scmp.ne.s32.totalorder %s451, %s453
      %p457 = scmp.eq.s32.totalorder %s34, 0
      %p458 = por %p456, %p457
      %p459 = scmp.ne.s32.totalorder %s451, %s453
      %p460 = scmp.eq.s32.totalorder %s39, 1
      %p461 = por %p459, %p460
      %p462 = scmp.ne.s32.totalorder %s453, %s454
      %p463 = scmp.eq.s32.totalorder %s39, 0
      %p464 = por %p462, %p463
      %p465 = scmp.ne.s32.totalorder %s453, %s454
      %p466 = scmp.eq.s32.totalorder %s40, 1
      %p467 = por %p465, %p466
      %p469 = scmp.ne.s32.totalorder %s454, %s468
      %p470 = scmp.eq.s32.totalorder %s40, 0
      %p471 = por %p469, %p470
      %s472 = ssub.s32 %s34, %s41
      %p473 = scmp.eq.s32.totalorder %s472, 0
      %s475 = sadd.s32 %s474, 1
      %s476 = scalar_select %p473, %s474, %s475
      %p479 = pneg %p473
      %p480 = scmp.eq.s32.totalorder %s34, 1
      %p481 = por %p479, %p480
      %p482 = scmp.ne.s32.totalorder %s474, %s477
      %p483 = scmp.eq.s32.totalorder %s34, 0
      %p484 = por %p482, %p483
      %p485 = scmp.ne.s32.totalorder %s474, %s477
      %p486 = scmp.eq.s32.totalorder %s39, 1
      %p487 = por %p485, %p486
      %p488 = scmp.ne.s32.totalorder %s477, %s478
      %p489 = scmp.eq.s32.totalorder %s39, 0
      %p490 = por %p488, %p489
      %p491 = scmp.ne.s32.totalorder %s477, %s478
      %p492 = scmp.eq.s32.totalorder %s40, 1
      %p493 = por %p491, %p492
      %p495 = scmp.ne.s32.totalorder %s478, %s494
      %p496 = scmp.eq.s32.totalorder %s40, 0
      %p497 = por %p495, %p496
      %p498 = scmp.le.s32.totalorder 1, %s34
      %p499 = scmp.lt.s32.totalorder %s34, 3
      %p500 = pnand %p498, %p499
      %p501 = pneg %p500
      // Predicated region
      $region9: #{tpu_custom_call.1} parent=5 // pred_check
        _
      $region10: #{tpu_custom_call.1} parent=5 // pred_check_branch
        %503 = sbr.rel (%p500) target = $region12
      $region11: #{tpu_custom_call.1} parent=5 // pred_region
        %s504 = ssub.s32 %s34, 1
        // Predicated region
        $region13: #{tpu_custom_call.1} parent=11 // pred_check
          %p505 = pneg %p107
        $region14: #{tpu_custom_call.1} parent=11 // pred_check_branch
          %507 = sbr.rel (%p505) target = $region16
        $region15: #{tpu_custom_call.1} parent=11 // pred_region
          %s509 = ssub.s32 112, 112
          %510 = vsyncadd [#allocation3], %s509
          %s511 = sshll.u32 [#allocation2], 4
          %s512 = int_to_ptr.vmem [resolvable:$true] %s511
          %517 = dma.hbm_to_vmem [thread:$0]  %s2, 112, %s512, [#allocation3], 16, 16, 1
        $region16: #{tpu_custom_call.1} parent=11 // pred_fallthru
          _
        // Predicated region
        $region17: #{tpu_custom_call.1} parent=11 // pred_check
          %p518 = pneg %p128
        $region18: #{tpu_custom_call.1} parent=11 // pred_check_branch
          %520 = sbr.rel (%p518) target = $region20
        $region19: #{tpu_custom_call.1} parent=11 // pred_region
          _
        $region20: #{tpu_custom_call.1} parent=11 // pred_fallthru
          _
        // Predicated region
        $region21: #{tpu_custom_call.1} parent=11 // pred_check
          %p521 = pneg %p149
        $region22: #{tpu_custom_call.1} parent=11 // pred_check_branch
          %523 = sbr.rel (%p521) target = $region24
        $region23: #{tpu_custom_call.1} parent=11 // pred_region
          _
        $region24: #{tpu_custom_call.1} parent=11 // pred_fallthru
          _
        // Predicated region
        $region25: #{tpu_custom_call.1} parent=11 // pred_check
          %p524 = pneg %p170
        $region26: #{tpu_custom_call.1} parent=11 // pred_check_branch
          %526 = sbr.rel (%p524) target = $region28
        $region27: #{tpu_custom_call.1} parent=11 // pred_region
          _
        $region28: #{tpu_custom_call.1} parent=11 // pred_fallthru
          _
        // Predicated region
        $region29: #{tpu_custom_call.1} parent=11 // pred_check
          %p527 = pneg %p191
        $region30: #{tpu_custom_call.1} parent=11 // pred_check_branch
          %529 = sbr.rel (%p527) target = $region32
        $region31: #{tpu_custom_call.1} parent=11 // pred_region
          %s531 = ssub.s32 1792, 1792
          %532 = vsyncadd [#allocation6], %s531
          %s533 = sshll.u32 [#allocation5], 4
          %s534 = int_to_ptr.vmem [resolvable:$true] %s533
          %539 = dma.hbm_to_vmem [thread:$0]  %s6, 1792, %s534, [#allocation6], 64, 64, 4
        $region32: #{tpu_custom_call.1} parent=11 // pred_fallthru
          _
        // Predicated region
        $region33: #{tpu_custom_call.1} parent=11 // pred_check
          %p540 = pneg %p212
        $region34: #{tpu_custom_call.1} parent=11 // pred_check_branch
          %542 = sbr.rel (%p540) target = $region36
        $region35: #{tpu_custom_call.1} parent=11 // pred_region
          _
        $region36: #{tpu_custom_call.1} parent=11 // pred_fallthru
          _
        // Predicated region
        $region37: #{tpu_custom_call.1} parent=11 // pred_check
          %p543 = pneg %p233
        $region38: #{tpu_custom_call.1} parent=11 // pred_check_branch
          %545 = sbr.rel (%p543) target = $region40
        $region39: #{tpu_custom_call.1} parent=11 // pred_region
          %s547 = ssub.s32 2048, 2048
          %548 = vsyncadd [#allocation6], %s547
          %s549 = sshll.u32 [#allocation7], 4
          %s550 = int_to_ptr.vmem [resolvable:$true] %s549
          %555 = dma.hbm_to_vmem [thread:$0]  %s8, 2048, %s550, [#allocation6], 64, 64, 4
        $region40: #{tpu_custom_call.1} parent=11 // pred_fallthru
          _
        // Predicated region
        $region41: #{tpu_custom_call.1} parent=11 // pred_check
          %p556 = pneg %p254
        $region42: #{tpu_custom_call.1} parent=11 // pred_check_branch
          %558 = sbr.rel (%p556) target = $region44
        $region43: #{tpu_custom_call.1} parent=11 // pred_region
          _
        $region44: #{tpu_custom_call.1} parent=11 // pred_fallthru
          _
        // Predicated region
        $region45: #{tpu_custom_call.1} parent=11 // pred_check
          %p559 = pneg %p275
        $region46: #{tpu_custom_call.1} parent=11 // pred_check_branch
          %561 = sbr.rel (%p559) target = $region48
        $region47: #{tpu_custom_call.1} parent=11 // pred_region
          %s563 = ssub.s32 1024, 1024
          %564 = vsyncadd [#allocation9], %s563
          %s565 = sshll.u32 [#allocation8], 4
          %s566 = int_to_ptr.vmem [resolvable:$true] %s565
          %571 = dma.hbm_to_vmem [thread:$0]  %s10, 1024, %s566, [#allocation9], 64, 64, 4
        $region48: #{tpu_custom_call.1} parent=11 // pred_fallthru
          _
        // Predicated region
        $region49: #{tpu_custom_call.1} parent=11 // pred_check
          %p572 = pneg %p296
        $region50: #{tpu_custom_call.1} parent=11 // pred_check_branch
          %574 = sbr.rel (%p572) target = $region52
        $region51: #{tpu_custom_call.1} parent=11 // pred_region
          _
        $region52: #{tpu_custom_call.1} parent=11 // pred_fallthru
          _
        // Predicated region
        $region53: #{tpu_custom_call.1} parent=11 // pred_check
          %p575 = pneg %p317
        $region54: #{tpu_custom_call.1} parent=11 // pred_check_branch
          %577 = sbr.rel (%p575) target = $region56
        $region55: #{tpu_custom_call.1} parent=11 // pred_region
          %s579 = ssub.s32 1024, 1024
          %580 = vsyncadd [#allocation9], %s579
          %s581 = sshll.u32 [#allocation10], 4
          %s582 = int_to_ptr.vmem [resolvable:$true] %s581
          %587 = dma.hbm_to_vmem [thread:$0]  %s12, 1024, %s582, [#allocation9], 64, 64, 4
        $region56: #{tpu_custom_call.1} parent=11 // pred_fallthru
          _
        // Predicated region
        $region57: #{tpu_custom_call.1} parent=11 // pred_check
          %p588 = pneg %p338
        $region58: #{tpu_custom_call.1} parent=11 // pred_check_branch
          %590 = sbr.rel (%p588) target = $region60
        $region59: #{tpu_custom_call.1} parent=11 // pred_region
          %s592 = ssub.s32 16, 16
          %593 = vsyncadd [#allocation12], %s592
          %s595 = sshll.u32 [#allocation11], 4
          %s596 = int_to_ptr.vmem [resolvable:$true] %s595
          %598 = dma.hbm_to_vmem [thread:$0]  %s13, 16, %s596, [#allocation12]
        $region60: #{tpu_custom_call.1} parent=11 // pred_fallthru
          _
        // Predicated region
        $region61: #{tpu_custom_call.1} parent=11 // pred_check
          %p599 = pneg %p359
        $region62: #{tpu_custom_call.1} parent=11 // pred_check_branch
          %601 = sbr.rel (%p599) target = $region64
        $region63: #{tpu_custom_call.1} parent=11 // pred_region
          _
        $region64: #{tpu_custom_call.1} parent=11 // pred_fallthru
          _
        // Predicated region
        $region65: #{tpu_custom_call.1} parent=11 // pred_check
          %p602 = pneg %p380
        $region66: #{tpu_custom_call.1} parent=11 // pred_check_branch
          %604 = sbr.rel (%p602) target = $region68
        $region67: #{tpu_custom_call.1} parent=11 // pred_region
          %s606 = ssub.s32 16, 16
          %607 = vsyncadd [#allocation12], %s606
          %s609 = sshll.u32 [#allocation13], 4
          %s610 = int_to_ptr.vmem [resolvable:$true] %s609
          %612 = dma.hbm_to_vmem [thread:$0]  %s15, 16, %s610, [#allocation12]
        $region68: #{tpu_custom_call.1} parent=11 // pred_fallthru
          _
        // Predicated region
        $region69: #{tpu_custom_call.1} parent=11 // pred_check
          %p613 = pneg %p401
        $region70: #{tpu_custom_call.1} parent=11 // pred_check_branch
          %615 = sbr.rel (%p613) target = $region72
        $region71: #{tpu_custom_call.1} parent=11 // pred_region
          _
        $region72: #{tpu_custom_call.1} parent=11 // pred_fallthru
          _
        // Predicated region
        $region73: #{tpu_custom_call.1} parent=11 // pred_check
          %p616 = pneg %p422
        $region74: #{tpu_custom_call.1} parent=11 // pred_check_branch
          %618 = sbr.rel (%p616) target = $region76
        $region75: #{tpu_custom_call.1} parent=11 // pred_region
          _
        $region76: #{tpu_custom_call.1} parent=11 // pred_fallthru
          _
        // Predicated region
        $region77: #{tpu_custom_call.1} parent=11 // pred_check
          %p619 = pneg %p443
        $region78: #{tpu_custom_call.1} parent=11 // pred_check_branch
          %621 = sbr.rel (%p619) target = $region80
        $region79: #{tpu_custom_call.1} parent=11 // pred_region
          %s623 = ssub.s32 3072, 3072
          %624 = vsyncadd [#allocation15], %s623
          %s625 = sshll.u32 [#allocation14], 4
          %s626 = int_to_ptr.vmem [resolvable:$true] %s625
          %631 = dma.hbm_to_vmem [thread:$0]  %s18, 3072, %s626, [#allocation15], 64, 64, 4
        $region80: #{tpu_custom_call.1} parent=11 // pred_fallthru
          _
        // Predicated region
        $region81: #{tpu_custom_call.1} parent=11 // pred_check
          %p632 = pneg %p464
        $region82: #{tpu_custom_call.1} parent=11 // pred_check_branch
          %634 = sbr.rel (%p632) target = $region84
        $region83: #{tpu_custom_call.1} parent=11 // pred_region
          _
        $region84: #{tpu_custom_call.1} parent=11 // pred_fallthru
          _
      $region12: #{tpu_custom_call.1} parent=5 // pred_fallthru
        _
      %p635 = scmp.lt.s32.totalorder %s34, 2
      // Predicated region
      $region85: #{tpu_custom_call.1} parent=5 // pred_check
        %p636 = pneg %p635
      $region86: #{tpu_custom_call.1} parent=5 // pred_check_branch
        %638 = sbr.rel (%p636) target = $region88
      $region87: #{tpu_custom_call.1} parent=5 // pred_region
        // Predicated region
        $region89: #{tpu_custom_call.1} parent=87 // pred_check
          %p639 = pneg %p54
        $region90: #{tpu_custom_call.1} parent=87 // pred_check_branch
          %641 = sbr.rel (%p639) target = $region92
        $region91: #{tpu_custom_call.1} parent=87 // pred_region
          %s642 = smul.u32 4, %s34
          %p643 = scmp.lt.s32.totalorder %s642, 7
          %s644 = scalar_select %p643, %s642, 7
          %s645 = smul.addr %s644, 8
          %s646 = smul.addr %s645, 4
          %s647 = scalar_lea.vmem %s0, %s646
          %s648 = smul.u32 4, %s34
        $region92: #{tpu_custom_call.1} parent=87 // pred_fallthru
          _
        // Predicated region
        $region93: #{tpu_custom_call.1} parent=87 // pred_check
          %p649 = pneg %p80
        $region94: #{tpu_custom_call.1} parent=87 // pred_check_branch
          %651 = sbr.rel (%p649) target = $region96
        $region95: #{tpu_custom_call.1} parent=87 // pred_region
          %s652 = smul.u32 4, %s34
          %p653 = scmp.lt.s32.totalorder %s652, 7
          %s654 = scalar_select %p653, %s652, 7
          %s655 = smul.addr %s654, 8
          %s656 = smul.addr %s655, 8
          %s657 = scalar_lea.vmem %s1, %s656
          %s658 = smul.u32 4, %s34
        $region96: #{tpu_custom_call.1} parent=87 // pred_fallthru
          _
      $region88: #{tpu_custom_call.1} parent=5 // pred_fallthru
        _
      %p659 = scmp.le.s32.totalorder 1, %s34
      %p660 = scmp.lt.s32.totalorder %s34, 3
      %p661 = pnand %p659, %p660
      %p662 = pneg %p661
      // Predicated region
      $region97: #{tpu_custom_call.1} parent=5 // pred_check
        _
      $region98: #{tpu_custom_call.1} parent=5 // pred_check_branch
        %664 = sbr.rel (%p661) target = $region100
      $region99: #{tpu_custom_call.1} parent=5 // pred_region
        %s665 = ssub.s32 %s34, 1
        // Predicated region
        $region101: #{tpu_custom_call.1} parent=99 // pred_check
          %p666 = pneg %p107
        $region102: #{tpu_custom_call.1} parent=99 // pred_check_branch
          %668 = sbr.rel (%p666) target = $region104
        $region103: #{tpu_custom_call.1} parent=99 // pred_region
          %669 = dma.done [#allocation3], 112
        $region104: #{tpu_custom_call.1} parent=99 // pred_fallthru
          _
        // Predicated region
        $region105: #{tpu_custom_call.1} parent=99 // pred_check
          %p670 = pneg %p191
        $region106: #{tpu_custom_call.1} parent=99 // pred_check_branch
          %672 = sbr.rel (%p670) target = $region108
        $region107: #{tpu_custom_call.1} parent=99 // pred_region
          %673 = dma.done [#allocation6], 1792
        $region108: #{tpu_custom_call.1} parent=99 // pred_fallthru
          _
        // Predicated region
        $region109: #{tpu_custom_call.1} parent=99 // pred_check
          %p674 = pneg %p233
        $region110: #{tpu_custom_call.1} parent=99 // pred_check_branch
          %676 = sbr.rel (%p674) target = $region112
        $region111: #{tpu_custom_call.1} parent=99 // pred_region
          %677 = dma.done [#allocation6], 2048
        $region112: #{tpu_custom_call.1} parent=99 // pred_fallthru
          _
        // Predicated region
        $region113: #{tpu_custom_call.1} parent=99 // pred_check
          %p678 = pneg %p275
        $region114: #{tpu_custom_call.1} parent=99 // pred_check_branch
          %680 = sbr.rel (%p678) target = $region116
        $region115: #{tpu_custom_call.1} parent=99 // pred_region
          %681 = dma.done [#allocation9], 1024
        $region116: #{tpu_custom_call.1} parent=99 // pred_fallthru
          _
        // Predicated region
        $region117: #{tpu_custom_call.1} parent=99 // pred_check
          %p682 = pneg %p317
        $region118: #{tpu_custom_call.1} parent=99 // pred_check_branch
          %684 = sbr.rel (%p682) target = $region120
        $region119: #{tpu_custom_call.1} parent=99 // pred_region
          %685 = dma.done [#allocation9], 1024
        $region120: #{tpu_custom_call.1} parent=99 // pred_fallthru
          _
        // Predicated region
        $region121: #{tpu_custom_call.1} parent=99 // pred_check
          %p686 = pneg %p338
        $region122: #{tpu_custom_call.1} parent=99 // pred_check_branch
          %688 = sbr.rel (%p686) target = $region124
        $region123: #{tpu_custom_call.1} parent=99 // pred_region
          %689 = dma.done [#allocation12], 16
        $region124: #{tpu_custom_call.1} parent=99 // pred_fallthru
          _
        // Predicated region
        $region125: #{tpu_custom_call.1} parent=99 // pred_check
          %p690 = pneg %p380
        $region126: #{tpu_custom_call.1} parent=99 // pred_check_branch
          %692 = sbr.rel (%p690) target = $region128
        $region127: #{tpu_custom_call.1} parent=99 // pred_region
          %693 = dma.done [#allocation12], 16
        $region128: #{tpu_custom_call.1} parent=99 // pred_fallthru
          _
        // Predicated region
        $region129: #{tpu_custom_call.1} parent=99 // pred_check
          %p694 = pneg %p443
        $region130: #{tpu_custom_call.1} parent=99 // pred_check_branch
          %696 = sbr.rel (%p694) target = $region132
        $region131: #{tpu_custom_call.1} parent=99 // pred_region
          %697 = dma.done [#allocation15], 3072
        $region132: #{tpu_custom_call.1} parent=99 // pred_fallthru
          _
        %s698 = smul.u32 4, %s39
        %p699 = scmp.lt.s32.totalorder %s698, 7
        %s700 = scalar_select %p699, %s698, 7
        %s701 = smul.addr %s700, 8
        %s702 = smul.addr %s701, 4
        %s703 = scalar_lea.vmem %s0, %s702
        %p704 = pneg %p60
        %p705 = pneg %p57
        %s706 = smul.u32 4, %s39
        %p707 = scmp.lt.s32.totalorder %s706, 7
        %s708 = scalar_select %p707, %s706, 7
        %s709 = smul.addr %s708, 8
        %s710 = smul.addr %s709, 8
        %s711 = scalar_lea.vmem %s1, %s710
        %p712 = pneg %p86
        %p713 = pneg %p83
        %p714 = pneg %p107
        %p715 = pneg %p104
        %p716 = pneg %p128
        %p717 = pneg %p125
        %p718 = pneg %p149
        %p719 = pneg %p146
        %p720 = pneg %p170
        %p721 = pneg %p167
        %p722 = pneg %p191
        %p723 = pneg %p188
        %p724 = pneg %p212
        %p725 = pneg %p209
        %p726 = pneg %p233
        %p727 = pneg %p230
        %p728 = pneg %p254
        %p729 = pneg %p251
        %p730 = pneg %p275
        %p731 = pneg %p272
        %p732 = pneg %p296
        %p733 = pneg %p293
        %p734 = pneg %p317
        %p735 = pneg %p314
        %p736 = pneg %p338
        %p737 = pneg %p335
        %p738 = pneg %p359
        %p739 = pneg %p356
        %p740 = pneg %p380
        %p741 = pneg %p377
        %p742 = pneg %p401
        %p743 = pneg %p398
        %p744 = pneg %p422
        %p745 = pneg %p419
        %p746 = pneg %p443
        %p747 = pneg %p440
        %p748 = pneg %p464
        %p749 = pneg %p461
        %p750 = pneg %p490
        %p751 = pneg %p487
        %s752 = sand.u32 %s477, 1
        %s753 = scalar_lea.sflag [#allocation4], %s752
        %s754 = sand.u32 %s477, 1
        %s755 = smul.addr %s754, 256
        %s756 = scalar_lea.vmem [#allocation16], %s755
        %s757 = smul.u32 4, %s39
        %p758 = scmp.lt.s32.totalorder %s757, 7
        %s759 = scalar_select %p758, %s757, 7
        %s760 = smul.addr %s759, 8
        %s761 = smul.addr %s760, 4
        %s762 = scalar_lea.vmem %s0, %s761
        %s763 = smul.u32 4, %s39
        %s764 = smul.u32 4, %s39
        %p765 = scmp.lt.s32.totalorder %s764, 7
        %s766 = scalar_select %p765, %s764, 7
        %s767 = smul.addr %s766, 8
        %s768 = smul.addr %s767, 8
        %s769 = scalar_lea.vmem %s1, %s768
        %s770 = smul.u32 4, %s39
        %s771 = smul.u32 4, %s39
        %v773 = vlaneseq
        %v774 = vshrl.u32 %v773, 7
        %v775 = vadd.s32 %v774, 8
        %v776 = vadd.s32 %v774, 16
        %v777 = vadd.s32 %v774, 24
        %v778 = vadd.s32 %v774, 32
        %v779 = vadd.s32 %v774, 40
        %v780 = vadd.s32 %v774, 48
        %v781 = vadd.s32 %v774, 56
        %v782 = vadd.s32 %v774, 4294967287
        %v783 = vadd.s32 %v775, 4294967287
        %v784 = vadd.s32 %v776, 4294967287
        %v785 = vadd.s32 %v777, 4294967287
        %v786 = vadd.s32 %v778, 4294967287
        %v787 = vadd.s32 %v779, 4294967287
        %v788 = vadd.s32 %v780, 4294967287
        %v789 = vadd.s32 %v781, 4294967287
        %vm790 = vcmp.ge.s32.totalorder %v782, 0
        %vm791 = vcmp.ge.s32.totalorder %v783, 0
        %vm792 = vcmp.ge.s32.totalorder %v784, 0
        %vm793 = vcmp.ge.s32.totalorder %v785, 0
        %vm794 = vcmp.ge.s32.totalorder %v786, 0
        %vm795 = vcmp.ge.s32.totalorder %v787, 0
        %vm796 = vcmp.ge.s32.totalorder %v788, 0
        %vm797 = vcmp.ge.s32.totalorder %v789, 0
        %vm798 = vcmp.lt.s32.totalorder %v782, 64
        %vm799 = vcmp.lt.s32.totalorder %v783, 64
        %vm800 = vcmp.lt.s32.totalorder %v784, 64
        %vm801 = vcmp.lt.s32.totalorder %v785, 64
        %vm802 = vcmp.lt.s32.totalorder %v786, 64
        %vm803 = vcmp.lt.s32.totalorder %v787, 64
        %vm804 = vcmp.lt.s32.totalorder %v788, 64
        %vm805 = vcmp.lt.s32.totalorder %v789, 64
        %vm806 = vmand %vm790, %vm798
        %vm807 = vmand %vm791, %vm799
        %vm808 = vmand %vm792, %vm800
        %vm809 = vmand %vm793, %vm801
        %vm810 = vmand %vm794, %vm802
        %vm811 = vmand %vm795, %vm803
        %vm812 = vmand %vm796, %vm804
        %vm813 = vmand %vm797, %vm805
        %v814 = vsel %vm806, 1, 0
        %v815 = vsel %vm807, 1, 0
        %v816 = vsel %vm808, 1, 0
        %v817 = vsel %vm809, 1, 0
        %v818 = vsel %vm810, 1, 0
        %v819 = vsel %vm811, 1, 0
        %v820 = vsel %vm812, 1, 0
        %v821 = vsel %vm813, 1, 0
        %v822 = vcvt.s32.f32 %v814
        %v823 = vcvt.s32.f32 %v815
        %v824 = vcvt.s32.f32 %v816
        %v825 = vcvt.s32.f32 %v817
        %v826 = vcvt.s32.f32 %v818
        %v827 = vcvt.s32.f32 %v819
        %v828 = vcvt.s32.f32 %v820
        %v829 = vcvt.s32.f32 %v821
        %v830 = vadd.s32 %v774, 4294967293
        %v831 = vadd.s32 %v775, 4294967293
        %v832 = vadd.s32 %v776, 4294967293
        %v833 = vadd.s32 %v777, 4294967293
        %v834 = vadd.s32 %v778, 4294967293
        %v835 = vadd.s32 %v779, 4294967293
        %v836 = vadd.s32 %v780, 4294967293
        %v837 = vadd.s32 %v781, 4294967293
        %vm838 = vcmp.ge.s32.totalorder %v830, 0
        %vm839 = vcmp.ge.s32.totalorder %v831, 0
        %vm840 = vcmp.ge.s32.totalorder %v832, 0
        %vm841 = vcmp.ge.s32.totalorder %v833, 0
        %vm842 = vcmp.ge.s32.totalorder %v834, 0
        %vm843 = vcmp.ge.s32.totalorder %v835, 0
        %vm844 = vcmp.ge.s32.totalorder %v836, 0
        %vm845 = vcmp.ge.s32.totalorder %v837, 0
        %vm846 = vcmp.lt.s32.totalorder %v830, 64
        %vm847 = vcmp.lt.s32.totalorder %v831, 64
        %vm848 = vcmp.lt.s32.totalorder %v832, 64
        %vm849 = vcmp.lt.s32.totalorder %v833, 64
        %vm850 = vcmp.lt.s32.totalorder %v834, 64
        %vm851 = vcmp.lt.s32.totalorder %v835, 64
        %vm852 = vcmp.lt.s32.totalorder %v836, 64
        %vm853 = vcmp.lt.s32.totalorder %v837, 64
        %vm854 = vmand %vm838, %vm846
        %vm855 = vmand %vm839, %vm847
        %vm856 = vmand %vm840, %vm848
        %vm857 = vmand %vm841, %vm849
        %vm858 = vmand %vm842, %vm850
        %vm859 = vmand %vm843, %vm851
        %vm860 = vmand %vm844, %vm852
        %vm861 = vmand %vm845, %vm853
        %v862 = vsel %vm854, 1, 0
        %v863 = vsel %vm855, 1, 0
        %v864 = vsel %vm856, 1, 0
        %v865 = vsel %vm857, 1, 0
        %v866 = vsel %vm858, 1, 0
        %v867 = vsel %vm859, 1, 0
        %v868 = vsel %vm860, 1, 0
        %v869 = vsel %vm861, 1, 0
        %v870 = vcvt.s32.f32 %v862
        %v871 = vcvt.s32.f32 %v863
        %v872 = vcvt.s32.f32 %v864
        %v873 = vcvt.s32.f32 %v865
        %v874 = vcvt.s32.f32 %v866
        %v875 = vcvt.s32.f32 %v867
        %v876 = vcvt.s32.f32 %v868
        %v877 = vcvt.s32.f32 %v869
        %v878 = vadd.s32 %v774, 4294967294
        %v879 = vadd.s32 %v775, 4294967294
        %v880 = vadd.s32 %v776, 4294967294
        %v881 = vadd.s32 %v777, 4294967294
        %v882 = vadd.s32 %v778, 4294967294
        %v883 = vadd.s32 %v779, 4294967294
        %v884 = vadd.s32 %v780, 4294967294
        %v885 = vadd.s32 %v781, 4294967294
        %vm886 = vcmp.ge.s32.totalorder %v878, 0
        %vm887 = vcmp.ge.s32.totalorder %v879, 0
        %vm888 = vcmp.ge.s32.totalorder %v880, 0
        %vm889 = vcmp.ge.s32.totalorder %v881, 0
        %vm890 = vcmp.ge.s32.totalorder %v882, 0
        %vm891 = vcmp.ge.s32.totalorder %v883, 0
        %vm892 = vcmp.ge.s32.totalorder %v884, 0
        %vm893 = vcmp.ge.s32.totalorder %v885, 0
        %vm894 = vcmp.lt.s32.totalorder %v878, 64
        %vm895 = vcmp.lt.s32.totalorder %v879, 64
        %vm896 = vcmp.lt.s32.totalorder %v880, 64
        %vm897 = vcmp.lt.s32.totalorder %v881, 64
        %vm898 = vcmp.lt.s32.totalorder %v882, 64
        %vm899 = vcmp.lt.s32.totalorder %v883, 64
        %vm900 = vcmp.lt.s32.totalorder %v884, 64
        %vm901 = vcmp.lt.s32.totalorder %v885, 64
        %vm902 = vmand %vm886, %vm894
        %vm903 = vmand %vm887, %vm895
        %vm904 = vmand %vm888, %vm896
        %vm905 = vmand %vm889, %vm897
        %vm906 = vmand %vm890, %vm898
        %vm907 = vmand %vm891, %vm899
        %vm908 = vmand %vm892, %vm900
        %vm909 = vmand %vm893, %vm901
        %v910 = vsel %vm902, 1, 0
        %v911 = vsel %vm903, 1, 0
        %v912 = vsel %vm904, 1, 0
        %v913 = vsel %vm905, 1, 0
        %v914 = vsel %vm906, 1, 0
        %v915 = vsel %vm907, 1, 0
        %v916 = vsel %vm908, 1, 0
        %v917 = vsel %vm909, 1, 0
        %v918 = vcvt.s32.f32 %v910
        %v919 = vcvt.s32.f32 %v911
        %v920 = vcvt.s32.f32 %v912
        %v921 = vcvt.s32.f32 %v913
        %v922 = vcvt.s32.f32 %v914
        %v923 = vcvt.s32.f32 %v915
        %v924 = vcvt.s32.f32 %v916
        %v925 = vcvt.s32.f32 %v917
        %v926 = vadd.s32 %v774, 4294967295
        %v927 = vadd.s32 %v775, 4294967295
        %v928 = vadd.s32 %v776, 4294967295
        %v929 = vadd.s32 %v777, 4294967295
        %v930 = vadd.s32 %v778, 4294967295
        %v931 = vadd.s32 %v779, 4294967295
        %v932 = vadd.s32 %v780, 4294967295
        %v933 = vadd.s32 %v781, 4294967295
        %vm934 = vcmp.ge.s32.totalorder %v926, 0
        %vm935 = vcmp.ge.s32.totalorder %v927, 0
        %vm936 = vcmp.ge.s32.totalorder %v928, 0
        %vm937 = vcmp.ge.s32.totalorder %v929, 0
        %vm938 = vcmp.ge.s32.totalorder %v930, 0
        %vm939 = vcmp.ge.s32.totalorder %v931, 0
        %vm940 = vcmp.ge.s32.totalorder %v932, 0
        %vm941 = vcmp.ge.s32.totalorder %v933, 0
        %vm942 = vcmp.lt.s32.totalorder %v926, 64
        %vm943 = vcmp.lt.s32.totalorder %v927, 64
        %vm944 = vcmp.lt.s32.totalorder %v928, 64
        %vm945 = vcmp.lt.s32.totalorder %v929, 64
        %vm946 = vcmp.lt.s32.totalorder %v930, 64
        %vm947 = vcmp.lt.s32.totalorder %v931, 64
        %vm948 = vcmp.lt.s32.totalorder %v932, 64
        %vm949 = vcmp.lt.s32.totalorder %v933, 64
        %vm950 = vmand %vm934, %vm942
        %vm951 = vmand %vm935, %vm943
        %vm952 = vmand %vm936, %vm944
        %vm953 = vmand %vm937, %vm945
        %vm954 = vmand %vm938, %vm946
        %vm955 = vmand %vm939, %vm947
        %vm956 = vmand %vm940, %vm948
        %vm957 = vmand %vm941, %vm949
        %v958 = vsel %vm950, 1, 0
        %v959 = vsel %vm951, 1, 0
        %v960 = vsel %vm952, 1, 0
        %v961 = vsel %vm953, 1, 0
        %v962 = vsel %vm954, 1, 0
        %v963 = vsel %vm955, 1, 0
        %v964 = vsel %vm956, 1, 0
        %v965 = vsel %vm957, 1, 0
        %v966 = vcvt.s32.f32 %v958
        %v967 = vcvt.s32.f32 %v959
        %v968 = vcvt.s32.f32 %v960
        %v969 = vcvt.s32.f32 %v961
        %v970 = vcvt.s32.f32 %v962
        %v971 = vcvt.s32.f32 %v963
        %v972 = vcvt.s32.f32 %v964
        %v973 = vcvt.s32.f32 %v965
        %v974 = vadd.s32 %v774, 1
        %v975 = vadd.s32 %v775, 1
        %v976 = vadd.s32 %v776, 1
        %v977 = vadd.s32 %v777, 1
        %v978 = vadd.s32 %v778, 1
        %v979 = vadd.s32 %v779, 1
        %v980 = vadd.s32 %v780, 1
        %v981 = vadd.s32 %v781, 1
        %vm982 = vcmp.ge.s32.totalorder %v974, 0
        %vm983 = vcmp.ge.s32.totalorder %v975, 0
        %vm984 = vcmp.ge.s32.totalorder %v976, 0
        %vm985 = vcmp.ge.s32.totalorder %v977, 0
        %vm986 = vcmp.ge.s32.totalorder %v978, 0
        %vm987 = vcmp.ge.s32.totalorder %v979, 0
        %vm988 = vcmp.ge.s32.totalorder %v980, 0
        %vm989 = vcmp.ge.s32.totalorder %v981, 0
        %vm990 = vcmp.lt.s32.totalorder %v974, 64
        %vm991 = vcmp.lt.s32.totalorder %v975, 64
        %vm992 = vcmp.lt.s32.totalorder %v976, 64
        %vm993 = vcmp.lt.s32.totalorder %v977, 64
        %vm994 = vcmp.lt.s32.totalorder %v978, 64
        %vm995 = vcmp.lt.s32.totalorder %v979, 64
        %vm996 = vcmp.lt.s32.totalorder %v980, 64
        %vm997 = vcmp.lt.s32.totalorder %v981, 64
        %vm998 = vmand %vm982, %vm990
        %vm999 = vmand %vm983, %vm991
        %vm1000 = vmand %vm984, %vm992
        %vm1001 = vmand %vm985, %vm993
        %vm1002 = vmand %vm986, %vm994
        %vm1003 = vmand %vm987, %vm995
        %vm1004 = vmand %vm988, %vm996
        %vm1005 = vmand %vm989, %vm997
        %v1006 = vsel %vm998, 1, 0
        %v1007 = vsel %vm999, 1, 0
        %v1008 = vsel %vm1000, 1, 0
        %v1009 = vsel %vm1001, 1, 0
        %v1010 = vsel %vm1002, 1, 0
        %v1011 = vsel %vm1003, 1, 0
        %v1012 = vsel %vm1004, 1, 0
        %v1013 = vsel %vm1005, 1, 0
        %v1014 = vcvt.s32.f32 %v1006
        %v1015 = vcvt.s32.f32 %v1007
        %v1016 = vcvt.s32.f32 %v1008
        %v1017 = vcvt.s32.f32 %v1009
        %v1018 = vcvt.s32.f32 %v1010
        %v1019 = vcvt.s32.f32 %v1011
        %v1020 = vcvt.s32.f32 %v1012
        %v1021 = vcvt.s32.f32 %v1013
        %v1022 = vadd.s32 %v774, 2
        %v1023 = vadd.s32 %v775, 2
        %v1024 = vadd.s32 %v776, 2
        %v1025 = vadd.s32 %v777, 2
        %v1026 = vadd.s32 %v778, 2
        %v1027 = vadd.s32 %v779, 2
        %v1028 = vadd.s32 %v780, 2
        %v1029 = vadd.s32 %v781, 2
        %vm1030 = vcmp.ge.s32.totalorder %v1022, 0
        %vm1031 = vcmp.ge.s32.totalorder %v1023, 0
        %vm1032 = vcmp.ge.s32.totalorder %v1024, 0
        %vm1033 = vcmp.ge.s32.totalorder %v1025, 0
        %vm1034 = vcmp.ge.s32.totalorder %v1026, 0
        %vm1035 = vcmp.ge.s32.totalorder %v1027, 0
        %vm1036 = vcmp.ge.s32.totalorder %v1028, 0
        %vm1037 = vcmp.ge.s32.totalorder %v1029, 0
        %vm1038 = vcmp.lt.s32.totalorder %v1022, 64
        %vm1039 = vcmp.lt.s32.totalorder %v1023, 64
        %vm1040 = vcmp.lt.s32.totalorder %v1024, 64
        %vm1041 = vcmp.lt.s32.totalorder %v1025, 64
        %vm1042 = vcmp.lt.s32.totalorder %v1026, 64
        %vm1043 = vcmp.lt.s32.totalorder %v1027, 64
        %vm1044 = vcmp.lt.s32.totalorder %v1028, 64
        %vm1045 = vcmp.lt.s32.totalorder %v1029, 64
        %vm1046 = vmand %vm1030, %vm1038
        %vm1047 = vmand %vm1031, %vm1039
        %vm1048 = vmand %vm1032, %vm1040
        %vm1049 = vmand %vm1033, %vm1041
        %vm1050 = vmand %vm1034, %vm1042
        %vm1051 = vmand %vm1035, %vm1043
        %vm1052 = vmand %vm1036, %vm1044
        %vm1053 = vmand %vm1037, %vm1045
        %v1054 = vsel %vm1046, 1, 0
        %v1055 = vsel %vm1047, 1, 0
        %v1056 = vsel %vm1048, 1, 0
        %v1057 = vsel %vm1049, 1, 0
        %v1058 = vsel %vm1050, 1, 0
        %v1059 = vsel %vm1051, 1, 0
        %v1060 = vsel %vm1052, 1, 0
        %v1061 = vsel %vm1053, 1, 0
        %v1062 = vcvt.s32.f32 %v1054
        %v1063 = vcvt.s32.f32 %v1055
        %v1064 = vcvt.s32.f32 %v1056
        %v1065 = vcvt.s32.f32 %v1057
        %v1066 = vcvt.s32.f32 %v1058
        %v1067 = vcvt.s32.f32 %v1059
        %v1068 = vcvt.s32.f32 %v1060
        %v1069 = vcvt.s32.f32 %v1061
        %v1070 = vadd.s32 %v774, 3
        %v1071 = vadd.s32 %v775, 3
        %v1072 = vadd.s32 %v776, 3
        %v1073 = vadd.s32 %v777, 3
        %v1074 = vadd.s32 %v778, 3
        %v1075 = vadd.s32 %v779, 3
        %v1076 = vadd.s32 %v780, 3
        %v1077 = vadd.s32 %v781, 3
        %vm1078 = vcmp.ge.s32.totalorder %v1070, 0
        %vm1079 = vcmp.ge.s32.totalorder %v1071, 0
        %vm1080 = vcmp.ge.s32.totalorder %v1072, 0
        %vm1081 = vcmp.ge.s32.totalorder %v1073, 0
        %vm1082 = vcmp.ge.s32.totalorder %v1074, 0
        %vm1083 = vcmp.ge.s32.totalorder %v1075, 0
        %vm1084 = vcmp.ge.s32.totalorder %v1076, 0
        %vm1085 = vcmp.ge.s32.totalorder %v1077, 0
        %vm1086 = vcmp.lt.s32.totalorder %v1070, 64
        %vm1087 = vcmp.lt.s32.totalorder %v1071, 64
        %vm1088 = vcmp.lt.s32.totalorder %v1072, 64
        %vm1089 = vcmp.lt.s32.totalorder %v1073, 64
        %vm1090 = vcmp.lt.s32.totalorder %v1074, 64
        %vm1091 = vcmp.lt.s32.totalorder %v1075, 64
        %vm1092 = vcmp.lt.s32.totalorder %v1076, 64
        %vm1093 = vcmp.lt.s32.totalorder %v1077, 64
        %vm1094 = vmand %vm1078, %vm1086
        %vm1095 = vmand %vm1079, %vm1087
        %vm1096 = vmand %vm1080, %vm1088
        %vm1097 = vmand %vm1081, %vm1089
        %vm1098 = vmand %vm1082, %vm1090
        %vm1099 = vmand %vm1083, %vm1091
        %vm1100 = vmand %vm1084, %vm1092
        %vm1101 = vmand %vm1085, %vm1093
        %v1102 = vsel %vm1094, 1, 0
        %v1103 = vsel %vm1095, 1, 0
        %v1104 = vsel %vm1096, 1, 0
        %v1105 = vsel %vm1097, 1, 0
        %v1106 = vsel %vm1098, 1, 0
        %v1107 = vsel %vm1099, 1, 0
        %v1108 = vsel %vm1100, 1, 0
        %v1109 = vsel %vm1101, 1, 0
        %v1110 = vcvt.s32.f32 %v1102
        %v1111 = vcvt.s32.f32 %v1103
        %v1112 = vcvt.s32.f32 %v1104
        %v1113 = vcvt.s32.f32 %v1105
        %v1114 = vcvt.s32.f32 %v1106
        %v1115 = vcvt.s32.f32 %v1107
        %v1116 = vcvt.s32.f32 %v1108
        %v1117 = vcvt.s32.f32 %v1109
        %v1118 = vadd.s32 %v774, 9
        %v1119 = vadd.s32 %v775, 9
        %v1120 = vadd.s32 %v776, 9
        %v1121 = vadd.s32 %v777, 9
        %v1122 = vadd.s32 %v778, 9
        %v1123 = vadd.s32 %v779, 9
        %v1124 = vadd.s32 %v780, 9
        %v1125 = vadd.s32 %v781, 9
        %vm1126 = vcmp.ge.s32.totalorder %v1118, 0
        %vm1127 = vcmp.ge.s32.totalorder %v1119, 0
        %vm1128 = vcmp.ge.s32.totalorder %v1120, 0
        %vm1129 = vcmp.ge.s32.totalorder %v1121, 0
        %vm1130 = vcmp.ge.s32.totalorder %v1122, 0
        %vm1131 = vcmp.ge.s32.totalorder %v1123, 0
        %vm1132 = vcmp.ge.s32.totalorder %v1124, 0
        %vm1133 = vcmp.ge.s32.totalorder %v1125, 0
        %vm1134 = vcmp.lt.s32.totalorder %v1118, 64
        %vm1135 = vcmp.lt.s32.totalorder %v1119, 64
        %vm1136 = vcmp.lt.s32.totalorder %v1120, 64
        %vm1137 = vcmp.lt.s32.totalorder %v1121, 64
        %vm1138 = vcmp.lt.s32.totalorder %v1122, 64
        %vm1139 = vcmp.lt.s32.totalorder %v1123, 64
        %vm1140 = vcmp.lt.s32.totalorder %v1124, 64
        %vm1141 = vcmp.lt.s32.totalorder %v1125, 64
        %vm1142 = vmand %vm1126, %vm1134
        %vm1143 = vmand %vm1127, %vm1135
        %vm1144 = vmand %vm1128, %vm1136
        %vm1145 = vmand %vm1129, %vm1137
        %vm1146 = vmand %vm1130, %vm1138
        %vm1147 = vmand %vm1131, %vm1139
        %vm1148 = vmand %vm1132, %vm1140
        %vm1149 = vmand %vm1133, %vm1141
        %v1150 = vsel %vm1142, 1, 0
        %v1151 = vsel %vm1143, 1, 0
        %v1152 = vsel %vm1144, 1, 0
        %v1153 = vsel %vm1145, 1, 0
        %v1154 = vsel %vm1146, 1, 0
        %v1155 = vsel %vm1147, 1, 0
        %v1156 = vsel %vm1148, 1, 0
        %v1157 = vsel %vm1149, 1, 0
        %v1158 = vcvt.s32.f32 %v1150
        %v1159 = vcvt.s32.f32 %v1151
        %v1160 = vcvt.s32.f32 %v1152
        %v1161 = vcvt.s32.f32 %v1153
        %v1162 = vcvt.s32.f32 %v1154
        %v1163 = vcvt.s32.f32 %v1155
        %v1164 = vcvt.s32.f32 %v1156
        %v1165 = vcvt.s32.f32 %v1157
        %v1166 = vld [vmem:[%s769] sm:$0xff]
        %v1167 = vld [vmem:[%s769 + $0x8] sm:$0xff]
        %v1168 = vld [vmem:[%s769 + $0x10] sm:$0xff]
        %v1169 = vld [vmem:[%s769 + $0x18] sm:$0xff]
        %v1170 = vld [vmem:[%s769 + $0x20] sm:$0xff]
        %v1171 = vld [vmem:[%s769 + $0x28] sm:$0xff]
        %v1172 = vld [vmem:[%s769 + $0x30] sm:$0xff]
        %v1173 = vld [vmem:[%s769 + $0x38] sm:$0xff]
        %v1174 = vld [vmem:[%s769 + $0x40] sm:$0xff]
        %v1175 = vld [vmem:[%s769 + $0x48] sm:$0xff]
        %v1176 = vld [vmem:[%s769 + $0x50] sm:$0xff]
        %v1177 = vld [vmem:[%s769 + $0x58] sm:$0xff]
        %v1178 = vld [vmem:[%s769 + $0x60] sm:$0xff]
        %v1179 = vld [vmem:[%s769 + $0x68] sm:$0xff]
        %v1180 = vld [vmem:[%s769 + $0x70] sm:$0xff]
        %v1181 = vld [vmem:[%s769 + $0x78] sm:$0xff]
        %v1182 = vld [vmem:[%s769 + $0x80] sm:$0xff]
        %v1183 = vld [vmem:[%s769 + $0x88] sm:$0xff]
        %v1184 = vld [vmem:[%s769 + $0x90] sm:$0xff]
        %v1185 = vld [vmem:[%s769 + $0x98] sm:$0xff]
        %v1186 = vld [vmem:[%s769 + $0xa0] sm:$0xff]
        %v1187 = vld [vmem:[%s769 + $0xa8] sm:$0xff]
        %v1188 = vld [vmem:[%s769 + $0xb0] sm:$0xff]
        %v1189 = vld [vmem:[%s769 + $0xb8] sm:$0xff]
        %v1190 = vld [vmem:[%s769 + $0xc0] sm:$0xff]
        %v1191 = vld [vmem:[%s769 + $0xc8] sm:$0xff]
        %v1192 = vld [vmem:[%s769 + $0xd0] sm:$0xff]
        %v1193 = vld [vmem:[%s769 + $0xd8] sm:$0xff]
        %v1194 = vld [vmem:[%s769 + $0xe0] sm:$0xff]
        %v1195 = vld [vmem:[%s769 + $0xe8] sm:$0xff]
        %v1196 = vld [vmem:[%s769 + $0xf0] sm:$0xff]
        %v1197 = vld [vmem:[%s769 + $0xf8] sm:$0xff]
        %v1198 = vld [vmem:[#allocation2] sm:$0x1]
        %v1199 = vld [vmem:[#allocation2 + $0x1] sm:$0x1]
        %v1200 = vld [vmem:[#allocation2 + $0x2] sm:$0x1]
        %v1201 = vld [vmem:[#allocation2 + $0x3] sm:$0x1]
        %v1202 = vld [vmem:[#allocation2 + $0x4] sm:$0x1]
        %v1203 = vld [vmem:[#allocation2 + $0x5] sm:$0x1]
        %v1204 = vld [vmem:[#allocation2 + $0x6] sm:$0x1]
        %v1205 = vld [vmem:[%s3] sm:$0x1]
        %v1206 = vrot.slane %v1166, 5
        %v1207 = vrot.slane %v1167, 5
        %v1208 = vrot.slane %v1168, 5
        %v1209 = vrot.slane %v1169, 5
        %v1210 = vrot.slane %v1170, 5
        %v1211 = vrot.slane %v1171, 5
        %v1212 = vrot.slane %v1172, 5
        %v1213 = vrot.slane %v1173, 5
        %v1214 = vrot.slane %v1174, 5
        %v1215 = vrot.slane %v1175, 5
        %v1216 = vrot.slane %v1176, 5
        %v1217 = vrot.slane %v1177, 5
        %v1218 = vrot.slane %v1178, 5
        %v1219 = vrot.slane %v1179, 5
        %v1220 = vrot.slane %v1180, 5
        %v1221 = vrot.slane %v1181, 5
        %v1222 = vrot.slane %v1182, 5
        %v1223 = vrot.slane %v1183, 5
        %v1224 = vrot.slane %v1184, 5
        %v1225 = vrot.slane %v1185, 5
        %v1226 = vrot.slane %v1186, 5
        %v1227 = vrot.slane %v1187, 5
        %v1228 = vrot.slane %v1188, 5
        %v1229 = vrot.slane %v1189, 5
        %v1230 = vrot.slane %v1190, 5
        %v1231 = vrot.slane %v1191, 5
        %v1232 = vrot.slane %v1192, 5
        %v1233 = vrot.slane %v1193, 5
        %v1234 = vrot.slane %v1194, 5
        %v1235 = vrot.slane %v1195, 5
        %v1236 = vrot.slane %v1196, 5
        %v1237 = vrot.slane %v1197, 5
        %vm1238 = vcmp.lt.s32.totalorder %v774, 3
        %v1239 = vsel %vm1238, %v1236, %v1237
        %v1240 = vsel %vm1238, %v1235, %v1236
        %v1241 = vsel %vm1238, %v1234, %v1235
        %v1242 = vsel %vm1238, %v1233, %v1234
        %v1243 = vsel %vm1238, %v1232, %v1233
        %v1244 = vsel %vm1238, %v1231, %v1232
        %v1245 = vsel %vm1238, %v1230, %v1231
        %v1246 = vsel %vm1238, %v1229, %v1230
        %v1247 = vsel %vm1238, %v1228, %v1229
        %v1248 = vsel %vm1238, %v1227, %v1228
        %v1249 = vsel %vm1238, %v1226, %v1227
        %v1250 = vsel %vm1238, %v1225, %v1226
        %v1251 = vsel %vm1238, %v1224, %v1225
        %v1252 = vsel %vm1238, %v1223, %v1224
        %v1253 = vsel %vm1238, %v1222, %v1223
        %v1254 = vsel %vm1238, %v1221, %v1222
        %v1255 = vsel %vm1238, %v1220, %v1221
        %v1256 = vsel %vm1238, %v1219, %v1220
        %v1257 = vsel %vm1238, %v1218, %v1219
        %v1258 = vsel %vm1238, %v1217, %v1218
        %v1259 = vsel %vm1238, %v1216, %v1217
        %v1260 = vsel %vm1238, %v1215, %v1216
        %v1261 = vsel %vm1238, %v1214, %v1215
        %v1262 = vsel %vm1238, %v1213, %v1214
        %v1263 = vsel %vm1238, %v1212, %v1213
        %v1264 = vsel %vm1238, %v1211, %v1212
        %v1265 = vsel %vm1238, %v1210, %v1211
        %v1266 = vsel %vm1238, %v1209, %v1210
        %v1267 = vsel %vm1238, %v1208, %v1209
        %v1268 = vsel %vm1238, %v1207, %v1208
        %v1269 = vsel %vm1238, %v1206, %v1207
        %v1270 = vsel %vm1238, %v1237, %v1206
        %v1271 = vmul.f32 %v1270, %v870
        %v1272 = vmul.f32 %v1269, %v871
        %v1273 = vmul.f32 %v1268, %v872
        %v1274 = vmul.f32 %v1267, %v873
        %v1275 = vmul.f32 %v1266, %v874
        %v1276 = vmul.f32 %v1265, %v875
        %v1277 = vmul.f32 %v1264, %v876
        %v1278 = vmul.f32 %v1263, %v877
        %v1279 = vmul.f32 %v1262, %v870
        %v1280 = vmul.f32 %v1261, %v871
        %v1281 = vmul.f32 %v1260, %v872
        %v1282 = vmul.f32 %v1259, %v873
        %v1283 = vmul.f32 %v1258, %v874
        %v1284 = vmul.f32 %v1257, %v875
        %v1285 = vmul.f32 %v1256, %v876
        %v1286 = vmul.f32 %v1255, %v877
        %v1287 = vmul.f32 %v1254, %v870
        %v1288 = vmul.f32 %v1253, %v871
        %v1289 = vmul.f32 %v1252, %v872
        %v1290 = vmul.f32 %v1251, %v873
        %v1291 = vmul.f32 %v1250, %v874
        %v1292 = vmul.f32 %v1249, %v875
        %v1293 = vmul.f32 %v1248, %v876
        %v1294 = vmul.f32 %v1247, %v877
        %v1295 = vmul.f32 %v1246, %v870
        %v1296 = vmul.f32 %v1245, %v871
        %v1297 = vmul.f32 %v1244, %v872
        %v1298 = vmul.f32 %v1243, %v873
        %v1299 = vmul.f32 %v1242, %v874
        %v1300 = vmul.f32 %v1241, %v875
        %v1301 = vmul.f32 %v1240, %v876
        %v1302 = vmul.f32 %v1239, %v877
        %1304 = vset.pattern.permute.xlu0 0
        %1305 = vperm.xlu0 %1304, %v1271
        %v1306 = vpop.permute.xlu0 %1305
        %1309 = vset.pattern.permute.xlu0 0
        %1310 = vperm.xlu0 %1309, %v1272
        %v1311 = vpop.permute.xlu0 %1310
        %1314 = vset.pattern.permute.xlu0 0
        %1315 = vperm.xlu0 %1314, %v1273
        %v1316 = vpop.permute.xlu0 %1315
        %1319 = vset.pattern.permute.xlu0 0
        %1320 = vperm.xlu0 %1319, %v1274
        %v1321 = vpop.permute.xlu0 %1320
        %1324 = vset.pattern.permute.xlu0 0
        %1325 = vperm.xlu0 %1324, %v1275
        %v1326 = vpop.permute.xlu0 %1325
        %1329 = vset.pattern.permute.xlu0 0
        %1330 = vperm.xlu0 %1329, %v1276
        %v1331 = vpop.permute.xlu0 %1330
        %1334 = vset.pattern.permute.xlu0 0
        %1335 = vperm.xlu0 %1334, %v1277
        %v1336 = vpop.permute.xlu0 %1335
        %1339 = vset.pattern.permute.xlu0 0
        %1340 = vperm.xlu0 %1339, %v1278
        %v1341 = vpop.permute.xlu0 %1340
        %1344 = vset.pattern.permute.xlu0 0
        %1345 = vperm.xlu0 %1344, %v1279
        %v1346 = vpop.permute.xlu0 %1345
        %1349 = vset.pattern.permute.xlu0 0
        %1350 = vperm.xlu0 %1349, %v1280
        %v1351 = vpop.permute.xlu0 %1350
        %1354 = vset.pattern.permute.xlu0 0
        %1355 = vperm.xlu0 %1354, %v1281
        %v1356 = vpop.permute.xlu0 %1355
        %1359 = vset.pattern.permute.xlu0 0
        %1360 = vperm.xlu0 %1359, %v1282
        %v1361 = vpop.permute.xlu0 %1360
        %1364 = vset.pattern.permute.xlu0 0
        %1365 = vperm.xlu0 %1364, %v1283
        %v1366 = vpop.permute.xlu0 %1365
        %1369 = vset.pattern.permute.xlu0 0
        %1370 = vperm.xlu0 %1369, %v1284
        %v1371 = vpop.permute.xlu0 %1370
        %1374 = vset.pattern.permute.xlu0 0
        %1375 = vperm.xlu0 %1374, %v1285
        %v1376 = vpop.permute.xlu0 %1375
        %1379 = vset.pattern.permute.xlu0 0
        %1380 = vperm.xlu0 %1379, %v1286
        %v1381 = vpop.permute.xlu0 %1380
        %1384 = vset.pattern.permute.xlu0 0
        %1385 = vperm.xlu0 %1384, %v1287
        %v1386 = vpop.permute.xlu0 %1385
        %1389 = vset.pattern.permute.xlu0 0
        %1390 = vperm.xlu0 %1389, %v1288
        %v1391 = vpop.permute.xlu0 %1390
        %1394 = vset.pattern.permute.xlu0 0
        %1395 = vperm.xlu0 %1394, %v1289
        %v1396 = vpop.permute.xlu0 %1395
        %1399 = vset.pattern.permute.xlu0 0
        %1400 = vperm.xlu0 %1399, %v1290
        %v1401 = vpop.permute.xlu0 %1400
        %1404 = vset.pattern.permute.xlu0 0
        %1405 = vperm.xlu0 %1404, %v1291
        %v1406 = vpop.permute.xlu0 %1405
        %1409 = vset.pattern.permute.xlu0 0
        %1410 = vperm.xlu0 %1409, %v1292
        %v1411 = vpop.permute.xlu0 %1410
        %1414 = vset.pattern.permute.xlu0 0
        %1415 = vperm.xlu0 %1414, %v1293
        %v1416 = vpop.permute.xlu0 %1415
        %1419 = vset.pattern.permute.xlu0 0
        %1420 = vperm.xlu0 %1419, %v1294
        %v1421 = vpop.permute.xlu0 %1420
        %1424 = vset.pattern.permute.xlu0 0
        %1425 = vperm.xlu0 %1424, %v1295
        %v1426 = vpop.permute.xlu0 %1425
        %1429 = vset.pattern.permute.xlu0 0
        %1430 = vperm.xlu0 %1429, %v1296
        %v1431 = vpop.permute.xlu0 %1430
        %1434 = vset.pattern.permute.xlu0 0
        %1435 = vperm.xlu0 %1434, %v1297
        %v1436 = vpop.permute.xlu0 %1435
        %1439 = vset.pattern.permute.xlu0 0
        %1440 = vperm.xlu0 %1439, %v1298
        %v1441 = vpop.permute.xlu0 %1440
        %1444 = vset.pattern.permute.xlu0 0
        %1445 = vperm.xlu0 %1444, %v1299
        %v1446 = vpop.permute.xlu0 %1445
        %1449 = vset.pattern.permute.xlu0 0
        %1450 = vperm.xlu0 %1449, %v1300
        %v1451 = vpop.permute.xlu0 %1450
        %1454 = vset.pattern.permute.xlu0 0
        %1455 = vperm.xlu0 %1454, %v1301
        %v1456 = vpop.permute.xlu0 %1455
        %1459 = vset.pattern.permute.xlu0 0
        %1460 = vperm.xlu0 %1459, %v1302
        %v1461 = vpop.permute.xlu0 %1460
        %v1464 = vlaneseq
        %v1465 = vshrl.u32 %v1464, 7
        %v1466 = vsub.s32 0, %v1465
        %v1467 = vrot.slane %v1198, %v1466
        %v1469 = vmul.f32 %v1306, %v1467
        %v1470 = vmul.f32 %v1311, %v1467
        %v1471 = vmul.f32 %v1316, %v1467
        %v1472 = vmul.f32 %v1321, %v1467
        %v1473 = vmul.f32 %v1326, %v1467
        %v1474 = vmul.f32 %v1331, %v1467
        %v1475 = vmul.f32 %v1336, %v1467
        %v1476 = vmul.f32 %v1341, %v1467
        %v1477 = vmul.f32 %v1346, %v1467
        %v1478 = vmul.f32 %v1351, %v1467
        %v1479 = vmul.f32 %v1356, %v1467
        %v1480 = vmul.f32 %v1361, %v1467
        %v1481 = vmul.f32 %v1366, %v1467
        %v1482 = vmul.f32 %v1371, %v1467
        %v1483 = vmul.f32 %v1376, %v1467
        %v1484 = vmul.f32 %v1381, %v1467
        %v1485 = vmul.f32 %v1386, %v1467
        %v1486 = vmul.f32 %v1391, %v1467
        %v1487 = vmul.f32 %v1396, %v1467
        %v1488 = vmul.f32 %v1401, %v1467
        %v1489 = vmul.f32 %v1406, %v1467
        %v1490 = vmul.f32 %v1411, %v1467
        %v1491 = vmul.f32 %v1416, %v1467
        %v1492 = vmul.f32 %v1421, %v1467
        %v1493 = vmul.f32 %v1426, %v1467
        %v1494 = vmul.f32 %v1431, %v1467
        %v1495 = vmul.f32 %v1436, %v1467
        %v1496 = vmul.f32 %v1441, %v1467
        %v1497 = vmul.f32 %v1446, %v1467
        %v1498 = vmul.f32 %v1451, %v1467
        %v1499 = vmul.f32 %v1456, %v1467
        %v1500 = vmul.f32 %v1461, %v1467
        %v1502 = vlaneseq
        %v1503 = vshrl.u32 %v1502, 7
        %v1504 = vsub.s32 0, %v1503
        %v1505 = vrot.slane %v1205, %v1504
        %v1507 = vadd.f32 %v1505, %v1469
        %v1508 = vadd.f32 %v1505, %v1470
        %v1509 = vadd.f32 %v1505, %v1471
        %v1510 = vadd.f32 %v1505, %v1472
        %v1511 = vadd.f32 %v1505, %v1473
        %v1512 = vadd.f32 %v1505, %v1474
        %v1513 = vadd.f32 %v1505, %v1475
        %v1514 = vadd.f32 %v1505, %v1476
        %v1515 = vadd.f32 %v1505, %v1477
        %v1516 = vadd.f32 %v1505, %v1478
        %v1517 = vadd.f32 %v1505, %v1479
        %v1518 = vadd.f32 %v1505, %v1480
        %v1519 = vadd.f32 %v1505, %v1481
        %v1520 = vadd.f32 %v1505, %v1482
        %v1521 = vadd.f32 %v1505, %v1483
        %v1522 = vadd.f32 %v1505, %v1484
        %v1523 = vadd.f32 %v1505, %v1485
        %v1524 = vadd.f32 %v1505, %v1486
        %v1525 = vadd.f32 %v1505, %v1487
        %v1526 = vadd.f32 %v1505, %v1488
        %v1527 = vadd.f32 %v1505, %v1489
        %v1528 = vadd.f32 %v1505, %v1490
        %v1529 = vadd.f32 %v1505, %v1491
        %v1530 = vadd.f32 %v1505, %v1492
        %v1531 = vadd.f32 %v1505, %v1493
        %v1532 = vadd.f32 %v1505, %v1494
        %v1533 = vadd.f32 %v1505, %v1495
        %v1534 = vadd.f32 %v1505, %v1496
        %v1535 = vadd.f32 %v1505, %v1497
        %v1536 = vadd.f32 %v1505, %v1498
        %v1537 = vadd.f32 %v1505, %v1499
        %v1538 = vadd.f32 %v1505, %v1500
        %v1539 = vrot.slane %v1166, 6
        %v1540 = vrot.slane %v1167, 6
        %v1541 = vrot.slane %v1168, 6
        %v1542 = vrot.slane %v1169, 6
        %v1543 = vrot.slane %v1170, 6
        %v1544 = vrot.slane %v1171, 6
        %v1545 = vrot.slane %v1172, 6
        %v1546 = vrot.slane %v1173, 6
        %v1547 = vrot.slane %v1174, 6
        %v1548 = vrot.slane %v1175, 6
        %v1549 = vrot.slane %v1176, 6
        %v1550 = vrot.slane %v1177, 6
        %v1551 = vrot.slane %v1178, 6
        %v1552 = vrot.slane %v1179, 6
        %v1553 = vrot.slane %v1180, 6
        %v1554 = vrot.slane %v1181, 6
        %v1555 = vrot.slane %v1182, 6
        %v1556 = vrot.slane %v1183, 6
        %v1557 = vrot.slane %v1184, 6
        %v1558 = vrot.slane %v1185, 6
        %v1559 = vrot.slane %v1186, 6
        %v1560 = vrot.slane %v1187, 6
        %v1561 = vrot.slane %v1188, 6
        %v1562 = vrot.slane %v1189, 6
        %v1563 = vrot.slane %v1190, 6
        %v1564 = vrot.slane %v1191, 6
        %v1565 = vrot.slane %v1192, 6
        %v1566 = vrot.slane %v1193, 6
        %v1567 = vrot.slane %v1194, 6
        %v1568 = vrot.slane %v1195, 6
        %v1569 = vrot.slane %v1196, 6
        %v1570 = vrot.slane %v1197, 6
        %vm1571 = vcmp.lt.s32.totalorder %v774, 2
        %v1572 = vsel %vm1571, %v1569, %v1570
        %v1573 = vsel %vm1571, %v1568, %v1569
        %v1574 = vsel %vm1571, %v1567, %v1568
        %v1575 = vsel %vm1571, %v1566, %v1567
        %v1576 = vsel %vm1571, %v1565, %v1566
        %v1577 = vsel %vm1571, %v1564, %v1565
        %v1578 = vsel %vm1571, %v1563, %v1564
        %v1579 = vsel %vm1571, %v1562, %v1563
        %v1580 = vsel %vm1571, %v1561, %v1562
        %v1581 = vsel %vm1571, %v1560, %v1561
        %v1582 = vsel %vm1571, %v1559, %v1560
        %v1583 = vsel %vm1571, %v1558, %v1559
        %v1584 = vsel %vm1571, %v1557, %v1558
        %v1585 = vsel %vm1571, %v1556, %v1557
        %v1586 = vsel %vm1571, %v1555, %v1556
        %v1587 = vsel %vm1571, %v1554, %v1555
        %v1588 = vsel %vm1571, %v1553, %v1554
        %v1589 = vsel %vm1571, %v1552, %v1553
        %v1590 = vsel %vm1571, %v1551, %v1552
        %v1591 = vsel %vm1571, %v1550, %v1551
        %v1592 = vsel %vm1571, %v1549, %v1550
        %v1593 = vsel %vm1571, %v1548, %v1549
        %v1594 = vsel %vm1571, %v1547, %v1548
        %v1595 = vsel %vm1571, %v1546, %v1547
        %v1596 = vsel %vm1571, %v1545, %v1546
        %v1597 = vsel %vm1571, %v1544, %v1545
        %v1598 = vsel %vm1571, %v1543, %v1544
        %v1599 = vsel %vm1571, %v1542, %v1543
        %v1600 = vsel %vm1571, %v1541, %v1542
        %v1601 = vsel %vm1571, %v1540, %v1541
        %v1602 = vsel %vm1571, %v1539, %v1540
        %v1603 = vsel %vm1571, %v1570, %v1539
        %v1604 = vmul.f32 %v1603, %v918
        %v1605 = vmul.f32 %v1602, %v919
        %v1606 = vmul.f32 %v1601, %v920
        %v1607 = vmul.f32 %v1600, %v921
        %v1608 = vmul.f32 %v1599, %v922
        %v1609 = vmul.f32 %v1598, %v923
        %v1610 = vmul.f32 %v1597, %v924
        %v1611 = vmul.f32 %v1596, %v925
        %v1612 = vmul.f32 %v1595, %v918
        %v1613 = vmul.f32 %v1594, %v919
        %v1614 = vmul.f32 %v1593, %v920
        %v1615 = vmul.f32 %v1592, %v921
        %v1616 = vmul.f32 %v1591, %v922
        %v1617 = vmul.f32 %v1590, %v923
        %v1618 = vmul.f32 %v1589, %v924
        %v1619 = vmul.f32 %v1588, %v925
        %v1620 = vmul.f32 %v1587, %v918
        %v1621 = vmul.f32 %v1586, %v919
        %v1622 = vmul.f32 %v1585, %v920
        %v1623 = vmul.f32 %v1584, %v921
        %v1624 = vmul.f32 %v1583, %v922
        %v1625 = vmul.f32 %v1582, %v923
        %v1626 = vmul.f32 %v1581, %v924
        %v1627 = vmul.f32 %v1580, %v925
        %v1628 = vmul.f32 %v1579, %v918
        %v1629 = vmul.f32 %v1578, %v919
        %v1630 = vmul.f32 %v1577, %v920
        %v1631 = vmul.f32 %v1576, %v921
        %v1632 = vmul.f32 %v1575, %v922
        %v1633 = vmul.f32 %v1574, %v923
        %v1634 = vmul.f32 %v1573, %v924
        %v1635 = vmul.f32 %v1572, %v925
        %1637 = vset.pattern.permute.xlu0 0
        %1638 = vperm.xlu0 %1637, %v1604
        %v1639 = vpop.permute.xlu0 %1638
        %1642 = vset.pattern.permute.xlu0 0
        %1643 = vperm.xlu0 %1642, %v1605
        %v1644 = vpop.permute.xlu0 %1643
        %1647 = vset.pattern.permute.xlu0 0
        %1648 = vperm.xlu0 %1647, %v1606
        %v1649 = vpop.permute.xlu0 %1648
        %1652 = vset.pattern.permute.xlu0 0
        %1653 = vperm.xlu0 %1652, %v1607
        %v1654 = vpop.permute.xlu0 %1653
        %1657 = vset.pattern.permute.xlu0 0
        %1658 = vperm.xlu0 %1657, %v1608
        %v1659 = vpop.permute.xlu0 %1658
        %1662 = vset.pattern.permute.xlu0 0
        %1663 = vperm.xlu0 %1662, %v1609
        %v1664 = vpop.permute.xlu0 %1663
        %1667 = vset.pattern.permute.xlu0 0
        %1668 = vperm.xlu0 %1667, %v1610
        %v1669 = vpop.permute.xlu0 %1668
        %1672 = vset.pattern.permute.xlu0 0
        %1673 = vperm.xlu0 %1672, %v1611
        %v1674 = vpop.permute.xlu0 %1673
        %1677 = vset.pattern.permute.xlu0 0
        %1678 = vperm.xlu0 %1677, %v1612
        %v1679 = vpop.permute.xlu0 %1678
        %1682 = vset.pattern.permute.xlu0 0
        %1683 = vperm.xlu0 %1682, %v1613
        %v1684 = vpop.permute.xlu0 %1683
        %1687 = vset.pattern.permute.xlu0 0
        %1688 = vperm.xlu0 %1687, %v1614
        %v1689 = vpop.permute.xlu0 %1688
        %1692 = vset.pattern.permute.xlu0 0
        %1693 = vperm.xlu0 %1692, %v1615
        %v1694 = vpop.permute.xlu0 %1693
        %1697 = vset.pattern.permute.xlu0 0
        %1698 = vperm.xlu0 %1697, %v1616
        %v1699 = vpop.permute.xlu0 %1698
        %1702 = vset.pattern.permute.xlu0 0
        %1703 = vperm.xlu0 %1702, %v1617
        %v1704 = vpop.permute.xlu0 %1703
        %1707 = vset.pattern.permute.xlu0 0
        %1708 = vperm.xlu0 %1707, %v1618
        %v1709 = vpop.permute.xlu0 %1708
        %1712 = vset.pattern.permute.xlu0 0
        %1713 = vperm.xlu0 %1712, %v1619
        %v1714 = vpop.permute.xlu0 %1713
        %1717 = vset.pattern.permute.xlu0 0
        %1718 = vperm.xlu0 %1717, %v1620
        %v1719 = vpop.permute.xlu0 %1718
        %1722 = vset.pattern.permute.xlu0 0
        %1723 = vperm.xlu0 %1722, %v1621
        %v1724 = vpop.permute.xlu0 %1723
        %1727 = vset.pattern.permute.xlu0 0
        %1728 = vperm.xlu0 %1727, %v1622
        %v1729 = vpop.permute.xlu0 %1728
        %1732 = vset.pattern.permute.xlu0 0
        %1733 = vperm.xlu0 %1732, %v1623
        %v1734 = vpop.permute.xlu0 %1733
        %1737 = vset.pattern.permute.xlu0 0
        %1738 = vperm.xlu0 %1737, %v1624
        %v1739 = vpop.permute.xlu0 %1738
        %1742 = vset.pattern.permute.xlu0 0
        %1743 = vperm.xlu0 %1742, %v1625
        %v1744 = vpop.permute.xlu0 %1743
        %1747 = vset.pattern.permute.xlu0 0
        %1748 = vperm.xlu0 %1747, %v1626
        %v1749 = vpop.permute.xlu0 %1748
        %1752 = vset.pattern.permute.xlu0 0
        %1753 = vperm.xlu0 %1752, %v1627
        %v1754 = vpop.permute.xlu0 %1753
        %1757 = vset.pattern.permute.xlu0 0
        %1758 = vperm.xlu0 %1757, %v1628
        %v1759 = vpop.permute.xlu0 %1758
        %1762 = vset.pattern.permute.xlu0 0
        %1763 = vperm.xlu0 %1762, %v1629
        %v1764 = vpop.permute.xlu0 %1763
        %1767 = vset.pattern.permute.xlu0 0
        %1768 = vperm.xlu0 %1767, %v1630
        %v1769 = vpop.permute.xlu0 %1768
        %1772 = vset.pattern.permute.xlu0 0
        %1773 = vperm.xlu0 %1772, %v1631
        %v1774 = vpop.permute.xlu0 %1773
        %1777 = vset.pattern.permute.xlu0 0
        %1778 = vperm.xlu0 %1777, %v1632
        %v1779 = vpop.permute.xlu0 %1778
        %1782 = vset.pattern.permute.xlu0 0
        %1783 = vperm.xlu0 %1782, %v1633
        %v1784 = vpop.permute.xlu0 %1783
        %1787 = vset.pattern.permute.xlu0 0
        %1788 = vperm.xlu0 %1787, %v1634
        %v1789 = vpop.permute.xlu0 %1788
        %1792 = vset.pattern.permute.xlu0 0
        %1793 = vperm.xlu0 %1792, %v1635
        %v1794 = vpop.permute.xlu0 %1793
        %v1797 = vlaneseq
        %v1798 = vshrl.u32 %v1797, 7
        %v1799 = vsub.s32 0, %v1798
        %v1800 = vrot.slane %v1199, %v1799
        %v1802 = vmul.f32 %v1639, %v1800
        %v1803 = vmul.f32 %v1644, %v1800
        %v1804 = vmul.f32 %v1649, %v1800
        %v1805 = vmul.f32 %v1654, %v1800
        %v1806 = vmul.f32 %v1659, %v1800
        %v1807 = vmul.f32 %v1664, %v1800
        %v1808 = vmul.f32 %v1669, %v1800
        %v1809 = vmul.f32 %v1674, %v1800
        %v1810 = vmul.f32 %v1679, %v1800
        %v1811 = vmul.f32 %v1684, %v1800
        %v1812 = vmul.f32 %v1689, %v1800
        %v1813 = vmul.f32 %v1694, %v1800
        %v1814 = vmul.f32 %v1699, %v1800
        %v1815 = vmul.f32 %v1704, %v1800
        %v1816 = vmul.f32 %v1709, %v1800
        %v1817 = vmul.f32 %v1714, %v1800
        %v1818 = vmul.f32 %v1719, %v1800
        %v1819 = vmul.f32 %v1724, %v1800
        %v1820 = vmul.f32 %v1729, %v1800
        %v1821 = vmul.f32 %v1734, %v1800
        %v1822 = vmul.f32 %v1739, %v1800
        %v1823 = vmul.f32 %v1744, %v1800
        %v1824 = vmul.f32 %v1749, %v1800
        %v1825 = vmul.f32 %v1754, %v1800
        %v1826 = vmul.f32 %v1759, %v1800
        %v1827 = vmul.f32 %v1764, %v1800
        %v1828 = vmul.f32 %v1769, %v1800
        %v1829 = vmul.f32 %v1774, %v1800
        %v1830 = vmul.f32 %v1779, %v1800
        %v1831 = vmul.f32 %v1784, %v1800
        %v1832 = vmul.f32 %v1789, %v1800
        %v1833 = vmul.f32 %v1794, %v1800
        %v1834 = vadd.f32 %v1507, %v1802
        %v1835 = vadd.f32 %v1508, %v1803
        %v1836 = vadd.f32 %v1509, %v1804
        %v1837 = vadd.f32 %v1510, %v1805
        %v1838 = vadd.f32 %v1511, %v1806
        %v1839 = vadd.f32 %v1512, %v1807
        %v1840 = vadd.f32 %v1513, %v1808
        %v1841 = vadd.f32 %v1514, %v1809
        %v1842 = vadd.f32 %v1515, %v1810
        %v1843 = vadd.f32 %v1516, %v1811
        %v1844 = vadd.f32 %v1517, %v1812
        %v1845 = vadd.f32 %v1518, %v1813
        %v1846 = vadd.f32 %v1519, %v1814
        %v1847 = vadd.f32 %v1520, %v1815
        %v1848 = vadd.f32 %v1521, %v1816
        %v1849 = vadd.f32 %v1522, %v1817
        %v1850 = vadd.f32 %v1523, %v1818
        %v1851 = vadd.f32 %v1524, %v1819
        %v1852 = vadd.f32 %v1525, %v1820
        %v1853 = vadd.f32 %v1526, %v1821
        %v1854 = vadd.f32 %v1527, %v1822
        %v1855 = vadd.f32 %v1528, %v1823
        %v1856 = vadd.f32 %v1529, %v1824
        %v1857 = vadd.f32 %v1530, %v1825
        %v1858 = vadd.f32 %v1531, %v1826
        %v1859 = vadd.f32 %v1532, %v1827
        %v1860 = vadd.f32 %v1533, %v1828
        %v1861 = vadd.f32 %v1534, %v1829
        %v1862 = vadd.f32 %v1535, %v1830
        %v1863 = vadd.f32 %v1536, %v1831
        %v1864 = vadd.f32 %v1537, %v1832
        %v1865 = vadd.f32 %v1538, %v1833
        %v1866 = vrot.slane %v1166, 7
        %v1867 = vrot.slane %v1167, 7
        %v1868 = vrot.slane %v1168, 7
        %v1869 = vrot.slane %v1169, 7
        %v1870 = vrot.slane %v1170, 7
        %v1871 = vrot.slane %v1171, 7
        %v1872 = vrot.slane %v1172, 7
        %v1873 = vrot.slane %v1173, 7
        %v1874 = vrot.slane %v1174, 7
        %v1875 = vrot.slane %v1175, 7
        %v1876 = vrot.slane %v1176, 7
        %v1877 = vrot.slane %v1177, 7
        %v1878 = vrot.slane %v1178, 7
        %v1879 = vrot.slane %v1179, 7
        %v1880 = vrot.slane %v1180, 7
        %v1881 = vrot.slane %v1181, 7
        %v1882 = vrot.slane %v1182, 7
        %v1883 = vrot.slane %v1183, 7
        %v1884 = vrot.slane %v1184, 7
        %v1885 = vrot.slane %v1185, 7
        %v1886 = vrot.slane %v1186, 7
        %v1887 = vrot.slane %v1187, 7
        %v1888 = vrot.slane %v1188, 7
        %v1889 = vrot.slane %v1189, 7
        %v1890 = vrot.slane %v1190, 7
        %v1891 = vrot.slane %v1191, 7
        %v1892 = vrot.slane %v1192, 7
        %v1893 = vrot.slane %v1193, 7
        %v1894 = vrot.slane %v1194, 7
        %v1895 = vrot.slane %v1195, 7
        %v1896 = vrot.slane %v1196, 7
        %v1897 = vrot.slane %v1197, 7
        %vm1898 = vcmp.lt.s32.totalorder %v774, 1
        %v1899 = vsel %vm1898, %v1896, %v1897
        %v1900 = vsel %vm1898, %v1895, %v1896
        %v1901 = vsel %vm1898, %v1894, %v1895
        %v1902 = vsel %vm1898, %v1893, %v1894
        %v1903 = vsel %vm1898, %v1892, %v1893
        %v1904 = vsel %vm1898, %v1891, %v1892
        %v1905 = vsel %vm1898, %v1890, %v1891
        %v1906 = vsel %vm1898, %v1889, %v1890
        %v1907 = vsel %vm1898, %v1888, %v1889
        %v1908 = vsel %vm1898, %v1887, %v1888
        %v1909 = vsel %vm1898, %v1886, %v1887
        %v1910 = vsel %vm1898, %v1885, %v1886
        %v1911 = vsel %vm1898, %v1884, %v1885
        %v1912 = vsel %vm1898, %v1883, %v1884
        %v1913 = vsel %vm1898, %v1882, %v1883
        %v1914 = vsel %vm1898, %v1881, %v1882
        %v1915 = vsel %vm1898, %v1880, %v1881
        %v1916 = vsel %vm1898, %v1879, %v1880
        %v1917 = vsel %vm1898, %v1878, %v1879
        %v1918 = vsel %vm1898, %v1877, %v1878
        %v1919 = vsel %vm1898, %v1876, %v1877
        %v1920 = vsel %vm1898, %v1875, %v1876
        %v1921 = vsel %vm1898, %v1874, %v1875
        %v1922 = vsel %vm1898, %v1873, %v1874
        %v1923 = vsel %vm1898, %v1872, %v1873
        %v1924 = vsel %vm1898, %v1871, %v1872
        %v1925 = vsel %vm1898, %v1870, %v1871
        %v1926 = vsel %vm1898, %v1869, %v1870
        %v1927 = vsel %vm1898, %v1868, %v1869
        %v1928 = vsel %vm1898, %v1867, %v1868
        %v1929 = vsel %vm1898, %v1866, %v1867
        %v1930 = vsel %vm1898, %v1897, %v1866
        %v1931 = vmul.f32 %v1930, %v966
        %v1932 = vmul.f32 %v1929, %v967
        %v1933 = vmul.f32 %v1928, %v968
        %v1934 = vmul.f32 %v1927, %v969
        %v1935 = vmul.f32 %v1926, %v970
        %v1936 = vmul.f32 %v1925, %v971
        %v1937 = vmul.f32 %v1924, %v972
        %v1938 = vmul.f32 %v1923, %v973
        %v1939 = vmul.f32 %v1922, %v966
        %v1940 = vmul.f32 %v1921, %v967
        %v1941 = vmul.f32 %v1920, %v968
        %v1942 = vmul.f32 %v1919, %v969
        %v1943 = vmul.f32 %v1918, %v970
        %v1944 = vmul.f32 %v1917, %v971
        %v1945 = vmul.f32 %v1916, %v972
        %v1946 = vmul.f32 %v1915, %v973
        %v1947 = vmul.f32 %v1914, %v966
        %v1948 = vmul.f32 %v1913, %v967
        %v1949 = vmul.f32 %v1912, %v968
        %v1950 = vmul.f32 %v1911, %v969
        %v1951 = vmul.f32 %v1910, %v970
        %v1952 = vmul.f32 %v1909, %v971
        %v1953 = vmul.f32 %v1908, %v972
        %v1954 = vmul.f32 %v1907, %v973
        %v1955 = vmul.f32 %v1906, %v966
        %v1956 = vmul.f32 %v1905, %v967
        %v1957 = vmul.f32 %v1904, %v968
        %v1958 = vmul.f32 %v1903, %v969
        %v1959 = vmul.f32 %v1902, %v970
        %v1960 = vmul.f32 %v1901, %v971
        %v1961 = vmul.f32 %v1900, %v972
        %v1962 = vmul.f32 %v1899, %v973
        %1964 = vset.pattern.permute.xlu0 0
        %1965 = vperm.xlu0 %1964, %v1931
        %v1966 = vpop.permute.xlu0 %1965
        %1969 = vset.pattern.permute.xlu0 0
        %1970 = vperm.xlu0 %1969, %v1932
        %v1971 = vpop.permute.xlu0 %1970
        %1974 = vset.pattern.permute.xlu0 0
        %1975 = vperm.xlu0 %1974, %v1933
        %v1976 = vpop.permute.xlu0 %1975
        %1979 = vset.pattern.permute.xlu0 0
        %1980 = vperm.xlu0 %1979, %v1934
        %v1981 = vpop.permute.xlu0 %1980
        %1984 = vset.pattern.permute.xlu0 0
        %1985 = vperm.xlu0 %1984, %v1935
        %v1986 = vpop.permute.xlu0 %1985
        %1989 = vset.pattern.permute.xlu0 0
        %1990 = vperm.xlu0 %1989, %v1936
        %v1991 = vpop.permute.xlu0 %1990
        %1994 = vset.pattern.permute.xlu0 0
        %1995 = vperm.xlu0 %1994, %v1937
        %v1996 = vpop.permute.xlu0 %1995
        %1999 = vset.pattern.permute.xlu0 0
        %2000 = vperm.xlu0 %1999, %v1938
        %v2001 = vpop.permute.xlu0 %2000
        %2004 = vset.pattern.permute.xlu0 0
        %2005 = vperm.xlu0 %2004, %v1939
        %v2006 = vpop.permute.xlu0 %2005
        %2009 = vset.pattern.permute.xlu0 0
        %2010 = vperm.xlu0 %2009, %v1940
        %v2011 = vpop.permute.xlu0 %2010
        %2014 = vset.pattern.permute.xlu0 0
        %2015 = vperm.xlu0 %2014, %v1941
        %v2016 = vpop.permute.xlu0 %2015
        %2019 = vset.pattern.permute.xlu0 0
        %2020 = vperm.xlu0 %2019, %v1942
        %v2021 = vpop.permute.xlu0 %2020
        %2024 = vset.pattern.permute.xlu0 0
        %2025 = vperm.xlu0 %2024, %v1943
        %v2026 = vpop.permute.xlu0 %2025
        %2029 = vset.pattern.permute.xlu0 0
        %2030 = vperm.xlu0 %2029, %v1944
        %v2031 = vpop.permute.xlu0 %2030
        %2034 = vset.pattern.permute.xlu0 0
        %2035 = vperm.xlu0 %2034, %v1945
        %v2036 = vpop.permute.xlu0 %2035
        %2039 = vset.pattern.permute.xlu0 0
        %2040 = vperm.xlu0 %2039, %v1946
        %v2041 = vpop.permute.xlu0 %2040
        %2044 = vset.pattern.permute.xlu0 0
        %2045 = vperm.xlu0 %2044, %v1947
        %v2046 = vpop.permute.xlu0 %2045
        %2049 = vset.pattern.permute.xlu0 0
        %2050 = vperm.xlu0 %2049, %v1948
        %v2051 = vpop.permute.xlu0 %2050
        %2054 = vset.pattern.permute.xlu0 0
        %2055 = vperm.xlu0 %2054, %v1949
        %v2056 = vpop.permute.xlu0 %2055
        %2059 = vset.pattern.permute.xlu0 0
        %2060 = vperm.xlu0 %2059, %v1950
        %v2061 = vpop.permute.xlu0 %2060
        %2064 = vset.pattern.permute.xlu0 0
        %2065 = vperm.xlu0 %2064, %v1951
        %v2066 = vpop.permute.xlu0 %2065
        %2069 = vset.pattern.permute.xlu0 0
        %2070 = vperm.xlu0 %2069, %v1952
        %v2071 = vpop.permute.xlu0 %2070
        %2074 = vset.pattern.permute.xlu0 0
        %2075 = vperm.xlu0 %2074, %v1953
        %v2076 = vpop.permute.xlu0 %2075
        %2079 = vset.pattern.permute.xlu0 0
        %2080 = vperm.xlu0 %2079, %v1954
        %v2081 = vpop.permute.xlu0 %2080
        %2084 = vset.pattern.permute.xlu0 0
        %2085 = vperm.xlu0 %2084, %v1955
        %v2086 = vpop.permute.xlu0 %2085
        %2089 = vset.pattern.permute.xlu0 0
        %2090 = vperm.xlu0 %2089, %v1956
        %v2091 = vpop.permute.xlu0 %2090
        %2094 = vset.pattern.permute.xlu0 0
        %2095 = vperm.xlu0 %2094, %v1957
        %v2096 = vpop.permute.xlu0 %2095
        %2099 = vset.pattern.permute.xlu0 0
        %2100 = vperm.xlu0 %2099, %v1958
        %v2101 = vpop.permute.xlu0 %2100
        %2104 = vset.pattern.permute.xlu0 0
        %2105 = vperm.xlu0 %2104, %v1959
        %v2106 = vpop.permute.xlu0 %2105
        %2109 = vset.pattern.permute.xlu0 0
        %2110 = vperm.xlu0 %2109, %v1960
        %v2111 = vpop.permute.xlu0 %2110
        %2114 = vset.pattern.permute.xlu0 0
        %2115 = vperm.xlu0 %2114, %v1961
        %v2116 = vpop.permute.xlu0 %2115
        %2119 = vset.pattern.permute.xlu0 0
        %2120 = vperm.xlu0 %2119, %v1962
        %v2121 = vpop.permute.xlu0 %2120
        %v2124 = vlaneseq
        %v2125 = vshrl.u32 %v2124, 7
        %v2126 = vsub.s32 0, %v2125
        %v2127 = vrot.slane %v1200, %v2126
        %v2129 = vmul.f32 %v1966, %v2127
        %v2130 = vmul.f32 %v1971, %v2127
        %v2131 = vmul.f32 %v1976, %v2127
        %v2132 = vmul.f32 %v1981, %v2127
        %v2133 = vmul.f32 %v1986, %v2127
        %v2134 = vmul.f32 %v1991, %v2127
        %v2135 = vmul.f32 %v1996, %v2127
        %v2136 = vmul.f32 %v2001, %v2127
        %v2137 = vmul.f32 %v2006, %v2127
        %v2138 = vmul.f32 %v2011, %v2127
        %v2139 = vmul.f32 %v2016, %v2127
        %v2140 = vmul.f32 %v2021, %v2127
        %v2141 = vmul.f32 %v2026, %v2127
        %v2142 = vmul.f32 %v2031, %v2127
        %v2143 = vmul.f32 %v2036, %v2127
        %v2144 = vmul.f32 %v2041, %v2127
        %v2145 = vmul.f32 %v2046, %v2127
        %v2146 = vmul.f32 %v2051, %v2127
        %v2147 = vmul.f32 %v2056, %v2127
        %v2148 = vmul.f32 %v2061, %v2127
        %v2149 = vmul.f32 %v2066, %v2127
        %v2150 = vmul.f32 %v2071, %v2127
        %v2151 = vmul.f32 %v2076, %v2127
        %v2152 = vmul.f32 %v2081, %v2127
        %v2153 = vmul.f32 %v2086, %v2127
        %v2154 = vmul.f32 %v2091, %v2127
        %v2155 = vmul.f32 %v2096, %v2127
        %v2156 = vmul.f32 %v2101, %v2127
        %v2157 = vmul.f32 %v2106, %v2127
        %v2158 = vmul.f32 %v2111, %v2127
        %v2159 = vmul.f32 %v2116, %v2127
        %v2160 = vmul.f32 %v2121, %v2127
        %v2161 = vadd.f32 %v1834, %v2129
        %v2162 = vadd.f32 %v1835, %v2130
        %v2163 = vadd.f32 %v1836, %v2131
        %v2164 = vadd.f32 %v1837, %v2132
        %v2165 = vadd.f32 %v1838, %v2133
        %v2166 = vadd.f32 %v1839, %v2134
        %v2167 = vadd.f32 %v1840, %v2135
        %v2168 = vadd.f32 %v1841, %v2136
        %v2169 = vadd.f32 %v1842, %v2137
        %v2170 = vadd.f32 %v1843, %v2138
        %v2171 = vadd.f32 %v1844, %v2139
        %v2172 = vadd.f32 %v1845, %v2140
        %v2173 = vadd.f32 %v1846, %v2141
        %v2174 = vadd.f32 %v1847, %v2142
        %v2175 = vadd.f32 %v1848, %v2143
        %v2176 = vadd.f32 %v1849, %v2144
        %v2177 = vadd.f32 %v1850, %v2145
        %v2178 = vadd.f32 %v1851, %v2146
        %v2179 = vadd.f32 %v1852, %v2147
        %v2180 = vadd.f32 %v1853, %v2148
        %v2181 = vadd.f32 %v1854, %v2149
        %v2182 = vadd.f32 %v1855, %v2150
        %v2183 = vadd.f32 %v1856, %v2151
        %v2184 = vadd.f32 %v1857, %v2152
        %v2185 = vadd.f32 %v1858, %v2153
        %v2186 = vadd.f32 %v1859, %v2154
        %v2187 = vadd.f32 %v1860, %v2155
        %v2188 = vadd.f32 %v1861, %v2156
        %v2189 = vadd.f32 %v1862, %v2157
        %v2190 = vadd.f32 %v1863, %v2158
        %v2191 = vadd.f32 %v1864, %v2159
        %v2192 = vadd.f32 %v1865, %v2160
        %2194 = vset.pattern.permute.xlu0 0
        %2195 = vperm.xlu0 %2194, %v1166
        %v2196 = vpop.permute.xlu0 %2195
        %2199 = vset.pattern.permute.xlu0 0
        %2200 = vperm.xlu0 %2199, %v1167
        %v2201 = vpop.permute.xlu0 %2200
        %2204 = vset.pattern.permute.xlu0 0
        %2205 = vperm.xlu0 %2204, %v1168
        %v2206 = vpop.permute.xlu0 %2205
        %2209 = vset.pattern.permute.xlu0 0
        %2210 = vperm.xlu0 %2209, %v1169
        %v2211 = vpop.permute.xlu0 %2210
        %2214 = vset.pattern.permute.xlu0 0
        %2215 = vperm.xlu0 %2214, %v1170
        %v2216 = vpop.permute.xlu0 %2215
        %2219 = vset.pattern.permute.xlu0 0
        %2220 = vperm.xlu0 %2219, %v1171
        %v2221 = vpop.permute.xlu0 %2220
        %2224 = vset.pattern.permute.xlu0 0
        %2225 = vperm.xlu0 %2224, %v1172
        %v2226 = vpop.permute.xlu0 %2225
        %2229 = vset.pattern.permute.xlu0 0
        %2230 = vperm.xlu0 %2229, %v1173
        %v2231 = vpop.permute.xlu0 %2230
        %2234 = vset.pattern.permute.xlu0 0
        %2235 = vperm.xlu0 %2234, %v1174
        %v2236 = vpop.permute.xlu0 %2235
        %2239 = vset.pattern.permute.xlu0 0
        %2240 = vperm.xlu0 %2239, %v1175
        %v2241 = vpop.permute.xlu0 %2240
        %2244 = vset.pattern.permute.xlu0 0
        %2245 = vperm.xlu0 %2244, %v1176
        %v2246 = vpop.permute.xlu0 %2245
        %2249 = vset.pattern.permute.xlu0 0
        %2250 = vperm.xlu0 %2249, %v1177
        %v2251 = vpop.permute.xlu0 %2250
        %2254 = vset.pattern.permute.xlu0 0
        %2255 = vperm.xlu0 %2254, %v1178
        %v2256 = vpop.permute.xlu0 %2255
        %2259 = vset.pattern.permute.xlu0 0
        %2260 = vperm.xlu0 %2259, %v1179
        %v2261 = vpop.permute.xlu0 %2260
        %2264 = vset.pattern.permute.xlu0 0
        %2265 = vperm.xlu0 %2264, %v1180
        %v2266 = vpop.permute.xlu0 %2265
        %2269 = vset.pattern.permute.xlu0 0
        %2270 = vperm.xlu0 %2269, %v1181
        %v2271 = vpop.permute.xlu0 %2270
        %2274 = vset.pattern.permute.xlu0 0
        %2275 = vperm.xlu0 %2274, %v1182
        %v2276 = vpop.permute.xlu0 %2275
        %2279 = vset.pattern.permute.xlu0 0
        %2280 = vperm.xlu0 %2279, %v1183
        %v2281 = vpop.permute.xlu0 %2280
        %2284 = vset.pattern.permute.xlu0 0
        %2285 = vperm.xlu0 %2284, %v1184
        %v2286 = vpop.permute.xlu0 %2285
        %2289 = vset.pattern.permute.xlu0 0
        %2290 = vperm.xlu0 %2289, %v1185
        %v2291 = vpop.permute.xlu0 %2290
        %2294 = vset.pattern.permute.xlu0 0
        %2295 = vperm.xlu0 %2294, %v1186
        %v2296 = vpop.permute.xlu0 %2295
        %2299 = vset.pattern.permute.xlu0 0
        %2300 = vperm.xlu0 %2299, %v1187
        %v2301 = vpop.permute.xlu0 %2300
        %2304 = vset.pattern.permute.xlu0 0
        %2305 = vperm.xlu0 %2304, %v1188
        %v2306 = vpop.permute.xlu0 %2305
        %2309 = vset.pattern.permute.xlu0 0
        %2310 = vperm.xlu0 %2309, %v1189
        %v2311 = vpop.permute.xlu0 %2310
        %2314 = vset.pattern.permute.xlu0 0
        %2315 = vperm.xlu0 %2314, %v1190
        %v2316 = vpop.permute.xlu0 %2315
        %2319 = vset.pattern.permute.xlu0 0
        %2320 = vperm.xlu0 %2319, %v1191
        %v2321 = vpop.permute.xlu0 %2320
        %2324 = vset.pattern.permute.xlu0 0
        %2325 = vperm.xlu0 %2324, %v1192
        %v2326 = vpop.permute.xlu0 %2325
        %2329 = vset.pattern.permute.xlu0 0
        %2330 = vperm.xlu0 %2329, %v1193
        %v2331 = vpop.permute.xlu0 %2330
        %2334 = vset.pattern.permute.xlu0 0
        %2335 = vperm.xlu0 %2334, %v1194
        %v2336 = vpop.permute.xlu0 %2335
        %2339 = vset.pattern.permute.xlu0 0
        %2340 = vperm.xlu0 %2339, %v1195
        %v2341 = vpop.permute.xlu0 %2340
        %2344 = vset.pattern.permute.xlu0 0
        %2345 = vperm.xlu0 %2344, %v1196
        %v2346 = vpop.permute.xlu0 %2345
        %2349 = vset.pattern.permute.xlu0 0
        %2350 = vperm.xlu0 %2349, %v1197
        %v2351 = vpop.permute.xlu0 %2350
        %v2354 = vlaneseq
        %v2355 = vshrl.u32 %v2354, 7
        %v2356 = vsub.s32 0, %v2355
        %v2357 = vrot.slane %v1201, %v2356
        %v2359 = vmul.f32 %v2196, %v2357
        %v2360 = vmul.f32 %v2201, %v2357
        %v2361 = vmul.f32 %v2206, %v2357
        %v2362 = vmul.f32 %v2211, %v2357
        %v2363 = vmul.f32 %v2216, %v2357
        %v2364 = vmul.f32 %v2221, %v2357
        %v2365 = vmul.f32 %v2226, %v2357
        %v2366 = vmul.f32 %v2231, %v2357
        %v2367 = vmul.f32 %v2236, %v2357
        %v2368 = vmul.f32 %v2241, %v2357
        %v2369 = vmul.f32 %v2246, %v2357
        %v2370 = vmul.f32 %v2251, %v2357
        %v2371 = vmul.f32 %v2256, %v2357
        %v2372 = vmul.f32 %v2261, %v2357
        %v2373 = vmul.f32 %v2266, %v2357
        %v2374 = vmul.f32 %v2271, %v2357
        %v2375 = vmul.f32 %v2276, %v2357
        %v2376 = vmul.f32 %v2281, %v2357
        %v2377 = vmul.f32 %v2286, %v2357
        %v2378 = vmul.f32 %v2291, %v2357
        %v2379 = vmul.f32 %v2296, %v2357
        %v2380 = vmul.f32 %v2301, %v2357
        %v2381 = vmul.f32 %v2306, %v2357
        %v2382 = vmul.f32 %v2311, %v2357
        %v2383 = vmul.f32 %v2316, %v2357
        %v2384 = vmul.f32 %v2321, %v2357
        %v2385 = vmul.f32 %v2326, %v2357
        %v2386 = vmul.f32 %v2331, %v2357
        %v2387 = vmul.f32 %v2336, %v2357
        %v2388 = vmul.f32 %v2341, %v2357
        %v2389 = vmul.f32 %v2346, %v2357
        %v2390 = vmul.f32 %v2351, %v2357
        %v2391 = vadd.f32 %v2161, %v2359
        %v2392 = vadd.f32 %v2162, %v2360
        %v2393 = vadd.f32 %v2163, %v2361
        %v2394 = vadd.f32 %v2164, %v2362
        %v2395 = vadd.f32 %v2165, %v2363
        %v2396 = vadd.f32 %v2166, %v2364
        %v2397 = vadd.f32 %v2167, %v2365
        %v2398 = vadd.f32 %v2168, %v2366
        %v2399 = vadd.f32 %v2169, %v2367
        %v2400 = vadd.f32 %v2170, %v2368
        %v2401 = vadd.f32 %v2171, %v2369
        %v2402 = vadd.f32 %v2172, %v2370
        %v2403 = vadd.f32 %v2173, %v2371
        %v2404 = vadd.f32 %v2174, %v2372
        %v2405 = vadd.f32 %v2175, %v2373
        %v2406 = vadd.f32 %v2176, %v2374
        %v2407 = vadd.f32 %v2177, %v2375
        %v2408 = vadd.f32 %v2178, %v2376
        %v2409 = vadd.f32 %v2179, %v2377
        %v2410 = vadd.f32 %v2180, %v2378
        %v2411 = vadd.f32 %v2181, %v2379
        %v2412 = vadd.f32 %v2182, %v2380
        %v2413 = vadd.f32 %v2183, %v2381
        %v2414 = vadd.f32 %v2184, %v2382
        %v2415 = vadd.f32 %v2185, %v2383
        %v2416 = vadd.f32 %v2186, %v2384
        %v2417 = vadd.f32 %v2187, %v2385
        %v2418 = vadd.f32 %v2188, %v2386
        %v2419 = vadd.f32 %v2189, %v2387
        %v2420 = vadd.f32 %v2190, %v2388
        %v2421 = vadd.f32 %v2191, %v2389
        %v2422 = vadd.f32 %v2192, %v2390
        %v2423 = vrot.slane %v1166, 1
        %v2424 = vrot.slane %v1167, 1
        %v2425 = vrot.slane %v1168, 1
        %v2426 = vrot.slane %v1169, 1
        %v2427 = vrot.slane %v1170, 1
        %v2428 = vrot.slane %v1171, 1
        %v2429 = vrot.slane %v1172, 1
        %v2430 = vrot.slane %v1173, 1
        %v2431 = vrot.slane %v1174, 1
        %v2432 = vrot.slane %v1175, 1
        %v2433 = vrot.slane %v1176, 1
        %v2434 = vrot.slane %v1177, 1
        %v2435 = vrot.slane %v1178, 1
        %v2436 = vrot.slane %v1179, 1
        %v2437 = vrot.slane %v1180, 1
        %v2438 = vrot.slane %v1181, 1
        %v2439 = vrot.slane %v1182, 1
        %v2440 = vrot.slane %v1183, 1
        %v2441 = vrot.slane %v1184, 1
        %v2442 = vrot.slane %v1185, 1
        %v2443 = vrot.slane %v1186, 1
        %v2444 = vrot.slane %v1187, 1
        %v2445 = vrot.slane %v1188, 1
        %v2446 = vrot.slane %v1189, 1
        %v2447 = vrot.slane %v1190, 1
        %v2448 = vrot.slane %v1191, 1
        %v2449 = vrot.slane %v1192, 1
        %v2450 = vrot.slane %v1193, 1
        %v2451 = vrot.slane %v1194, 1
        %v2452 = vrot.slane %v1195, 1
        %v2453 = vrot.slane %v1196, 1
        %v2454 = vrot.slane %v1197, 1
        %vm2455 = vcmp.lt.s32.totalorder %v774, 7
        %v2456 = vsel %vm2455, %v2453, %v2454
        %v2457 = vsel %vm2455, %v2452, %v2453
        %v2458 = vsel %vm2455, %v2451, %v2452
        %v2459 = vsel %vm2455, %v2450, %v2451
        %v2460 = vsel %vm2455, %v2449, %v2450
        %v2461 = vsel %vm2455, %v2448, %v2449
        %v2462 = vsel %vm2455, %v2447, %v2448
        %v2463 = vsel %vm2455, %v2446, %v2447
        %v2464 = vsel %vm2455, %v2445, %v2446
        %v2465 = vsel %vm2455, %v2444, %v2445
        %v2466 = vsel %vm2455, %v2443, %v2444
        %v2467 = vsel %vm2455, %v2442, %v2443
        %v2468 = vsel %vm2455, %v2441, %v2442
        %v2469 = vsel %vm2455, %v2440, %v2441
        %v2470 = vsel %vm2455, %v2439, %v2440
        %v2471 = vsel %vm2455, %v2438, %v2439
        %v2472 = vsel %vm2455, %v2437, %v2438
        %v2473 = vsel %vm2455, %v2436, %v2437
        %v2474 = vsel %vm2455, %v2435, %v2436
        %v2475 = vsel %vm2455, %v2434, %v2435
        %v2476 = vsel %vm2455, %v2433, %v2434
        %v2477 = vsel %vm2455, %v2432, %v2433
        %v2478 = vsel %vm2455, %v2431, %v2432
        %v2479 = vsel %vm2455, %v2430, %v2431
        %v2480 = vsel %vm2455, %v2429, %v2430
        %v2481 = vsel %vm2455, %v2428, %v2429
        %v2482 = vsel %vm2455, %v2427, %v2428
        %v2483 = vsel %vm2455, %v2426, %v2427
        %v2484 = vsel %vm2455, %v2425, %v2426
        %v2485 = vsel %vm2455, %v2424, %v2425
        %v2486 = vsel %vm2455, %v2423, %v2424
        %v2487 = vsel %vm2455, %v2454, %v2423
        %v2488 = vmul.f32 %v2486, %v1014
        %v2489 = vmul.f32 %v2485, %v1015
        %v2490 = vmul.f32 %v2484, %v1016
        %v2491 = vmul.f32 %v2483, %v1017
        %v2492 = vmul.f32 %v2482, %v1018
        %v2493 = vmul.f32 %v2481, %v1019
        %v2494 = vmul.f32 %v2480, %v1020
        %v2495 = vmul.f32 %v2479, %v1021
        %v2496 = vmul.f32 %v2478, %v1014
        %v2497 = vmul.f32 %v2477, %v1015
        %v2498 = vmul.f32 %v2476, %v1016
        %v2499 = vmul.f32 %v2475, %v1017
        %v2500 = vmul.f32 %v2474, %v1018
        %v2501 = vmul.f32 %v2473, %v1019
        %v2502 = vmul.f32 %v2472, %v1020
        %v2503 = vmul.f32 %v2471, %v1021
        %v2504 = vmul.f32 %v2470, %v1014
        %v2505 = vmul.f32 %v2469, %v1015
        %v2506 = vmul.f32 %v2468, %v1016
        %v2507 = vmul.f32 %v2467, %v1017
        %v2508 = vmul.f32 %v2466, %v1018
        %v2509 = vmul.f32 %v2465, %v1019
        %v2510 = vmul.f32 %v2464, %v1020
        %v2511 = vmul.f32 %v2463, %v1021
        %v2512 = vmul.f32 %v2462, %v1014
        %v2513 = vmul.f32 %v2461, %v1015
        %v2514 = vmul.f32 %v2460, %v1016
        %v2515 = vmul.f32 %v2459, %v1017
        %v2516 = vmul.f32 %v2458, %v1018
        %v2517 = vmul.f32 %v2457, %v1019
        %v2518 = vmul.f32 %v2456, %v1020
        %v2519 = vmul.f32 %v2487, %v1021
        %2521 = vset.pattern.permute.xlu0 0
        %2522 = vperm.xlu0 %2521, %v2488
        %v2523 = vpop.permute.xlu0 %2522
        %2526 = vset.pattern.permute.xlu0 0
        %2527 = vperm.xlu0 %2526, %v2489
        %v2528 = vpop.permute.xlu0 %2527
        %2531 = vset.pattern.permute.xlu0 0
        %2532 = vperm.xlu0 %2531, %v2490
        %v2533 = vpop.permute.xlu0 %2532
        %2536 = vset.pattern.permute.xlu0 0
        %2537 = vperm.xlu0 %2536, %v2491
        %v2538 = vpop.permute.xlu0 %2537
        %2541 = vset.pattern.permute.xlu0 0
        %2542 = vperm.xlu0 %2541, %v2492
        %v2543 = vpop.permute.xlu0 %2542
        %2546 = vset.pattern.permute.xlu0 0
        %2547 = vperm.xlu0 %2546, %v2493
        %v2548 = vpop.permute.xlu0 %2547
        %2551 = vset.pattern.permute.xlu0 0
        %2552 = vperm.xlu0 %2551, %v2494
        %v2553 = vpop.permute.xlu0 %2552
        %2556 = vset.pattern.permute.xlu0 0
        %2557 = vperm.xlu0 %2556, %v2495
        %v2558 = vpop.permute.xlu0 %2557
        %2561 = vset.pattern.permute.xlu0 0
        %2562 = vperm.xlu0 %2561, %v2496
        %v2563 = vpop.permute.xlu0 %2562
        %2566 = vset.pattern.permute.xlu0 0
        %2567 = vperm.xlu0 %2566, %v2497
        %v2568 = vpop.permute.xlu0 %2567
        %2571 = vset.pattern.permute.xlu0 0
        %2572 = vperm.xlu0 %2571, %v2498
        %v2573 = vpop.permute.xlu0 %2572
        %2576 = vset.pattern.permute.xlu0 0
        %2577 = vperm.xlu0 %2576, %v2499
        %v2578 = vpop.permute.xlu0 %2577
        %2581 = vset.pattern.permute.xlu0 0
        %2582 = vperm.xlu0 %2581, %v2500
        %v2583 = vpop.permute.xlu0 %2582
        %2586 = vset.pattern.permute.xlu0 0
        %2587 = vperm.xlu0 %2586, %v2501
        %v2588 = vpop.permute.xlu0 %2587
        %2591 = vset.pattern.permute.xlu0 0
        %2592 = vperm.xlu0 %2591, %v2502
        %v2593 = vpop.permute.xlu0 %2592
        %2596 = vset.pattern.permute.xlu0 0
        %2597 = vperm.xlu0 %2596, %v2503
        %v2598 = vpop.permute.xlu0 %2597
        %2601 = vset.pattern.permute.xlu0 0
        %2602 = vperm.xlu0 %2601, %v2504
        %v2603 = vpop.permute.xlu0 %2602
        %2606 = vset.pattern.permute.xlu0 0
        %2607 = vperm.xlu0 %2606, %v2505
        %v2608 = vpop.permute.xlu0 %2607
        %2611 = vset.pattern.permute.xlu0 0
        %2612 = vperm.xlu0 %2611, %v2506
        %v2613 = vpop.permute.xlu0 %2612
        %2616 = vset.pattern.permute.xlu0 0
        %2617 = vperm.xlu0 %2616, %v2507
        %v2618 = vpop.permute.xlu0 %2617
        %2621 = vset.pattern.permute.xlu0 0
        %2622 = vperm.xlu0 %2621, %v2508
        %v2623 = vpop.permute.xlu0 %2622
        %2626 = vset.pattern.permute.xlu0 0
        %2627 = vperm.xlu0 %2626, %v2509
        %v2628 = vpop.permute.xlu0 %2627
        %2631 = vset.pattern.permute.xlu0 0
        %2632 = vperm.xlu0 %2631, %v2510
        %v2633 = vpop.permute.xlu0 %2632
        %2636 = vset.pattern.permute.xlu0 0
        %2637 = vperm.xlu0 %2636, %v2511
        %v2638 = vpop.permute.xlu0 %2637
        %2641 = vset.pattern.permute.xlu0 0
        %2642 = vperm.xlu0 %2641, %v2512
        %v2643 = vpop.permute.xlu0 %2642
        %2646 = vset.pattern.permute.xlu0 0
        %2647 = vperm.xlu0 %2646, %v2513
        %v2648 = vpop.permute.xlu0 %2647
        %2651 = vset.pattern.permute.xlu0 0
        %2652 = vperm.xlu0 %2651, %v2514
        %v2653 = vpop.permute.xlu0 %2652
        %2656 = vset.pattern.permute.xlu0 0
        %2657 = vperm.xlu0 %2656, %v2515
        %v2658 = vpop.permute.xlu0 %2657
        %2661 = vset.pattern.permute.xlu0 0
        %2662 = vperm.xlu0 %2661, %v2516
        %v2663 = vpop.permute.xlu0 %2662
        %2666 = vset.pattern.permute.xlu0 0
        %2667 = vperm.xlu0 %2666, %v2517
        %v2668 = vpop.permute.xlu0 %2667
        %2671 = vset.pattern.permute.xlu0 0
        %2672 = vperm.xlu0 %2671, %v2518
        %v2673 = vpop.permute.xlu0 %2672
        %2676 = vset.pattern.permute.xlu0 0
        %2677 = vperm.xlu0 %2676, %v2519
        %v2678 = vpop.permute.xlu0 %2677
        %v2681 = vlaneseq
        %v2682 = vshrl.u32 %v2681, 7
        %v2683 = vsub.s32 0, %v2682
        %v2684 = vrot.slane %v1202, %v2683
        %v2686 = vmul.f32 %v2523, %v2684
        %v2687 = vmul.f32 %v2528, %v2684
        %v2688 = vmul.f32 %v2533, %v2684
        %v2689 = vmul.f32 %v2538, %v2684
        %v2690 = vmul.f32 %v2543, %v2684
        %v2691 = vmul.f32 %v2548, %v2684
        %v2692 = vmul.f32 %v2553, %v2684
        %v2693 = vmul.f32 %v2558, %v2684
        %v2694 = vmul.f32 %v2563, %v2684
        %v2695 = vmul.f32 %v2568, %v2684
        %v2696 = vmul.f32 %v2573, %v2684
        %v2697 = vmul.f32 %v2578, %v2684
        %v2698 = vmul.f32 %v2583, %v2684
        %v2699 = vmul.f32 %v2588, %v2684
        %v2700 = vmul.f32 %v2593, %v2684
        %v2701 = vmul.f32 %v2598, %v2684
        %v2702 = vmul.f32 %v2603, %v2684
        %v2703 = vmul.f32 %v2608, %v2684
        %v2704 = vmul.f32 %v2613, %v2684
        %v2705 = vmul.f32 %v2618, %v2684
        %v2706 = vmul.f32 %v2623, %v2684
        %v2707 = vmul.f32 %v2628, %v2684
        %v2708 = vmul.f32 %v2633, %v2684
        %v2709 = vmul.f32 %v2638, %v2684
        %v2710 = vmul.f32 %v2643, %v2684
        %v2711 = vmul.f32 %v2648, %v2684
        %v2712 = vmul.f32 %v2653, %v2684
        %v2713 = vmul.f32 %v2658, %v2684
        %v2714 = vmul.f32 %v2663, %v2684
        %v2715 = vmul.f32 %v2668, %v2684
        %v2716 = vmul.f32 %v2673, %v2684
        %v2717 = vmul.f32 %v2678, %v2684
        %v2718 = vadd.f32 %v2391, %v2686
        %v2719 = vadd.f32 %v2392, %v2687
        %v2720 = vadd.f32 %v2393, %v2688
        %v2721 = vadd.f32 %v2394, %v2689
        %v2722 = vadd.f32 %v2395, %v2690
        %v2723 = vadd.f32 %v2396, %v2691
        %v2724 = vadd.f32 %v2397, %v2692
        %v2725 = vadd.f32 %v2398, %v2693
        %v2726 = vadd.f32 %v2399, %v2694
        %v2727 = vadd.f32 %v2400, %v2695
        %v2728 = vadd.f32 %v2401, %v2696
        %v2729 = vadd.f32 %v2402, %v2697
        %v2730 = vadd.f32 %v2403, %v2698
        %v2731 = vadd.f32 %v2404, %v2699
        %v2732 = vadd.f32 %v2405, %v2700
        %v2733 = vadd.f32 %v2406, %v2701
        %v2734 = vadd.f32 %v2407, %v2702
        %v2735 = vadd.f32 %v2408, %v2703
        %v2736 = vadd.f32 %v2409, %v2704
        %v2737 = vadd.f32 %v2410, %v2705
        %v2738 = vadd.f32 %v2411, %v2706
        %v2739 = vadd.f32 %v2412, %v2707
        %v2740 = vadd.f32 %v2413, %v2708
        %v2741 = vadd.f32 %v2414, %v2709
        %v2742 = vadd.f32 %v2415, %v2710
        %v2743 = vadd.f32 %v2416, %v2711
        %v2744 = vadd.f32 %v2417, %v2712
        %v2745 = vadd.f32 %v2418, %v2713
        %v2746 = vadd.f32 %v2419, %v2714
        %v2747 = vadd.f32 %v2420, %v2715
        %v2748 = vadd.f32 %v2421, %v2716
        %v2749 = vadd.f32 %v2422, %v2717
        %v2750 = vrot.slane %v1166, 2
        %v2751 = vrot.slane %v1167, 2
        %v2752 = vrot.slane %v1168, 2
        %v2753 = vrot.slane %v1169, 2
        %v2754 = vrot.slane %v1170, 2
        %v2755 = vrot.slane %v1171, 2
        %v2756 = vrot.slane %v1172, 2
        %v2757 = vrot.slane %v1173, 2
        %v2758 = vrot.slane %v1174, 2
        %v2759 = vrot.slane %v1175, 2
        %v2760 = vrot.slane %v1176, 2
        %v2761 = vrot.slane %v1177, 2
        %v2762 = vrot.slane %v1178, 2
        %v2763 = vrot.slane %v1179, 2
        %v2764 = vrot.slane %v1180, 2
        %v2765 = vrot.slane %v1181, 2
        %v2766 = vrot.slane %v1182, 2
        %v2767 = vrot.slane %v1183, 2
        %v2768 = vrot.slane %v1184, 2
        %v2769 = vrot.slane %v1185, 2
        %v2770 = vrot.slane %v1186, 2
        %v2771 = vrot.slane %v1187, 2
        %v2772 = vrot.slane %v1188, 2
        %v2773 = vrot.slane %v1189, 2
        %v2774 = vrot.slane %v1190, 2
        %v2775 = vrot.slane %v1191, 2
        %v2776 = vrot.slane %v1192, 2
        %v2777 = vrot.slane %v1193, 2
        %v2778 = vrot.slane %v1194, 2
        %v2779 = vrot.slane %v1195, 2
        %v2780 = vrot.slane %v1196, 2
        %v2781 = vrot.slane %v1197, 2
        %vm2782 = vcmp.lt.s32.totalorder %v774, 6
        %v2783 = vsel %vm2782, %v2780, %v2781
        %v2784 = vsel %vm2782, %v2779, %v2780
        %v2785 = vsel %vm2782, %v2778, %v2779
        %v2786 = vsel %vm2782, %v2777, %v2778
        %v2787 = vsel %vm2782, %v2776, %v2777
        %v2788 = vsel %vm2782, %v2775, %v2776
        %v2789 = vsel %vm2782, %v2774, %v2775
        %v2790 = vsel %vm2782, %v2773, %v2774
        %v2791 = vsel %vm2782, %v2772, %v2773
        %v2792 = vsel %vm2782, %v2771, %v2772
        %v2793 = vsel %vm2782, %v2770, %v2771
        %v2794 = vsel %vm2782, %v2769, %v2770
        %v2795 = vsel %vm2782, %v2768, %v2769
        %v2796 = vsel %vm2782, %v2767, %v2768
        %v2797 = vsel %vm2782, %v2766, %v2767
        %v2798 = vsel %vm2782, %v2765, %v2766
        %v2799 = vsel %vm2782, %v2764, %v2765
        %v2800 = vsel %vm2782, %v2763, %v2764
        %v2801 = vsel %vm2782, %v2762, %v2763
        %v2802 = vsel %vm2782, %v2761, %v2762
        %v2803 = vsel %vm2782, %v2760, %v2761
        %v2804 = vsel %vm2782, %v2759, %v2760
        %v2805 = vsel %vm2782, %v2758, %v2759
        %v2806 = vsel %vm2782, %v2757, %v2758
        %v2807 = vsel %vm2782, %v2756, %v2757
        %v2808 = vsel %vm2782, %v2755, %v2756
        %v2809 = vsel %vm2782, %v2754, %v2755
        %v2810 = vsel %vm2782, %v2753, %v2754
        %v2811 = vsel %vm2782, %v2752, %v2753
        %v2812 = vsel %vm2782, %v2751, %v2752
        %v2813 = vsel %vm2782, %v2750, %v2751
        %v2814 = vsel %vm2782, %v2781, %v2750
        %v2815 = vmul.f32 %v2813, %v1062
        %v2816 = vmul.f32 %v2812, %v1063
        %v2817 = vmul.f32 %v2811, %v1064
        %v2818 = vmul.f32 %v2810, %v1065
        %v2819 = vmul.f32 %v2809, %v1066
        %v2820 = vmul.f32 %v2808, %v1067
        %v2821 = vmul.f32 %v2807, %v1068
        %v2822 = vmul.f32 %v2806, %v1069
        %v2823 = vmul.f32 %v2805, %v1062
        %v2824 = vmul.f32 %v2804, %v1063
        %v2825 = vmul.f32 %v2803, %v1064
        %v2826 = vmul.f32 %v2802, %v1065
        %v2827 = vmul.f32 %v2801, %v1066
        %v2828 = vmul.f32 %v2800, %v1067
        %v2829 = vmul.f32 %v2799, %v1068
        %v2830 = vmul.f32 %v2798, %v1069
        %v2831 = vmul.f32 %v2797, %v1062
        %v2832 = vmul.f32 %v2796, %v1063
        %v2833 = vmul.f32 %v2795, %v1064
        %v2834 = vmul.f32 %v2794, %v1065
        %v2835 = vmul.f32 %v2793, %v1066
        %v2836 = vmul.f32 %v2792, %v1067
        %v2837 = vmul.f32 %v2791, %v1068
        %v2838 = vmul.f32 %v2790, %v1069
        %v2839 = vmul.f32 %v2789, %v1062
        %v2840 = vmul.f32 %v2788, %v1063
        %v2841 = vmul.f32 %v2787, %v1064
        %v2842 = vmul.f32 %v2786, %v1065
        %v2843 = vmul.f32 %v2785, %v1066
        %v2844 = vmul.f32 %v2784, %v1067
        %v2845 = vmul.f32 %v2783, %v1068
        %v2846 = vmul.f32 %v2814, %v1069
        %2848 = vset.pattern.permute.xlu0 0
        %2849 = vperm.xlu0 %2848, %v2815
        %v2850 = vpop.permute.xlu0 %2849
        %2853 = vset.pattern.permute.xlu0 0
        %2854 = vperm.xlu0 %2853, %v2816
        %v2855 = vpop.permute.xlu0 %2854
        %2858 = vset.pattern.permute.xlu0 0
        %2859 = vperm.xlu0 %2858, %v2817
        %v2860 = vpop.permute.xlu0 %2859
        %2863 = vset.pattern.permute.xlu0 0
        %2864 = vperm.xlu0 %2863, %v2818
        %v2865 = vpop.permute.xlu0 %2864
        %2868 = vset.pattern.permute.xlu0 0
        %2869 = vperm.xlu0 %2868, %v2819
        %v2870 = vpop.permute.xlu0 %2869
        %2873 = vset.pattern.permute.xlu0 0
        %2874 = vperm.xlu0 %2873, %v2820
        %v2875 = vpop.permute.xlu0 %2874
        %2878 = vset.pattern.permute.xlu0 0
        %2879 = vperm.xlu0 %2878, %v2821
        %v2880 = vpop.permute.xlu0 %2879
        %2883 = vset.pattern.permute.xlu0 0
        %2884 = vperm.xlu0 %2883, %v2822
        %v2885 = vpop.permute.xlu0 %2884
        %2888 = vset.pattern.permute.xlu0 0
        %2889 = vperm.xlu0 %2888, %v2823
        %v2890 = vpop.permute.xlu0 %2889
        %2893 = vset.pattern.permute.xlu0 0
        %2894 = vperm.xlu0 %2893, %v2824
        %v2895 = vpop.permute.xlu0 %2894
        %2898 = vset.pattern.permute.xlu0 0
        %2899 = vperm.xlu0 %2898, %v2825
        %v2900 = vpop.permute.xlu0 %2899
        %2903 = vset.pattern.permute.xlu0 0
        %2904 = vperm.xlu0 %2903, %v2826
        %v2905 = vpop.permute.xlu0 %2904
        %2908 = vset.pattern.permute.xlu0 0
        %2909 = vperm.xlu0 %2908, %v2827
        %v2910 = vpop.permute.xlu0 %2909
        %2913 = vset.pattern.permute.xlu0 0
        %2914 = vperm.xlu0 %2913, %v2828
        %v2915 = vpop.permute.xlu0 %2914
        %2918 = vset.pattern.permute.xlu0 0
        %2919 = vperm.xlu0 %2918, %v2829
        %v2920 = vpop.permute.xlu0 %2919
        %2923 = vset.pattern.permute.xlu0 0
        %2924 = vperm.xlu0 %2923, %v2830
        %v2925 = vpop.permute.xlu0 %2924
        %2928 = vset.pattern.permute.xlu0 0
        %2929 = vperm.xlu0 %2928, %v2831
        %v2930 = vpop.permute.xlu0 %2929
        %2933 = vset.pattern.permute.xlu0 0
        %2934 = vperm.xlu0 %2933, %v2832
        %v2935 = vpop.permute.xlu0 %2934
        %2938 = vset.pattern.permute.xlu0 0
        %2939 = vperm.xlu0 %2938, %v2833
        %v2940 = vpop.permute.xlu0 %2939
        %2943 = vset.pattern.permute.xlu0 0
        %2944 = vperm.xlu0 %2943, %v2834
        %v2945 = vpop.permute.xlu0 %2944
        %2948 = vset.pattern.permute.xlu0 0
        %2949 = vperm.xlu0 %2948, %v2835
        %v2950 = vpop.permute.xlu0 %2949
        %2953 = vset.pattern.permute.xlu0 0
        %2954 = vperm.xlu0 %2953, %v2836
        %v2955 = vpop.permute.xlu0 %2954
        %2958 = vset.pattern.permute.xlu0 0
        %2959 = vperm.xlu0 %2958, %v2837
        %v2960 = vpop.permute.xlu0 %2959
        %2963 = vset.pattern.permute.xlu0 0
        %2964 = vperm.xlu0 %2963, %v2838
        %v2965 = vpop.permute.xlu0 %2964
        %2968 = vset.pattern.permute.xlu0 0
        %2969 = vperm.xlu0 %2968, %v2839
        %v2970 = vpop.permute.xlu0 %2969
        %2973 = vset.pattern.permute.xlu0 0
        %2974 = vperm.xlu0 %2973, %v2840
        %v2975 = vpop.permute.xlu0 %2974
        %2978 = vset.pattern.permute.xlu0 0
        %2979 = vperm.xlu0 %2978, %v2841
        %v2980 = vpop.permute.xlu0 %2979
        %2983 = vset.pattern.permute.xlu0 0
        %2984 = vperm.xlu0 %2983, %v2842
        %v2985 = vpop.permute.xlu0 %2984
        %2988 = vset.pattern.permute.xlu0 0
        %2989 = vperm.xlu0 %2988, %v2843
        %v2990 = vpop.permute.xlu0 %2989
        %2993 = vset.pattern.permute.xlu0 0
        %2994 = vperm.xlu0 %2993, %v2844
        %v2995 = vpop.permute.xlu0 %2994
        %2998 = vset.pattern.permute.xlu0 0
        %2999 = vperm.xlu0 %2998, %v2845
        %v3000 = vpop.permute.xlu0 %2999
        %3003 = vset.pattern.permute.xlu0 0
        %3004 = vperm.xlu0 %3003, %v2846
        %v3005 = vpop.permute.xlu0 %3004
        %v3008 = vlaneseq
        %v3009 = vshrl.u32 %v3008, 7
        %v3010 = vsub.s32 0, %v3009
        %v3011 = vrot.slane %v1203, %v3010
        %v3013 = vmul.f32 %v2850, %v3011
        %v3014 = vmul.f32 %v2855, %v3011
        %v3015 = vmul.f32 %v2860, %v3011
        %v3016 = vmul.f32 %v2865, %v3011
        %v3017 = vmul.f32 %v2870, %v3011
        %v3018 = vmul.f32 %v2875, %v3011
        %v3019 = vmul.f32 %v2880, %v3011
        %v3020 = vmul.f32 %v2885, %v3011
        %v3021 = vmul.f32 %v2890, %v3011
        %v3022 = vmul.f32 %v2895, %v3011
        %v3023 = vmul.f32 %v2900, %v3011
        %v3024 = vmul.f32 %v2905, %v3011
        %v3025 = vmul.f32 %v2910, %v3011
        %v3026 = vmul.f32 %v2915, %v3011
        %v3027 = vmul.f32 %v2920, %v3011
        %v3028 = vmul.f32 %v2925, %v3011
        %v3029 = vmul.f32 %v2930, %v3011
        %v3030 = vmul.f32 %v2935, %v3011
        %v3031 = vmul.f32 %v2940, %v3011
        %v3032 = vmul.f32 %v2945, %v3011
        %v3033 = vmul.f32 %v2950, %v3011
        %v3034 = vmul.f32 %v2955, %v3011
        %v3035 = vmul.f32 %v2960, %v3011
        %v3036 = vmul.f32 %v2965, %v3011
        %v3037 = vmul.f32 %v2970, %v3011
        %v3038 = vmul.f32 %v2975, %v3011
        %v3039 = vmul.f32 %v2980, %v3011
        %v3040 = vmul.f32 %v2985, %v3011
        %v3041 = vmul.f32 %v2990, %v3011
        %v3042 = vmul.f32 %v2995, %v3011
        %v3043 = vmul.f32 %v3000, %v3011
        %v3044 = vmul.f32 %v3005, %v3011
        %v3045 = vadd.f32 %v2718, %v3013
        %v3046 = vadd.f32 %v2719, %v3014
        %v3047 = vadd.f32 %v2720, %v3015
        %v3048 = vadd.f32 %v2721, %v3016
        %v3049 = vadd.f32 %v2722, %v3017
        %v3050 = vadd.f32 %v2723, %v3018
        %v3051 = vadd.f32 %v2724, %v3019
        %v3052 = vadd.f32 %v2725, %v3020
        %v3053 = vadd.f32 %v2726, %v3021
        %v3054 = vadd.f32 %v2727, %v3022
        %v3055 = vadd.f32 %v2728, %v3023
        %v3056 = vadd.f32 %v2729, %v3024
        %v3057 = vadd.f32 %v2730, %v3025
        %v3058 = vadd.f32 %v2731, %v3026
        %v3059 = vadd.f32 %v2732, %v3027
        %v3060 = vadd.f32 %v2733, %v3028
        %v3061 = vadd.f32 %v2734, %v3029
        %v3062 = vadd.f32 %v2735, %v3030
        %v3063 = vadd.f32 %v2736, %v3031
        %v3064 = vadd.f32 %v2737, %v3032
        %v3065 = vadd.f32 %v2738, %v3033
        %v3066 = vadd.f32 %v2739, %v3034
        %v3067 = vadd.f32 %v2740, %v3035
        %v3068 = vadd.f32 %v2741, %v3036
        %v3069 = vadd.f32 %v2742, %v3037
        %v3070 = vadd.f32 %v2743, %v3038
        %v3071 = vadd.f32 %v2744, %v3039
        %v3072 = vadd.f32 %v2745, %v3040
        %v3073 = vadd.f32 %v2746, %v3041
        %v3074 = vadd.f32 %v2747, %v3042
        %v3075 = vadd.f32 %v2748, %v3043
        %v3076 = vadd.f32 %v2749, %v3044
        %v3077 = vrot.slane %v1166, 3
        %v3078 = vrot.slane %v1167, 3
        %v3079 = vrot.slane %v1168, 3
        %v3080 = vrot.slane %v1169, 3
        %v3081 = vrot.slane %v1170, 3
        %v3082 = vrot.slane %v1171, 3
        %v3083 = vrot.slane %v1172, 3
        %v3084 = vrot.slane %v1173, 3
        %v3085 = vrot.slane %v1174, 3
        %v3086 = vrot.slane %v1175, 3
        %v3087 = vrot.slane %v1176, 3
        %v3088 = vrot.slane %v1177, 3
        %v3089 = vrot.slane %v1178, 3
        %v3090 = vrot.slane %v1179, 3
        %v3091 = vrot.slane %v1180, 3
        %v3092 = vrot.slane %v1181, 3
        %v3093 = vrot.slane %v1182, 3
        %v3094 = vrot.slane %v1183, 3
        %v3095 = vrot.slane %v1184, 3
        %v3096 = vrot.slane %v1185, 3
        %v3097 = vrot.slane %v1186, 3
        %v3098 = vrot.slane %v1187, 3
        %v3099 = vrot.slane %v1188, 3
        %v3100 = vrot.slane %v1189, 3
        %v3101 = vrot.slane %v1190, 3
        %v3102 = vrot.slane %v1191, 3
        %v3103 = vrot.slane %v1192, 3
        %v3104 = vrot.slane %v1193, 3
        %v3105 = vrot.slane %v1194, 3
        %v3106 = vrot.slane %v1195, 3
        %v3107 = vrot.slane %v1196, 3
        %v3108 = vrot.slane %v1197, 3
        %vm3109 = vcmp.lt.s32.totalorder %v774, 5
        %v3110 = vsel %vm3109, %v3107, %v3108
        %v3111 = vsel %vm3109, %v3106, %v3107
        %v3112 = vsel %vm3109, %v3105, %v3106
        %v3113 = vsel %vm3109, %v3104, %v3105
        %v3114 = vsel %vm3109, %v3103, %v3104
        %v3115 = vsel %vm3109, %v3102, %v3103
        %v3116 = vsel %vm3109, %v3101, %v3102
        %v3117 = vsel %vm3109, %v3100, %v3101
        %v3118 = vsel %vm3109, %v3099, %v3100
        %v3119 = vsel %vm3109, %v3098, %v3099
        %v3120 = vsel %vm3109, %v3097, %v3098
        %v3121 = vsel %vm3109, %v3096, %v3097
        %v3122 = vsel %vm3109, %v3095, %v3096
        %v3123 = vsel %vm3109, %v3094, %v3095
        %v3124 = vsel %vm3109, %v3093, %v3094
        %v3125 = vsel %vm3109, %v3092, %v3093
        %v3126 = vsel %vm3109, %v3091, %v3092
        %v3127 = vsel %vm3109, %v3090, %v3091
        %v3128 = vsel %vm3109, %v3089, %v3090
        %v3129 = vsel %vm3109, %v3088, %v3089
        %v3130 = vsel %vm3109, %v3087, %v3088
        %v3131 = vsel %vm3109, %v3086, %v3087
        %v3132 = vsel %vm3109, %v3085, %v3086
        %v3133 = vsel %vm3109, %v3084, %v3085
        %v3134 = vsel %vm3109, %v3083, %v3084
        %v3135 = vsel %vm3109, %v3082, %v3083
        %v3136 = vsel %vm3109, %v3081, %v3082
        %v3137 = vsel %vm3109, %v3080, %v3081
        %v3138 = vsel %vm3109, %v3079, %v3080
        %v3139 = vsel %vm3109, %v3078, %v3079
        %v3140 = vsel %vm3109, %v3077, %v3078
        %v3141 = vsel %vm3109, %v3108, %v3077
        %v3142 = vmul.f32 %v3140, %v1110
        %v3143 = vmul.f32 %v3139, %v1111
        %v3144 = vmul.f32 %v3138, %v1112
        %v3145 = vmul.f32 %v3137, %v1113
        %v3146 = vmul.f32 %v3136, %v1114
        %v3147 = vmul.f32 %v3135, %v1115
        %v3148 = vmul.f32 %v3134, %v1116
        %v3149 = vmul.f32 %v3133, %v1117
        %v3150 = vmul.f32 %v3132, %v1110
        %v3151 = vmul.f32 %v3131, %v1111
        %v3152 = vmul.f32 %v3130, %v1112
        %v3153 = vmul.f32 %v3129, %v1113
        %v3154 = vmul.f32 %v3128, %v1114
        %v3155 = vmul.f32 %v3127, %v1115
        %v3156 = vmul.f32 %v3126, %v1116
        %v3157 = vmul.f32 %v3125, %v1117
        %v3158 = vmul.f32 %v3124, %v1110
        %v3159 = vmul.f32 %v3123, %v1111
        %v3160 = vmul.f32 %v3122, %v1112
        %v3161 = vmul.f32 %v3121, %v1113
        %v3162 = vmul.f32 %v3120, %v1114
        %v3163 = vmul.f32 %v3119, %v1115
        %v3164 = vmul.f32 %v3118, %v1116
        %v3165 = vmul.f32 %v3117, %v1117
        %v3166 = vmul.f32 %v3116, %v1110
        %v3167 = vmul.f32 %v3115, %v1111
        %v3168 = vmul.f32 %v3114, %v1112
        %v3169 = vmul.f32 %v3113, %v1113
        %v3170 = vmul.f32 %v3112, %v1114
        %v3171 = vmul.f32 %v3111, %v1115
        %v3172 = vmul.f32 %v3110, %v1116
        %v3173 = vmul.f32 %v3141, %v1117
        %3175 = vset.pattern.permute.xlu0 0
        %3176 = vperm.xlu0 %3175, %v3142
        %v3177 = vpop.permute.xlu0 %3176
        %3180 = vset.pattern.permute.xlu0 0
        %3181 = vperm.xlu0 %3180, %v3143
        %v3182 = vpop.permute.xlu0 %3181
        %3185 = vset.pattern.permute.xlu0 0
        %3186 = vperm.xlu0 %3185, %v3144
        %v3187 = vpop.permute.xlu0 %3186
        %3190 = vset.pattern.permute.xlu0 0
        %3191 = vperm.xlu0 %3190, %v3145
        %v3192 = vpop.permute.xlu0 %3191
        %3195 = vset.pattern.permute.xlu0 0
        %3196 = vperm.xlu0 %3195, %v3146
        %v3197 = vpop.permute.xlu0 %3196
        %3200 = vset.pattern.permute.xlu0 0
        %3201 = vperm.xlu0 %3200, %v3147
        %v3202 = vpop.permute.xlu0 %3201
        %3205 = vset.pattern.permute.xlu0 0
        %3206 = vperm.xlu0 %3205, %v3148
        %v3207 = vpop.permute.xlu0 %3206
        %3210 = vset.pattern.permute.xlu0 0
        %3211 = vperm.xlu0 %3210, %v3149
        %v3212 = vpop.permute.xlu0 %3211
        %3215 = vset.pattern.permute.xlu0 0
        %3216 = vperm.xlu0 %3215, %v3150
        %v3217 = vpop.permute.xlu0 %3216
        %3220 = vset.pattern.permute.xlu0 0
        %3221 = vperm.xlu0 %3220, %v3151
        %v3222 = vpop.permute.xlu0 %3221
        %3225 = vset.pattern.permute.xlu0 0
        %3226 = vperm.xlu0 %3225, %v3152
        %v3227 = vpop.permute.xlu0 %3226
        %3230 = vset.pattern.permute.xlu0 0
        %3231 = vperm.xlu0 %3230, %v3153
        %v3232 = vpop.permute.xlu0 %3231
        %3235 = vset.pattern.permute.xlu0 0
        %3236 = vperm.xlu0 %3235, %v3154
        %v3237 = vpop.permute.xlu0 %3236
        %3240 = vset.pattern.permute.xlu0 0
        %3241 = vperm.xlu0 %3240, %v3155
        %v3242 = vpop.permute.xlu0 %3241
        %3245 = vset.pattern.permute.xlu0 0
        %3246 = vperm.xlu0 %3245, %v3156
        %v3247 = vpop.permute.xlu0 %3246
        %3250 = vset.pattern.permute.xlu0 0
        %3251 = vperm.xlu0 %3250, %v3157
        %v3252 = vpop.permute.xlu0 %3251
        %3255 = vset.pattern.permute.xlu0 0
        %3256 = vperm.xlu0 %3255, %v3158
        %v3257 = vpop.permute.xlu0 %3256
        %3260 = vset.pattern.permute.xlu0 0
        %3261 = vperm.xlu0 %3260, %v3159
        %v3262 = vpop.permute.xlu0 %3261
        %3265 = vset.pattern.permute.xlu0 0
        %3266 = vperm.xlu0 %3265, %v3160
        %v3267 = vpop.permute.xlu0 %3266
        %3270 = vset.pattern.permute.xlu0 0
        %3271 = vperm.xlu0 %3270, %v3161
        %v3272 = vpop.permute.xlu0 %3271
        %3275 = vset.pattern.permute.xlu0 0
        %3276 = vperm.xlu0 %3275, %v3162
        %v3277 = vpop.permute.xlu0 %3276
        %3280 = vset.pattern.permute.xlu0 0
        %3281 = vperm.xlu0 %3280, %v3163
        %v3282 = vpop.permute.xlu0 %3281
        %3285 = vset.pattern.permute.xlu0 0
        %3286 = vperm.xlu0 %3285, %v3164
        %v3287 = vpop.permute.xlu0 %3286
        %3290 = vset.pattern.permute.xlu0 0
        %3291 = vperm.xlu0 %3290, %v3165
        %v3292 = vpop.permute.xlu0 %3291
        %3295 = vset.pattern.permute.xlu0 0
        %3296 = vperm.xlu0 %3295, %v3166
        %v3297 = vpop.permute.xlu0 %3296
        %3300 = vset.pattern.permute.xlu0 0
        %3301 = vperm.xlu0 %3300, %v3167
        %v3302 = vpop.permute.xlu0 %3301
        %3305 = vset.pattern.permute.xlu0 0
        %3306 = vperm.xlu0 %3305, %v3168
        %v3307 = vpop.permute.xlu0 %3306
        %3310 = vset.pattern.permute.xlu0 0
        %3311 = vperm.xlu0 %3310, %v3169
        %v3312 = vpop.permute.xlu0 %3311
        %3315 = vset.pattern.permute.xlu0 0
        %3316 = vperm.xlu0 %3315, %v3170
        %v3317 = vpop.permute.xlu0 %3316
        %3320 = vset.pattern.permute.xlu0 0
        %3321 = vperm.xlu0 %3320, %v3171
        %v3322 = vpop.permute.xlu0 %3321
        %3325 = vset.pattern.permute.xlu0 0
        %3326 = vperm.xlu0 %3325, %v3172
        %v3327 = vpop.permute.xlu0 %3326
        %3330 = vset.pattern.permute.xlu0 0
        %3331 = vperm.xlu0 %3330, %v3173
        %v3332 = vpop.permute.xlu0 %3331
        %v3335 = vlaneseq
        %v3336 = vshrl.u32 %v3335, 7
        %v3337 = vsub.s32 0, %v3336
        %v3338 = vrot.slane %v1204, %v3337
        %v3340 = vmul.f32 %v3177, %v3338
        %v3341 = vmul.f32 %v3182, %v3338
        %v3342 = vmul.f32 %v3187, %v3338
        %v3343 = vmul.f32 %v3192, %v3338
        %v3344 = vmul.f32 %v3197, %v3338
        %v3345 = vmul.f32 %v3202, %v3338
        %v3346 = vmul.f32 %v3207, %v3338
        %v3347 = vmul.f32 %v3212, %v3338
        %v3348 = vmul.f32 %v3217, %v3338
        %v3349 = vmul.f32 %v3222, %v3338
        %v3350 = vmul.f32 %v3227, %v3338
        %v3351 = vmul.f32 %v3232, %v3338
        %v3352 = vmul.f32 %v3237, %v3338
        %v3353 = vmul.f32 %v3242, %v3338
        %v3354 = vmul.f32 %v3247, %v3338
        %v3355 = vmul.f32 %v3252, %v3338
        %v3356 = vmul.f32 %v3257, %v3338
        %v3357 = vmul.f32 %v3262, %v3338
        %v3358 = vmul.f32 %v3267, %v3338
        %v3359 = vmul.f32 %v3272, %v3338
        %v3360 = vmul.f32 %v3277, %v3338
        %v3361 = vmul.f32 %v3282, %v3338
        %v3362 = vmul.f32 %v3287, %v3338
        %v3363 = vmul.f32 %v3292, %v3338
        %v3364 = vmul.f32 %v3297, %v3338
        %v3365 = vmul.f32 %v3302, %v3338
        %v3366 = vmul.f32 %v3307, %v3338
        %v3367 = vmul.f32 %v3312, %v3338
        %v3368 = vmul.f32 %v3317, %v3338
        %v3369 = vmul.f32 %v3322, %v3338
        %v3370 = vmul.f32 %v3327, %v3338
        %v3371 = vmul.f32 %v3332, %v3338
        %v3372 = vadd.f32 %v3045, %v3340
        %v3373 = vadd.f32 %v3046, %v3341
        %v3374 = vadd.f32 %v3047, %v3342
        %v3375 = vadd.f32 %v3048, %v3343
        %v3376 = vadd.f32 %v3049, %v3344
        %v3377 = vadd.f32 %v3050, %v3345
        %v3378 = vadd.f32 %v3051, %v3346
        %v3379 = vadd.f32 %v3052, %v3347
        %v3380 = vadd.f32 %v3053, %v3348
        %v3381 = vadd.f32 %v3054, %v3349
        %v3382 = vadd.f32 %v3055, %v3350
        %v3383 = vadd.f32 %v3056, %v3351
        %v3384 = vadd.f32 %v3057, %v3352
        %v3385 = vadd.f32 %v3058, %v3353
        %v3386 = vadd.f32 %v3059, %v3354
        %v3387 = vadd.f32 %v3060, %v3355
        %v3388 = vadd.f32 %v3061, %v3356
        %v3389 = vadd.f32 %v3062, %v3357
        %v3390 = vadd.f32 %v3063, %v3358
        %v3391 = vadd.f32 %v3064, %v3359
        %v3392 = vadd.f32 %v3065, %v3360
        %v3393 = vadd.f32 %v3066, %v3361
        %v3394 = vadd.f32 %v3067, %v3362
        %v3395 = vadd.f32 %v3068, %v3363
        %v3396 = vadd.f32 %v3069, %v3364
        %v3397 = vadd.f32 %v3070, %v3365
        %v3398 = vadd.f32 %v3071, %v3366
        %v3399 = vadd.f32 %v3072, %v3367
        %v3400 = vadd.f32 %v3073, %v3368
        %v3401 = vadd.f32 %v3074, %v3369
        %v3402 = vadd.f32 %v3075, %v3370
        %v3403 = vadd.f32 %v3076, %v3371
        %v3404 = vmul.f32 %v3372, 0.2
        %v3405 = vmul.f32 %v3373, 0.2
        %v3406 = vmul.f32 %v3374, 0.2
        %v3407 = vmul.f32 %v3375, 0.2
        %v3408 = vmul.f32 %v3376, 0.2
        %v3409 = vmul.f32 %v3377, 0.2
        %v3410 = vmul.f32 %v3378, 0.2
        %v3411 = vmul.f32 %v3379, 0.2
        %v3412 = vmul.f32 %v3380, 0.2
        %v3413 = vmul.f32 %v3381, 0.2
        %v3414 = vmul.f32 %v3382, 0.2
        %v3415 = vmul.f32 %v3383, 0.2
        %v3416 = vmul.f32 %v3384, 0.2
        %v3417 = vmul.f32 %v3385, 0.2
        %v3418 = vmul.f32 %v3386, 0.2
        %v3419 = vmul.f32 %v3387, 0.2
        %v3420 = vmul.f32 %v3388, 0.2
        %v3421 = vmul.f32 %v3389, 0.2
        %v3422 = vmul.f32 %v3390, 0.2
        %v3423 = vmul.f32 %v3391, 0.2
        %v3424 = vmul.f32 %v3392, 0.2
        %v3425 = vmul.f32 %v3393, 0.2
        %v3426 = vmul.f32 %v3394, 0.2
        %v3427 = vmul.f32 %v3395, 0.2
        %v3428 = vmul.f32 %v3396, 0.2
        %v3429 = vmul.f32 %v3397, 0.2
        %v3430 = vmul.f32 %v3398, 0.2
        %v3431 = vmul.f32 %v3399, 0.2
        %v3432 = vmul.f32 %v3400, 0.2
        %v3433 = vmul.f32 %v3401, 0.2
        %v3434 = vmul.f32 %v3402, 0.2
        %v3435 = vmul.f32 %v3403, 0.2
        %v3436 = vmax.f32 %v3372, %v3404
        %v3437 = vmax.f32 %v3373, %v3405
        %v3438 = vmax.f32 %v3374, %v3406
        %v3439 = vmax.f32 %v3375, %v3407
        %v3440 = vmax.f32 %v3376, %v3408
        %v3441 = vmax.f32 %v3377, %v3409
        %v3442 = vmax.f32 %v3378, %v3410
        %v3443 = vmax.f32 %v3379, %v3411
        %v3444 = vmax.f32 %v3380, %v3412
        %v3445 = vmax.f32 %v3381, %v3413
        %v3446 = vmax.f32 %v3382, %v3414
        %v3447 = vmax.f32 %v3383, %v3415
        %v3448 = vmax.f32 %v3384, %v3416
        %v3449 = vmax.f32 %v3385, %v3417
        %v3450 = vmax.f32 %v3386, %v3418
        %v3451 = vmax.f32 %v3387, %v3419
        %v3452 = vmax.f32 %v3388, %v3420
        %v3453 = vmax.f32 %v3389, %v3421
        %v3454 = vmax.f32 %v3390, %v3422
        %v3455 = vmax.f32 %v3391, %v3423
        %v3456 = vmax.f32 %v3392, %v3424
        %v3457 = vmax.f32 %v3393, %v3425
        %v3458 = vmax.f32 %v3394, %v3426
        %v3459 = vmax.f32 %v3395, %v3427
        %v3460 = vmax.f32 %v3396, %v3428
        %v3461 = vmax.f32 %v3397, %v3429
        %v3462 = vmax.f32 %v3398, %v3430
        %v3463 = vmax.f32 %v3399, %v3431
        %v3464 = vmax.f32 %v3400, %v3432
        %v3465 = vmax.f32 %v3401, %v3433
        %v3466 = vmax.f32 %v3402, %v3434
        %v3467 = vmax.f32 %v3403, %v3435
        %v3468 = vrot.slane %v3436, 5
        %v3469 = vrot.slane %v3437, 5
        %v3470 = vrot.slane %v3438, 5
        %v3471 = vrot.slane %v3439, 5
        %v3472 = vrot.slane %v3440, 5
        %v3473 = vrot.slane %v3441, 5
        %v3474 = vrot.slane %v3442, 5
        %v3475 = vrot.slane %v3443, 5
        %v3476 = vrot.slane %v3444, 5
        %v3477 = vrot.slane %v3445, 5
        %v3478 = vrot.slane %v3446, 5
        %v3479 = vrot.slane %v3447, 5
        %v3480 = vrot.slane %v3448, 5
        %v3481 = vrot.slane %v3449, 5
        %v3482 = vrot.slane %v3450, 5
        %v3483 = vrot.slane %v3451, 5
        %v3484 = vrot.slane %v3452, 5
        %v3485 = vrot.slane %v3453, 5
        %v3486 = vrot.slane %v3454, 5
        %v3487 = vrot.slane %v3455, 5
        %v3488 = vrot.slane %v3456, 5
        %v3489 = vrot.slane %v3457, 5
        %v3490 = vrot.slane %v3458, 5
        %v3491 = vrot.slane %v3459, 5
        %v3492 = vrot.slane %v3460, 5
        %v3493 = vrot.slane %v3461, 5
        %v3494 = vrot.slane %v3462, 5
        %v3495 = vrot.slane %v3463, 5
        %v3496 = vrot.slane %v3464, 5
        %v3497 = vrot.slane %v3465, 5
        %v3498 = vrot.slane %v3466, 5
        %v3499 = vrot.slane %v3467, 5
        %v3500 = vsel %vm1238, %v3498, %v3499
        %v3501 = vsel %vm1238, %v3497, %v3498
        %v3502 = vsel %vm1238, %v3496, %v3497
        %v3503 = vsel %vm1238, %v3495, %v3496
        %v3504 = vsel %vm1238, %v3494, %v3495
        %v3505 = vsel %vm1238, %v3493, %v3494
        %v3506 = vsel %vm1238, %v3492, %v3493
        %v3507 = vsel %vm1238, %v3491, %v3492
        %v3508 = vsel %vm1238, %v3490, %v3491
        %v3509 = vsel %vm1238, %v3489, %v3490
        %v3510 = vsel %vm1238, %v3488, %v3489
        %v3511 = vsel %vm1238, %v3487, %v3488
        %v3512 = vsel %vm1238, %v3486, %v3487
        %v3513 = vsel %vm1238, %v3485, %v3486
        %v3514 = vsel %vm1238, %v3484, %v3485
        %v3515 = vsel %vm1238, %v3483, %v3484
        %v3516 = vsel %vm1238, %v3482, %v3483
        %v3517 = vsel %vm1238, %v3481, %v3482
        %v3518 = vsel %vm1238, %v3480, %v3481
        %v3519 = vsel %vm1238, %v3479, %v3480
        %v3520 = vsel %vm1238, %v3478, %v3479
        %v3521 = vsel %vm1238, %v3477, %v3478
        %v3522 = vsel %vm1238, %v3476, %v3477
        %v3523 = vsel %vm1238, %v3475, %v3476
        %v3524 = vsel %vm1238, %v3474, %v3475
        %v3525 = vsel %vm1238, %v3473, %v3474
        %v3526 = vsel %vm1238, %v3472, %v3473
        %v3527 = vsel %vm1238, %v3471, %v3472
        %v3528 = vsel %vm1238, %v3470, %v3471
        %v3529 = vsel %vm1238, %v3469, %v3470
        %v3530 = vsel %vm1238, %v3468, %v3469
        %v3531 = vsel %vm1238, %v3499, %v3468
        %v3532 = vmul.f32 %v3531, %v870
        %v3533 = vmul.f32 %v3530, %v871
        %v3534 = vmul.f32 %v3529, %v872
        %v3535 = vmul.f32 %v3528, %v873
        %v3536 = vmul.f32 %v3527, %v874
        %v3537 = vmul.f32 %v3526, %v875
        %v3538 = vmul.f32 %v3525, %v876
        %v3539 = vmul.f32 %v3524, %v877
        %v3540 = vmul.f32 %v3523, %v870
        %v3541 = vmul.f32 %v3522, %v871
        %v3542 = vmul.f32 %v3521, %v872
        %v3543 = vmul.f32 %v3520, %v873
        %v3544 = vmul.f32 %v3519, %v874
        %v3545 = vmul.f32 %v3518, %v875
        %v3546 = vmul.f32 %v3517, %v876
        %v3547 = vmul.f32 %v3516, %v877
        %v3548 = vmul.f32 %v3515, %v870
        %v3549 = vmul.f32 %v3514, %v871
        %v3550 = vmul.f32 %v3513, %v872
        %v3551 = vmul.f32 %v3512, %v873
        %v3552 = vmul.f32 %v3511, %v874
        %v3553 = vmul.f32 %v3510, %v875
        %v3554 = vmul.f32 %v3509, %v876
        %v3555 = vmul.f32 %v3508, %v877
        %v3556 = vmul.f32 %v3507, %v870
        %v3557 = vmul.f32 %v3506, %v871
        %v3558 = vmul.f32 %v3505, %v872
        %v3559 = vmul.f32 %v3504, %v873
        %v3560 = vmul.f32 %v3503, %v874
        %v3561 = vmul.f32 %v3502, %v875
        %v3562 = vmul.f32 %v3501, %v876
        %v3563 = vmul.f32 %v3500, %v877
        %v3564 = vrot.slane %v3436, 6
        %v3565 = vrot.slane %v3437, 6
        %v3566 = vrot.slane %v3438, 6
        %v3567 = vrot.slane %v3439, 6
        %v3568 = vrot.slane %v3440, 6
        %v3569 = vrot.slane %v3441, 6
        %v3570 = vrot.slane %v3442, 6
        %v3571 = vrot.slane %v3443, 6
        %v3572 = vrot.slane %v3444, 6
        %v3573 = vrot.slane %v3445, 6
        %v3574 = vrot.slane %v3446, 6
        %v3575 = vrot.slane %v3447, 6
        %v3576 = vrot.slane %v3448, 6
        %v3577 = vrot.slane %v3449, 6
        %v3578 = vrot.slane %v3450, 6
        %v3579 = vrot.slane %v3451, 6
        %v3580 = vrot.slane %v3452, 6
        %v3581 = vrot.slane %v3453, 6
        %v3582 = vrot.slane %v3454, 6
        %v3583 = vrot.slane %v3455, 6
        %v3584 = vrot.slane %v3456, 6
        %v3585 = vrot.slane %v3457, 6
        %v3586 = vrot.slane %v3458, 6
        %v3587 = vrot.slane %v3459, 6
        %v3588 = vrot.slane %v3460, 6
        %v3589 = vrot.slane %v3461, 6
        %v3590 = vrot.slane %v3462, 6
        %v3591 = vrot.slane %v3463, 6
        %v3592 = vrot.slane %v3464, 6
        %v3593 = vrot.slane %v3465, 6
        %v3594 = vrot.slane %v3466, 6
        %v3595 = vrot.slane %v3467, 6
        %v3596 = vsel %vm1571, %v3594, %v3595
        %v3597 = vsel %vm1571, %v3593, %v3594
        %v3598 = vsel %vm1571, %v3592, %v3593
        %v3599 = vsel %vm1571, %v3591, %v3592
        %v3600 = vsel %vm1571, %v3590, %v3591
        %v3601 = vsel %vm1571, %v3589, %v3590
        %v3602 = vsel %vm1571, %v3588, %v3589
        %v3603 = vsel %vm1571, %v3587, %v3588
        %v3604 = vsel %vm1571, %v3586, %v3587
        %v3605 = vsel %vm1571, %v3585, %v3586
        %v3606 = vsel %vm1571, %v3584, %v3585
        %v3607 = vsel %vm1571, %v3583, %v3584
        %v3608 = vsel %vm1571, %v3582, %v3583
        %v3609 = vsel %vm1571, %v3581, %v3582
        %v3610 = vsel %vm1571, %v3580, %v3581
        %v3611 = vsel %vm1571, %v3579, %v3580
        %v3612 = vsel %vm1571, %v3578, %v3579
        %v3613 = vsel %vm1571, %v3577, %v3578
        %v3614 = vsel %vm1571, %v3576, %v3577
        %v3615 = vsel %vm1571, %v3575, %v3576
        %v3616 = vsel %vm1571, %v3574, %v3575
        %v3617 = vsel %vm1571, %v3573, %v3574
        %v3618 = vsel %vm1571, %v3572, %v3573
        %v3619 = vsel %vm1571, %v3571, %v3572
        %v3620 = vsel %vm1571, %v3570, %v3571
        %v3621 = vsel %vm1571, %v3569, %v3570
        %v3622 = vsel %vm1571, %v3568, %v3569
        %v3623 = vsel %vm1571, %v3567, %v3568
        %v3624 = vsel %vm1571, %v3566, %v3567
        %v3625 = vsel %vm1571, %v3565, %v3566
        %v3626 = vsel %vm1571, %v3564, %v3565
        %v3627 = vsel %vm1571, %v3595, %v3564
        %v3628 = vmul.f32 %v3627, %v918
        %v3629 = vmul.f32 %v3626, %v919
        %v3630 = vmul.f32 %v3625, %v920
        %v3631 = vmul.f32 %v3624, %v921
        %v3632 = vmul.f32 %v3623, %v922
        %v3633 = vmul.f32 %v3622, %v923
        %v3634 = vmul.f32 %v3621, %v924
        %v3635 = vmul.f32 %v3620, %v925
        %v3636 = vmul.f32 %v3619, %v918
        %v3637 = vmul.f32 %v3618, %v919
        %v3638 = vmul.f32 %v3617, %v920
        %v3639 = vmul.f32 %v3616, %v921
        %v3640 = vmul.f32 %v3615, %v922
        %v3641 = vmul.f32 %v3614, %v923
        %v3642 = vmul.f32 %v3613, %v924
        %v3643 = vmul.f32 %v3612, %v925
        %v3644 = vmul.f32 %v3611, %v918
        %v3645 = vmul.f32 %v3610, %v919
        %v3646 = vmul.f32 %v3609, %v920
        %v3647 = vmul.f32 %v3608, %v921
        %v3648 = vmul.f32 %v3607, %v922
        %v3649 = vmul.f32 %v3606, %v923
        %v3650 = vmul.f32 %v3605, %v924
        %v3651 = vmul.f32 %v3604, %v925
        %v3652 = vmul.f32 %v3603, %v918
        %v3653 = vmul.f32 %v3602, %v919
        %v3654 = vmul.f32 %v3601, %v920
        %v3655 = vmul.f32 %v3600, %v921
        %v3656 = vmul.f32 %v3599, %v922
        %v3657 = vmul.f32 %v3598, %v923
        %v3658 = vmul.f32 %v3597, %v924
        %v3659 = vmul.f32 %v3596, %v925
        %v3660 = vrot.slane %v3436, 7
        %v3661 = vrot.slane %v3437, 7
        %v3662 = vrot.slane %v3438, 7
        %v3663 = vrot.slane %v3439, 7
        %v3664 = vrot.slane %v3440, 7
        %v3665 = vrot.slane %v3441, 7
        %v3666 = vrot.slane %v3442, 7
        %v3667 = vrot.slane %v3443, 7
        %v3668 = vrot.slane %v3444, 7
        %v3669 = vrot.slane %v3445, 7
        %v3670 = vrot.slane %v3446, 7
        %v3671 = vrot.slane %v3447, 7
        %v3672 = vrot.slane %v3448, 7
        %v3673 = vrot.slane %v3449, 7
        %v3674 = vrot.slane %v3450, 7
        %v3675 = vrot.slane %v3451, 7
        %v3676 = vrot.slane %v3452, 7
        %v3677 = vrot.slane %v3453, 7
        %v3678 = vrot.slane %v3454, 7
        %v3679 = vrot.slane %v3455, 7
        %v3680 = vrot.slane %v3456, 7
        %v3681 = vrot.slane %v3457, 7
        %v3682 = vrot.slane %v3458, 7
        %v3683 = vrot.slane %v3459, 7
        %v3684 = vrot.slane %v3460, 7
        %v3685 = vrot.slane %v3461, 7
        %v3686 = vrot.slane %v3462, 7
        %v3687 = vrot.slane %v3463, 7
        %v3688 = vrot.slane %v3464, 7
        %v3689 = vrot.slane %v3465, 7
        %v3690 = vrot.slane %v3466, 7
        %v3691 = vrot.slane %v3467, 7
        %v3692 = vsel %vm1898, %v3690, %v3691
        %v3693 = vsel %vm1898, %v3689, %v3690
        %v3694 = vsel %vm1898, %v3688, %v3689
        %v3695 = vsel %vm1898, %v3687, %v3688
        %v3696 = vsel %vm1898, %v3686, %v3687
        %v3697 = vsel %vm1898, %v3685, %v3686
        %v3698 = vsel %vm1898, %v3684, %v3685
        %v3699 = vsel %vm1898, %v3683, %v3684
        %v3700 = vsel %vm1898, %v3682, %v3683
        %v3701 = vsel %vm1898, %v3681, %v3682
        %v3702 = vsel %vm1898, %v3680, %v3681
        %v3703 = vsel %vm1898, %v3679, %v3680
        %v3704 = vsel %vm1898, %v3678, %v3679
        %v3705 = vsel %vm1898, %v3677, %v3678
        %v3706 = vsel %vm1898, %v3676, %v3677
        %v3707 = vsel %vm1898, %v3675, %v3676
        %v3708 = vsel %vm1898, %v3674, %v3675
        %v3709 = vsel %vm1898, %v3673, %v3674
        %v3710 = vsel %vm1898, %v3672, %v3673
        %v3711 = vsel %vm1898, %v3671, %v3672
        %v3712 = vsel %vm1898, %v3670, %v3671
        %v3713 = vsel %vm1898, %v3669, %v3670
        %v3714 = vsel %vm1898, %v3668, %v3669
        %v3715 = vsel %vm1898, %v3667, %v3668
        %v3716 = vsel %vm1898, %v3666, %v3667
        %v3717 = vsel %vm1898, %v3665, %v3666
        %v3718 = vsel %vm1898, %v3664, %v3665
        %v3719 = vsel %vm1898, %v3663, %v3664
        %v3720 = vsel %vm1898, %v3662, %v3663
        %v3721 = vsel %vm1898, %v3661, %v3662
        %v3722 = vsel %vm1898, %v3660, %v3661
        %v3723 = vsel %vm1898, %v3691, %v3660
        %v3724 = vmul.f32 %v3723, %v966
        %v3725 = vmul.f32 %v3722, %v967
        %v3726 = vmul.f32 %v3721, %v968
        %v3727 = vmul.f32 %v3720, %v969
        %v3728 = vmul.f32 %v3719, %v970
        %v3729 = vmul.f32 %v3718, %v971
        %v3730 = vmul.f32 %v3717, %v972
        %v3731 = vmul.f32 %v3716, %v973
        %v3732 = vmul.f32 %v3715, %v966
        %v3733 = vmul.f32 %v3714, %v967
        %v3734 = vmul.f32 %v3713, %v968
        %v3735 = vmul.f32 %v3712, %v969
        %v3736 = vmul.f32 %v3711, %v970
        %v3737 = vmul.f32 %v3710, %v971
        %v3738 = vmul.f32 %v3709, %v972
        %v3739 = vmul.f32 %v3708, %v973
        %v3740 = vmul.f32 %v3707, %v966
        %v3741 = vmul.f32 %v3706, %v967
        %v3742 = vmul.f32 %v3705, %v968
        %v3743 = vmul.f32 %v3704, %v969
        %v3744 = vmul.f32 %v3703, %v970
        %v3745 = vmul.f32 %v3702, %v971
        %v3746 = vmul.f32 %v3701, %v972
        %v3747 = vmul.f32 %v3700, %v973
        %v3748 = vmul.f32 %v3699, %v966
        %v3749 = vmul.f32 %v3698, %v967
        %v3750 = vmul.f32 %v3697, %v968
        %v3751 = vmul.f32 %v3696, %v969
        %v3752 = vmul.f32 %v3695, %v970
        %v3753 = vmul.f32 %v3694, %v971
        %v3754 = vmul.f32 %v3693, %v972
        %v3755 = vmul.f32 %v3692, %v973
        %v3756 = vrot.slane %v3436, 1
        %v3757 = vrot.slane %v3437, 1
        %v3758 = vrot.slane %v3438, 1
        %v3759 = vrot.slane %v3439, 1
        %v3760 = vrot.slane %v3440, 1
        %v3761 = vrot.slane %v3441, 1
        %v3762 = vrot.slane %v3442, 1
        %v3763 = vrot.slane %v3443, 1
        %v3764 = vrot.slane %v3444, 1
        %v3765 = vrot.slane %v3445, 1
        %v3766 = vrot.slane %v3446, 1
        %v3767 = vrot.slane %v3447, 1
        %v3768 = vrot.slane %v3448, 1
        %v3769 = vrot.slane %v3449, 1
        %v3770 = vrot.slane %v3450, 1
        %v3771 = vrot.slane %v3451, 1
        %v3772 = vrot.slane %v3452, 1
        %v3773 = vrot.slane %v3453, 1
        %v3774 = vrot.slane %v3454, 1
        %v3775 = vrot.slane %v3455, 1
        %v3776 = vrot.slane %v3456, 1
        %v3777 = vrot.slane %v3457, 1
        %v3778 = vrot.slane %v3458, 1
        %v3779 = vrot.slane %v3459, 1
        %v3780 = vrot.slane %v3460, 1
        %v3781 = vrot.slane %v3461, 1
        %v3782 = vrot.slane %v3462, 1
        %v3783 = vrot.slane %v3463, 1
        %v3784 = vrot.slane %v3464, 1
        %v3785 = vrot.slane %v3465, 1
        %v3786 = vrot.slane %v3466, 1
        %v3787 = vrot.slane %v3467, 1
        %v3788 = vsel %vm2455, %v3786, %v3787
        %v3789 = vsel %vm2455, %v3785, %v3786
        %v3790 = vsel %vm2455, %v3784, %v3785
        %v3791 = vsel %vm2455, %v3783, %v3784
        %v3792 = vsel %vm2455, %v3782, %v3783
        %v3793 = vsel %vm2455, %v3781, %v3782
        %v3794 = vsel %vm2455, %v3780, %v3781
        %v3795 = vsel %vm2455, %v3779, %v3780
        %v3796 = vsel %vm2455, %v3778, %v3779
        %v3797 = vsel %vm2455, %v3777, %v3778
        %v3798 = vsel %vm2455, %v3776, %v3777
        %v3799 = vsel %vm2455, %v3775, %v3776
        %v3800 = vsel %vm2455, %v3774, %v3775
        %v3801 = vsel %vm2455, %v3773, %v3774
        %v3802 = vsel %vm2455, %v3772, %v3773
        %v3803 = vsel %vm2455, %v3771, %v3772
        %v3804 = vsel %vm2455, %v3770, %v3771
        %v3805 = vsel %vm2455, %v3769, %v3770
        %v3806 = vsel %vm2455, %v3768, %v3769
        %v3807 = vsel %vm2455, %v3767, %v3768
        %v3808 = vsel %vm2455, %v3766, %v3767
        %v3809 = vsel %vm2455, %v3765, %v3766
        %v3810 = vsel %vm2455, %v3764, %v3765
        %v3811 = vsel %vm2455, %v3763, %v3764
        %v3812 = vsel %vm2455, %v3762, %v3763
        %v3813 = vsel %vm2455, %v3761, %v3762
        %v3814 = vsel %vm2455, %v3760, %v3761
        %v3815 = vsel %vm2455, %v3759, %v3760
        %v3816 = vsel %vm2455, %v3758, %v3759
        %v3817 = vsel %vm2455, %v3757, %v3758
        %v3818 = vsel %vm2455, %v3756, %v3757
        %v3819 = vsel %vm2455, %v3787, %v3756
        %v3820 = vmul.f32 %v3818, %v1014
        %v3821 = vmul.f32 %v3817, %v1015
        %v3822 = vmul.f32 %v3816, %v1016
        %v3823 = vmul.f32 %v3815, %v1017
        %v3824 = vmul.f32 %v3814, %v1018
        %v3825 = vmul.f32 %v3813, %v1019
        %v3826 = vmul.f32 %v3812, %v1020
        %v3827 = vmul.f32 %v3811, %v1021
        %v3828 = vmul.f32 %v3810, %v1014
        %v3829 = vmul.f32 %v3809, %v1015
        %v3830 = vmul.f32 %v3808, %v1016
        %v3831 = vmul.f32 %v3807, %v1017
        %v3832 = vmul.f32 %v3806, %v1018
        %v3833 = vmul.f32 %v3805, %v1019
        %v3834 = vmul.f32 %v3804, %v1020
        %v3835 = vmul.f32 %v3803, %v1021
        %v3836 = vmul.f32 %v3802, %v1014
        %v3837 = vmul.f32 %v3801, %v1015
        %v3838 = vmul.f32 %v3800, %v1016
        %v3839 = vmul.f32 %v3799, %v1017
        %v3840 = vmul.f32 %v3798, %v1018
        %v3841 = vmul.f32 %v3797, %v1019
        %v3842 = vmul.f32 %v3796, %v1020
        %v3843 = vmul.f32 %v3795, %v1021
        %v3844 = vmul.f32 %v3794, %v1014
        %v3845 = vmul.f32 %v3793, %v1015
        %v3846 = vmul.f32 %v3792, %v1016
        %v3847 = vmul.f32 %v3791, %v1017
        %v3848 = vmul.f32 %v3790, %v1018
        %v3849 = vmul.f32 %v3789, %v1019
        %v3850 = vmul.f32 %v3788, %v1020
        %v3851 = vmul.f32 %v3819, %v1021
        %v3852 = vrot.slane %v3436, 2
        %v3853 = vrot.slane %v3437, 2
        %v3854 = vrot.slane %v3438, 2
        %v3855 = vrot.slane %v3439, 2
        %v3856 = vrot.slane %v3440, 2
        %v3857 = vrot.slane %v3441, 2
        %v3858 = vrot.slane %v3442, 2
        %v3859 = vrot.slane %v3443, 2
        %v3860 = vrot.slane %v3444, 2
        %v3861 = vrot.slane %v3445, 2
        %v3862 = vrot.slane %v3446, 2
        %v3863 = vrot.slane %v3447, 2
        %v3864 = vrot.slane %v3448, 2
        %v3865 = vrot.slane %v3449, 2
        %v3866 = vrot.slane %v3450, 2
        %v3867 = vrot.slane %v3451, 2
        %v3868 = vrot.slane %v3452, 2
        %v3869 = vrot.slane %v3453, 2
        %v3870 = vrot.slane %v3454, 2
        %v3871 = vrot.slane %v3455, 2
        %v3872 = vrot.slane %v3456, 2
        %v3873 = vrot.slane %v3457, 2
        %v3874 = vrot.slane %v3458, 2
        %v3875 = vrot.slane %v3459, 2
        %v3876 = vrot.slane %v3460, 2
        %v3877 = vrot.slane %v3461, 2
        %v3878 = vrot.slane %v3462, 2
        %v3879 = vrot.slane %v3463, 2
        %v3880 = vrot.slane %v3464, 2
        %v3881 = vrot.slane %v3465, 2
        %v3882 = vrot.slane %v3466, 2
        %v3883 = vrot.slane %v3467, 2
        %v3884 = vsel %vm2782, %v3882, %v3883
        %v3885 = vsel %vm2782, %v3881, %v3882
        %v3886 = vsel %vm2782, %v3880, %v3881
        %v3887 = vsel %vm2782, %v3879, %v3880
        %v3888 = vsel %vm2782, %v3878, %v3879
        %v3889 = vsel %vm2782, %v3877, %v3878
        %v3890 = vsel %vm2782, %v3876, %v3877
        %v3891 = vsel %vm2782, %v3875, %v3876
        %v3892 = vsel %vm2782, %v3874, %v3875
        %v3893 = vsel %vm2782, %v3873, %v3874
        %v3894 = vsel %vm2782, %v3872, %v3873
        %v3895 = vsel %vm2782, %v3871, %v3872
        %v3896 = vsel %vm2782, %v3870, %v3871
        %v3897 = vsel %vm2782, %v3869, %v3870
        %v3898 = vsel %vm2782, %v3868, %v3869
        %v3899 = vsel %vm2782, %v3867, %v3868
        %v3900 = vsel %vm2782, %v3866, %v3867
        %v3901 = vsel %vm2782, %v3865, %v3866
        %v3902 = vsel %vm2782, %v3864, %v3865
        %v3903 = vsel %vm2782, %v3863, %v3864
        %v3904 = vsel %vm2782, %v3862, %v3863
        %v3905 = vsel %vm2782, %v3861, %v3862
        %v3906 = vsel %vm2782, %v3860, %v3861
        %v3907 = vsel %vm2782, %v3859, %v3860
        %v3908 = vsel %vm2782, %v3858, %v3859
        %v3909 = vsel %vm2782, %v3857, %v3858
        %v3910 = vsel %vm2782, %v3856, %v3857
        %v3911 = vsel %vm2782, %v3855, %v3856
        %v3912 = vsel %vm2782, %v3854, %v3855
        %v3913 = vsel %vm2782, %v3853, %v3854
        %v3914 = vsel %vm2782, %v3852, %v3853
        %v3915 = vsel %vm2782, %v3883, %v3852
        %v3916 = vmul.f32 %v3914, %v1062
        %v3917 = vmul.f32 %v3913, %v1063
        %v3918 = vmul.f32 %v3912, %v1064
        %v3919 = vmul.f32 %v3911, %v1065
        %v3920 = vmul.f32 %v3910, %v1066
        %v3921 = vmul.f32 %v3909, %v1067
        %v3922 = vmul.f32 %v3908, %v1068
        %v3923 = vmul.f32 %v3907, %v1069
        %v3924 = vmul.f32 %v3906, %v1062
        %v3925 = vmul.f32 %v3905, %v1063
        %v3926 = vmul.f32 %v3904, %v1064
        %v3927 = vmul.f32 %v3903, %v1065
        %v3928 = vmul.f32 %v3902, %v1066
        %v3929 = vmul.f32 %v3901, %v1067
        %v3930 = vmul.f32 %v3900, %v1068
        %v3931 = vmul.f32 %v3899, %v1069
        %v3932 = vmul.f32 %v3898, %v1062
        %v3933 = vmul.f32 %v3897, %v1063
        %v3934 = vmul.f32 %v3896, %v1064
        %v3935 = vmul.f32 %v3895, %v1065
        %v3936 = vmul.f32 %v3894, %v1066
        %v3937 = vmul.f32 %v3893, %v1067
        %v3938 = vmul.f32 %v3892, %v1068
        %v3939 = vmul.f32 %v3891, %v1069
        %v3940 = vmul.f32 %v3890, %v1062
        %v3941 = vmul.f32 %v3889, %v1063
        %v3942 = vmul.f32 %v3888, %v1064
        %v3943 = vmul.f32 %v3887, %v1065
        %v3944 = vmul.f32 %v3886, %v1066
        %v3945 = vmul.f32 %v3885, %v1067
        %v3946 = vmul.f32 %v3884, %v1068
        %v3947 = vmul.f32 %v3915, %v1069
        %v3948 = vrot.slane %v3436, 3
        %v3949 = vrot.slane %v3437, 3
        %v3950 = vrot.slane %v3438, 3
        %v3951 = vrot.slane %v3439, 3
        %v3952 = vrot.slane %v3440, 3
        %v3953 = vrot.slane %v3441, 3
        %v3954 = vrot.slane %v3442, 3
        %v3955 = vrot.slane %v3443, 3
        %v3956 = vrot.slane %v3444, 3
        %v3957 = vrot.slane %v3445, 3
        %v3958 = vrot.slane %v3446, 3
        %v3959 = vrot.slane %v3447, 3
        %v3960 = vrot.slane %v3448, 3
        %v3961 = vrot.slane %v3449, 3
        %v3962 = vrot.slane %v3450, 3
        %v3963 = vrot.slane %v3451, 3
        %v3964 = vrot.slane %v3452, 3
        %v3965 = vrot.slane %v3453, 3
        %v3966 = vrot.slane %v3454, 3
        %v3967 = vrot.slane %v3455, 3
        %v3968 = vrot.slane %v3456, 3
        %v3969 = vrot.slane %v3457, 3
        %v3970 = vrot.slane %v3458, 3
        %v3971 = vrot.slane %v3459, 3
        %v3972 = vrot.slane %v3460, 3
        %v3973 = vrot.slane %v3461, 3
        %v3974 = vrot.slane %v3462, 3
        %v3975 = vrot.slane %v3463, 3
        %v3976 = vrot.slane %v3464, 3
        %v3977 = vrot.slane %v3465, 3
        %v3978 = vrot.slane %v3466, 3
        %v3979 = vrot.slane %v3467, 3
        %v3980 = vsel %vm3109, %v3978, %v3979
        %v3981 = vsel %vm3109, %v3977, %v3978
        %v3982 = vsel %vm3109, %v3976, %v3977
        %v3983 = vsel %vm3109, %v3975, %v3976
        %v3984 = vsel %vm3109, %v3974, %v3975
        %v3985 = vsel %vm3109, %v3973, %v3974
        %v3986 = vsel %vm3109, %v3972, %v3973
        %v3987 = vsel %vm3109, %v3971, %v3972
        %v3988 = vsel %vm3109, %v3970, %v3971
        %v3989 = vsel %vm3109, %v3969, %v3970
        %v3990 = vsel %vm3109, %v3968, %v3969
        %v3991 = vsel %vm3109, %v3967, %v3968
        %v3992 = vsel %vm3109, %v3966, %v3967
        %v3993 = vsel %vm3109, %v3965, %v3966
        %v3994 = vsel %vm3109, %v3964, %v3965
        %v3995 = vsel %vm3109, %v3963, %v3964
        %v3996 = vsel %vm3109, %v3962, %v3963
        %v3997 = vsel %vm3109, %v3961, %v3962
        %v3998 = vsel %vm3109, %v3960, %v3961
        %v3999 = vsel %vm3109, %v3959, %v3960
        %v4000 = vsel %vm3109, %v3958, %v3959
        %v4001 = vsel %vm3109, %v3957, %v3958
        %v4002 = vsel %vm3109, %v3956, %v3957
        %v4003 = vsel %vm3109, %v3955, %v3956
        %v4004 = vsel %vm3109, %v3954, %v3955
        %v4005 = vsel %vm3109, %v3953, %v3954
        %v4006 = vsel %vm3109, %v3952, %v3953
        %v4007 = vsel %vm3109, %v3951, %v3952
        %v4008 = vsel %vm3109, %v3950, %v3951
        %v4009 = vsel %vm3109, %v3949, %v3950
        %v4010 = vsel %vm3109, %v3948, %v3949
        %v4011 = vsel %vm3109, %v3979, %v3948
        %v4012 = vmul.f32 %v4010, %v1110
        %v4013 = vmul.f32 %v4009, %v1111
        %v4014 = vmul.f32 %v4008, %v1112
        %v4015 = vmul.f32 %v4007, %v1113
        %v4016 = vmul.f32 %v4006, %v1114
        %v4017 = vmul.f32 %v4005, %v1115
        %v4018 = vmul.f32 %v4004, %v1116
        %v4019 = vmul.f32 %v4003, %v1117
        %v4020 = vmul.f32 %v4002, %v1110
        %v4021 = vmul.f32 %v4001, %v1111
        %v4022 = vmul.f32 %v4000, %v1112
        %v4023 = vmul.f32 %v3999, %v1113
        %v4024 = vmul.f32 %v3998, %v1114
        %v4025 = vmul.f32 %v3997, %v1115
        %v4026 = vmul.f32 %v3996, %v1116
        %v4027 = vmul.f32 %v3995, %v1117
        %v4028 = vmul.f32 %v3994, %v1110
        %v4029 = vmul.f32 %v3993, %v1111
        %v4030 = vmul.f32 %v3992, %v1112
        %v4031 = vmul.f32 %v3991, %v1113
        %v4032 = vmul.f32 %v3990, %v1114
        %v4033 = vmul.f32 %v3989, %v1115
        %v4034 = vmul.f32 %v3988, %v1116
        %v4035 = vmul.f32 %v3987, %v1117
        %v4036 = vmul.f32 %v3986, %v1110
        %v4037 = vmul.f32 %v3985, %v1111
        %v4038 = vmul.f32 %v3984, %v1112
        %v4039 = vmul.f32 %v3983, %v1113
        %v4040 = vmul.f32 %v3982, %v1114
        %v4041 = vmul.f32 %v3981, %v1115
        %v4042 = vmul.f32 %v3980, %v1116
        %v4043 = vmul.f32 %v4011, %v1117
        %4076 = vrot.lane.b32.xlu0 %v3628, 16
        %v4077 = vpop.permute.xlu0 %4076
        %4078 = vrot.lane.b32.xlu0 %v3629, 16
        %v4079 = vpop.permute.xlu0 %4078
        %4080 = vrot.lane.b32.xlu0 %v3630, 16
        %v4081 = vpop.permute.xlu0 %4080
        %4082 = vrot.lane.b32.xlu0 %v3631, 16
        %v4083 = vpop.permute.xlu0 %4082
        %4084 = vrot.lane.b32.xlu0 %v3632, 16
        %v4085 = vpop.permute.xlu0 %4084
        %4086 = vrot.lane.b32.xlu0 %v3633, 16
        %v4087 = vpop.permute.xlu0 %4086
        %4088 = vrot.lane.b32.xlu0 %v3634, 16
        %v4089 = vpop.permute.xlu0 %4088
        %4090 = vrot.lane.b32.xlu0 %v3635, 16
        %v4091 = vpop.permute.xlu0 %4090
        %4092 = vrot.lane.b32.xlu0 %v3636, 16
        %v4093 = vpop.permute.xlu0 %4092
        %4094 = vrot.lane.b32.xlu0 %v3637, 16
        %v4095 = vpop.permute.xlu0 %4094
        %4096 = vrot.lane.b32.xlu0 %v3638, 16
        %v4097 = vpop.permute.xlu0 %4096
        %4098 = vrot.lane.b32.xlu0 %v3639, 16
        %v4099 = vpop.permute.xlu0 %4098
        %4100 = vrot.lane.b32.xlu0 %v3640, 16
        %v4101 = vpop.permute.xlu0 %4100
        %4102 = vrot.lane.b32.xlu0 %v3641, 16
        %v4103 = vpop.permute.xlu0 %4102
        %4104 = vrot.lane.b32.xlu0 %v3642, 16
        %v4105 = vpop.permute.xlu0 %4104
        %4106 = vrot.lane.b32.xlu0 %v3643, 16
        %v4107 = vpop.permute.xlu0 %4106
        %4108 = vrot.lane.b32.xlu0 %v3644, 16
        %v4109 = vpop.permute.xlu0 %4108
        %4110 = vrot.lane.b32.xlu0 %v3645, 16
        %v4111 = vpop.permute.xlu0 %4110
        %4112 = vrot.lane.b32.xlu0 %v3646, 16
        %v4113 = vpop.permute.xlu0 %4112
        %4114 = vrot.lane.b32.xlu0 %v3647, 16
        %v4115 = vpop.permute.xlu0 %4114
        %4116 = vrot.lane.b32.xlu0 %v3648, 16
        %v4117 = vpop.permute.xlu0 %4116
        %4118 = vrot.lane.b32.xlu0 %v3649, 16
        %v4119 = vpop.permute.xlu0 %4118
        %4120 = vrot.lane.b32.xlu0 %v3650, 16
        %v4121 = vpop.permute.xlu0 %4120
        %4122 = vrot.lane.b32.xlu0 %v3651, 16
        %v4123 = vpop.permute.xlu0 %4122
        %4124 = vrot.lane.b32.xlu0 %v3652, 16
        %v4125 = vpop.permute.xlu0 %4124
        %4126 = vrot.lane.b32.xlu0 %v3653, 16
        %v4127 = vpop.permute.xlu0 %4126
        %4128 = vrot.lane.b32.xlu0 %v3654, 16
        %v4129 = vpop.permute.xlu0 %4128
        %4130 = vrot.lane.b32.xlu0 %v3655, 16
        %v4131 = vpop.permute.xlu0 %4130
        %4132 = vrot.lane.b32.xlu0 %v3656, 16
        %v4133 = vpop.permute.xlu0 %4132
        %4134 = vrot.lane.b32.xlu0 %v3657, 16
        %v4135 = vpop.permute.xlu0 %4134
        %4136 = vrot.lane.b32.xlu0 %v3658, 16
        %v4137 = vpop.permute.xlu0 %4136
        %4138 = vrot.lane.b32.xlu0 %v3659, 16
        %v4139 = vpop.permute.xlu0 %4138
        %4204 = vrot.lane.b32.xlu0 %v3724, 32
        %v4205 = vpop.permute.xlu0 %4204
        %4206 = vrot.lane.b32.xlu0 %v3725, 32
        %v4207 = vpop.permute.xlu0 %4206
        %4208 = vrot.lane.b32.xlu0 %v3726, 32
        %v4209 = vpop.permute.xlu0 %4208
        %4210 = vrot.lane.b32.xlu0 %v3727, 32
        %v4211 = vpop.permute.xlu0 %4210
        %4212 = vrot.lane.b32.xlu0 %v3728, 32
        %v4213 = vpop.permute.xlu0 %4212
        %4214 = vrot.lane.b32.xlu0 %v3729, 32
        %v4215 = vpop.permute.xlu0 %4214
        %4216 = vrot.lane.b32.xlu0 %v3730, 32
        %v4217 = vpop.permute.xlu0 %4216
        %4218 = vrot.lane.b32.xlu0 %v3731, 32
        %v4219 = vpop.permute.xlu0 %4218
        %4220 = vrot.lane.b32.xlu0 %v3732, 32
        %v4221 = vpop.permute.xlu0 %4220
        %4222 = vrot.lane.b32.xlu0 %v3733, 32
        %v4223 = vpop.permute.xlu0 %4222
        %4224 = vrot.lane.b32.xlu0 %v3734, 32
        %v4225 = vpop.permute.xlu0 %4224
        %4226 = vrot.lane.b32.xlu0 %v3735, 32
        %v4227 = vpop.permute.xlu0 %4226
        %4228 = vrot.lane.b32.xlu0 %v3736, 32
        %v4229 = vpop.permute.xlu0 %4228
        %4230 = vrot.lane.b32.xlu0 %v3737, 32
        %v4231 = vpop.permute.xlu0 %4230
        %4232 = vrot.lane.b32.xlu0 %v3738, 32
        %v4233 = vpop.permute.xlu0 %4232
        %4234 = vrot.lane.b32.xlu0 %v3739, 32
        %v4235 = vpop.permute.xlu0 %4234
        %4236 = vrot.lane.b32.xlu0 %v3740, 32
        %v4237 = vpop.permute.xlu0 %4236
        %4238 = vrot.lane.b32.xlu0 %v3741, 32
        %v4239 = vpop.permute.xlu0 %4238
        %4240 = vrot.lane.b32.xlu0 %v3742, 32
        %v4241 = vpop.permute.xlu0 %4240
        %4242 = vrot.lane.b32.xlu0 %v3743, 32
        %v4243 = vpop.permute.xlu0 %4242
        %4244 = vrot.lane.b32.xlu0 %v3744, 32
        %v4245 = vpop.permute.xlu0 %4244
        %4246 = vrot.lane.b32.xlu0 %v3745, 32
        %v4247 = vpop.permute.xlu0 %4246
        %4248 = vrot.lane.b32.xlu0 %v3746, 32
        %v4249 = vpop.permute.xlu0 %4248
        %4250 = vrot.lane.b32.xlu0 %v3747, 32
        %v4251 = vpop.permute.xlu0 %4250
        %4252 = vrot.lane.b32.xlu0 %v3748, 32
        %v4253 = vpop.permute.xlu0 %4252
        %4254 = vrot.lane.b32.xlu0 %v3749, 32
        %v4255 = vpop.permute.xlu0 %4254
        %4256 = vrot.lane.b32.xlu0 %v3750, 32
        %v4257 = vpop.permute.xlu0 %4256
        %4258 = vrot.lane.b32.xlu0 %v3751, 32
        %v4259 = vpop.permute.xlu0 %4258
        %4260 = vrot.lane.b32.xlu0 %v3752, 32
        %v4261 = vpop.permute.xlu0 %4260
        %4262 = vrot.lane.b32.xlu0 %v3753, 32
        %v4263 = vpop.permute.xlu0 %4262
        %4264 = vrot.lane.b32.xlu0 %v3754, 32
        %v4265 = vpop.permute.xlu0 %4264
        %4266 = vrot.lane.b32.xlu0 %v3755, 32
        %v4267 = vpop.permute.xlu0 %4266
        %4332 = vrot.lane.b32.xlu0 %v3436, 48
        %v4333 = vpop.permute.xlu0 %4332
        %4334 = vrot.lane.b32.xlu0 %v3437, 48
        %v4335 = vpop.permute.xlu0 %4334
        %4336 = vrot.lane.b32.xlu0 %v3438, 48
        %v4337 = vpop.permute.xlu0 %4336
        %4338 = vrot.lane.b32.xlu0 %v3439, 48
        %v4339 = vpop.permute.xlu0 %4338
        %4340 = vrot.lane.b32.xlu0 %v3440, 48
        %v4341 = vpop.permute.xlu0 %4340
        %4342 = vrot.lane.b32.xlu0 %v3441, 48
        %v4343 = vpop.permute.xlu0 %4342
        %4344 = vrot.lane.b32.xlu0 %v3442, 48
        %v4345 = vpop.permute.xlu0 %4344
        %4346 = vrot.lane.b32.xlu0 %v3443, 48
        %v4347 = vpop.permute.xlu0 %4346
        %4348 = vrot.lane.b32.xlu0 %v3444, 48
        %v4349 = vpop.permute.xlu0 %4348
        %4350 = vrot.lane.b32.xlu0 %v3445, 48
        %v4351 = vpop.permute.xlu0 %4350
        %4352 = vrot.lane.b32.xlu0 %v3446, 48
        %v4353 = vpop.permute.xlu0 %4352
        %4354 = vrot.lane.b32.xlu0 %v3447, 48
        %v4355 = vpop.permute.xlu0 %4354
        %4356 = vrot.lane.b32.xlu0 %v3448, 48
        %v4357 = vpop.permute.xlu0 %4356
        %4358 = vrot.lane.b32.xlu0 %v3449, 48
        %v4359 = vpop.permute.xlu0 %4358
        %4360 = vrot.lane.b32.xlu0 %v3450, 48
        %v4361 = vpop.permute.xlu0 %4360
        %4362 = vrot.lane.b32.xlu0 %v3451, 48
        %v4363 = vpop.permute.xlu0 %4362
        %4364 = vrot.lane.b32.xlu0 %v3452, 48
        %v4365 = vpop.permute.xlu0 %4364
        %4366 = vrot.lane.b32.xlu0 %v3453, 48
        %v4367 = vpop.permute.xlu0 %4366
        %4368 = vrot.lane.b32.xlu0 %v3454, 48
        %v4369 = vpop.permute.xlu0 %4368
        %4370 = vrot.lane.b32.xlu0 %v3455, 48
        %v4371 = vpop.permute.xlu0 %4370
        %4372 = vrot.lane.b32.xlu0 %v3456, 48
        %v4373 = vpop.permute.xlu0 %4372
        %4374 = vrot.lane.b32.xlu0 %v3457, 48
        %v4375 = vpop.permute.xlu0 %4374
        %4376 = vrot.lane.b32.xlu0 %v3458, 48
        %v4377 = vpop.permute.xlu0 %4376
        %4378 = vrot.lane.b32.xlu0 %v3459, 48
        %v4379 = vpop.permute.xlu0 %4378
        %4380 = vrot.lane.b32.xlu0 %v3460, 48
        %v4381 = vpop.permute.xlu0 %4380
        %4382 = vrot.lane.b32.xlu0 %v3461, 48
        %v4383 = vpop.permute.xlu0 %4382
        %4384 = vrot.lane.b32.xlu0 %v3462, 48
        %v4385 = vpop.permute.xlu0 %4384
        %4386 = vrot.lane.b32.xlu0 %v3463, 48
        %v4387 = vpop.permute.xlu0 %4386
        %4388 = vrot.lane.b32.xlu0 %v3464, 48
        %v4389 = vpop.permute.xlu0 %4388
        %4390 = vrot.lane.b32.xlu0 %v3465, 48
        %v4391 = vpop.permute.xlu0 %4390
        %4392 = vrot.lane.b32.xlu0 %v3466, 48
        %v4393 = vpop.permute.xlu0 %4392
        %4394 = vrot.lane.b32.xlu0 %v3467, 48
        %v4395 = vpop.permute.xlu0 %4394
        %4460 = vrot.lane.b32.xlu0 %v3820, 64
        %v4461 = vpop.permute.xlu0 %4460
        %4462 = vrot.lane.b32.xlu0 %v3821, 64
        %v4463 = vpop.permute.xlu0 %4462
        %4464 = vrot.lane.b32.xlu0 %v3822, 64
        %v4465 = vpop.permute.xlu0 %4464
        %4466 = vrot.lane.b32.xlu0 %v3823, 64
        %v4467 = vpop.permute.xlu0 %4466
        %4468 = vrot.lane.b32.xlu0 %v3824, 64
        %v4469 = vpop.permute.xlu0 %4468
        %4470 = vrot.lane.b32.xlu0 %v3825, 64
        %v4471 = vpop.permute.xlu0 %4470
        %4472 = vrot.lane.b32.xlu0 %v3826, 64
        %v4473 = vpop.permute.xlu0 %4472
        %4474 = vrot.lane.b32.xlu0 %v3827, 64
        %v4475 = vpop.permute.xlu0 %4474
        %4476 = vrot.lane.b32.xlu0 %v3828, 64
        %v4477 = vpop.permute.xlu0 %4476
        %4478 = vrot.lane.b32.xlu0 %v3829, 64
        %v4479 = vpop.permute.xlu0 %4478
        %4480 = vrot.lane.b32.xlu0 %v3830, 64
        %v4481 = vpop.permute.xlu0 %4480
        %4482 = vrot.lane.b32.xlu0 %v3831, 64
        %v4483 = vpop.permute.xlu0 %4482
        %4484 = vrot.lane.b32.xlu0 %v3832, 64
        %v4485 = vpop.permute.xlu0 %4484
        %4486 = vrot.lane.b32.xlu0 %v3833, 64
        %v4487 = vpop.permute.xlu0 %4486
        %4488 = vrot.lane.b32.xlu0 %v3834, 64
        %v4489 = vpop.permute.xlu0 %4488
        %4490 = vrot.lane.b32.xlu0 %v3835, 64
        %v4491 = vpop.permute.xlu0 %4490
        %4492 = vrot.lane.b32.xlu0 %v3836, 64
        %v4493 = vpop.permute.xlu0 %4492
        %4494 = vrot.lane.b32.xlu0 %v3837, 64
        %v4495 = vpop.permute.xlu0 %4494
        %4496 = vrot.lane.b32.xlu0 %v3838, 64
        %v4497 = vpop.permute.xlu0 %4496
        %4498 = vrot.lane.b32.xlu0 %v3839, 64
        %v4499 = vpop.permute.xlu0 %4498
        %4500 = vrot.lane.b32.xlu0 %v3840, 64
        %v4501 = vpop.permute.xlu0 %4500
        %4502 = vrot.lane.b32.xlu0 %v3841, 64
        %v4503 = vpop.permute.xlu0 %4502
        %4504 = vrot.lane.b32.xlu0 %v3842, 64
        %v4505 = vpop.permute.xlu0 %4504
        %4506 = vrot.lane.b32.xlu0 %v3843, 64
        %v4507 = vpop.permute.xlu0 %4506
        %4508 = vrot.lane.b32.xlu0 %v3844, 64
        %v4509 = vpop.permute.xlu0 %4508
        %4510 = vrot.lane.b32.xlu0 %v3845, 64
        %v4511 = vpop.permute.xlu0 %4510
        %4512 = vrot.lane.b32.xlu0 %v3846, 64
        %v4513 = vpop.permute.xlu0 %4512
        %4514 = vrot.lane.b32.xlu0 %v3847, 64
        %v4515 = vpop.permute.xlu0 %4514
        %4516 = vrot.lane.b32.xlu0 %v3848, 64
        %v4517 = vpop.permute.xlu0 %4516
        %4518 = vrot.lane.b32.xlu0 %v3849, 64
        %v4519 = vpop.permute.xlu0 %4518
        %4520 = vrot.lane.b32.xlu0 %v3850, 64
        %v4521 = vpop.permute.xlu0 %4520
        %4522 = vrot.lane.b32.xlu0 %v3851, 64
        %v4523 = vpop.permute.xlu0 %4522
        %4588 = vrot.lane.b32.xlu0 %v3916, 80
        %v4589 = vpop.permute.xlu0 %4588
        %4590 = vrot.lane.b32.xlu0 %v3917, 80
        %v4591 = vpop.permute.xlu0 %4590
        %4592 = vrot.lane.b32.xlu0 %v3918, 80
        %v4593 = vpop.permute.xlu0 %4592
        %4594 = vrot.lane.b32.xlu0 %v3919, 80
        %v4595 = vpop.permute.xlu0 %4594
        %4596 = vrot.lane.b32.xlu0 %v3920, 80
        %v4597 = vpop.permute.xlu0 %4596
        %4598 = vrot.lane.b32.xlu0 %v3921, 80
        %v4599 = vpop.permute.xlu0 %4598
        %4600 = vrot.lane.b32.xlu0 %v3922, 80
        %v4601 = vpop.permute.xlu0 %4600
        %4602 = vrot.lane.b32.xlu0 %v3923, 80
        %v4603 = vpop.permute.xlu0 %4602
        %4604 = vrot.lane.b32.xlu0 %v3924, 80
        %v4605 = vpop.permute.xlu0 %4604
        %4606 = vrot.lane.b32.xlu0 %v3925, 80
        %v4607 = vpop.permute.xlu0 %4606
        %4608 = vrot.lane.b32.xlu0 %v3926, 80
        %v4609 = vpop.permute.xlu0 %4608
        %4610 = vrot.lane.b32.xlu0 %v3927, 80
        %v4611 = vpop.permute.xlu0 %4610
        %4612 = vrot.lane.b32.xlu0 %v3928, 80
        %v4613 = vpop.permute.xlu0 %4612
        %4614 = vrot.lane.b32.xlu0 %v3929, 80
        %v4615 = vpop.permute.xlu0 %4614
        %4616 = vrot.lane.b32.xlu0 %v3930, 80
        %v4617 = vpop.permute.xlu0 %4616
        %4618 = vrot.lane.b32.xlu0 %v3931, 80
        %v4619 = vpop.permute.xlu0 %4618
        %4620 = vrot.lane.b32.xlu0 %v3932, 80
        %v4621 = vpop.permute.xlu0 %4620
        %4622 = vrot.lane.b32.xlu0 %v3933, 80
        %v4623 = vpop.permute.xlu0 %4622
        %4624 = vrot.lane.b32.xlu0 %v3934, 80
        %v4625 = vpop.permute.xlu0 %4624
        %4626 = vrot.lane.b32.xlu0 %v3935, 80
        %v4627 = vpop.permute.xlu0 %4626
        %4628 = vrot.lane.b32.xlu0 %v3936, 80
        %v4629 = vpop.permute.xlu0 %4628
        %4630 = vrot.lane.b32.xlu0 %v3937, 80
        %v4631 = vpop.permute.xlu0 %4630
        %4632 = vrot.lane.b32.xlu0 %v3938, 80
        %v4633 = vpop.permute.xlu0 %4632
        %4634 = vrot.lane.b32.xlu0 %v3939, 80
        %v4635 = vpop.permute.xlu0 %4634
        %4636 = vrot.lane.b32.xlu0 %v3940, 80
        %v4637 = vpop.permute.xlu0 %4636
        %4638 = vrot.lane.b32.xlu0 %v3941, 80
        %v4639 = vpop.permute.xlu0 %4638
        %4640 = vrot.lane.b32.xlu0 %v3942, 80
        %v4641 = vpop.permute.xlu0 %4640
        %4642 = vrot.lane.b32.xlu0 %v3943, 80
        %v4643 = vpop.permute.xlu0 %4642
        %4644 = vrot.lane.b32.xlu0 %v3944, 80
        %v4645 = vpop.permute.xlu0 %4644
        %4646 = vrot.lane.b32.xlu0 %v3945, 80
        %v4647 = vpop.permute.xlu0 %4646
        %4648 = vrot.lane.b32.xlu0 %v3946, 80
        %v4649 = vpop.permute.xlu0 %4648
        %4650 = vrot.lane.b32.xlu0 %v3947, 80
        %v4651 = vpop.permute.xlu0 %4650
        %4716 = vrot.lane.b32.xlu0 %v4012, 96
        %v4717 = vpop.permute.xlu0 %4716
        %4718 = vrot.lane.b32.xlu0 %v4013, 96
        %v4719 = vpop.permute.xlu0 %4718
        %4720 = vrot.lane.b32.xlu0 %v4014, 96
        %v4721 = vpop.permute.xlu0 %4720
        %4722 = vrot.lane.b32.xlu0 %v4015, 96
        %v4723 = vpop.permute.xlu0 %4722
        %4724 = vrot.lane.b32.xlu0 %v4016, 96
        %v4725 = vpop.permute.xlu0 %4724
        %4726 = vrot.lane.b32.xlu0 %v4017, 96
        %v4727 = vpop.permute.xlu0 %4726
        %4728 = vrot.lane.b32.xlu0 %v4018, 96
        %v4729 = vpop.permute.xlu0 %4728
        %4730 = vrot.lane.b32.xlu0 %v4019, 96
        %v4731 = vpop.permute.xlu0 %4730
        %4732 = vrot.lane.b32.xlu0 %v4020, 96
        %v4733 = vpop.permute.xlu0 %4732
        %4734 = vrot.lane.b32.xlu0 %v4021, 96
        %v4735 = vpop.permute.xlu0 %4734
        %4736 = vrot.lane.b32.xlu0 %v4022, 96
        %v4737 = vpop.permute.xlu0 %4736
        %4738 = vrot.lane.b32.xlu0 %v4023, 96
        %v4739 = vpop.permute.xlu0 %4738
        %4740 = vrot.lane.b32.xlu0 %v4024, 96
        %v4741 = vpop.permute.xlu0 %4740
        %4742 = vrot.lane.b32.xlu0 %v4025, 96
        %v4743 = vpop.permute.xlu0 %4742
        %4744 = vrot.lane.b32.xlu0 %v4026, 96
        %v4745 = vpop.permute.xlu0 %4744
        %4746 = vrot.lane.b32.xlu0 %v4027, 96
        %v4747 = vpop.permute.xlu0 %4746
        %4748 = vrot.lane.b32.xlu0 %v4028, 96
        %v4749 = vpop.permute.xlu0 %4748
        %4750 = vrot.lane.b32.xlu0 %v4029, 96
        %v4751 = vpop.permute.xlu0 %4750
        %4752 = vrot.lane.b32.xlu0 %v4030, 96
        %v4753 = vpop.permute.xlu0 %4752
        %4754 = vrot.lane.b32.xlu0 %v4031, 96
        %v4755 = vpop.permute.xlu0 %4754
        %4756 = vrot.lane.b32.xlu0 %v4032, 96
        %v4757 = vpop.permute.xlu0 %4756
        %4758 = vrot.lane.b32.xlu0 %v4033, 96
        %v4759 = vpop.permute.xlu0 %4758
        %4760 = vrot.lane.b32.xlu0 %v4034, 96
        %v4761 = vpop.permute.xlu0 %4760
        %4762 = vrot.lane.b32.xlu0 %v4035, 96
        %v4763 = vpop.permute.xlu0 %4762
        %4764 = vrot.lane.b32.xlu0 %v4036, 96
        %v4765 = vpop.permute.xlu0 %4764
        %4766 = vrot.lane.b32.xlu0 %v4037, 96
        %v4767 = vpop.permute.xlu0 %4766
        %4768 = vrot.lane.b32.xlu0 %v4038, 96
        %v4769 = vpop.permute.xlu0 %4768
        %4770 = vrot.lane.b32.xlu0 %v4039, 96
        %v4771 = vpop.permute.xlu0 %4770
        %4772 = vrot.lane.b32.xlu0 %v4040, 96
        %v4773 = vpop.permute.xlu0 %4772
        %4774 = vrot.lane.b32.xlu0 %v4041, 96
        %v4775 = vpop.permute.xlu0 %4774
        %4776 = vrot.lane.b32.xlu0 %v4042, 96
        %v4777 = vpop.permute.xlu0 %4776
        %4778 = vrot.lane.b32.xlu0 %v4043, 96
        %v4779 = vpop.permute.xlu0 %4778
        %vm4812 = vcmask 130048
        %v4813 = vsel %vm4812, %v3532, %v4077
        %v4814 = vsel %vm4812, %v3533, %v4079
        %v4815 = vsel %vm4812, %v3534, %v4081
        %v4816 = vsel %vm4812, %v3535, %v4083
        %v4817 = vsel %vm4812, %v3536, %v4085
        %v4818 = vsel %vm4812, %v3537, %v4087
        %v4819 = vsel %vm4812, %v3538, %v4089
        %v4820 = vsel %vm4812, %v3539, %v4091
        %v4821 = vsel %vm4812, %v3540, %v4093
        %v4822 = vsel %vm4812, %v3541, %v4095
        %v4823 = vsel %vm4812, %v3542, %v4097
        %v4824 = vsel %vm4812, %v3543, %v4099
        %v4825 = vsel %vm4812, %v3544, %v4101
        %v4826 = vsel %vm4812, %v3545, %v4103
        %v4827 = vsel %vm4812, %v3546, %v4105
        %v4828 = vsel %vm4812, %v3547, %v4107
        %v4829 = vsel %vm4812, %v3548, %v4109
        %v4830 = vsel %vm4812, %v3549, %v4111
        %v4831 = vsel %vm4812, %v3550, %v4113
        %v4832 = vsel %vm4812, %v3551, %v4115
        %v4833 = vsel %vm4812, %v3552, %v4117
        %v4834 = vsel %vm4812, %v3553, %v4119
        %v4835 = vsel %vm4812, %v3554, %v4121
        %v4836 = vsel %vm4812, %v3555, %v4123
        %v4837 = vsel %vm4812, %v3556, %v4125
        %v4838 = vsel %vm4812, %v3557, %v4127
        %v4839 = vsel %vm4812, %v3558, %v4129
        %v4840 = vsel %vm4812, %v3559, %v4131
        %v4841 = vsel %vm4812, %v3560, %v4133
        %v4842 = vsel %vm4812, %v3561, %v4135
        %v4843 = vsel %vm4812, %v3562, %v4137
        %v4844 = vsel %vm4812, %v3563, %v4139
        %vm4845 = vcmask 261120
        %v4846 = vsel %vm4845, %v4813, %v4205
        %v4847 = vsel %vm4845, %v4814, %v4207
        %v4848 = vsel %vm4845, %v4815, %v4209
        %v4849 = vsel %vm4845, %v4816, %v4211
        %v4850 = vsel %vm4845, %v4817, %v4213
        %v4851 = vsel %vm4845, %v4818, %v4215
        %v4852 = vsel %vm4845, %v4819, %v4217
        %v4853 = vsel %vm4845, %v4820, %v4219
        %v4854 = vsel %vm4845, %v4821, %v4221
        %v4855 = vsel %vm4845, %v4822, %v4223
        %v4856 = vsel %vm4845, %v4823, %v4225
        %v4857 = vsel %vm4845, %v4824, %v4227
        %v4858 = vsel %vm4845, %v4825, %v4229
        %v4859 = vsel %vm4845, %v4826, %v4231
        %v4860 = vsel %vm4845, %v4827, %v4233
        %v4861 = vsel %vm4845, %v4828, %v4235
        %v4862 = vsel %vm4845, %v4829, %v4237
        %v4863 = vsel %vm4845, %v4830, %v4239
        %v4864 = vsel %vm4845, %v4831, %v4241
        %v4865 = vsel %vm4845, %v4832, %v4243
        %v4866 = vsel %vm4845, %v4833, %v4245
        %v4867 = vsel %vm4845, %v4834, %v4247
        %v4868 = vsel %vm4845, %v4835, %v4249
        %v4869 = vsel %vm4845, %v4836, %v4251
        %v4870 = vsel %vm4845, %v4837, %v4253
        %v4871 = vsel %vm4845, %v4838, %v4255
        %v4872 = vsel %vm4845, %v4839, %v4257
        %v4873 = vsel %vm4845, %v4840, %v4259
        %v4874 = vsel %vm4845, %v4841, %v4261
        %v4875 = vsel %vm4845, %v4842, %v4263
        %v4876 = vsel %vm4845, %v4843, %v4265
        %v4877 = vsel %vm4845, %v4844, %v4267
        %vm4878 = vcmask 392192
        %v4879 = vsel %vm4878, %v4846, %v4333
        %v4880 = vsel %vm4878, %v4847, %v4335
        %v4881 = vsel %vm4878, %v4848, %v4337
        %v4882 = vsel %vm4878, %v4849, %v4339
        %v4883 = vsel %vm4878, %v4850, %v4341
        %v4884 = vsel %vm4878, %v4851, %v4343
        %v4885 = vsel %vm4878, %v4852, %v4345
        %v4886 = vsel %vm4878, %v4853, %v4347
        %v4887 = vsel %vm4878, %v4854, %v4349
        %v4888 = vsel %vm4878, %v4855, %v4351
        %v4889 = vsel %vm4878, %v4856, %v4353
        %v4890 = vsel %vm4878, %v4857, %v4355
        %v4891 = vsel %vm4878, %v4858, %v4357
        %v4892 = vsel %vm4878, %v4859, %v4359
        %v4893 = vsel %vm4878, %v4860, %v4361
        %v4894 = vsel %vm4878, %v4861, %v4363
        %v4895 = vsel %vm4878, %v4862, %v4365
        %v4896 = vsel %vm4878, %v4863, %v4367
        %v4897 = vsel %vm4878, %v4864, %v4369
        %v4898 = vsel %vm4878, %v4865, %v4371
        %v4899 = vsel %vm4878, %v4866, %v4373
        %v4900 = vsel %vm4878, %v4867, %v4375
        %v4901 = vsel %vm4878, %v4868, %v4377
        %v4902 = vsel %vm4878, %v4869, %v4379
        %v4903 = vsel %vm4878, %v4870, %v4381
        %v4904 = vsel %vm4878, %v4871, %v4383
        %v4905 = vsel %vm4878, %v4872, %v4385
        %v4906 = vsel %vm4878, %v4873, %v4387
        %v4907 = vsel %vm4878, %v4874, %v4389
        %v4908 = vsel %vm4878, %v4875, %v4391
        %v4909 = vsel %vm4878, %v4876, %v4393
        %v4910 = vsel %vm4878, %v4877, %v4395
        %vm4911 = vcmask 523264
        %v4912 = vsel %vm4911, %v4879, %v4461
        %v4913 = vsel %vm4911, %v4880, %v4463
        %v4914 = vsel %vm4911, %v4881, %v4465
        %v4915 = vsel %vm4911, %v4882, %v4467
        %v4916 = vsel %vm4911, %v4883, %v4469
        %v4917 = vsel %vm4911, %v4884, %v4471
        %v4918 = vsel %vm4911, %v4885, %v4473
        %v4919 = vsel %vm4911, %v4886, %v4475
        %v4920 = vsel %vm4911, %v4887, %v4477
        %v4921 = vsel %vm4911, %v4888, %v4479
        %v4922 = vsel %vm4911, %v4889, %v4481
        %v4923 = vsel %vm4911, %v4890, %v4483
        %v4924 = vsel %vm4911, %v4891, %v4485
        %v4925 = vsel %vm4911, %v4892, %v4487
        %v4926 = vsel %vm4911, %v4893, %v4489
        %v4927 = vsel %vm4911, %v4894, %v4491
        %v4928 = vsel %vm4911, %v4895, %v4493
        %v4929 = vsel %vm4911, %v4896, %v4495
        %v4930 = vsel %vm4911, %v4897, %v4497
        %v4931 = vsel %vm4911, %v4898, %v4499
        %v4932 = vsel %vm4911, %v4899, %v4501
        %v4933 = vsel %vm4911, %v4900, %v4503
        %v4934 = vsel %vm4911, %v4901, %v4505
        %v4935 = vsel %vm4911, %v4902, %v4507
        %v4936 = vsel %vm4911, %v4903, %v4509
        %v4937 = vsel %vm4911, %v4904, %v4511
        %v4938 = vsel %vm4911, %v4905, %v4513
        %v4939 = vsel %vm4911, %v4906, %v4515
        %v4940 = vsel %vm4911, %v4907, %v4517
        %v4941 = vsel %vm4911, %v4908, %v4519
        %v4942 = vsel %vm4911, %v4909, %v4521
        %v4943 = vsel %vm4911, %v4910, %v4523
        %vm4944 = vcmask 654336
        %v4945 = vsel %vm4944, %v4912, %v4589
        %v4946 = vsel %vm4944, %v4913, %v4591
        %v4947 = vsel %vm4944, %v4914, %v4593
        %v4948 = vsel %vm4944, %v4915, %v4595
        %v4949 = vsel %vm4944, %v4916, %v4597
        %v4950 = vsel %vm4944, %v4917, %v4599
        %v4951 = vsel %vm4944, %v4918, %v4601
        %v4952 = vsel %vm4944, %v4919, %v4603
        %v4953 = vsel %vm4944, %v4920, %v4605
        %v4954 = vsel %vm4944, %v4921, %v4607
        %v4955 = vsel %vm4944, %v4922, %v4609
        %v4956 = vsel %vm4944, %v4923, %v4611
        %v4957 = vsel %vm4944, %v4924, %v4613
        %v4958 = vsel %vm4944, %v4925, %v4615
        %v4959 = vsel %vm4944, %v4926, %v4617
        %v4960 = vsel %vm4944, %v4927, %v4619
        %v4961 = vsel %vm4944, %v4928, %v4621
        %v4962 = vsel %vm4944, %v4929, %v4623
        %v4963 = vsel %vm4944, %v4930, %v4625
        %v4964 = vsel %vm4944, %v4931, %v4627
        %v4965 = vsel %vm4944, %v4932, %v4629
        %v4966 = vsel %vm4944, %v4933, %v4631
        %v4967 = vsel %vm4944, %v4934, %v4633
        %v4968 = vsel %vm4944, %v4935, %v4635
        %v4969 = vsel %vm4944, %v4936, %v4637
        %v4970 = vsel %vm4944, %v4937, %v4639
        %v4971 = vsel %vm4944, %v4938, %v4641
        %v4972 = vsel %vm4944, %v4939, %v4643
        %v4973 = vsel %vm4944, %v4940, %v4645
        %v4974 = vsel %vm4944, %v4941, %v4647
        %v4975 = vsel %vm4944, %v4942, %v4649
        %v4976 = vsel %vm4944, %v4943, %v4651
        %vm4977 = vcmask 785408
        %v4978 = vsel %vm4977, %v4945, %v4717
        %v4979 = vsel %vm4977, %v4946, %v4719
        %v4980 = vsel %vm4977, %v4947, %v4721
        %v4981 = vsel %vm4977, %v4948, %v4723
        %v4982 = vsel %vm4977, %v4949, %v4725
        %v4983 = vsel %vm4977, %v4950, %v4727
        %v4984 = vsel %vm4977, %v4951, %v4729
        %v4985 = vsel %vm4977, %v4952, %v4731
        %v4986 = vsel %vm4977, %v4953, %v4733
        %v4987 = vsel %vm4977, %v4954, %v4735
        %v4988 = vsel %vm4977, %v4955, %v4737
        %v4989 = vsel %vm4977, %v4956, %v4739
        %v4990 = vsel %vm4977, %v4957, %v4741
        %v4991 = vsel %vm4977, %v4958, %v4743
        %v4992 = vsel %vm4977, %v4959, %v4745
        %v4993 = vsel %vm4977, %v4960, %v4747
        %v4994 = vsel %vm4977, %v4961, %v4749
        %v4995 = vsel %vm4977, %v4962, %v4751
        %v4996 = vsel %vm4977, %v4963, %v4753
        %v4997 = vsel %vm4977, %v4964, %v4755
        %v4998 = vsel %vm4977, %v4965, %v4757
        %v4999 = vsel %vm4977, %v4966, %v4759
        %v5000 = vsel %vm4977, %v4967, %v4761
        %v5001 = vsel %vm4977, %v4968, %v4763
        %v5002 = vsel %vm4977, %v4969, %v4765
        %v5003 = vsel %vm4977, %v4970, %v4767
        %v5004 = vsel %vm4977, %v4971, %v4769
        %v5005 = vsel %vm4977, %v4972, %v4771
        %v5006 = vsel %vm4977, %v4973, %v4773
        %v5007 = vsel %vm4977, %v4974, %v4775
        %v5008 = vsel %vm4977, %v4975, %v4777
        %v5009 = vsel %vm4977, %v4976, %v4779
        %v5010 = vpack.c.bf16 %v4979, %v4978
        %v5011 = vpack.c.bf16 %v4981, %v4980
        %v5012 = vpack.c.bf16 %v4983, %v4982
        %v5013 = vpack.c.bf16 %v4985, %v4984
        %v5014 = vpack.c.bf16 %v4987, %v4986
        %v5015 = vpack.c.bf16 %v4989, %v4988
        %v5016 = vpack.c.bf16 %v4991, %v4990
        %v5017 = vpack.c.bf16 %v4993, %v4992
        %v5018 = vpack.c.bf16 %v4995, %v4994
        %v5019 = vpack.c.bf16 %v4997, %v4996
        %v5020 = vpack.c.bf16 %v4999, %v4998
        %v5021 = vpack.c.bf16 %v5001, %v5000
        %v5022 = vpack.c.bf16 %v5003, %v5002
        %v5023 = vpack.c.bf16 %v5005, %v5004
        %v5024 = vpack.c.bf16 %v5007, %v5006
        %v5025 = vpack.c.bf16 %v5009, %v5008
        %v5026 = vld [vmem:[%s4] sm:$0xf]
        %v5027 = vld [vmem:[%s4 + $0x4] sm:$0xf]
        %v5028 = vld [vmem:[%s4 + $0x8] sm:$0xf]
        %v5029 = vld [vmem:[%s4 + $0xc] sm:$0xf]
        %v5030 = vld [vmem:[%s4 + $0x10] sm:$0xf]
        %v5031 = vld [vmem:[%s4 + $0x14] sm:$0xf]
        %v5032 = vld [vmem:[%s4 + $0x18] sm:$0xf]
        %v5033 = vld [vmem:[%s4 + $0x1c] sm:$0xf]
        %v5034 = vld [vmem:[%s4 + $0x20] sm:$0xf]
        %v5035 = vld [vmem:[%s4 + $0x24] sm:$0xf]
        %v5036 = vld [vmem:[%s4 + $0x28] sm:$0xf]
        %v5037 = vld [vmem:[%s4 + $0x2c] sm:$0xf]
        %v5038 = vld [vmem:[%s4 + $0x30] sm:$0xf]
        %v5039 = vld [vmem:[%s4 + $0x34] sm:$0xf]
        %v5040 = vld [vmem:[%s5] sm:$0x1]
        %v5042 = vlaneseq
        %v5043 = vshrl.u32 %v5042, 7
        %v5044 = vsub.s32 0, %v5043
        %v5045 = vrot.slane %v5040, %v5044
        %v5061 = vunpack.c.l.b16 %v5026
        %v5062 = vunpack.c.l.b16 %v5027
        %v5063 = vunpack.c.l.b16 %v5028
        %v5064 = vunpack.c.l.b16 %v5029
        %v5065 = vunpack.c.l.b16 %v5030
        %v5066 = vunpack.c.l.b16 %v5031
        %v5067 = vunpack.c.l.b16 %v5032
        %v5068 = vunpack.c.l.b16 %v5033
        %v5069 = vunpack.c.l.b16 %v5034
        %v5070 = vunpack.c.l.b16 %v5035
        %v5071 = vunpack.c.l.b16 %v5036
        %v5072 = vunpack.c.l.b16 %v5037
        %v5073 = vunpack.c.l.b16 %v5038
        %v5074 = vunpack.c.l.b16 %v5039
        %v5075 = vpack.c.b16 %v5062, %v5061
        %v5076 = vpack.c.b16 %v5064, %v5063
        %v5077 = vpack.c.b16 %v5066, %v5065
        %v5078 = vpack.c.b16 %v5068, %v5067
        %v5079 = vpack.c.b16 %v5070, %v5069
        %v5080 = vpack.c.b16 %v5072, %v5071
        %v5081 = vpack.c.b16 %v5074, %v5073
        %vm5089 = vcmask 916480
        %v5091 = vsel %vm5089, %v5010, 0
        %v5094 = vsel %vm5089, %v5011, 0
        %v5097 = vsel %vm5089, %v5012, 0
        %v5100 = vsel %vm5089, %v5013, 0
        %v5103 = vsel %vm5089, %v5014, 0
        %v5106 = vsel %vm5089, %v5015, 0
        %v5109 = vsel %vm5089, %v5016, 0
        %v5112 = vsel %vm5089, %v5017, 0
        %v5115 = vsel %vm5089, %v5018, 0
        %v5118 = vsel %vm5089, %v5019, 0
        %v5121 = vsel %vm5089, %v5020, 0
        %v5124 = vsel %vm5089, %v5021, 0
        %v5127 = vsel %vm5089, %v5022, 0
        %v5130 = vsel %vm5089, %v5023, 0
        %v5133 = vsel %vm5089, %v5024, 0
        %v5136 = vsel %vm5089, %v5025, 0
        %5138 = vmatprep.subr.bf16.mxu0 0
        %5139 = vmatpush1.bf16.msra.mxu0 %v5075
        %5140 = vmatprep.subr.bf16.mxu0 0
        %5141 = vmatpush1.bf16.msra.mxu0 %v5076
        %5142 = vmatprep.subr.bf16.mxu0 0
        %5143 = vmatpush1.bf16.msra.mxu0 %v5077
        %5144 = vmatprep.subr.bf16.mxu0 0
        %5145 = vmatpush1.bf16.msra.mxu0 %v5078
        %5146 = vmatprep.subr.bf16.mxu0 0
        %5147 = vmatpush1.bf16.msra.mxu0 %v5079
        %5148 = vmatprep.subr.bf16.mxu0 0
        %5149 = vmatpush1.bf16.msra.mxu0 %v5080
        %5150 = vmatprep.subr.bf16.mxu0 0
        %5151 = vmatpush1.bf16.msra.mxu0 %v5081
        %5152 = vmatprep.subr.bf16.mxu0 0
        %5153 = vmatpush1.bf16.msra.mxu0 0
        %5154 = vmatprep.subr.bf16.mxu0 0
        %5155 = vmatpush1.bf16.msra.mxu0 0
        %5156 = vmatprep.subr.bf16.mxu0 0
        %5157 = vmatpush1.bf16.msra.mxu0 0
        %5158 = vmatprep.subr.bf16.mxu0 0
        %5159 = vmatpush1.bf16.msra.mxu0 0
        %5160 = vmatprep.subr.bf16.mxu0 0
        %5161 = vmatpush1.bf16.msra.mxu0 0
        %5162 = vmatprep.subr.bf16.mxu0 0
        %5163 = vmatpush1.bf16.msra.mxu0 0
        %5164 = vmatprep.subr.bf16.mxu0 0
        %5165 = vmatpush1.bf16.msra.mxu0 0
        %5166 = vmatprep.subr.bf16.mxu0 0
        %5167 = vmatpush1.bf16.msra.mxu0 0
        %5168 = vmatprep.subr.bf16.mxu0 0
        %5169 = vmatpush1.bf16.msra.mxu0 0
        %5170 = vmatprep.mubr.bf16.mxu0 0
        %5171 = vmatmul.mubr.bf16.gmra.mrb[0].mxu0 %v5091
        %v5172 = vpop.f32.mrb[0].mxu0
        %v5173 = vadd.f32 %v5045, %v5172
        %v5174 = vpop.f32.mrb[0].mxu0
        %v5175 = vpop.f32.mrb[0].mxu0
        %v5176 = vadd.f32 %v5045, %v5175
        %v5177 = vpop.f32.mrb[0].mxu0
        %5178 = vmatprep.mubr.bf16.mxu0 0
        %5179 = vmatmul.mubr.bf16.gmra.mrb[0].mxu0 %v5094
        %v5180 = vpop.f32.mrb[0].mxu0
        %v5181 = vadd.f32 %v5045, %v5180
        %v5182 = vpop.f32.mrb[0].mxu0
        %v5183 = vpop.f32.mrb[0].mxu0
        %v5184 = vadd.f32 %v5045, %v5183
        %v5185 = vpop.f32.mrb[0].mxu0
        %5186 = vmatprep.mubr.bf16.mxu0 0
        %5187 = vmatmul.mubr.bf16.gmra.mrb[0].mxu0 %v5097
        %v5188 = vpop.f32.mrb[0].mxu0
        %v5189 = vadd.f32 %v5045, %v5188
        %v5190 = vpop.f32.mrb[0].mxu0
        %v5191 = vpop.f32.mrb[0].mxu0
        %v5192 = vadd.f32 %v5045, %v5191
        %v5193 = vpop.f32.mrb[0].mxu0
        %5194 = vmatprep.mubr.bf16.mxu0 0
        %5195 = vmatmul.mubr.bf16.gmra.mrb[0].mxu0 %v5100
        %v5196 = vpop.f32.mrb[0].mxu0
        %v5197 = vadd.f32 %v5045, %v5196
        %v5198 = vpop.f32.mrb[0].mxu0
        %v5199 = vpop.f32.mrb[0].mxu0
        %v5200 = vadd.f32 %v5045, %v5199
        %v5201 = vpop.f32.mrb[0].mxu0
        %5202 = vmatprep.mubr.bf16.mxu0 0
        %5203 = vmatmul.mubr.bf16.gmra.mrb[0].mxu0 %v5103
        %v5204 = vpop.f32.mrb[0].mxu0
        %v5205 = vadd.f32 %v5045, %v5204
        %v5206 = vpop.f32.mrb[0].mxu0
        %v5207 = vpop.f32.mrb[0].mxu0
        %v5208 = vadd.f32 %v5045, %v5207
        %v5209 = vpop.f32.mrb[0].mxu0
        %5210 = vmatprep.mubr.bf16.mxu0 0
        %5211 = vmatmul.mubr.bf16.gmra.mrb[0].mxu0 %v5106
        %v5212 = vpop.f32.mrb[0].mxu0
        %v5213 = vadd.f32 %v5045, %v5212
        %v5214 = vpop.f32.mrb[0].mxu0
        %v5215 = vpop.f32.mrb[0].mxu0
        %v5216 = vadd.f32 %v5045, %v5215
        %v5217 = vpop.f32.mrb[0].mxu0
        %5218 = vmatprep.mubr.bf16.mxu0 0
        %5219 = vmatmul.mubr.bf16.gmra.mrb[0].mxu0 %v5109
        %v5220 = vpop.f32.mrb[0].mxu0
        %v5221 = vadd.f32 %v5045, %v5220
        %v5222 = vpop.f32.mrb[0].mxu0
        %v5223 = vpop.f32.mrb[0].mxu0
        %v5224 = vadd.f32 %v5045, %v5223
        %v5225 = vpop.f32.mrb[0].mxu0
        %5226 = vmatprep.mubr.bf16.mxu0 0
        %5227 = vmatmul.mubr.bf16.gmra.mrb[0].mxu0 %v5112
        %v5228 = vpop.f32.mrb[0].mxu0
        %v5229 = vadd.f32 %v5045, %v5228
        %v5230 = vpop.f32.mrb[0].mxu0
        %v5231 = vpop.f32.mrb[0].mxu0
        %v5232 = vadd.f32 %v5045, %v5231
        %v5233 = vpop.f32.mrb[0].mxu0
        %5234 = vmatprep.mubr.bf16.mxu0 0
        %5235 = vmatmul.mubr.bf16.gmra.mrb[0].mxu0 %v5115
        %v5236 = vpop.f32.mrb[0].mxu0
        %v5237 = vadd.f32 %v5045, %v5236
        %v5238 = vpop.f32.mrb[0].mxu0
        %v5239 = vpop.f32.mrb[0].mxu0
        %v5240 = vadd.f32 %v5045, %v5239
        %v5241 = vpop.f32.mrb[0].mxu0
        %5242 = vmatprep.mubr.bf16.mxu0 0
        %5243 = vmatmul.mubr.bf16.gmra.mrb[0].mxu0 %v5118
        %v5244 = vpop.f32.mrb[0].mxu0
        %v5245 = vadd.f32 %v5045, %v5244
        %v5246 = vpop.f32.mrb[0].mxu0
        %v5247 = vpop.f32.mrb[0].mxu0
        %v5248 = vadd.f32 %v5045, %v5247
        %v5249 = vpop.f32.mrb[0].mxu0
        %5250 = vmatprep.mubr.bf16.mxu0 0
        %5251 = vmatmul.mubr.bf16.gmra.mrb[0].mxu0 %v5121
        %v5252 = vpop.f32.mrb[0].mxu0
        %v5253 = vadd.f32 %v5045, %v5252
        %v5254 = vpop.f32.mrb[0].mxu0
        %v5255 = vpop.f32.mrb[0].mxu0
        %v5256 = vadd.f32 %v5045, %v5255
        %v5257 = vpop.f32.mrb[0].mxu0
        %5258 = vmatprep.mubr.bf16.mxu0 0
        %5259 = vmatmul.mubr.bf16.gmra.mrb[0].mxu0 %v5124
        %v5260 = vpop.f32.mrb[0].mxu0
        %v5261 = vadd.f32 %v5045, %v5260
        %v5262 = vpop.f32.mrb[0].mxu0
        %v5263 = vpop.f32.mrb[0].mxu0
        %v5264 = vadd.f32 %v5045, %v5263
        %v5265 = vpop.f32.mrb[0].mxu0
        %5266 = vmatprep.mubr.bf16.mxu0 0
        %5267 = vmatmul.mubr.bf16.gmra.mrb[0].mxu0 %v5127
        %v5268 = vpop.f32.mrb[0].mxu0
        %v5269 = vadd.f32 %v5045, %v5268
        %v5270 = vpop.f32.mrb[0].mxu0
        %v5271 = vpop.f32.mrb[0].mxu0
        %v5272 = vadd.f32 %v5045, %v5271
        %v5273 = vpop.f32.mrb[0].mxu0
        %5274 = vmatprep.mubr.bf16.mxu0 0
        %5275 = vmatmul.mubr.bf16.gmra.mrb[0].mxu0 %v5130
        %v5276 = vpop.f32.mrb[0].mxu0
        %v5277 = vadd.f32 %v5045, %v5276
        %v5278 = vpop.f32.mrb[0].mxu0
        %v5279 = vpop.f32.mrb[0].mxu0
        %v5280 = vadd.f32 %v5045, %v5279
        %v5281 = vpop.f32.mrb[0].mxu0
        %5282 = vmatprep.mubr.bf16.mxu0 0
        %5283 = vmatmul.mubr.bf16.gmra.mrb[0].mxu0 %v5133
        %v5284 = vpop.f32.mrb[0].mxu0
        %v5285 = vadd.f32 %v5045, %v5284
        %v5286 = vpop.f32.mrb[0].mxu0
        %v5287 = vpop.f32.mrb[0].mxu0
        %v5288 = vadd.f32 %v5045, %v5287
        %v5289 = vpop.f32.mrb[0].mxu0
        %5290 = vmatprep.mubr.bf16.mxu0 0
        %5291 = vmatmul.mubr.bf16.gmra.mrb[0].mxu0 %v5136
        %v5292 = vpop.f32.mrb[0].mxu0
        %v5293 = vadd.f32 %v5045, %v5292
        %v5294 = vpop.f32.mrb[0].mxu0
        %v5295 = vpop.f32.mrb[0].mxu0
        %v5296 = vadd.f32 %v5045, %v5295
        %v5297 = vpop.f32.mrb[0].mxu0
        %5298 = vdwg.mxu0
        %v5299 = vmul.f32 %v5173, 0.2
        %v5300 = vmul.f32 %v5176, 0.2
        %v5301 = vmul.f32 %v5181, 0.2
        %v5302 = vmul.f32 %v5184, 0.2
        %v5303 = vmul.f32 %v5189, 0.2
        %v5304 = vmul.f32 %v5192, 0.2
        %v5305 = vmul.f32 %v5197, 0.2
        %v5306 = vmul.f32 %v5200, 0.2
        %v5307 = vmul.f32 %v5205, 0.2
        %v5308 = vmul.f32 %v5208, 0.2
        %v5309 = vmul.f32 %v5213, 0.2
        %v5310 = vmul.f32 %v5216, 0.2
        %v5311 = vmul.f32 %v5221, 0.2
        %v5312 = vmul.f32 %v5224, 0.2
        %v5313 = vmul.f32 %v5229, 0.2
        %v5314 = vmul.f32 %v5232, 0.2
        %v5315 = vmul.f32 %v5237, 0.2
        %v5316 = vmul.f32 %v5240, 0.2
        %v5317 = vmul.f32 %v5245, 0.2
        %v5318 = vmul.f32 %v5248, 0.2
        %v5319 = vmul.f32 %v5253, 0.2
        %v5320 = vmul.f32 %v5256, 0.2
        %v5321 = vmul.f32 %v5261, 0.2
        %v5322 = vmul.f32 %v5264, 0.2
        %v5323 = vmul.f32 %v5269, 0.2
        %v5324 = vmul.f32 %v5272, 0.2
        %v5325 = vmul.f32 %v5277, 0.2
        %v5326 = vmul.f32 %v5280, 0.2
        %v5327 = vmul.f32 %v5285, 0.2
        %v5328 = vmul.f32 %v5288, 0.2
        %v5329 = vmul.f32 %v5293, 0.2
        %v5330 = vmul.f32 %v5296, 0.2
        %v5331 = vmax.f32 %v5173, %v5299
        %v5332 = vmax.f32 %v5176, %v5300
        %v5333 = vmax.f32 %v5181, %v5301
        %v5334 = vmax.f32 %v5184, %v5302
        %v5335 = vmax.f32 %v5189, %v5303
        %v5336 = vmax.f32 %v5192, %v5304
        %v5337 = vmax.f32 %v5197, %v5305
        %v5338 = vmax.f32 %v5200, %v5306
        %v5339 = vmax.f32 %v5205, %v5307
        %v5340 = vmax.f32 %v5208, %v5308
        %v5341 = vmax.f32 %v5213, %v5309
        %v5342 = vmax.f32 %v5216, %v5310
        %v5343 = vmax.f32 %v5221, %v5311
        %v5344 = vmax.f32 %v5224, %v5312
        %v5345 = vmax.f32 %v5229, %v5313
        %v5346 = vmax.f32 %v5232, %v5314
        %v5347 = vmax.f32 %v5237, %v5315
        %v5348 = vmax.f32 %v5240, %v5316
        %v5349 = vmax.f32 %v5245, %v5317
        %v5350 = vmax.f32 %v5248, %v5318
        %v5351 = vmax.f32 %v5253, %v5319
        %v5352 = vmax.f32 %v5256, %v5320
        %v5353 = vmax.f32 %v5261, %v5321
        %v5354 = vmax.f32 %v5264, %v5322
        %v5355 = vmax.f32 %v5269, %v5323
        %v5356 = vmax.f32 %v5272, %v5324
        %v5357 = vmax.f32 %v5277, %v5325
        %v5358 = vmax.f32 %v5280, %v5326
        %v5359 = vmax.f32 %v5285, %v5327
        %v5360 = vmax.f32 %v5288, %v5328
        %v5361 = vmax.f32 %v5293, %v5329
        %v5362 = vmax.f32 %v5296, %v5330
        %v5363 = vrot.slane %v5331, 5
        %v5364 = vrot.slane %v5332, 5
        %v5365 = vrot.slane %v5333, 5
        %v5366 = vrot.slane %v5334, 5
        %v5367 = vrot.slane %v5335, 5
        %v5368 = vrot.slane %v5336, 5
        %v5369 = vrot.slane %v5337, 5
        %v5370 = vrot.slane %v5338, 5
        %v5371 = vrot.slane %v5339, 5
        %v5372 = vrot.slane %v5340, 5
        %v5373 = vrot.slane %v5341, 5
        %v5374 = vrot.slane %v5342, 5
        %v5375 = vrot.slane %v5343, 5
        %v5376 = vrot.slane %v5344, 5
        %v5377 = vrot.slane %v5345, 5
        %v5378 = vrot.slane %v5346, 5
        %v5379 = vrot.slane %v5347, 5
        %v5380 = vrot.slane %v5348, 5
        %v5381 = vrot.slane %v5349, 5
        %v5382 = vrot.slane %v5350, 5
        %v5383 = vrot.slane %v5351, 5
        %v5384 = vrot.slane %v5352, 5
        %v5385 = vrot.slane %v5353, 5
        %v5386 = vrot.slane %v5354, 5
        %v5387 = vrot.slane %v5355, 5
        %v5388 = vrot.slane %v5356, 5
        %v5389 = vrot.slane %v5357, 5
        %v5390 = vrot.slane %v5358, 5
        %v5391 = vrot.slane %v5359, 5
        %v5392 = vrot.slane %v5360, 5
        %v5393 = vrot.slane %v5361, 5
        %v5394 = vrot.slane %v5362, 5
        %v5395 = vsel %vm1238, %v5393, %v5394
        %v5396 = vsel %vm1238, %v5392, %v5393
        %v5397 = vsel %vm1238, %v5391, %v5392
        %v5398 = vsel %vm1238, %v5390, %v5391
        %v5399 = vsel %vm1238, %v5389, %v5390
        %v5400 = vsel %vm1238, %v5388, %v5389
        %v5401 = vsel %vm1238, %v5387, %v5388
        %v5402 = vsel %vm1238, %v5386, %v5387
        %v5403 = vsel %vm1238, %v5385, %v5386
        %v5404 = vsel %vm1238, %v5384, %v5385
        %v5405 = vsel %vm1238, %v5383, %v5384
        %v5406 = vsel %vm1238, %v5382, %v5383
        %v5407 = vsel %vm1238, %v5381, %v5382
        %v5408 = vsel %vm1238, %v5380, %v5381
        %v5409 = vsel %vm1238, %v5379, %v5380
        %v5410 = vsel %vm1238, %v5378, %v5379
        %v5411 = vsel %vm1238, %v5377, %v5378
        %v5412 = vsel %vm1238, %v5376, %v5377
        %v5413 = vsel %vm1238, %v5375, %v5376
        %v5414 = vsel %vm1238, %v5374, %v5375
        %v5415 = vsel %vm1238, %v5373, %v5374
        %v5416 = vsel %vm1238, %v5372, %v5373
        %v5417 = vsel %vm1238, %v5371, %v5372
        %v5418 = vsel %vm1238, %v5370, %v5371
        %v5419 = vsel %vm1238, %v5369, %v5370
        %v5420 = vsel %vm1238, %v5368, %v5369
        %v5421 = vsel %vm1238, %v5367, %v5368
        %v5422 = vsel %vm1238, %v5366, %v5367
        %v5423 = vsel %vm1238, %v5365, %v5366
        %v5424 = vsel %vm1238, %v5364, %v5365
        %v5425 = vsel %vm1238, %v5363, %v5364
        %v5426 = vsel %vm1238, %v5394, %v5363
        %v5427 = vmul.f32 %v5426, %v870
        %v5428 = vmul.f32 %v5425, %v871
        %v5429 = vmul.f32 %v5424, %v872
        %v5430 = vmul.f32 %v5423, %v873
        %v5431 = vmul.f32 %v5422, %v874
        %v5432 = vmul.f32 %v5421, %v875
        %v5433 = vmul.f32 %v5420, %v876
        %v5434 = vmul.f32 %v5419, %v877
        %v5435 = vmul.f32 %v5418, %v870
        %v5436 = vmul.f32 %v5417, %v871
        %v5437 = vmul.f32 %v5416, %v872
        %v5438 = vmul.f32 %v5415, %v873
        %v5439 = vmul.f32 %v5414, %v874
        %v5440 = vmul.f32 %v5413, %v875
        %v5441 = vmul.f32 %v5412, %v876
        %v5442 = vmul.f32 %v5411, %v877
        %v5443 = vmul.f32 %v5410, %v870
        %v5444 = vmul.f32 %v5409, %v871
        %v5445 = vmul.f32 %v5408, %v872
        %v5446 = vmul.f32 %v5407, %v873
        %v5447 = vmul.f32 %v5406, %v874
        %v5448 = vmul.f32 %v5405, %v875
        %v5449 = vmul.f32 %v5404, %v876
        %v5450 = vmul.f32 %v5403, %v877
        %v5451 = vmul.f32 %v5402, %v870
        %v5452 = vmul.f32 %v5401, %v871
        %v5453 = vmul.f32 %v5400, %v872
        %v5454 = vmul.f32 %v5399, %v873
        %v5455 = vmul.f32 %v5398, %v874
        %v5456 = vmul.f32 %v5397, %v875
        %v5457 = vmul.f32 %v5396, %v876
        %v5458 = vmul.f32 %v5395, %v877
        %v5459 = vrot.slane %v5331, 6
        %v5460 = vrot.slane %v5332, 6
        %v5461 = vrot.slane %v5333, 6
        %v5462 = vrot.slane %v5334, 6
        %v5463 = vrot.slane %v5335, 6
        %v5464 = vrot.slane %v5336, 6
        %v5465 = vrot.slane %v5337, 6
        %v5466 = vrot.slane %v5338, 6
        %v5467 = vrot.slane %v5339, 6
        %v5468 = vrot.slane %v5340, 6
        %v5469 = vrot.slane %v5341, 6
        %v5470 = vrot.slane %v5342, 6
        %v5471 = vrot.slane %v5343, 6
        %v5472 = vrot.slane %v5344, 6
        %v5473 = vrot.slane %v5345, 6
        %v5474 = vrot.slane %v5346, 6
        %v5475 = vrot.slane %v5347, 6
        %v5476 = vrot.slane %v5348, 6
        %v5477 = vrot.slane %v5349, 6
        %v5478 = vrot.slane %v5350, 6
        %v5479 = vrot.slane %v5351, 6
        %v5480 = vrot.slane %v5352, 6
        %v5481 = vrot.slane %v5353, 6
        %v5482 = vrot.slane %v5354, 6
        %v5483 = vrot.slane %v5355, 6
        %v5484 = vrot.slane %v5356, 6
        %v5485 = vrot.slane %v5357, 6
        %v5486 = vrot.slane %v5358, 6
        %v5487 = vrot.slane %v5359, 6
        %v5488 = vrot.slane %v5360, 6
        %v5489 = vrot.slane %v5361, 6
        %v5490 = vrot.slane %v5362, 6
        %v5491 = vsel %vm1571, %v5489, %v5490
        %v5492 = vsel %vm1571, %v5488, %v5489
        %v5493 = vsel %vm1571, %v5487, %v5488
        %v5494 = vsel %vm1571, %v5486, %v5487
        %v5495 = vsel %vm1571, %v5485, %v5486
        %v5496 = vsel %vm1571, %v5484, %v5485
        %v5497 = vsel %vm1571, %v5483, %v5484
        %v5498 = vsel %vm1571, %v5482, %v5483
        %v5499 = vsel %vm1571, %v5481, %v5482
        %v5500 = vsel %vm1571, %v5480, %v5481
        %v5501 = vsel %vm1571, %v5479, %v5480
        %v5502 = vsel %vm1571, %v5478, %v5479
        %v5503 = vsel %vm1571, %v5477, %v5478
        %v5504 = vsel %vm1571, %v5476, %v5477
        %v5505 = vsel %vm1571, %v5475, %v5476
        %v5506 = vsel %vm1571, %v5474, %v5475
        %v5507 = vsel %vm1571, %v5473, %v5474
        %v5508 = vsel %vm1571, %v5472, %v5473
        %v5509 = vsel %vm1571, %v5471, %v5472
        %v5510 = vsel %vm1571, %v5470, %v5471
        %v5511 = vsel %vm1571, %v5469, %v5470
        %v5512 = vsel %vm1571, %v5468, %v5469
        %v5513 = vsel %vm1571, %v5467, %v5468
        %v5514 = vsel %vm1571, %v5466, %v5467
        %v5515 = vsel %vm1571, %v5465, %v5466
        %v5516 = vsel %vm1571, %v5464, %v5465
        %v5517 = vsel %vm1571, %v5463, %v5464
        %v5518 = vsel %vm1571, %v5462, %v5463
        %v5519 = vsel %vm1571, %v5461, %v5462
        %v5520 = vsel %vm1571, %v5460, %v5461
        %v5521 = vsel %vm1571, %v5459, %v5460
        %v5522 = vsel %vm1571, %v5490, %v5459
        %v5523 = vmul.f32 %v5522, %v918
        %v5524 = vmul.f32 %v5521, %v919
        %v5525 = vmul.f32 %v5520, %v920
        %v5526 = vmul.f32 %v5519, %v921
        %v5527 = vmul.f32 %v5518, %v922
        %v5528 = vmul.f32 %v5517, %v923
        %v5529 = vmul.f32 %v5516, %v924
        %v5530 = vmul.f32 %v5515, %v925
        %v5531 = vmul.f32 %v5514, %v918
        %v5532 = vmul.f32 %v5513, %v919
        %v5533 = vmul.f32 %v5512, %v920
        %v5534 = vmul.f32 %v5511, %v921
        %v5535 = vmul.f32 %v5510, %v922
        %v5536 = vmul.f32 %v5509, %v923
        %v5537 = vmul.f32 %v5508, %v924
        %v5538 = vmul.f32 %v5507, %v925
        %v5539 = vmul.f32 %v5506, %v918
        %v5540 = vmul.f32 %v5505, %v919
        %v5541 = vmul.f32 %v5504, %v920
        %v5542 = vmul.f32 %v5503, %v921
        %v5543 = vmul.f32 %v5502, %v922
        %v5544 = vmul.f32 %v5501, %v923
        %v5545 = vmul.f32 %v5500, %v924
        %v5546 = vmul.f32 %v5499, %v925
        %v5547 = vmul.f32 %v5498, %v918
        %v5548 = vmul.f32 %v5497, %v919
        %v5549 = vmul.f32 %v5496, %v920
        %v5550 = vmul.f32 %v5495, %v921
        %v5551 = vmul.f32 %v5494, %v922
        %v5552 = vmul.f32 %v5493, %v923
        %v5553 = vmul.f32 %v5492, %v924
        %v5554 = vmul.f32 %v5491, %v925
        %v5555 = vrot.slane %v5331, 7
        %v5556 = vrot.slane %v5332, 7
        %v5557 = vrot.slane %v5333, 7
        %v5558 = vrot.slane %v5334, 7
        %v5559 = vrot.slane %v5335, 7
        %v5560 = vrot.slane %v5336, 7
        %v5561 = vrot.slane %v5337, 7
        %v5562 = vrot.slane %v5338, 7
        %v5563 = vrot.slane %v5339, 7
        %v5564 = vrot.slane %v5340, 7
        %v5565 = vrot.slane %v5341, 7
        %v5566 = vrot.slane %v5342, 7
        %v5567 = vrot.slane %v5343, 7
        %v5568 = vrot.slane %v5344, 7
        %v5569 = vrot.slane %v5345, 7
        %v5570 = vrot.slane %v5346, 7
        %v5571 = vrot.slane %v5347, 7
        %v5572 = vrot.slane %v5348, 7
        %v5573 = vrot.slane %v5349, 7
        %v5574 = vrot.slane %v5350, 7
        %v5575 = vrot.slane %v5351, 7
        %v5576 = vrot.slane %v5352, 7
        %v5577 = vrot.slane %v5353, 7
        %v5578 = vrot.slane %v5354, 7
        %v5579 = vrot.slane %v5355, 7
        %v5580 = vrot.slane %v5356, 7
        %v5581 = vrot.slane %v5357, 7
        %v5582 = vrot.slane %v5358, 7
        %v5583 = vrot.slane %v5359, 7
        %v5584 = vrot.slane %v5360, 7
        %v5585 = vrot.slane %v5361, 7
        %v5586 = vrot.slane %v5362, 7
        %v5587 = vsel %vm1898, %v5585, %v5586
        %v5588 = vsel %vm1898, %v5584, %v5585
        %v5589 = vsel %vm1898, %v5583, %v5584
        %v5590 = vsel %vm1898, %v5582, %v5583
        %v5591 = vsel %vm1898, %v5581, %v5582
        %v5592 = vsel %vm1898, %v5580, %v5581
        %v5593 = vsel %vm1898, %v5579, %v5580
        %v5594 = vsel %vm1898, %v5578, %v5579
        %v5595 = vsel %vm1898, %v5577, %v5578
        %v5596 = vsel %vm1898, %v5576, %v5577
        %v5597 = vsel %vm1898, %v5575, %v5576
        %v5598 = vsel %vm1898, %v5574, %v5575
        %v5599 = vsel %vm1898, %v5573, %v5574
        %v5600 = vsel %vm1898, %v5572, %v5573
        %v5601 = vsel %vm1898, %v5571, %v5572
        %v5602 = vsel %vm1898, %v5570, %v5571
        %v5603 = vsel %vm1898, %v5569, %v5570
        %v5604 = vsel %vm1898, %v5568, %v5569
        %v5605 = vsel %vm1898, %v5567, %v5568
        %v5606 = vsel %vm1898, %v5566, %v5567
        %v5607 = vsel %vm1898, %v5565, %v5566
        %v5608 = vsel %vm1898, %v5564, %v5565
        %v5609 = vsel %vm1898, %v5563, %v5564
        %v5610 = vsel %vm1898, %v5562, %v5563
        %v5611 = vsel %vm1898, %v5561, %v5562
        %v5612 = vsel %vm1898, %v5560, %v5561
        %v5613 = vsel %vm1898, %v5559, %v5560
        %v5614 = vsel %vm1898, %v5558, %v5559
        %v5615 = vsel %vm1898, %v5557, %v5558
        %v5616 = vsel %vm1898, %v5556, %v5557
        %v5617 = vsel %vm1898, %v5555, %v5556
        %v5618 = vsel %vm1898, %v5586, %v5555
        %v5619 = vmul.f32 %v5618, %v966
        %v5620 = vmul.f32 %v5617, %v967
        %v5621 = vmul.f32 %v5616, %v968
        %v5622 = vmul.f32 %v5615, %v969
        %v5623 = vmul.f32 %v5614, %v970
        %v5624 = vmul.f32 %v5613, %v971
        %v5625 = vmul.f32 %v5612, %v972
        %v5626 = vmul.f32 %v5611, %v973
        %v5627 = vmul.f32 %v5610, %v966
        %v5628 = vmul.f32 %v5609, %v967
        %v5629 = vmul.f32 %v5608, %v968
        %v5630 = vmul.f32 %v5607, %v969
        %v5631 = vmul.f32 %v5606, %v970
        %v5632 = vmul.f32 %v5605, %v971
        %v5633 = vmul.f32 %v5604, %v972
        %v5634 = vmul.f32 %v5603, %v973
        %v5635 = vmul.f32 %v5602, %v966
        %v5636 = vmul.f32 %v5601, %v967
        %v5637 = vmul.f32 %v5600, %v968
        %v5638 = vmul.f32 %v5599, %v969
        %v5639 = vmul.f32 %v5598, %v970
        %v5640 = vmul.f32 %v5597, %v971
        %v5641 = vmul.f32 %v5596, %v972
        %v5642 = vmul.f32 %v5595, %v973
        %v5643 = vmul.f32 %v5594, %v966
        %v5644 = vmul.f32 %v5593, %v967
        %v5645 = vmul.f32 %v5592, %v968
        %v5646 = vmul.f32 %v5591, %v969
        %v5647 = vmul.f32 %v5590, %v970
        %v5648 = vmul.f32 %v5589, %v971
        %v5649 = vmul.f32 %v5588, %v972
        %v5650 = vmul.f32 %v5587, %v973
        %v5651 = vrot.slane %v5331, 1
        %v5652 = vrot.slane %v5332, 1
        %v5653 = vrot.slane %v5333, 1
        %v5654 = vrot.slane %v5334, 1
        %v5655 = vrot.slane %v5335, 1
        %v5656 = vrot.slane %v5336, 1
        %v5657 = vrot.slane %v5337, 1
        %v5658 = vrot.slane %v5338, 1
        %v5659 = vrot.slane %v5339, 1
        %v5660 = vrot.slane %v5340, 1
        %v5661 = vrot.slane %v5341, 1
        %v5662 = vrot.slane %v5342, 1
        %v5663 = vrot.slane %v5343, 1
        %v5664 = vrot.slane %v5344, 1
        %v5665 = vrot.slane %v5345, 1
        %v5666 = vrot.slane %v5346, 1
        %v5667 = vrot.slane %v5347, 1
        %v5668 = vrot.slane %v5348, 1
        %v5669 = vrot.slane %v5349, 1
        %v5670 = vrot.slane %v5350, 1
        %v5671 = vrot.slane %v5351, 1
        %v5672 = vrot.slane %v5352, 1
        %v5673 = vrot.slane %v5353, 1
        %v5674 = vrot.slane %v5354, 1
        %v5675 = vrot.slane %v5355, 1
        %v5676 = vrot.slane %v5356, 1
        %v5677 = vrot.slane %v5357, 1
        %v5678 = vrot.slane %v5358, 1
        %v5679 = vrot.slane %v5359, 1
        %v5680 = vrot.slane %v5360, 1
        %v5681 = vrot.slane %v5361, 1
        %v5682 = vrot.slane %v5362, 1
        %v5683 = vsel %vm2455, %v5681, %v5682
        %v5684 = vsel %vm2455, %v5680, %v5681
        %v5685 = vsel %vm2455, %v5679, %v5680
        %v5686 = vsel %vm2455, %v5678, %v5679
        %v5687 = vsel %vm2455, %v5677, %v5678
        %v5688 = vsel %vm2455, %v5676, %v5677
        %v5689 = vsel %vm2455, %v5675, %v5676
        %v5690 = vsel %vm2455, %v5674, %v5675
        %v5691 = vsel %vm2455, %v5673, %v5674
        %v5692 = vsel %vm2455, %v5672, %v5673
        %v5693 = vsel %vm2455, %v5671, %v5672
        %v5694 = vsel %vm2455, %v5670, %v5671
        %v5695 = vsel %vm2455, %v5669, %v5670
        %v5696 = vsel %vm2455, %v5668, %v5669
        %v5697 = vsel %vm2455, %v5667, %v5668
        %v5698 = vsel %vm2455, %v5666, %v5667
        %v5699 = vsel %vm2455, %v5665, %v5666
        %v5700 = vsel %vm2455, %v5664, %v5665
        %v5701 = vsel %vm2455, %v5663, %v5664
        %v5702 = vsel %vm2455, %v5662, %v5663
        %v5703 = vsel %vm2455, %v5661, %v5662
        %v5704 = vsel %vm2455, %v5660, %v5661
        %v5705 = vsel %vm2455, %v5659, %v5660
        %v5706 = vsel %vm2455, %v5658, %v5659
        %v5707 = vsel %vm2455, %v5657, %v5658
        %v5708 = vsel %vm2455, %v5656, %v5657
        %v5709 = vsel %vm2455, %v5655, %v5656
        %v5710 = vsel %vm2455, %v5654, %v5655
        %v5711 = vsel %vm2455, %v5653, %v5654
        %v5712 = vsel %vm2455, %v5652, %v5653
        %v5713 = vsel %vm2455, %v5651, %v5652
        %v5714 = vsel %vm2455, %v5682, %v5651
        %v5715 = vmul.f32 %v5713, %v1014
        %v5716 = vmul.f32 %v5712, %v1015
        %v5717 = vmul.f32 %v5711, %v1016
        %v5718 = vmul.f32 %v5710, %v1017
        %v5719 = vmul.f32 %v5709, %v1018
        %v5720 = vmul.f32 %v5708, %v1019
        %v5721 = vmul.f32 %v5707, %v1020
        %v5722 = vmul.f32 %v5706, %v1021
        %v5723 = vmul.f32 %v5705, %v1014
        %v5724 = vmul.f32 %v5704, %v1015
        %v5725 = vmul.f32 %v5703, %v1016
        %v5726 = vmul.f32 %v5702, %v1017
        %v5727 = vmul.f32 %v5701, %v1018
        %v5728 = vmul.f32 %v5700, %v1019
        %v5729 = vmul.f32 %v5699, %v1020
        %v5730 = vmul.f32 %v5698, %v1021
        %v5731 = vmul.f32 %v5697, %v1014
        %v5732 = vmul.f32 %v5696, %v1015
        %v5733 = vmul.f32 %v5695, %v1016
        %v5734 = vmul.f32 %v5694, %v1017
        %v5735 = vmul.f32 %v5693, %v1018
        %v5736 = vmul.f32 %v5692, %v1019
        %v5737 = vmul.f32 %v5691, %v1020
        %v5738 = vmul.f32 %v5690, %v1021
        %v5739 = vmul.f32 %v5689, %v1014
        %v5740 = vmul.f32 %v5688, %v1015
        %v5741 = vmul.f32 %v5687, %v1016
        %v5742 = vmul.f32 %v5686, %v1017
        %v5743 = vmul.f32 %v5685, %v1018
        %v5744 = vmul.f32 %v5684, %v1019
        %v5745 = vmul.f32 %v5683, %v1020
        %v5746 = vmul.f32 %v5714, %v1021
        %v5747 = vrot.slane %v5331, 2
        %v5748 = vrot.slane %v5332, 2
        %v5749 = vrot.slane %v5333, 2
        %v5750 = vrot.slane %v5334, 2
        %v5751 = vrot.slane %v5335, 2
        %v5752 = vrot.slane %v5336, 2
        %v5753 = vrot.slane %v5337, 2
        %v5754 = vrot.slane %v5338, 2
        %v5755 = vrot.slane %v5339, 2
        %v5756 = vrot.slane %v5340, 2
        %v5757 = vrot.slane %v5341, 2
        %v5758 = vrot.slane %v5342, 2
        %v5759 = vrot.slane %v5343, 2
        %v5760 = vrot.slane %v5344, 2
        %v5761 = vrot.slane %v5345, 2
        %v5762 = vrot.slane %v5346, 2
        %v5763 = vrot.slane %v5347, 2
        %v5764 = vrot.slane %v5348, 2
        %v5765 = vrot.slane %v5349, 2
        %v5766 = vrot.slane %v5350, 2
        %v5767 = vrot.slane %v5351, 2
        %v5768 = vrot.slane %v5352, 2
        %v5769 = vrot.slane %v5353, 2
        %v5770 = vrot.slane %v5354, 2
        %v5771 = vrot.slane %v5355, 2
        %v5772 = vrot.slane %v5356, 2
        %v5773 = vrot.slane %v5357, 2
        %v5774 = vrot.slane %v5358, 2
        %v5775 = vrot.slane %v5359, 2
        %v5776 = vrot.slane %v5360, 2
        %v5777 = vrot.slane %v5361, 2
        %v5778 = vrot.slane %v5362, 2
        %v5779 = vsel %vm2782, %v5777, %v5778
        %v5780 = vsel %vm2782, %v5776, %v5777
        %v5781 = vsel %vm2782, %v5775, %v5776
        %v5782 = vsel %vm2782, %v5774, %v5775
        %v5783 = vsel %vm2782, %v5773, %v5774
        %v5784 = vsel %vm2782, %v5772, %v5773
        %v5785 = vsel %vm2782, %v5771, %v5772
        %v5786 = vsel %vm2782, %v5770, %v5771
        %v5787 = vsel %vm2782, %v5769, %v5770
        %v5788 = vsel %vm2782, %v5768, %v5769
        %v5789 = vsel %vm2782, %v5767, %v5768
        %v5790 = vsel %vm2782, %v5766, %v5767
        %v5791 = vsel %vm2782, %v5765, %v5766
        %v5792 = vsel %vm2782, %v5764, %v5765
        %v5793 = vsel %vm2782, %v5763, %v5764
        %v5794 = vsel %vm2782, %v5762, %v5763
        %v5795 = vsel %vm2782, %v5761, %v5762
        %v5796 = vsel %vm2782, %v5760, %v5761
        %v5797 = vsel %vm2782, %v5759, %v5760
        %v5798 = vsel %vm2782, %v5758, %v5759
        %v5799 = vsel %vm2782, %v5757, %v5758
        %v5800 = vsel %vm2782, %v5756, %v5757
        %v5801 = vsel %vm2782, %v5755, %v5756
        %v5802 = vsel %vm2782, %v5754, %v5755
        %v5803 = vsel %vm2782, %v5753, %v5754
        %v5804 = vsel %vm2782, %v5752, %v5753
        %v5805 = vsel %vm2782, %v5751, %v5752
        %v5806 = vsel %vm2782, %v5750, %v5751
        %v5807 = vsel %vm2782, %v5749, %v5750
        %v5808 = vsel %vm2782, %v5748, %v5749
        %v5809 = vsel %vm2782, %v5747, %v5748
        %v5810 = vsel %vm2782, %v5778, %v5747
        %v5811 = vmul.f32 %v5809, %v1062
        %v5812 = vmul.f32 %v5808, %v1063
        %v5813 = vmul.f32 %v5807, %v1064
        %v5814 = vmul.f32 %v5806, %v1065
        %v5815 = vmul.f32 %v5805, %v1066
        %v5816 = vmul.f32 %v5804, %v1067
        %v5817 = vmul.f32 %v5803, %v1068
        %v5818 = vmul.f32 %v5802, %v1069
        %v5819 = vmul.f32 %v5801, %v1062
        %v5820 = vmul.f32 %v5800, %v1063
        %v5821 = vmul.f32 %v5799, %v1064
        %v5822 = vmul.f32 %v5798, %v1065
        %v5823 = vmul.f32 %v5797, %v1066
        %v5824 = vmul.f32 %v5796, %v1067
        %v5825 = vmul.f32 %v5795, %v1068
        %v5826 = vmul.f32 %v5794, %v1069
        %v5827 = vmul.f32 %v5793, %v1062
        %v5828 = vmul.f32 %v5792, %v1063
        %v5829 = vmul.f32 %v5791, %v1064
        %v5830 = vmul.f32 %v5790, %v1065
        %v5831 = vmul.f32 %v5789, %v1066
        %v5832 = vmul.f32 %v5788, %v1067
        %v5833 = vmul.f32 %v5787, %v1068
        %v5834 = vmul.f32 %v5786, %v1069
        %v5835 = vmul.f32 %v5785, %v1062
        %v5836 = vmul.f32 %v5784, %v1063
        %v5837 = vmul.f32 %v5783, %v1064
        %v5838 = vmul.f32 %v5782, %v1065
        %v5839 = vmul.f32 %v5781, %v1066
        %v5840 = vmul.f32 %v5780, %v1067
        %v5841 = vmul.f32 %v5779, %v1068
        %v5842 = vmul.f32 %v5810, %v1069
        %v5843 = vrot.slane %v5331, 3
        %v5844 = vrot.slane %v5332, 3
        %v5845 = vrot.slane %v5333, 3
        %v5846 = vrot.slane %v5334, 3
        %v5847 = vrot.slane %v5335, 3
        %v5848 = vrot.slane %v5336, 3
        %v5849 = vrot.slane %v5337, 3
        %v5850 = vrot.slane %v5338, 3
        %v5851 = vrot.slane %v5339, 3
        %v5852 = vrot.slane %v5340, 3
        %v5853 = vrot.slane %v5341, 3
        %v5854 = vrot.slane %v5342, 3
        %v5855 = vrot.slane %v5343, 3
        %v5856 = vrot.slane %v5344, 3
        %v5857 = vrot.slane %v5345, 3
        %v5858 = vrot.slane %v5346, 3
        %v5859 = vrot.slane %v5347, 3
        %v5860 = vrot.slane %v5348, 3
        %v5861 = vrot.slane %v5349, 3
        %v5862 = vrot.slane %v5350, 3
        %v5863 = vrot.slane %v5351, 3
        %v5864 = vrot.slane %v5352, 3
        %v5865 = vrot.slane %v5353, 3
        %v5866 = vrot.slane %v5354, 3
        %v5867 = vrot.slane %v5355, 3
        %v5868 = vrot.slane %v5356, 3
        %v5869 = vrot.slane %v5357, 3
        %v5870 = vrot.slane %v5358, 3
        %v5871 = vrot.slane %v5359, 3
        %v5872 = vrot.slane %v5360, 3
        %v5873 = vrot.slane %v5361, 3
        %v5874 = vrot.slane %v5362, 3
        %v5875 = vsel %vm3109, %v5873, %v5874
        %v5876 = vsel %vm3109, %v5872, %v5873
        %v5877 = vsel %vm3109, %v5871, %v5872
        %v5878 = vsel %vm3109, %v5870, %v5871
        %v5879 = vsel %vm3109, %v5869, %v5870
        %v5880 = vsel %vm3109, %v5868, %v5869
        %v5881 = vsel %vm3109, %v5867, %v5868
        %v5882 = vsel %vm3109, %v5866, %v5867
        %v5883 = vsel %vm3109, %v5865, %v5866
        %v5884 = vsel %vm3109, %v5864, %v5865
        %v5885 = vsel %vm3109, %v5863, %v5864
        %v5886 = vsel %vm3109, %v5862, %v5863
        %v5887 = vsel %vm3109, %v5861, %v5862
        %v5888 = vsel %vm3109, %v5860, %v5861
        %v5889 = vsel %vm3109, %v5859, %v5860
        %v5890 = vsel %vm3109, %v5858, %v5859
        %v5891 = vsel %vm3109, %v5857, %v5858
        %v5892 = vsel %vm3109, %v5856, %v5857
        %v5893 = vsel %vm3109, %v5855, %v5856
        %v5894 = vsel %vm3109, %v5854, %v5855
        %v5895 = vsel %vm3109, %v5853, %v5854
        %v5896 = vsel %vm3109, %v5852, %v5853
        %v5897 = vsel %vm3109, %v5851, %v5852
        %v5898 = vsel %vm3109, %v5850, %v5851
        %v5899 = vsel %vm3109, %v5849, %v5850
        %v5900 = vsel %vm3109, %v5848, %v5849
        %v5901 = vsel %vm3109, %v5847, %v5848
        %v5902 = vsel %vm3109, %v5846, %v5847
        %v5903 = vsel %vm3109, %v5845, %v5846
        %v5904 = vsel %vm3109, %v5844, %v5845
        %v5905 = vsel %vm3109, %v5843, %v5844
        %v5906 = vsel %vm3109, %v5874, %v5843
        %v5907 = vmul.f32 %v5905, %v1110
        %v5908 = vmul.f32 %v5904, %v1111
        %v5909 = vmul.f32 %v5903, %v1112
        %v5910 = vmul.f32 %v5902, %v1113
        %v5911 = vmul.f32 %v5901, %v1114
        %v5912 = vmul.f32 %v5900, %v1115
        %v5913 = vmul.f32 %v5899, %v1116
        %v5914 = vmul.f32 %v5898, %v1117
        %v5915 = vmul.f32 %v5897, %v1110
        %v5916 = vmul.f32 %v5896, %v1111
        %v5917 = vmul.f32 %v5895, %v1112
        %v5918 = vmul.f32 %v5894, %v1113
        %v5919 = vmul.f32 %v5893, %v1114
        %v5920 = vmul.f32 %v5892, %v1115
        %v5921 = vmul.f32 %v5891, %v1116
        %v5922 = vmul.f32 %v5890, %v1117
        %v5923 = vmul.f32 %v5889, %v1110
        %v5924 = vmul.f32 %v5888, %v1111
        %v5925 = vmul.f32 %v5887, %v1112
        %v5926 = vmul.f32 %v5886, %v1113
        %v5927 = vmul.f32 %v5885, %v1114
        %v5928 = vmul.f32 %v5884, %v1115
        %v5929 = vmul.f32 %v5883, %v1116
        %v5930 = vmul.f32 %v5882, %v1117
        %v5931 = vmul.f32 %v5881, %v1110
        %v5932 = vmul.f32 %v5880, %v1111
        %v5933 = vmul.f32 %v5879, %v1112
        %v5934 = vmul.f32 %v5878, %v1113
        %v5935 = vmul.f32 %v5877, %v1114
        %v5936 = vmul.f32 %v5876, %v1115
        %v5937 = vmul.f32 %v5875, %v1116
        %v5938 = vmul.f32 %v5906, %v1117
        %5971 = vrot.lane.b32.xlu0 %v5523, 32
        %v5972 = vpop.permute.xlu0 %5971
        %5973 = vrot.lane.b32.xlu0 %v5524, 32
        %v5974 = vpop.permute.xlu0 %5973
        %5975 = vrot.lane.b32.xlu0 %v5525, 32
        %v5976 = vpop.permute.xlu0 %5975
        %5977 = vrot.lane.b32.xlu0 %v5526, 32
        %v5978 = vpop.permute.xlu0 %5977
        %5979 = vrot.lane.b32.xlu0 %v5527, 32
        %v5980 = vpop.permute.xlu0 %5979
        %5981 = vrot.lane.b32.xlu0 %v5528, 32
        %v5982 = vpop.permute.xlu0 %5981
        %5983 = vrot.lane.b32.xlu0 %v5529, 32
        %v5984 = vpop.permute.xlu0 %5983
        %5985 = vrot.lane.b32.xlu0 %v5530, 32
        %v5986 = vpop.permute.xlu0 %5985
        %5987 = vrot.lane.b32.xlu0 %v5531, 32
        %v5988 = vpop.permute.xlu0 %5987
        %5989 = vrot.lane.b32.xlu0 %v5532, 32
        %v5990 = vpop.permute.xlu0 %5989
        %5991 = vrot.lane.b32.xlu0 %v5533, 32
        %v5992 = vpop.permute.xlu0 %5991
        %5993 = vrot.lane.b32.xlu0 %v5534, 32
        %v5994 = vpop.permute.xlu0 %5993
        %5995 = vrot.lane.b32.xlu0 %v5535, 32
        %v5996 = vpop.permute.xlu0 %5995
        %5997 = vrot.lane.b32.xlu0 %v5536, 32
        %v5998 = vpop.permute.xlu0 %5997
        %5999 = vrot.lane.b32.xlu0 %v5537, 32
        %v6000 = vpop.permute.xlu0 %5999
        %6001 = vrot.lane.b32.xlu0 %v5538, 32
        %v6002 = vpop.permute.xlu0 %6001
        %6003 = vrot.lane.b32.xlu0 %v5539, 32
        %v6004 = vpop.permute.xlu0 %6003
        %6005 = vrot.lane.b32.xlu0 %v5540, 32
        %v6006 = vpop.permute.xlu0 %6005
        %6007 = vrot.lane.b32.xlu0 %v5541, 32
        %v6008 = vpop.permute.xlu0 %6007
        %6009 = vrot.lane.b32.xlu0 %v5542, 32
        %v6010 = vpop.permute.xlu0 %6009
        %6011 = vrot.lane.b32.xlu0 %v5543, 32
        %v6012 = vpop.permute.xlu0 %6011
        %6013 = vrot.lane.b32.xlu0 %v5544, 32
        %v6014 = vpop.permute.xlu0 %6013
        %6015 = vrot.lane.b32.xlu0 %v5545, 32
        %v6016 = vpop.permute.xlu0 %6015
        %6017 = vrot.lane.b32.xlu0 %v5546, 32
        %v6018 = vpop.permute.xlu0 %6017
        %6019 = vrot.lane.b32.xlu0 %v5547, 32
        %v6020 = vpop.permute.xlu0 %6019
        %6021 = vrot.lane.b32.xlu0 %v5548, 32
        %v6022 = vpop.permute.xlu0 %6021
        %6023 = vrot.lane.b32.xlu0 %v5549, 32
        %v6024 = vpop.permute.xlu0 %6023
        %6025 = vrot.lane.b32.xlu0 %v5550, 32
        %v6026 = vpop.permute.xlu0 %6025
        %6027 = vrot.lane.b32.xlu0 %v5551, 32
        %v6028 = vpop.permute.xlu0 %6027
        %6029 = vrot.lane.b32.xlu0 %v5552, 32
        %v6030 = vpop.permute.xlu0 %6029
        %6031 = vrot.lane.b32.xlu0 %v5553, 32
        %v6032 = vpop.permute.xlu0 %6031
        %6033 = vrot.lane.b32.xlu0 %v5554, 32
        %v6034 = vpop.permute.xlu0 %6033
        %6099 = vrot.lane.b32.xlu0 %v5619, 64
        %v6100 = vpop.permute.xlu0 %6099
        %6101 = vrot.lane.b32.xlu0 %v5620, 64
        %v6102 = vpop.permute.xlu0 %6101
        %6103 = vrot.lane.b32.xlu0 %v5621, 64
        %v6104 = vpop.permute.xlu0 %6103
        %6105 = vrot.lane.b32.xlu0 %v5622, 64
        %v6106 = vpop.permute.xlu0 %6105
        %6107 = vrot.lane.b32.xlu0 %v5623, 64
        %v6108 = vpop.permute.xlu0 %6107
        %6109 = vrot.lane.b32.xlu0 %v5624, 64
        %v6110 = vpop.permute.xlu0 %6109
        %6111 = vrot.lane.b32.xlu0 %v5625, 64
        %v6112 = vpop.permute.xlu0 %6111
        %6113 = vrot.lane.b32.xlu0 %v5626, 64
        %v6114 = vpop.permute.xlu0 %6113
        %6115 = vrot.lane.b32.xlu0 %v5627, 64
        %v6116 = vpop.permute.xlu0 %6115
        %6117 = vrot.lane.b32.xlu0 %v5628, 64
        %v6118 = vpop.permute.xlu0 %6117
        %6119 = vrot.lane.b32.xlu0 %v5629, 64
        %v6120 = vpop.permute.xlu0 %6119
        %6121 = vrot.lane.b32.xlu0 %v5630, 64
        %v6122 = vpop.permute.xlu0 %6121
        %6123 = vrot.lane.b32.xlu0 %v5631, 64
        %v6124 = vpop.permute.xlu0 %6123
        %6125 = vrot.lane.b32.xlu0 %v5632, 64
        %v6126 = vpop.permute.xlu0 %6125
        %6127 = vrot.lane.b32.xlu0 %v5633, 64
        %v6128 = vpop.permute.xlu0 %6127
        %6129 = vrot.lane.b32.xlu0 %v5634, 64
        %v6130 = vpop.permute.xlu0 %6129
        %6131 = vrot.lane.b32.xlu0 %v5635, 64
        %v6132 = vpop.permute.xlu0 %6131
        %6133 = vrot.lane.b32.xlu0 %v5636, 64
        %v6134 = vpop.permute.xlu0 %6133
        %6135 = vrot.lane.b32.xlu0 %v5637, 64
        %v6136 = vpop.permute.xlu0 %6135
        %6137 = vrot.lane.b32.xlu0 %v5638, 64
        %v6138 = vpop.permute.xlu0 %6137
        %6139 = vrot.lane.b32.xlu0 %v5639, 64
        %v6140 = vpop.permute.xlu0 %6139
        %6141 = vrot.lane.b32.xlu0 %v5640, 64
        %v6142 = vpop.permute.xlu0 %6141
        %6143 = vrot.lane.b32.xlu0 %v5641, 64
        %v6144 = vpop.permute.xlu0 %6143
        %6145 = vrot.lane.b32.xlu0 %v5642, 64
        %v6146 = vpop.permute.xlu0 %6145
        %6147 = vrot.lane.b32.xlu0 %v5643, 64
        %v6148 = vpop.permute.xlu0 %6147
        %6149 = vrot.lane.b32.xlu0 %v5644, 64
        %v6150 = vpop.permute.xlu0 %6149
        %6151 = vrot.lane.b32.xlu0 %v5645, 64
        %v6152 = vpop.permute.xlu0 %6151
        %6153 = vrot.lane.b32.xlu0 %v5646, 64
        %v6154 = vpop.permute.xlu0 %6153
        %6155 = vrot.lane.b32.xlu0 %v5647, 64
        %v6156 = vpop.permute.xlu0 %6155
        %6157 = vrot.lane.b32.xlu0 %v5648, 64
        %v6158 = vpop.permute.xlu0 %6157
        %6159 = vrot.lane.b32.xlu0 %v5649, 64
        %v6160 = vpop.permute.xlu0 %6159
        %6161 = vrot.lane.b32.xlu0 %v5650, 64
        %v6162 = vpop.permute.xlu0 %6161
        %6227 = vrot.lane.b32.xlu0 %v5331, 96
        %v6228 = vpop.permute.xlu0 %6227
        %6229 = vrot.lane.b32.xlu0 %v5332, 96
        %v6230 = vpop.permute.xlu0 %6229
        %6231 = vrot.lane.b32.xlu0 %v5333, 96
        %v6232 = vpop.permute.xlu0 %6231
        %6233 = vrot.lane.b32.xlu0 %v5334, 96
        %v6234 = vpop.permute.xlu0 %6233
        %6235 = vrot.lane.b32.xlu0 %v5335, 96
        %v6236 = vpop.permute.xlu0 %6235
        %6237 = vrot.lane.b32.xlu0 %v5336, 96
        %v6238 = vpop.permute.xlu0 %6237
        %6239 = vrot.lane.b32.xlu0 %v5337, 96
        %v6240 = vpop.permute.xlu0 %6239
        %6241 = vrot.lane.b32.xlu0 %v5338, 96
        %v6242 = vpop.permute.xlu0 %6241
        %6243 = vrot.lane.b32.xlu0 %v5339, 96
        %v6244 = vpop.permute.xlu0 %6243
        %6245 = vrot.lane.b32.xlu0 %v5340, 96
        %v6246 = vpop.permute.xlu0 %6245
        %6247 = vrot.lane.b32.xlu0 %v5341, 96
        %v6248 = vpop.permute.xlu0 %6247
        %6249 = vrot.lane.b32.xlu0 %v5342, 96
        %v6250 = vpop.permute.xlu0 %6249
        %6251 = vrot.lane.b32.xlu0 %v5343, 96
        %v6252 = vpop.permute.xlu0 %6251
        %6253 = vrot.lane.b32.xlu0 %v5344, 96
        %v6254 = vpop.permute.xlu0 %6253
        %6255 = vrot.lane.b32.xlu0 %v5345, 96
        %v6256 = vpop.permute.xlu0 %6255
        %6257 = vrot.lane.b32.xlu0 %v5346, 96
        %v6258 = vpop.permute.xlu0 %6257
        %6259 = vrot.lane.b32.xlu0 %v5347, 96
        %v6260 = vpop.permute.xlu0 %6259
        %6261 = vrot.lane.b32.xlu0 %v5348, 96
        %v6262 = vpop.permute.xlu0 %6261
        %6263 = vrot.lane.b32.xlu0 %v5349, 96
        %v6264 = vpop.permute.xlu0 %6263
        %6265 = vrot.lane.b32.xlu0 %v5350, 96
        %v6266 = vpop.permute.xlu0 %6265
        %6267 = vrot.lane.b32.xlu0 %v5351, 96
        %v6268 = vpop.permute.xlu0 %6267
        %6269 = vrot.lane.b32.xlu0 %v5352, 96
        %v6270 = vpop.permute.xlu0 %6269
        %6271 = vrot.lane.b32.xlu0 %v5353, 96
        %v6272 = vpop.permute.xlu0 %6271
        %6273 = vrot.lane.b32.xlu0 %v5354, 96
        %v6274 = vpop.permute.xlu0 %6273
        %6275 = vrot.lane.b32.xlu0 %v5355, 96
        %v6276 = vpop.permute.xlu0 %6275
        %6277 = vrot.lane.b32.xlu0 %v5356, 96
        %v6278 = vpop.permute.xlu0 %6277
        %6279 = vrot.lane.b32.xlu0 %v5357, 96
        %v6280 = vpop.permute.xlu0 %6279
        %6281 = vrot.lane.b32.xlu0 %v5358, 96
        %v6282 = vpop.permute.xlu0 %6281
        %6283 = vrot.lane.b32.xlu0 %v5359, 96
        %v6284 = vpop.permute.xlu0 %6283
        %6285 = vrot.lane.b32.xlu0 %v5360, 96
        %v6286 = vpop.permute.xlu0 %6285
        %6287 = vrot.lane.b32.xlu0 %v5361, 96
        %v6288 = vpop.permute.xlu0 %6287
        %6289 = vrot.lane.b32.xlu0 %v5362, 96
        %v6290 = vpop.permute.xlu0 %6289
        %6355 = vrot.lane.b32.xlu0 %v5811, 32
        %v6356 = vpop.permute.xlu0 %6355
        %6357 = vrot.lane.b32.xlu0 %v5812, 32
        %v6358 = vpop.permute.xlu0 %6357
        %6359 = vrot.lane.b32.xlu0 %v5813, 32
        %v6360 = vpop.permute.xlu0 %6359
        %6361 = vrot.lane.b32.xlu0 %v5814, 32
        %v6362 = vpop.permute.xlu0 %6361
        %6363 = vrot.lane.b32.xlu0 %v5815, 32
        %v6364 = vpop.permute.xlu0 %6363
        %6365 = vrot.lane.b32.xlu0 %v5816, 32
        %v6366 = vpop.permute.xlu0 %6365
        %6367 = vrot.lane.b32.xlu0 %v5817, 32
        %v6368 = vpop.permute.xlu0 %6367
        %6369 = vrot.lane.b32.xlu0 %v5818, 32
        %v6370 = vpop.permute.xlu0 %6369
        %6371 = vrot.lane.b32.xlu0 %v5819, 32
        %v6372 = vpop.permute.xlu0 %6371
        %6373 = vrot.lane.b32.xlu0 %v5820, 32
        %v6374 = vpop.permute.xlu0 %6373
        %6375 = vrot.lane.b32.xlu0 %v5821, 32
        %v6376 = vpop.permute.xlu0 %6375
        %6377 = vrot.lane.b32.xlu0 %v5822, 32
        %v6378 = vpop.permute.xlu0 %6377
        %6379 = vrot.lane.b32.xlu0 %v5823, 32
        %v6380 = vpop.permute.xlu0 %6379
        %6381 = vrot.lane.b32.xlu0 %v5824, 32
        %v6382 = vpop.permute.xlu0 %6381
        %6383 = vrot.lane.b32.xlu0 %v5825, 32
        %v6384 = vpop.permute.xlu0 %6383
        %6385 = vrot.lane.b32.xlu0 %v5826, 32
        %v6386 = vpop.permute.xlu0 %6385
        %6387 = vrot.lane.b32.xlu0 %v5827, 32
        %v6388 = vpop.permute.xlu0 %6387
        %6389 = vrot.lane.b32.xlu0 %v5828, 32
        %v6390 = vpop.permute.xlu0 %6389
        %6391 = vrot.lane.b32.xlu0 %v5829, 32
        %v6392 = vpop.permute.xlu0 %6391
        %6393 = vrot.lane.b32.xlu0 %v5830, 32
        %v6394 = vpop.permute.xlu0 %6393
        %6395 = vrot.lane.b32.xlu0 %v5831, 32
        %v6396 = vpop.permute.xlu0 %6395
        %6397 = vrot.lane.b32.xlu0 %v5832, 32
        %v6398 = vpop.permute.xlu0 %6397
        %6399 = vrot.lane.b32.xlu0 %v5833, 32
        %v6400 = vpop.permute.xlu0 %6399
        %6401 = vrot.lane.b32.xlu0 %v5834, 32
        %v6402 = vpop.permute.xlu0 %6401
        %6403 = vrot.lane.b32.xlu0 %v5835, 32
        %v6404 = vpop.permute.xlu0 %6403
        %6405 = vrot.lane.b32.xlu0 %v5836, 32
        %v6406 = vpop.permute.xlu0 %6405
        %6407 = vrot.lane.b32.xlu0 %v5837, 32
        %v6408 = vpop.permute.xlu0 %6407
        %6409 = vrot.lane.b32.xlu0 %v5838, 32
        %v6410 = vpop.permute.xlu0 %6409
        %6411 = vrot.lane.b32.xlu0 %v5839, 32
        %v6412 = vpop.permute.xlu0 %6411
        %6413 = vrot.lane.b32.xlu0 %v5840, 32
        %v6414 = vpop.permute.xlu0 %6413
        %6415 = vrot.lane.b32.xlu0 %v5841, 32
        %v6416 = vpop.permute.xlu0 %6415
        %6417 = vrot.lane.b32.xlu0 %v5842, 32
        %v6418 = vpop.permute.xlu0 %6417
        %6483 = vrot.lane.b32.xlu0 %v5907, 64
        %v6484 = vpop.permute.xlu0 %6483
        %6485 = vrot.lane.b32.xlu0 %v5908, 64
        %v6486 = vpop.permute.xlu0 %6485
        %6487 = vrot.lane.b32.xlu0 %v5909, 64
        %v6488 = vpop.permute.xlu0 %6487
        %6489 = vrot.lane.b32.xlu0 %v5910, 64
        %v6490 = vpop.permute.xlu0 %6489
        %6491 = vrot.lane.b32.xlu0 %v5911, 64
        %v6492 = vpop.permute.xlu0 %6491
        %6493 = vrot.lane.b32.xlu0 %v5912, 64
        %v6494 = vpop.permute.xlu0 %6493
        %6495 = vrot.lane.b32.xlu0 %v5913, 64
        %v6496 = vpop.permute.xlu0 %6495
        %6497 = vrot.lane.b32.xlu0 %v5914, 64
        %v6498 = vpop.permute.xlu0 %6497
        %6499 = vrot.lane.b32.xlu0 %v5915, 64
        %v6500 = vpop.permute.xlu0 %6499
        %6501 = vrot.lane.b32.xlu0 %v5916, 64
        %v6502 = vpop.permute.xlu0 %6501
        %6503 = vrot.lane.b32.xlu0 %v5917, 64
        %v6504 = vpop.permute.xlu0 %6503
        %6505 = vrot.lane.b32.xlu0 %v5918, 64
        %v6506 = vpop.permute.xlu0 %6505
        %6507 = vrot.lane.b32.xlu0 %v5919, 64
        %v6508 = vpop.permute.xlu0 %6507
        %6509 = vrot.lane.b32.xlu0 %v5920, 64
        %v6510 = vpop.permute.xlu0 %6509
        %6511 = vrot.lane.b32.xlu0 %v5921, 64
        %v6512 = vpop.permute.xlu0 %6511
        %6513 = vrot.lane.b32.xlu0 %v5922, 64
        %v6514 = vpop.permute.xlu0 %6513
        %6515 = vrot.lane.b32.xlu0 %v5923, 64
        %v6516 = vpop.permute.xlu0 %6515
        %6517 = vrot.lane.b32.xlu0 %v5924, 64
        %v6518 = vpop.permute.xlu0 %6517
        %6519 = vrot.lane.b32.xlu0 %v5925, 64
        %v6520 = vpop.permute.xlu0 %6519
        %6521 = vrot.lane.b32.xlu0 %v5926, 64
        %v6522 = vpop.permute.xlu0 %6521
        %6523 = vrot.lane.b32.xlu0 %v5927, 64
        %v6524 = vpop.permute.xlu0 %6523
        %6525 = vrot.lane.b32.xlu0 %v5928, 64
        %v6526 = vpop.permute.xlu0 %6525
        %6527 = vrot.lane.b32.xlu0 %v5929, 64
        %v6528 = vpop.permute.xlu0 %6527
        %6529 = vrot.lane.b32.xlu0 %v5930, 64
        %v6530 = vpop.permute.xlu0 %6529
        %6531 = vrot.lane.b32.xlu0 %v5931, 64
        %v6532 = vpop.permute.xlu0 %6531
        %6533 = vrot.lane.b32.xlu0 %v5932, 64
        %v6534 = vpop.permute.xlu0 %6533
        %6535 = vrot.lane.b32.xlu0 %v5933, 64
        %v6536 = vpop.permute.xlu0 %6535
        %6537 = vrot.lane.b32.xlu0 %v5934, 64
        %v6538 = vpop.permute.xlu0 %6537
        %6539 = vrot.lane.b32.xlu0 %v5935, 64
        %v6540 = vpop.permute.xlu0 %6539
        %6541 = vrot.lane.b32.xlu0 %v5936, 64
        %v6542 = vpop.permute.xlu0 %6541
        %6543 = vrot.lane.b32.xlu0 %v5937, 64
        %v6544 = vpop.permute.xlu0 %6543
        %6545 = vrot.lane.b32.xlu0 %v5938, 64
        %v6546 = vpop.permute.xlu0 %6545
        %v6579 = vsel %vm4845, %v5427, %v5972
        %v6580 = vsel %vm4845, %v5428, %v5974
        %v6581 = vsel %vm4845, %v5429, %v5976
        %v6582 = vsel %vm4845, %v5430, %v5978
        %v6583 = vsel %vm4845, %v5431, %v5980
        %v6584 = vsel %vm4845, %v5432, %v5982
        %v6585 = vsel %vm4845, %v5433, %v5984
        %v6586 = vsel %vm4845, %v5434, %v5986
        %v6587 = vsel %vm4845, %v5435, %v5988
        %v6588 = vsel %vm4845, %v5436, %v5990
        %v6589 = vsel %vm4845, %v5437, %v5992
        %v6590 = vsel %vm4845, %v5438, %v5994
        %v6591 = vsel %vm4845, %v5439, %v5996
        %v6592 = vsel %vm4845, %v5440, %v5998
        %v6593 = vsel %vm4845, %v5441, %v6000
        %v6594 = vsel %vm4845, %v5442, %v6002
        %v6595 = vsel %vm4845, %v5443, %v6004
        %v6596 = vsel %vm4845, %v5444, %v6006
        %v6597 = vsel %vm4845, %v5445, %v6008
        %v6598 = vsel %vm4845, %v5446, %v6010
        %v6599 = vsel %vm4845, %v5447, %v6012
        %v6600 = vsel %vm4845, %v5448, %v6014
        %v6601 = vsel %vm4845, %v5449, %v6016
        %v6602 = vsel %vm4845, %v5450, %v6018
        %v6603 = vsel %vm4845, %v5451, %v6020
        %v6604 = vsel %vm4845, %v5452, %v6022
        %v6605 = vsel %vm4845, %v5453, %v6024
        %v6606 = vsel %vm4845, %v5454, %v6026
        %v6607 = vsel %vm4845, %v5455, %v6028
        %v6608 = vsel %vm4845, %v5456, %v6030
        %v6609 = vsel %vm4845, %v5457, %v6032
        %v6610 = vsel %vm4845, %v5458, %v6034
        %v6611 = vsel %vm4911, %v6579, %v6100
        %v6612 = vsel %vm4911, %v6580, %v6102
        %v6613 = vsel %vm4911, %v6581, %v6104
        %v6614 = vsel %vm4911, %v6582, %v6106
        %v6615 = vsel %vm4911, %v6583, %v6108
        %v6616 = vsel %vm4911, %v6584, %v6110
        %v6617 = vsel %vm4911, %v6585, %v6112
        %v6618 = vsel %vm4911, %v6586, %v6114
        %v6619 = vsel %vm4911, %v6587, %v6116
        %v6620 = vsel %vm4911, %v6588, %v6118
        %v6621 = vsel %vm4911, %v6589, %v6120
        %v6622 = vsel %vm4911, %v6590, %v6122
        %v6623 = vsel %vm4911, %v6591, %v6124
        %v6624 = vsel %vm4911, %v6592, %v6126
        %v6625 = vsel %vm4911, %v6593, %v6128
        %v6626 = vsel %vm4911, %v6594, %v6130
        %v6627 = vsel %vm4911, %v6595, %v6132
        %v6628 = vsel %vm4911, %v6596, %v6134
        %v6629 = vsel %vm4911, %v6597, %v6136
        %v6630 = vsel %vm4911, %v6598, %v6138
        %v6631 = vsel %vm4911, %v6599, %v6140
        %v6632 = vsel %vm4911, %v6600, %v6142
        %v6633 = vsel %vm4911, %v6601, %v6144
        %v6634 = vsel %vm4911, %v6602, %v6146
        %v6635 = vsel %vm4911, %v6603, %v6148
        %v6636 = vsel %vm4911, %v6604, %v6150
        %v6637 = vsel %vm4911, %v6605, %v6152
        %v6638 = vsel %vm4911, %v6606, %v6154
        %v6639 = vsel %vm4911, %v6607, %v6156
        %v6640 = vsel %vm4911, %v6608, %v6158
        %v6641 = vsel %vm4911, %v6609, %v6160
        %v6642 = vsel %vm4911, %v6610, %v6162
        %v6643 = vsel %vm4977, %v6611, %v6228
        %v6644 = vsel %vm4977, %v6612, %v6230
        %v6645 = vsel %vm4977, %v6613, %v6232
        %v6646 = vsel %vm4977, %v6614, %v6234
        %v6647 = vsel %vm4977, %v6615, %v6236
        %v6648 = vsel %vm4977, %v6616, %v6238
        %v6649 = vsel %vm4977, %v6617, %v6240
        %v6650 = vsel %vm4977, %v6618, %v6242
        %v6651 = vsel %vm4977, %v6619, %v6244
        %v6652 = vsel %vm4977, %v6620, %v6246
        %v6653 = vsel %vm4977, %v6621, %v6248
        %v6654 = vsel %vm4977, %v6622, %v6250
        %v6655 = vsel %vm4977, %v6623, %v6252
        %v6656 = vsel %vm4977, %v6624, %v6254
        %v6657 = vsel %vm4977, %v6625, %v6256
        %v6658 = vsel %vm4977, %v6626, %v6258
        %v6659 = vsel %vm4977, %v6627, %v6260
        %v6660 = vsel %vm4977, %v6628, %v6262
        %v6661 = vsel %vm4977, %v6629, %v6264
        %v6662 = vsel %vm4977, %v6630, %v6266
        %v6663 = vsel %vm4977, %v6631, %v6268
        %v6664 = vsel %vm4977, %v6632, %v6270
        %v6665 = vsel %vm4977, %v6633, %v6272
        %v6666 = vsel %vm4977, %v6634, %v6274
        %v6667 = vsel %vm4977, %v6635, %v6276
        %v6668 = vsel %vm4977, %v6636, %v6278
        %v6669 = vsel %vm4977, %v6637, %v6280
        %v6670 = vsel %vm4977, %v6638, %v6282
        %v6671 = vsel %vm4977, %v6639, %v6284
        %v6672 = vsel %vm4977, %v6640, %v6286
        %v6673 = vsel %vm4977, %v6641, %v6288
        %v6674 = vsel %vm4977, %v6642, %v6290
        %v6675 = vsel %vm4845, %v5715, %v6356
        %v6676 = vsel %vm4845, %v5716, %v6358
        %v6677 = vsel %vm4845, %v5717, %v6360
        %v6678 = vsel %vm4845, %v5718, %v6362
        %v6679 = vsel %vm4845, %v5719, %v6364
        %v6680 = vsel %vm4845, %v5720, %v6366
        %v6681 = vsel %vm4845, %v5721, %v6368
        %v6682 = vsel %vm4845, %v5722, %v6370
        %v6683 = vsel %vm4845, %v5723, %v6372
        %v6684 = vsel %vm4845, %v5724, %v6374
        %v6685 = vsel %vm4845, %v5725, %v6376
        %v6686 = vsel %vm4845, %v5726, %v6378
        %v6687 = vsel %vm4845, %v5727, %v6380
        %v6688 = vsel %vm4845, %v5728, %v6382
        %v6689 = vsel %vm4845, %v5729, %v6384
        %v6690 = vsel %vm4845, %v5730, %v6386
        %v6691 = vsel %vm4845, %v5731, %v6388
        %v6692 = vsel %vm4845, %v5732, %v6390
        %v6693 = vsel %vm4845, %v5733, %v6392
        %v6694 = vsel %vm4845, %v5734, %v6394
        %v6695 = vsel %vm4845, %v5735, %v6396
        %v6696 = vsel %vm4845, %v5736, %v6398
        %v6697 = vsel %vm4845, %v5737, %v6400
        %v6698 = vsel %vm4845, %v5738, %v6402
        %v6699 = vsel %vm4845, %v5739, %v6404
        %v6700 = vsel %vm4845, %v5740, %v6406
        %v6701 = vsel %vm4845, %v5741, %v6408
        %v6702 = vsel %vm4845, %v5742, %v6410
        %v6703 = vsel %vm4845, %v5743, %v6412
        %v6704 = vsel %vm4845, %v5744, %v6414
        %v6705 = vsel %vm4845, %v5745, %v6416
        %v6706 = vsel %vm4845, %v5746, %v6418
        %v6707 = vsel %vm4911, %v6675, %v6484
        %v6708 = vsel %vm4911, %v6676, %v6486
        %v6709 = vsel %vm4911, %v6677, %v6488
        %v6710 = vsel %vm4911, %v6678, %v6490
        %v6711 = vsel %vm4911, %v6679, %v6492
        %v6712 = vsel %vm4911, %v6680, %v6494
        %v6713 = vsel %vm4911, %v6681, %v6496
        %v6714 = vsel %vm4911, %v6682, %v6498
        %v6715 = vsel %vm4911, %v6683, %v6500
        %v6716 = vsel %vm4911, %v6684, %v6502
        %v6717 = vsel %vm4911, %v6685, %v6504
        %v6718 = vsel %vm4911, %v6686, %v6506
        %v6719 = vsel %vm4911, %v6687, %v6508
        %v6720 = vsel %vm4911, %v6688, %v6510
        %v6721 = vsel %vm4911, %v6689, %v6512
        %v6722 = vsel %vm4911, %v6690, %v6514
        %v6723 = vsel %vm4911, %v6691, %v6516
        %v6724 = vsel %vm4911, %v6692, %v6518
        %v6725 = vsel %vm4911, %v6693, %v6520
        %v6726 = vsel %vm4911, %v6694, %v6522
        %v6727 = vsel %vm4911, %v6695, %v6524
        %v6728 = vsel %vm4911, %v6696, %v6526
        %v6729 = vsel %vm4911, %v6697, %v6528
        %v6730 = vsel %vm4911, %v6698, %v6530
        %v6731 = vsel %vm4911, %v6699, %v6532
        %v6732 = vsel %vm4911, %v6700, %v6534
        %v6733 = vsel %vm4911, %v6701, %v6536
        %v6734 = vsel %vm4911, %v6702, %v6538
        %v6735 = vsel %vm4911, %v6703, %v6540
        %v6736 = vsel %vm4911, %v6704, %v6542
        %v6737 = vsel %vm4911, %v6705, %v6544
        %v6738 = vsel %vm4911, %v6706, %v6546
        %v6739 = vpack.c.bf16 %v6644, %v6643
        %v6740 = vpack.c.bf16 %v6708, %v6707
        %v6741 = vpack.c.bf16 %v6646, %v6645
        %v6742 = vpack.c.bf16 %v6710, %v6709
        %v6743 = vpack.c.bf16 %v6648, %v6647
        %v6744 = vpack.c.bf16 %v6712, %v6711
        %v6745 = vpack.c.bf16 %v6650, %v6649
        %v6746 = vpack.c.bf16 %v6714, %v6713
        %v6747 = vpack.c.bf16 %v6652, %v6651
        %v6748 = vpack.c.bf16 %v6716, %v6715
        %v6749 = vpack.c.bf16 %v6654, %v6653
        %v6750 = vpack.c.bf16 %v6718, %v6717
        %v6751 = vpack.c.bf16 %v6656, %v6655
        %v6752 = vpack.c.bf16 %v6720, %v6719
        %v6753 = vpack.c.bf16 %v6658, %v6657
        %v6754 = vpack.c.bf16 %v6722, %v6721
        %v6755 = vpack.c.bf16 %v6660, %v6659
        %v6756 = vpack.c.bf16 %v6724, %v6723
        %v6757 = vpack.c.bf16 %v6662, %v6661
        %v6758 = vpack.c.bf16 %v6726, %v6725
        %v6759 = vpack.c.bf16 %v6664, %v6663
        %v6760 = vpack.c.bf16 %v6728, %v6727
        %v6761 = vpack.c.bf16 %v6666, %v6665
        %v6762 = vpack.c.bf16 %v6730, %v6729
        %v6763 = vpack.c.bf16 %v6668, %v6667
        %v6764 = vpack.c.bf16 %v6732, %v6731
        %v6765 = vpack.c.bf16 %v6670, %v6669
        %v6766 = vpack.c.bf16 %v6734, %v6733
        %v6767 = vpack.c.bf16 %v6672, %v6671
        %v6768 = vpack.c.bf16 %v6736, %v6735
        %v6769 = vpack.c.bf16 %v6674, %v6673
        %v6770 = vpack.c.bf16 %v6738, %v6737
        %v6771 = vld [vmem:[#allocation5] sm:$0xf]
        %v6772 = vld [vmem:[#allocation5 + $0x4] sm:$0xf]
        %v6773 = vld [vmem:[#allocation5 + $0x8] sm:$0xf]
        %v6774 = vld [vmem:[#allocation5 + $0xc] sm:$0xf]
        %v6775 = vld [vmem:[#allocation5 + $0x10] sm:$0xf]
        %v6776 = vld [vmem:[#allocation5 + $0x14] sm:$0xf]
        %v6777 = vld [vmem:[#allocation5 + $0x18] sm:$0xf]
        %v6778 = vld [vmem:[#allocation5 + $0x1c] sm:$0xf]
        %v6779 = vld [vmem:[#allocation5 + $0x20] sm:$0xf]
        %v6780 = vld [vmem:[#allocation5 + $0x24] sm:$0xf]
        %v6781 = vld [vmem:[#allocation5 + $0x28] sm:$0xf]
        %v6782 = vld [vmem:[#allocation5 + $0x2c] sm:$0xf]
        %v6783 = vld [vmem:[#allocation5 + $0x30] sm:$0xf]
        %v6784 = vld [vmem:[#allocation5 + $0x34] sm:$0xf]
        %v6785 = vld [vmem:[#allocation5 + $0x38] sm:$0xf]
        %v6786 = vld [vmem:[#allocation5 + $0x3c] sm:$0xf]
        %v6787 = vld [vmem:[#allocation5 + $0x40] sm:$0xf]
        %v6788 = vld [vmem:[#allocation5 + $0x44] sm:$0xf]
        %v6789 = vld [vmem:[#allocation5 + $0x48] sm:$0xf]
        %v6790 = vld [vmem:[#allocation5 + $0x4c] sm:$0xf]
        %v6791 = vld [vmem:[#allocation5 + $0x50] sm:$0xf]
        %v6792 = vld [vmem:[#allocation5 + $0x54] sm:$0xf]
        %v6793 = vld [vmem:[#allocation5 + $0x58] sm:$0xf]
        %v6794 = vld [vmem:[#allocation5 + $0x5c] sm:$0xf]
        %v6795 = vld [vmem:[#allocation5 + $0x60] sm:$0xf]
        %v6796 = vld [vmem:[#allocation5 + $0x64] sm:$0xf]
        %v6797 = vld [vmem:[#allocation5 + $0x68] sm:$0xf]
        %v6798 = vld [vmem:[#allocation5 + $0x6c] sm:$0xf]
        %v6799 = vld [vmem:[%s7] sm:$0x1]
        %v6801 = vlaneseq
        %v6802 = vshrl.u32 %v6801, 7
        %v6803 = vsub.s32 0, %v6802
        %v6804 = vrot.slane %v6799, %v6803
        %v6834 = vunpack.c.l.b16 %v6771
        %v6835 = vunpack.c.l.b16 %v6772
        %v6836 = vunpack.c.l.b16 %v6773
        %v6837 = vunpack.c.l.b16 %v6774
        %v6838 = vunpack.c.l.b16 %v6775
        %v6839 = vunpack.c.l.b16 %v6776
        %v6840 = vunpack.c.l.b16 %v6777
        %v6841 = vunpack.c.l.b16 %v6778
        %v6842 = vunpack.c.l.b16 %v6779
        %v6843 = vunpack.c.l.b16 %v6780
        %v6844 = vunpack.c.l.b16 %v6781
        %v6845 = vunpack.c.l.b16 %v6782
        %v6846 = vunpack.c.l.b16 %v6783
        %v6847 = vunpack.c.l.b16 %v6784
        %v6848 = vunpack.c.l.b16 %v6785
        %v6849 = vunpack.c.l.b16 %v6786
        %v6850 = vunpack.c.l.b16 %v6787
        %v6851 = vunpack.c.l.b16 %v6788
        %v6852 = vunpack.c.l.b16 %v6789
        %v6853 = vunpack.c.l.b16 %v6790
        %v6854 = vunpack.c.l.b16 %v6791
        %v6855 = vunpack.c.l.b16 %v6792
        %v6856 = vunpack.c.l.b16 %v6793
        %v6857 = vunpack.c.l.b16 %v6794
        %v6858 = vunpack.c.l.b16 %v6795
        %v6859 = vunpack.c.l.b16 %v6796
        %v6860 = vunpack.c.l.b16 %v6797
        %v6861 = vunpack.c.l.b16 %v6798
        %v6862 = vpack.c.b16 %v6835, %v6834
        %v6863 = vpack.c.b16 %v6837, %v6836
        %v6864 = vpack.c.b16 %v6839, %v6838
        %v6865 = vpack.c.b16 %v6841, %v6840
        %v6866 = vpack.c.b16 %v6843, %v6842
        %v6867 = vpack.c.b16 %v6845, %v6844
        %v6868 = vpack.c.b16 %v6847, %v6846
        %v6869 = vpack.c.b16 %v6849, %v6848
        %v6870 = vpack.c.b16 %v6851, %v6850
        %v6871 = vpack.c.b16 %v6853, %v6852
        %v6872 = vpack.c.b16 %v6855, %v6854
        %v6873 = vpack.c.b16 %v6857, %v6856
        %v6874 = vpack.c.b16 %v6859, %v6858
        %v6875 = vpack.c.b16 %v6861, %v6860
        %v6891 = vsel %vm4977, %v6740, 0
        %v6894 = vsel %vm4977, %v6742, 0
        %v6897 = vsel %vm4977, %v6744, 0
        %v6900 = vsel %vm4977, %v6746, 0
        %v6903 = vsel %vm4977, %v6748, 0
        %v6906 = vsel %vm4977, %v6750, 0
        %v6909 = vsel %vm4977, %v6752, 0
        %v6912 = vsel %vm4977, %v6754, 0
        %v6915 = vsel %vm4977, %v6756, 0
        %v6918 = vsel %vm4977, %v6758, 0
        %v6921 = vsel %vm4977, %v6760, 0
        %v6924 = vsel %vm4977, %v6762, 0
        %v6927 = vsel %vm4977, %v6764, 0
        %v6930 = vsel %vm4977, %v6766, 0
        %v6933 = vsel %vm4977, %v6768, 0
        %v6936 = vsel %vm4977, %v6770, 0
        %6938 = vmatprep.subr.bf16.mxu0 0
        %6939 = vmatpush1.bf16.msra.mxu0 %v6862
        %6940 = vmatprep.subr.bf16.mxu0 0
        %6941 = vmatpush1.bf16.msra.mxu0 %v6863
        %6942 = vmatprep.subr.bf16.mxu0 0
        %6943 = vmatpush1.bf16.msra.mxu0 %v6864
        %6944 = vmatprep.subr.bf16.mxu0 0
        %6945 = vmatpush1.bf16.msra.mxu0 %v6865
        %6946 = vmatprep.subr.bf16.mxu0 0
        %6947 = vmatpush1.bf16.msra.mxu0 %v6866
        %6948 = vmatprep.subr.bf16.mxu0 0
        %6949 = vmatpush1.bf16.msra.mxu0 %v6867
        %6950 = vmatprep.subr.bf16.mxu0 0
        %6951 = vmatpush1.bf16.msra.mxu0 %v6868
        %6952 = vmatprep.subr.bf16.mxu0 0
        %6953 = vmatpush1.bf16.msra.mxu0 %v6869
        %6954 = vmatprep.subr.bf16.mxu0 0
        %6955 = vmatpush1.bf16.msra.mxu0 %v6870
        %6956 = vmatprep.subr.bf16.mxu0 0
        %6957 = vmatpush1.bf16.msra.mxu0 %v6871
        %6958 = vmatprep.subr.bf16.mxu0 0
        %6959 = vmatpush1.bf16.msra.mxu0 %v6872
        %6960 = vmatprep.subr.bf16.mxu0 0
        %6961 = vmatpush1.bf16.msra.mxu0 %v6873
        %6962 = vmatprep.subr.bf16.mxu0 0
        %6963 = vmatpush1.bf16.msra.mxu0 %v6874
        %6964 = vmatprep.subr.bf16.mxu0 0
        %6965 = vmatpush1.bf16.msra.mxu0 %v6875
        %6966 = vmatprep.subr.bf16.mxu0 0
        %6967 = vmatpush1.bf16.msra.mxu0 0
        %6968 = vmatprep.subr.bf16.mxu0 0
        %6969 = vmatpush1.bf16.msra.mxu0 0
        %6970 = vmatprep.mubr.bf16.mxu0 %v6891
        %6971 = vmatmul.mubr.bf16.gmra.mrb[0].mxu0 %v6739
        %v6972 = vpop.f32.mrb[0].mxu0
        %v6973 = vadd.f32 %v6804, %v6972
        %v6974 = vpop.f32.mrb[0].mxu0
        %v6975 = vpop.f32.mrb[0].mxu0
        %v6976 = vadd.f32 %v6804, %v6975
        %v6977 = vpop.f32.mrb[0].mxu0
        %6978 = vmatprep.mubr.bf16.mxu0 %v6894
        %6979 = vmatmul.mubr.bf16.gmra.mrb[0].mxu0 %v6741
        %v6980 = vpop.f32.mrb[0].mxu0
        %v6981 = vadd.f32 %v6804, %v6980
        %v6982 = vpop.f32.mrb[0].mxu0
        %v6983 = vpop.f32.mrb[0].mxu0
        %v6984 = vadd.f32 %v6804, %v6983
        %v6985 = vpop.f32.mrb[0].mxu0
        %6986 = vmatprep.mubr.bf16.mxu0 %v6897
        %6987 = vmatmul.mubr.bf16.gmra.mrb[0].mxu0 %v6743
        %v6988 = vpop.f32.mrb[0].mxu0
        %v6989 = vadd.f32 %v6804, %v6988
        %v6990 = vpop.f32.mrb[0].mxu0
        %v6991 = vpop.f32.mrb[0].mxu0
        %v6992 = vadd.f32 %v6804, %v6991
        %v6993 = vpop.f32.mrb[0].mxu0
        %6994 = vmatprep.mubr.bf16.mxu0 %v6900
        %6995 = vmatmul.mubr.bf16.gmra.mrb[0].mxu0 %v6745
        %v6996 = vpop.f32.mrb[0].mxu0
        %v6997 = vadd.f32 %v6804, %v6996
        %v6998 = vpop.f32.mrb[0].mxu0
        %v6999 = vpop.f32.mrb[0].mxu0
        %v7000 = vadd.f32 %v6804, %v6999
        %v7001 = vpop.f32.mrb[0].mxu0
        %7002 = vmatprep.mubr.bf16.mxu0 %v6903
        %7003 = vmatmul.mubr.bf16.gmra.mrb[0].mxu0 %v6747
        %v7004 = vpop.f32.mrb[0].mxu0
        %v7005 = vadd.f32 %v6804, %v7004
        %v7006 = vpop.f32.mrb[0].mxu0
        %v7007 = vpop.f32.mrb[0].mxu0
        %v7008 = vadd.f32 %v6804, %v7007
        %v7009 = vpop.f32.mrb[0].mxu0
        %7010 = vmatprep.mubr.bf16.mxu0 %v6906
        %7011 = vmatmul.mubr.bf16.gmra.mrb[0].mxu0 %v6749
        %v7012 = vpop.f32.mrb[0].mxu0
        %v7013 = vadd.f32 %v6804, %v7012
        %v7014 = vpop.f32.mrb[0].mxu0
        %v7015 = vpop.f32.mrb[0].mxu0
        %v7016 = vadd.f32 %v6804, %v7015
        %v7017 = vpop.f32.mrb[0].mxu0
        %7018 = vmatprep.mubr.bf16.mxu0 %v6909
        %7019 = vmatmul.mubr.bf16.gmra.mrb[0].mxu0 %v6751
        %v7020 = vpop.f32.mrb[0].mxu0
        %v7021 = vadd.f32 %v6804, %v7020
        %v7022 = vpop.f32.mrb[0].mxu0
        %v7023 = vpop.f32.mrb[0].mxu0
        %v7024 = vadd.f32 %v6804, %v7023
        %v7025 = vpop.f32.mrb[0].mxu0
        %7026 = vmatprep.mubr.bf16.mxu0 %v6912
        %7027 = vmatmul.mubr.bf16.gmra.mrb[0].mxu0 %v6753
        %v7028 = vpop.f32.mrb[0].mxu0
        %v7029 = vadd.f32 %v6804, %v7028
        %v7030 = vpop.f32.mrb[0].mxu0
        %v7031 = vpop.f32.mrb[0].mxu0
        %v7032 = vadd.f32 %v6804, %v7031
        %v7033 = vpop.f32.mrb[0].mxu0
        %7034 = vmatprep.mubr.bf16.mxu0 %v6915
        %7035 = vmatmul.mubr.bf16.gmra.mrb[0].mxu0 %v6755
        %v7036 = vpop.f32.mrb[0].mxu0
        %v7037 = vadd.f32 %v6804, %v7036
        %v7038 = vpop.f32.mrb[0].mxu0
        %v7039 = vpop.f32.mrb[0].mxu0
        %v7040 = vadd.f32 %v6804, %v7039
        %v7041 = vpop.f32.mrb[0].mxu0
        %7042 = vmatprep.mubr.bf16.mxu0 %v6918
        %7043 = vmatmul.mubr.bf16.gmra.mrb[0].mxu0 %v6757
        %v7044 = vpop.f32.mrb[0].mxu0
        %v7045 = vadd.f32 %v6804, %v7044
        %v7046 = vpop.f32.mrb[0].mxu0
        %v7047 = vpop.f32.mrb[0].mxu0
        %v7048 = vadd.f32 %v6804, %v7047
        %v7049 = vpop.f32.mrb[0].mxu0
        %7050 = vmatprep.mubr.bf16.mxu0 %v6921
        %7051 = vmatmul.mubr.bf16.gmra.mrb[0].mxu0 %v6759
        %v7052 = vpop.f32.mrb[0].mxu0
        %v7053 = vadd.f32 %v6804, %v7052
        %v7054 = vpop.f32.mrb[0].mxu0
        %v7055 = vpop.f32.mrb[0].mxu0
        %v7056 = vadd.f32 %v6804, %v7055
        %v7057 = vpop.f32.mrb[0].mxu0
        %7058 = vmatprep.mubr.bf16.mxu0 %v6924
        %7059 = vmatmul.mubr.bf16.gmra.mrb[0].mxu0 %v6761
        %v7060 = vpop.f32.mrb[0].mxu0
        %v7061 = vadd.f32 %v6804, %v7060
        %v7062 = vpop.f32.mrb[0].mxu0
        %v7063 = vpop.f32.mrb[0].mxu0
        %v7064 = vadd.f32 %v6804, %v7063
        %v7065 = vpop.f32.mrb[0].mxu0
        %7066 = vmatprep.mubr.bf16.mxu0 %v6927
        %7067 = vmatmul.mubr.bf16.gmra.mrb[0].mxu0 %v6763
        %v7068 = vpop.f32.mrb[0].mxu0
        %v7069 = vadd.f32 %v6804, %v7068
        %v7070 = vpop.f32.mrb[0].mxu0
        %v7071 = vpop.f32.mrb[0].mxu0
        %v7072 = vadd.f32 %v6804, %v7071
        %v7073 = vpop.f32.mrb[0].mxu0
        %7074 = vmatprep.mubr.bf16.mxu0 %v6930
        %7075 = vmatmul.mubr.bf16.gmra.mrb[0].mxu0 %v6765
        %v7076 = vpop.f32.mrb[0].mxu0
        %v7077 = vadd.f32 %v6804, %v7076
        %v7078 = vpop.f32.mrb[0].mxu0
        %v7079 = vpop.f32.mrb[0].mxu0
        %v7080 = vadd.f32 %v6804, %v7079
        %v7081 = vpop.f32.mrb[0].mxu0
        %7082 = vmatprep.mubr.bf16.mxu0 %v6933
        %7083 = vmatmul.mubr.bf16.gmra.mrb[0].mxu0 %v6767
        %v7084 = vpop.f32.mrb[0].mxu0
        %v7085 = vadd.f32 %v6804, %v7084
        %v7086 = vpop.f32.mrb[0].mxu0
        %v7087 = vpop.f32.mrb[0].mxu0
        %v7088 = vadd.f32 %v6804, %v7087
        %v7089 = vpop.f32.mrb[0].mxu0
        %7090 = vmatprep.mubr.bf16.mxu0 %v6936
        %7091 = vmatmul.mubr.bf16.gmra.mrb[0].mxu0 %v6769
        %v7092 = vpop.f32.mrb[0].mxu0
        %v7093 = vadd.f32 %v6804, %v7092
        %v7094 = vpop.f32.mrb[0].mxu0
        %v7095 = vpop.f32.mrb[0].mxu0
        %v7096 = vadd.f32 %v6804, %v7095
        %v7097 = vpop.f32.mrb[0].mxu0
        %7098 = vdwg.mxu0
        %v7099 = vld [vmem:[%s762] sm:$0xf]
        %v7100 = vld [vmem:[%s762 + $0x4] sm:$0xf]
        %v7101 = vld [vmem:[%s762 + $0x8] sm:$0xf]
        %v7102 = vld [vmem:[%s762 + $0xc] sm:$0xf]
        %v7103 = vld [vmem:[%s762 + $0x10] sm:$0xf]
        %v7104 = vld [vmem:[%s762 + $0x14] sm:$0xf]
        %v7105 = vld [vmem:[%s762 + $0x18] sm:$0xf]
        %v7106 = vld [vmem:[%s762 + $0x1c] sm:$0xf]
        %v7107 = vld [vmem:[%s762 + $0x20] sm:$0xf]
        %v7108 = vld [vmem:[%s762 + $0x24] sm:$0xf]
        %v7109 = vld [vmem:[%s762 + $0x28] sm:$0xf]
        %v7110 = vld [vmem:[%s762 + $0x2c] sm:$0xf]
        %v7111 = vld [vmem:[%s762 + $0x30] sm:$0xf]
        %v7112 = vld [vmem:[%s762 + $0x34] sm:$0xf]
        %v7113 = vld [vmem:[%s762 + $0x38] sm:$0xf]
        %v7114 = vld [vmem:[%s762 + $0x3c] sm:$0xf]
        %v7115 = vld [vmem:[%s762 + $0x40] sm:$0xf]
        %v7116 = vld [vmem:[%s762 + $0x44] sm:$0xf]
        %v7117 = vld [vmem:[%s762 + $0x48] sm:$0xf]
        %v7118 = vld [vmem:[%s762 + $0x4c] sm:$0xf]
        %v7119 = vld [vmem:[%s762 + $0x50] sm:$0xf]
        %v7120 = vld [vmem:[%s762 + $0x54] sm:$0xf]
        %v7121 = vld [vmem:[%s762 + $0x58] sm:$0xf]
        %v7122 = vld [vmem:[%s762 + $0x5c] sm:$0xf]
        %v7123 = vld [vmem:[%s762 + $0x60] sm:$0xf]
        %v7124 = vld [vmem:[%s762 + $0x64] sm:$0xf]
        %v7125 = vld [vmem:[%s762 + $0x68] sm:$0xf]
        %v7126 = vld [vmem:[%s762 + $0x6c] sm:$0xf]
        %v7127 = vld [vmem:[%s762 + $0x70] sm:$0xf]
        %v7128 = vld [vmem:[%s762 + $0x74] sm:$0xf]
        %v7129 = vld [vmem:[%s762 + $0x78] sm:$0xf]
        %v7130 = vld [vmem:[%s762 + $0x7c] sm:$0xf]
        %v7131 = vpack.c.bf16 %v6976, %v6973
        %v7132 = vpack.c.bf16 %v6984, %v6981
        %v7133 = vpack.c.bf16 %v6992, %v6989
        %v7134 = vpack.c.bf16 %v7000, %v6997
        %v7135 = vpack.c.bf16 %v7008, %v7005
        %v7136 = vpack.c.bf16 %v7016, %v7013
        %v7137 = vpack.c.bf16 %v7024, %v7021
        %v7138 = vpack.c.bf16 %v7032, %v7029
        %v7139 = vpack.c.bf16 %v7040, %v7037
        %v7140 = vpack.c.bf16 %v7048, %v7045
        %v7141 = vpack.c.bf16 %v7056, %v7053
        %v7142 = vpack.c.bf16 %v7064, %v7061
        %v7143 = vpack.c.bf16 %v7072, %v7069
        %v7144 = vpack.c.bf16 %v7080, %v7077
        %v7145 = vpack.c.bf16 %v7088, %v7085
        %v7146 = vpack.c.bf16 %v7096, %v7093
        %v7179 = vunpack.c.l.b16 %v7099
        %v7180 = vunpack.c.l.b16 %v7100
        %v7181 = vunpack.c.l.b16 %v7101
        %v7182 = vunpack.c.l.b16 %v7102
        %v7183 = vunpack.c.l.b16 %v7103
        %v7184 = vunpack.c.l.b16 %v7104
        %v7185 = vunpack.c.l.b16 %v7105
        %v7186 = vunpack.c.l.b16 %v7106
        %v7187 = vunpack.c.l.b16 %v7107
        %v7188 = vunpack.c.l.b16 %v7108
        %v7189 = vunpack.c.l.b16 %v7109
        %v7190 = vunpack.c.l.b16 %v7110
        %v7191 = vunpack.c.l.b16 %v7111
        %v7192 = vunpack.c.l.b16 %v7112
        %v7193 = vunpack.c.l.b16 %v7113
        %v7194 = vunpack.c.l.b16 %v7114
        %v7195 = vunpack.c.l.b16 %v7115
        %v7196 = vunpack.c.l.b16 %v7116
        %v7197 = vunpack.c.l.b16 %v7117
        %v7198 = vunpack.c.l.b16 %v7118
        %v7199 = vunpack.c.l.b16 %v7119
        %v7200 = vunpack.c.l.b16 %v7120
        %v7201 = vunpack.c.l.b16 %v7121
        %v7202 = vunpack.c.l.b16 %v7122
        %v7203 = vunpack.c.l.b16 %v7123
        %v7204 = vunpack.c.l.b16 %v7124
        %v7205 = vunpack.c.l.b16 %v7125
        %v7206 = vunpack.c.l.b16 %v7126
        %v7207 = vunpack.c.l.b16 %v7127
        %v7208 = vunpack.c.l.b16 %v7128
        %v7209 = vunpack.c.l.b16 %v7129
        %v7210 = vunpack.c.l.b16 %v7130
        %v7211 = vpack.c.b16 %v7180, %v7179
        %v7212 = vpack.c.b16 %v7182, %v7181
        %v7213 = vpack.c.b16 %v7184, %v7183
        %v7214 = vpack.c.b16 %v7186, %v7185
        %v7215 = vpack.c.b16 %v7188, %v7187
        %v7216 = vpack.c.b16 %v7190, %v7189
        %v7217 = vpack.c.b16 %v7192, %v7191
        %v7218 = vpack.c.b16 %v7194, %v7193
        %v7219 = vpack.c.b16 %v7196, %v7195
        %v7220 = vpack.c.b16 %v7198, %v7197
        %v7221 = vpack.c.b16 %v7200, %v7199
        %v7222 = vpack.c.b16 %v7202, %v7201
        %v7223 = vpack.c.b16 %v7204, %v7203
        %v7224 = vpack.c.b16 %v7206, %v7205
        %v7225 = vpack.c.b16 %v7208, %v7207
        %v7226 = vpack.c.b16 %v7210, %v7209
        %v7243 = vld [vmem:[#allocation7] sm:$0xf]
        %v7244 = vld [vmem:[#allocation7 + $0x4] sm:$0xf]
        %v7245 = vld [vmem:[#allocation7 + $0x8] sm:$0xf]
        %v7246 = vld [vmem:[#allocation7 + $0xc] sm:$0xf]
        %v7247 = vld [vmem:[#allocation7 + $0x10] sm:$0xf]
        %v7248 = vld [vmem:[#allocation7 + $0x14] sm:$0xf]
        %v7249 = vld [vmem:[#allocation7 + $0x18] sm:$0xf]
        %v7250 = vld [vmem:[#allocation7 + $0x1c] sm:$0xf]
        %v7251 = vld [vmem:[#allocation7 + $0x20] sm:$0xf]
        %v7252 = vld [vmem:[#allocation7 + $0x24] sm:$0xf]
        %v7253 = vld [vmem:[#allocation7 + $0x28] sm:$0xf]
        %v7254 = vld [vmem:[#allocation7 + $0x2c] sm:$0xf]
        %v7255 = vld [vmem:[#allocation7 + $0x30] sm:$0xf]
        %v7256 = vld [vmem:[#allocation7 + $0x34] sm:$0xf]
        %v7257 = vld [vmem:[#allocation7 + $0x38] sm:$0xf]
        %v7258 = vld [vmem:[#allocation7 + $0x3c] sm:$0xf]
        %v7259 = vld [vmem:[#allocation7 + $0x40] sm:$0xf]
        %v7260 = vld [vmem:[#allocation7 + $0x44] sm:$0xf]
        %v7261 = vld [vmem:[#allocation7 + $0x48] sm:$0xf]
        %v7262 = vld [vmem:[#allocation7 + $0x4c] sm:$0xf]
        %v7263 = vld [vmem:[#allocation7 + $0x50] sm:$0xf]
        %v7264 = vld [vmem:[#allocation7 + $0x54] sm:$0xf]
        %v7265 = vld [vmem:[#allocation7 + $0x58] sm:$0xf]
        %v7266 = vld [vmem:[#allocation7 + $0x5c] sm:$0xf]
        %v7267 = vld [vmem:[#allocation7 + $0x60] sm:$0xf]
        %v7268 = vld [vmem:[#allocation7 + $0x64] sm:$0xf]
        %v7269 = vld [vmem:[#allocation7 + $0x68] sm:$0xf]
        %v7270 = vld [vmem:[#allocation7 + $0x6c] sm:$0xf]
        %v7271 = vld [vmem:[#allocation7 + $0x70] sm:$0xf]
        %v7272 = vld [vmem:[#allocation7 + $0x74] sm:$0xf]
        %v7273 = vld [vmem:[#allocation7 + $0x78] sm:$0xf]
        %v7274 = vld [vmem:[#allocation7 + $0x7c] sm:$0xf]
        %v7275 = vld [vmem:[%s9] sm:$0x1]
        %v7277 = vlaneseq
        %v7278 = vshrl.u32 %v7277, 7
        %v7279 = vsub.s32 0, %v7278
        %v7280 = vrot.slane %v7275, %v7279
        %v7314 = vunpack.c.l.b16 %v7243
        %v7315 = vunpack.c.l.b16 %v7244
        %v7316 = vunpack.c.l.b16 %v7245
        %v7317 = vunpack.c.l.b16 %v7246
        %v7318 = vunpack.c.l.b16 %v7247
        %v7319 = vunpack.c.l.b16 %v7248
        %v7320 = vunpack.c.l.b16 %v7249
        %v7321 = vunpack.c.l.b16 %v7250
        %v7322 = vunpack.c.l.b16 %v7251
        %v7323 = vunpack.c.l.b16 %v7252
        %v7324 = vunpack.c.l.b16 %v7253
        %v7325 = vunpack.c.l.b16 %v7254
        %v7326 = vunpack.c.l.b16 %v7255
        %v7327 = vunpack.c.l.b16 %v7256
        %v7328 = vunpack.c.l.b16 %v7257
        %v7329 = vunpack.c.l.b16 %v7258
        %v7330 = vunpack.c.l.b16 %v7259
        %v7331 = vunpack.c.l.b16 %v7260
        %v7332 = vunpack.c.l.b16 %v7261
        %v7333 = vunpack.c.l.b16 %v7262
        %v7334 = vunpack.c.l.b16 %v7263
        %v7335 = vunpack.c.l.b16 %v7264
        %v7336 = vunpack.c.l.b16 %v7265
        %v7337 = vunpack.c.l.b16 %v7266
        %v7338 = vunpack.c.l.b16 %v7267
        %v7339 = vunpack.c.l.b16 %v7268
        %v7340 = vunpack.c.l.b16 %v7269
        %v7341 = vunpack.c.l.b16 %v7270
        %v7342 = vunpack.c.l.b16 %v7271
        %v7343 = vunpack.c.l.b16 %v7272
        %v7344 = vunpack.c.l.b16 %v7273
        %v7345 = vunpack.c.l.b16 %v7274
        %v7346 = vpack.c.b16 %v7315, %v7314
        %v7347 = vpack.c.b16 %v7317, %v7316
        %v7348 = vpack.c.b16 %v7319, %v7318
        %v7349 = vpack.c.b16 %v7321, %v7320
        %v7350 = vpack.c.b16 %v7323, %v7322
        %v7351 = vpack.c.b16 %v7325, %v7324
        %v7352 = vpack.c.b16 %v7327, %v7326
        %v7353 = vpack.c.b16 %v7329, %v7328
        %v7354 = vpack.c.b16 %v7331, %v7330
        %v7355 = vpack.c.b16 %v7333, %v7332
        %v7356 = vpack.c.b16 %v7335, %v7334
        %v7357 = vpack.c.b16 %v7337, %v7336
        %v7358 = vpack.c.b16 %v7339, %v7338
        %v7359 = vpack.c.b16 %v7341, %v7340
        %v7360 = vpack.c.b16 %v7343, %v7342
        %v7361 = vpack.c.b16 %v7345, %v7344
        %7378 = vmatprep.subr.bf16.mxu0 0
        %7379 = vmatpush1.bf16.msra.mxu0 %v7346
        %7380 = vmatprep.subr.bf16.mxu0 0
        %7381 = vmatpush1.bf16.msra.mxu0 %v7347
        %7382 = vmatprep.subr.bf16.mxu0 0
        %7383 = vmatpush1.bf16.msra.mxu0 %v7348
        %7384 = vmatprep.subr.bf16.mxu0 0
        %7385 = vmatpush1.bf16.msra.mxu0 %v7349
        %7386 = vmatprep.subr.bf16.mxu0 0
        %7387 = vmatpush1.bf16.msra.mxu0 %v7350
        %7388 = vmatprep.subr.bf16.mxu0 0
        %7389 = vmatpush1.bf16.msra.mxu0 %v7351
        %7390 = vmatprep.subr.bf16.mxu0 0
        %7391 = vmatpush1.bf16.msra.mxu0 %v7352
        %7392 = vmatprep.subr.bf16.mxu0 0
        %7393 = vmatpush1.bf16.msra.mxu0 %v7353
        %7394 = vmatprep.subr.bf16.mxu0 0
        %7395 = vmatpush1.bf16.msra.mxu0 %v7354
        %7396 = vmatprep.subr.bf16.mxu0 0
        %7397 = vmatpush1.bf16.msra.mxu0 %v7355
        %7398 = vmatprep.subr.bf16.mxu0 0
        %7399 = vmatpush1.bf16.msra.mxu0 %v7356
        %7400 = vmatprep.subr.bf16.mxu0 0
        %7401 = vmatpush1.bf16.msra.mxu0 %v7357
        %7402 = vmatprep.subr.bf16.mxu0 0
        %7403 = vmatpush1.bf16.msra.mxu0 %v7358
        %7404 = vmatprep.subr.bf16.mxu0 0
        %7405 = vmatpush1.bf16.msra.mxu0 %v7359
        %7406 = vmatprep.subr.bf16.mxu0 0
        %7407 = vmatpush1.bf16.msra.mxu0 %v7360
        %7408 = vmatprep.subr.bf16.mxu0 0
        %7409 = vmatpush1.bf16.msra.mxu0 %v7361
        %7410 = vmatprep.mubr.bf16.mxu0 %v7131
        %7411 = vmatmul.mubr.bf16.gmra.mrb[0].mxu0 %v7211
        %v7412 = vpop.f32.mrb[0].mxu0
        %v7413 = vadd.f32 %v7280, %v7412
        %v7414 = vpop.f32.mrb[0].mxu0
        %v7415 = vpop.f32.mrb[0].mxu0
        %v7416 = vadd.f32 %v7280, %v7415
        %v7417 = vpop.f32.mrb[0].mxu0
        %7418 = vmatprep.mubr.bf16.mxu0 %v7132
        %7419 = vmatmul.mubr.bf16.gmra.mrb[0].mxu0 %v7212
        %v7420 = vpop.f32.mrb[0].mxu0
        %v7421 = vadd.f32 %v7280, %v7420
        %v7422 = vpop.f32.mrb[0].mxu0
        %v7423 = vpop.f32.mrb[0].mxu0
        %v7424 = vadd.f32 %v7280, %v7423
        %v7425 = vpop.f32.mrb[0].mxu0
        %7426 = vmatprep.mubr.bf16.mxu0 %v7133
        %7427 = vmatmul.mubr.bf16.gmra.mrb[0].mxu0 %v7213
        %v7428 = vpop.f32.mrb[0].mxu0
        %v7429 = vadd.f32 %v7280, %v7428
        %v7430 = vpop.f32.mrb[0].mxu0
        %v7431 = vpop.f32.mrb[0].mxu0
        %v7432 = vadd.f32 %v7280, %v7431
        %v7433 = vpop.f32.mrb[0].mxu0
        %7434 = vmatprep.mubr.bf16.mxu0 %v7134
        %7435 = vmatmul.mubr.bf16.gmra.mrb[0].mxu0 %v7214
        %v7436 = vpop.f32.mrb[0].mxu0
        %v7437 = vadd.f32 %v7280, %v7436
        %v7438 = vpop.f32.mrb[0].mxu0
        %v7439 = vpop.f32.mrb[0].mxu0
        %v7440 = vadd.f32 %v7280, %v7439
        %v7441 = vpop.f32.mrb[0].mxu0
        %7442 = vmatprep.mubr.bf16.mxu0 %v7135
        %7443 = vmatmul.mubr.bf16.gmra.mrb[0].mxu0 %v7215
        %v7444 = vpop.f32.mrb[0].mxu0
        %v7445 = vadd.f32 %v7280, %v7444
        %v7446 = vpop.f32.mrb[0].mxu0
        %v7447 = vpop.f32.mrb[0].mxu0
        %v7448 = vadd.f32 %v7280, %v7447
        %v7449 = vpop.f32.mrb[0].mxu0
        %7450 = vmatprep.mubr.bf16.mxu0 %v7136
        %7451 = vmatmul.mubr.bf16.gmra.mrb[0].mxu0 %v7216
        %v7452 = vpop.f32.mrb[0].mxu0
        %v7453 = vadd.f32 %v7280, %v7452
        %v7454 = vpop.f32.mrb[0].mxu0
        %v7455 = vpop.f32.mrb[0].mxu0
        %v7456 = vadd.f32 %v7280, %v7455
        %v7457 = vpop.f32.mrb[0].mxu0
        %7458 = vmatprep.mubr.bf16.mxu0 %v7137
        %7459 = vmatmul.mubr.bf16.gmra.mrb[0].mxu0 %v7217
        %v7460 = vpop.f32.mrb[0].mxu0
        %v7461 = vadd.f32 %v7280, %v7460
        %v7462 = vpop.f32.mrb[0].mxu0
        %v7463 = vpop.f32.mrb[0].mxu0
        %v7464 = vadd.f32 %v7280, %v7463
        %v7465 = vpop.f32.mrb[0].mxu0
        %7466 = vmatprep.mubr.bf16.mxu0 %v7138
        %7467 = vmatmul.mubr.bf16.gmra.mrb[0].mxu0 %v7218
        %v7468 = vpop.f32.mrb[0].mxu0
        %v7469 = vadd.f32 %v7280, %v7468
        %v7470 = vpop.f32.mrb[0].mxu0
        %v7471 = vpop.f32.mrb[0].mxu0
        %v7472 = vadd.f32 %v7280, %v7471
        %v7473 = vpop.f32.mrb[0].mxu0
        %7474 = vmatprep.mubr.bf16.mxu0 %v7139
        %7475 = vmatmul.mubr.bf16.gmra.mrb[0].mxu0 %v7219
        %v7476 = vpop.f32.mrb[0].mxu0
        %v7477 = vadd.f32 %v7280, %v7476
        %v7478 = vpop.f32.mrb[0].mxu0
        %v7479 = vpop.f32.mrb[0].mxu0
        %v7480 = vadd.f32 %v7280, %v7479
        %v7481 = vpop.f32.mrb[0].mxu0
        %7482 = vmatprep.mubr.bf16.mxu0 %v7140
        %7483 = vmatmul.mubr.bf16.gmra.mrb[0].mxu0 %v7220
        %v7484 = vpop.f32.mrb[0].mxu0
        %v7485 = vadd.f32 %v7280, %v7484
        %v7486 = vpop.f32.mrb[0].mxu0
        %v7487 = vpop.f32.mrb[0].mxu0
        %v7488 = vadd.f32 %v7280, %v7487
        %v7489 = vpop.f32.mrb[0].mxu0
        %7490 = vmatprep.mubr.bf16.mxu0 %v7141
        %7491 = vmatmul.mubr.bf16.gmra.mrb[0].mxu0 %v7221
        %v7492 = vpop.f32.mrb[0].mxu0
        %v7493 = vadd.f32 %v7280, %v7492
        %v7494 = vpop.f32.mrb[0].mxu0
        %v7495 = vpop.f32.mrb[0].mxu0
        %v7496 = vadd.f32 %v7280, %v7495
        %v7497 = vpop.f32.mrb[0].mxu0
        %7498 = vmatprep.mubr.bf16.mxu0 %v7142
        %7499 = vmatmul.mubr.bf16.gmra.mrb[0].mxu0 %v7222
        %v7500 = vpop.f32.mrb[0].mxu0
        %v7501 = vadd.f32 %v7280, %v7500
        %v7502 = vpop.f32.mrb[0].mxu0
        %v7503 = vpop.f32.mrb[0].mxu0
        %v7504 = vadd.f32 %v7280, %v7503
        %v7505 = vpop.f32.mrb[0].mxu0
        %7506 = vmatprep.mubr.bf16.mxu0 %v7143
        %7507 = vmatmul.mubr.bf16.gmra.mrb[0].mxu0 %v7223
        %v7508 = vpop.f32.mrb[0].mxu0
        %v7509 = vadd.f32 %v7280, %v7508
        %v7510 = vpop.f32.mrb[0].mxu0
        %v7511 = vpop.f32.mrb[0].mxu0
        %v7512 = vadd.f32 %v7280, %v7511
        %v7513 = vpop.f32.mrb[0].mxu0
        %7514 = vmatprep.mubr.bf16.mxu0 %v7144
        %7515 = vmatmul.mubr.bf16.gmra.mrb[0].mxu0 %v7224
        %v7516 = vpop.f32.mrb[0].mxu0
        %v7517 = vadd.f32 %v7280, %v7516
        %v7518 = vpop.f32.mrb[0].mxu0
        %v7519 = vpop.f32.mrb[0].mxu0
        %v7520 = vadd.f32 %v7280, %v7519
        %v7521 = vpop.f32.mrb[0].mxu0
        %7522 = vmatprep.mubr.bf16.mxu0 %v7145
        %7523 = vmatmul.mubr.bf16.gmra.mrb[0].mxu0 %v7225
        %v7524 = vpop.f32.mrb[0].mxu0
        %v7525 = vadd.f32 %v7280, %v7524
        %v7526 = vpop.f32.mrb[0].mxu0
        %v7527 = vpop.f32.mrb[0].mxu0
        %v7528 = vadd.f32 %v7280, %v7527
        %v7529 = vpop.f32.mrb[0].mxu0
        %7530 = vmatprep.mubr.bf16.mxu0 %v7146
        %7531 = vmatmul.mubr.bf16.gmra.mrb[0].mxu0 %v7226
        %v7532 = vpop.f32.mrb[0].mxu0
        %v7533 = vadd.f32 %v7280, %v7532
        %v7534 = vpop.f32.mrb[0].mxu0
        %v7535 = vpop.f32.mrb[0].mxu0
        %v7536 = vadd.f32 %v7280, %v7535
        %v7537 = vpop.f32.mrb[0].mxu0
        %7538 = vdwg.mxu0
        %v7539 = vmul.f32 %v7413, 0.2
        %v7540 = vmul.f32 %v7416, 0.2
        %v7541 = vmul.f32 %v7421, 0.2
        %v7542 = vmul.f32 %v7424, 0.2
        %v7543 = vmul.f32 %v7429, 0.2
        %v7544 = vmul.f32 %v7432, 0.2
        %v7545 = vmul.f32 %v7437, 0.2
        %v7546 = vmul.f32 %v7440, 0.2
        %v7547 = vmul.f32 %v7445, 0.2
        %v7548 = vmul.f32 %v7448, 0.2
        %v7549 = vmul.f32 %v7453, 0.2
        %v7550 = vmul.f32 %v7456, 0.2
        %v7551 = vmul.f32 %v7461, 0.2
        %v7552 = vmul.f32 %v7464, 0.2
        %v7553 = vmul.f32 %v7469, 0.2
        %v7554 = vmul.f32 %v7472, 0.2
        %v7555 = vmul.f32 %v7477, 0.2
        %v7556 = vmul.f32 %v7480, 0.2
        %v7557 = vmul.f32 %v7485, 0.2
        %v7558 = vmul.f32 %v7488, 0.2
        %v7559 = vmul.f32 %v7493, 0.2
        %v7560 = vmul.f32 %v7496, 0.2
        %v7561 = vmul.f32 %v7501, 0.2
        %v7562 = vmul.f32 %v7504, 0.2
        %v7563 = vmul.f32 %v7509, 0.2
        %v7564 = vmul.f32 %v7512, 0.2
        %v7565 = vmul.f32 %v7517, 0.2
        %v7566 = vmul.f32 %v7520, 0.2
        %v7567 = vmul.f32 %v7525, 0.2
        %v7568 = vmul.f32 %v7528, 0.2
        %v7569 = vmul.f32 %v7533, 0.2
        %v7570 = vmul.f32 %v7536, 0.2
        %v7571 = vmax.f32 %v7413, %v7539
        %v7572 = vmax.f32 %v7416, %v7540
        %v7573 = vmax.f32 %v7421, %v7541
        %v7574 = vmax.f32 %v7424, %v7542
        %v7575 = vmax.f32 %v7429, %v7543
        %v7576 = vmax.f32 %v7432, %v7544
        %v7577 = vmax.f32 %v7437, %v7545
        %v7578 = vmax.f32 %v7440, %v7546
        %v7579 = vmax.f32 %v7445, %v7547
        %v7580 = vmax.f32 %v7448, %v7548
        %v7581 = vmax.f32 %v7453, %v7549
        %v7582 = vmax.f32 %v7456, %v7550
        %v7583 = vmax.f32 %v7461, %v7551
        %v7584 = vmax.f32 %v7464, %v7552
        %v7585 = vmax.f32 %v7469, %v7553
        %v7586 = vmax.f32 %v7472, %v7554
        %v7587 = vmax.f32 %v7477, %v7555
        %v7588 = vmax.f32 %v7480, %v7556
        %v7589 = vmax.f32 %v7485, %v7557
        %v7590 = vmax.f32 %v7488, %v7558
        %v7591 = vmax.f32 %v7493, %v7559
        %v7592 = vmax.f32 %v7496, %v7560
        %v7593 = vmax.f32 %v7501, %v7561
        %v7594 = vmax.f32 %v7504, %v7562
        %v7595 = vmax.f32 %v7509, %v7563
        %v7596 = vmax.f32 %v7512, %v7564
        %v7597 = vmax.f32 %v7517, %v7565
        %v7598 = vmax.f32 %v7520, %v7566
        %v7599 = vmax.f32 %v7525, %v7567
        %v7600 = vmax.f32 %v7528, %v7568
        %v7601 = vmax.f32 %v7533, %v7569
        %v7602 = vmax.f32 %v7536, %v7570
        %v7603 = vpack.c.bf16 %v7572, %v7571
        %v7604 = vpack.c.bf16 %v7574, %v7573
        %v7605 = vpack.c.bf16 %v7576, %v7575
        %v7606 = vpack.c.bf16 %v7578, %v7577
        %v7607 = vpack.c.bf16 %v7580, %v7579
        %v7608 = vpack.c.bf16 %v7582, %v7581
        %v7609 = vpack.c.bf16 %v7584, %v7583
        %v7610 = vpack.c.bf16 %v7586, %v7585
        %v7611 = vpack.c.bf16 %v7588, %v7587
        %v7612 = vpack.c.bf16 %v7590, %v7589
        %v7613 = vpack.c.bf16 %v7592, %v7591
        %v7614 = vpack.c.bf16 %v7594, %v7593
        %v7615 = vpack.c.bf16 %v7596, %v7595
        %v7616 = vpack.c.bf16 %v7598, %v7597
        %v7617 = vpack.c.bf16 %v7600, %v7599
        %v7618 = vpack.c.bf16 %v7602, %v7601
        %v7619 = vld [vmem:[#allocation8] sm:$0xf]
        %v7620 = vld [vmem:[#allocation8 + $0x4] sm:$0xf]
        %v7621 = vld [vmem:[#allocation8 + $0x8] sm:$0xf]
        %v7622 = vld [vmem:[#allocation8 + $0xc] sm:$0xf]
        %v7623 = vld [vmem:[#allocation8 + $0x10] sm:$0xf]
        %v7624 = vld [vmem:[#allocation8 + $0x14] sm:$0xf]
        %v7625 = vld [vmem:[#allocation8 + $0x18] sm:$0xf]
        %v7626 = vld [vmem:[#allocation8 + $0x1c] sm:$0xf]
        %v7627 = vld [vmem:[#allocation8 + $0x20] sm:$0xf]
        %v7628 = vld [vmem:[#allocation8 + $0x24] sm:$0xf]
        %v7629 = vld [vmem:[#allocation8 + $0x28] sm:$0xf]
        %v7630 = vld [vmem:[#allocation8 + $0x2c] sm:$0xf]
        %v7631 = vld [vmem:[#allocation8 + $0x30] sm:$0xf]
        %v7632 = vld [vmem:[#allocation8 + $0x34] sm:$0xf]
        %v7633 = vld [vmem:[#allocation8 + $0x38] sm:$0xf]
        %v7634 = vld [vmem:[#allocation8 + $0x3c] sm:$0xf]
        %v7635 = vld [vmem:[%s11] sm:$0x1]
        %v7637 = vlaneseq
        %v7638 = vshrl.u32 %v7637, 7
        %v7639 = vsub.s32 0, %v7638
        %v7640 = vrot.slane %v7635, %v7639
        %v7658 = vunpack.c.l.b16 %v7619
        %v7659 = vunpack.c.l.b16 %v7620
        %v7660 = vunpack.c.l.b16 %v7621
        %v7661 = vunpack.c.l.b16 %v7622
        %v7662 = vunpack.c.l.b16 %v7623
        %v7663 = vunpack.c.l.b16 %v7624
        %v7664 = vunpack.c.l.b16 %v7625
        %v7665 = vunpack.c.l.b16 %v7626
        %v7666 = vunpack.c.l.b16 %v7627
        %v7667 = vunpack.c.l.b16 %v7628
        %v7668 = vunpack.c.l.b16 %v7629
        %v7669 = vunpack.c.l.b16 %v7630
        %v7670 = vunpack.c.l.b16 %v7631
        %v7671 = vunpack.c.l.b16 %v7632
        %v7672 = vunpack.c.l.b16 %v7633
        %v7673 = vunpack.c.l.b16 %v7634
        %v7674 = vpack.c.b16 %v7659, %v7658
        %v7675 = vpack.c.b16 %v7661, %v7660
        %v7676 = vpack.c.b16 %v7663, %v7662
        %v7677 = vpack.c.b16 %v7665, %v7664
        %v7678 = vpack.c.b16 %v7667, %v7666
        %v7679 = vpack.c.b16 %v7669, %v7668
        %v7680 = vpack.c.b16 %v7671, %v7670
        %v7681 = vpack.c.b16 %v7673, %v7672
        %7690 = vmatprep.subr.bf16.mxu0 0
        %7691 = vmatpush1.bf16.msra.mxu0 %v7674
        %7692 = vmatprep.subr.bf16.mxu0 0
        %7693 = vmatpush1.bf16.msra.mxu0 %v7675
        %7694 = vmatprep.subr.bf16.mxu0 0
        %7695 = vmatpush1.bf16.msra.mxu0 %v7676
        %7696 = vmatprep.subr.bf16.mxu0 0
        %7697 = vmatpush1.bf16.msra.mxu0 %v7677
        %7698 = vmatprep.subr.bf16.mxu0 0
        %7699 = vmatpush1.bf16.msra.mxu0 %v7678
        %7700 = vmatprep.subr.bf16.mxu0 0
        %7701 = vmatpush1.bf16.msra.mxu0 %v7679
        %7702 = vmatprep.subr.bf16.mxu0 0
        %7703 = vmatpush1.bf16.msra.mxu0 %v7680
        %7704 = vmatprep.subr.bf16.mxu0 0
        %7705 = vmatpush1.bf16.msra.mxu0 %v7681
        %7706 = vmatprep.subr.bf16.mxu0 0
        %7707 = vmatpush1.bf16.msra.mxu0 0
        %7708 = vmatprep.subr.bf16.mxu0 0
        %7709 = vmatpush1.bf16.msra.mxu0 0
        %7710 = vmatprep.subr.bf16.mxu0 0
        %7711 = vmatpush1.bf16.msra.mxu0 0
        %7712 = vmatprep.subr.bf16.mxu0 0
        %7713 = vmatpush1.bf16.msra.mxu0 0
        %7714 = vmatprep.subr.bf16.mxu0 0
        %7715 = vmatpush1.bf16.msra.mxu0 0
        %7716 = vmatprep.subr.bf16.mxu0 0
        %7717 = vmatpush1.bf16.msra.mxu0 0
        %7718 = vmatprep.subr.bf16.mxu0 0
        %7719 = vmatpush1.bf16.msra.mxu0 0
        %7720 = vmatprep.subr.bf16.mxu0 0
        %7721 = vmatpush1.bf16.msra.mxu0 0
        %7722 = vmatprep.mubr.bf16.mxu0 0
        %7723 = vmatmul.mubr.bf16.gmra.mrb[0].mxu0 %v7603
        %v7724 = vpop.f32.mrb[0].mxu0
        %v7725 = vadd.f32 %v7640, %v7724
        %v7726 = vpop.f32.mrb[0].mxu0
        %v7727 = vpop.f32.mrb[0].mxu0
        %v7728 = vadd.f32 %v7640, %v7727
        %v7729 = vpop.f32.mrb[0].mxu0
        %7730 = vmatprep.mubr.bf16.mxu0 0
        %7731 = vmatmul.mubr.bf16.gmra.mrb[0].mxu0 %v7604
        %v7732 = vpop.f32.mrb[0].mxu0
        %v7733 = vadd.f32 %v7640, %v7732
        %v7734 = vpop.f32.mrb[0].mxu0
        %v7735 = vpop.f32.mrb[0].mxu0
        %v7736 = vadd.f32 %v7640, %v7735
        %v7737 = vpop.f32.mrb[0].mxu0
        %7738 = vmatprep.mubr.bf16.mxu0 0
        %7739 = vmatmul.mubr.bf16.gmra.mrb[0].mxu0 %v7605
        %v7740 = vpop.f32.mrb[0].mxu0
        %v7741 = vadd.f32 %v7640, %v7740
        %v7742 = vpop.f32.mrb[0].mxu0
        %v7743 = vpop.f32.mrb[0].mxu0
        %v7744 = vadd.f32 %v7640, %v7743
        %v7745 = vpop.f32.mrb[0].mxu0
        %7746 = vmatprep.mubr.bf16.mxu0 0
        %7747 = vmatmul.mubr.bf16.gmra.mrb[0].mxu0 %v7606
        %v7748 = vpop.f32.mrb[0].mxu0
        %v7749 = vadd.f32 %v7640, %v7748
        %v7750 = vpop.f32.mrb[0].mxu0
        %v7751 = vpop.f32.mrb[0].mxu0
        %v7752 = vadd.f32 %v7640, %v7751
        %v7753 = vpop.f32.mrb[0].mxu0
        %7754 = vmatprep.mubr.bf16.mxu0 0
        %7755 = vmatmul.mubr.bf16.gmra.mrb[0].mxu0 %v7607
        %v7756 = vpop.f32.mrb[0].mxu0
        %v7757 = vadd.f32 %v7640, %v7756
        %v7758 = vpop.f32.mrb[0].mxu0
        %v7759 = vpop.f32.mrb[0].mxu0
        %v7760 = vadd.f32 %v7640, %v7759
        %v7761 = vpop.f32.mrb[0].mxu0
        %7762 = vmatprep.mubr.bf16.mxu0 0
        %7763 = vmatmul.mubr.bf16.gmra.mrb[0].mxu0 %v7608
        %v7764 = vpop.f32.mrb[0].mxu0
        %v7765 = vadd.f32 %v7640, %v7764
        %v7766 = vpop.f32.mrb[0].mxu0
        %v7767 = vpop.f32.mrb[0].mxu0
        %v7768 = vadd.f32 %v7640, %v7767
        %v7769 = vpop.f32.mrb[0].mxu0
        %7770 = vmatprep.mubr.bf16.mxu0 0
        %7771 = vmatmul.mubr.bf16.gmra.mrb[0].mxu0 %v7609
        %v7772 = vpop.f32.mrb[0].mxu0
        %v7773 = vadd.f32 %v7640, %v7772
        %v7774 = vpop.f32.mrb[0].mxu0
        %v7775 = vpop.f32.mrb[0].mxu0
        %v7776 = vadd.f32 %v7640, %v7775
        %v7777 = vpop.f32.mrb[0].mxu0
        %7778 = vmatprep.mubr.bf16.mxu0 0
        %7779 = vmatmul.mubr.bf16.gmra.mrb[0].mxu0 %v7610
        %v7780 = vpop.f32.mrb[0].mxu0
        %v7781 = vadd.f32 %v7640, %v7780
        %v7782 = vpop.f32.mrb[0].mxu0
        %v7783 = vpop.f32.mrb[0].mxu0
        %v7784 = vadd.f32 %v7640, %v7783
        %v7785 = vpop.f32.mrb[0].mxu0
        %7786 = vmatprep.mubr.bf16.mxu0 0
        %7787 = vmatmul.mubr.bf16.gmra.mrb[0].mxu0 %v7611
        %v7788 = vpop.f32.mrb[0].mxu0
        %v7789 = vadd.f32 %v7640, %v7788
        %v7790 = vpop.f32.mrb[0].mxu0
        %v7791 = vpop.f32.mrb[0].mxu0
        %v7792 = vadd.f32 %v7640, %v7791
        %v7793 = vpop.f32.mrb[0].mxu0
        %7794 = vmatprep.mubr.bf16.mxu0 0
        %7795 = vmatmul.mubr.bf16.gmra.mrb[0].mxu0 %v7612
        %v7796 = vpop.f32.mrb[0].mxu0
        %v7797 = vadd.f32 %v7640, %v7796
        %v7798 = vpop.f32.mrb[0].mxu0
        %v7799 = vpop.f32.mrb[0].mxu0
        %v7800 = vadd.f32 %v7640, %v7799
        %v7801 = vpop.f32.mrb[0].mxu0
        %7802 = vmatprep.mubr.bf16.mxu0 0
        %7803 = vmatmul.mubr.bf16.gmra.mrb[0].mxu0 %v7613
        %v7804 = vpop.f32.mrb[0].mxu0
        %v7805 = vadd.f32 %v7640, %v7804
        %v7806 = vpop.f32.mrb[0].mxu0
        %v7807 = vpop.f32.mrb[0].mxu0
        %v7808 = vadd.f32 %v7640, %v7807
        %v7809 = vpop.f32.mrb[0].mxu0
        %7810 = vmatprep.mubr.bf16.mxu0 0
        %7811 = vmatmul.mubr.bf16.gmra.mrb[0].mxu0 %v7614
        %v7812 = vpop.f32.mrb[0].mxu0
        %v7813 = vadd.f32 %v7640, %v7812
        %v7814 = vpop.f32.mrb[0].mxu0
        %v7815 = vpop.f32.mrb[0].mxu0
        %v7816 = vadd.f32 %v7640, %v7815
        %v7817 = vpop.f32.mrb[0].mxu0
        %7818 = vmatprep.mubr.bf16.mxu0 0
        %7819 = vmatmul.mubr.bf16.gmra.mrb[0].mxu0 %v7615
        %v7820 = vpop.f32.mrb[0].mxu0
        %v7821 = vadd.f32 %v7640, %v7820
        %v7822 = vpop.f32.mrb[0].mxu0
        %v7823 = vpop.f32.mrb[0].mxu0
        %v7824 = vadd.f32 %v7640, %v7823
        %v7825 = vpop.f32.mrb[0].mxu0
        %7826 = vmatprep.mubr.bf16.mxu0 0
        %7827 = vmatmul.mubr.bf16.gmra.mrb[0].mxu0 %v7616
        %v7828 = vpop.f32.mrb[0].mxu0
        %v7829 = vadd.f32 %v7640, %v7828
        %v7830 = vpop.f32.mrb[0].mxu0
        %v7831 = vpop.f32.mrb[0].mxu0
        %v7832 = vadd.f32 %v7640, %v7831
        %v7833 = vpop.f32.mrb[0].mxu0
        %7834 = vmatprep.mubr.bf16.mxu0 0
        %7835 = vmatmul.mubr.bf16.gmra.mrb[0].mxu0 %v7617
        %v7836 = vpop.f32.mrb[0].mxu0
        %v7837 = vadd.f32 %v7640, %v7836
        %v7838 = vpop.f32.mrb[0].mxu0
        %v7839 = vpop.f32.mrb[0].mxu0
        %v7840 = vadd.f32 %v7640, %v7839
        %v7841 = vpop.f32.mrb[0].mxu0
        %7842 = vmatprep.mubr.bf16.mxu0 0
        %7843 = vmatmul.mubr.bf16.gmra.mrb[0].mxu0 %v7618
        %v7844 = vpop.f32.mrb[0].mxu0
        %v7845 = vadd.f32 %v7640, %v7844
        %v7846 = vpop.f32.mrb[0].mxu0
        %v7847 = vpop.f32.mrb[0].mxu0
        %v7848 = vadd.f32 %v7640, %v7847
        %v7849 = vpop.f32.mrb[0].mxu0
        %7850 = vdwg.mxu0
        %v7851 = vmul.f32 %v7725, 0.2
        %v7852 = vmul.f32 %v7728, 0.2
        %v7853 = vmul.f32 %v7733, 0.2
        %v7854 = vmul.f32 %v7736, 0.2
        %v7855 = vmul.f32 %v7741, 0.2
        %v7856 = vmul.f32 %v7744, 0.2
        %v7857 = vmul.f32 %v7749, 0.2
        %v7858 = vmul.f32 %v7752, 0.2
        %v7859 = vmul.f32 %v7757, 0.2
        %v7860 = vmul.f32 %v7760, 0.2
        %v7861 = vmul.f32 %v7765, 0.2
        %v7862 = vmul.f32 %v7768, 0.2
        %v7863 = vmul.f32 %v7773, 0.2
        %v7864 = vmul.f32 %v7776, 0.2
        %v7865 = vmul.f32 %v7781, 0.2
        %v7866 = vmul.f32 %v7784, 0.2
        %v7867 = vmul.f32 %v7789, 0.2
        %v7868 = vmul.f32 %v7792, 0.2
        %v7869 = vmul.f32 %v7797, 0.2
        %v7870 = vmul.f32 %v7800, 0.2
        %v7871 = vmul.f32 %v7805, 0.2
        %v7872 = vmul.f32 %v7808, 0.2
        %v7873 = vmul.f32 %v7813, 0.2
        %v7874 = vmul.f32 %v7816, 0.2
        %v7875 = vmul.f32 %v7821, 0.2
        %v7876 = vmul.f32 %v7824, 0.2
        %v7877 = vmul.f32 %v7829, 0.2
        %v7878 = vmul.f32 %v7832, 0.2
        %v7879 = vmul.f32 %v7837, 0.2
        %v7880 = vmul.f32 %v7840, 0.2
        %v7881 = vmul.f32 %v7845, 0.2
        %v7882 = vmul.f32 %v7848, 0.2
        %v7883 = vmax.f32 %v7725, %v7851
        %v7884 = vmax.f32 %v7728, %v7852
        %v7885 = vmax.f32 %v7733, %v7853
        %v7886 = vmax.f32 %v7736, %v7854
        %v7887 = vmax.f32 %v7741, %v7855
        %v7888 = vmax.f32 %v7744, %v7856
        %v7889 = vmax.f32 %v7749, %v7857
        %v7890 = vmax.f32 %v7752, %v7858
        %v7891 = vmax.f32 %v7757, %v7859
        %v7892 = vmax.f32 %v7760, %v7860
        %v7893 = vmax.f32 %v7765, %v7861
        %v7894 = vmax.f32 %v7768, %v7862
        %v7895 = vmax.f32 %v7773, %v7863
        %v7896 = vmax.f32 %v7776, %v7864
        %v7897 = vmax.f32 %v7781, %v7865
        %v7898 = vmax.f32 %v7784, %v7866
        %v7899 = vmax.f32 %v7789, %v7867
        %v7900 = vmax.f32 %v7792, %v7868
        %v7901 = vmax.f32 %v7797, %v7869
        %v7902 = vmax.f32 %v7800, %v7870
        %v7903 = vmax.f32 %v7805, %v7871
        %v7904 = vmax.f32 %v7808, %v7872
        %v7905 = vmax.f32 %v7813, %v7873
        %v7906 = vmax.f32 %v7816, %v7874
        %v7907 = vmax.f32 %v7821, %v7875
        %v7908 = vmax.f32 %v7824, %v7876
        %v7909 = vmax.f32 %v7829, %v7877
        %v7910 = vmax.f32 %v7832, %v7878
        %v7911 = vmax.f32 %v7837, %v7879
        %v7912 = vmax.f32 %v7840, %v7880
        %v7913 = vmax.f32 %v7845, %v7881
        %v7914 = vmax.f32 %v7848, %v7882
        %v7915 = vpack.c.bf16 %v7884, %v7883
        %v7916 = vpack.c.bf16 %v7886, %v7885
        %v7917 = vpack.c.bf16 %v7888, %v7887
        %v7918 = vpack.c.bf16 %v7890, %v7889
        %v7919 = vpack.c.bf16 %v7892, %v7891
        %v7920 = vpack.c.bf16 %v7894, %v7893
        %v7921 = vpack.c.bf16 %v7896, %v7895
        %v7922 = vpack.c.bf16 %v7898, %v7897
        %v7923 = vpack.c.bf16 %v7900, %v7899
        %v7924 = vpack.c.bf16 %v7902, %v7901
        %v7925 = vpack.c.bf16 %v7904, %v7903
        %v7926 = vpack.c.bf16 %v7906, %v7905
        %v7927 = vpack.c.bf16 %v7908, %v7907
        %v7928 = vpack.c.bf16 %v7910, %v7909
        %v7929 = vpack.c.bf16 %v7912, %v7911
        %v7930 = vpack.c.bf16 %v7914, %v7913
        %v7931 = vld [vmem:[#allocation10] sm:$0xf]
        %v7932 = vld [vmem:[#allocation10 + $0x4] sm:$0xf]
        %v7933 = vld [vmem:[#allocation10 + $0x8] sm:$0xf]
        %v7934 = vld [vmem:[#allocation10 + $0xc] sm:$0xf]
        %v7935 = vld [vmem:[#allocation10 + $0x10] sm:$0xf]
        %v7936 = vld [vmem:[#allocation10 + $0x14] sm:$0xf]
        %v7937 = vld [vmem:[#allocation10 + $0x18] sm:$0xf]
        %v7938 = vld [vmem:[#allocation10 + $0x1c] sm:$0xf]
        %v7939 = vld [vmem:[#allocation10 + $0x20] sm:$0xf]
        %v7940 = vld [vmem:[#allocation10 + $0x24] sm:$0xf]
        %v7941 = vld [vmem:[#allocation10 + $0x28] sm:$0xf]
        %v7942 = vld [vmem:[#allocation10 + $0x2c] sm:$0xf]
        %v7943 = vld [vmem:[#allocation10 + $0x30] sm:$0xf]
        %v7944 = vld [vmem:[#allocation10 + $0x34] sm:$0xf]
        %v7945 = vld [vmem:[#allocation10 + $0x38] sm:$0xf]
        %v7946 = vld [vmem:[#allocation10 + $0x3c] sm:$0xf]
        %v7947 = vld [vmem:[#allocation11] sm:$0x1]
        %v7949 = vlaneseq
        %v7950 = vshrl.u32 %v7949, 7
        %v7951 = vsub.s32 0, %v7950
        %v7952 = vrot.slane %v7947, %v7951
        %v7970 = vunpack.c.l.b16 %v7931
        %v7971 = vunpack.c.l.b16 %v7932
        %v7972 = vunpack.c.l.b16 %v7933
        %v7973 = vunpack.c.l.b16 %v7934
        %v7974 = vunpack.c.l.b16 %v7935
        %v7975 = vunpack.c.l.b16 %v7936
        %v7976 = vunpack.c.l.b16 %v7937
        %v7977 = vunpack.c.l.b16 %v7938
        %v7978 = vunpack.c.l.b16 %v7939
        %v7979 = vunpack.c.l.b16 %v7940
        %v7980 = vunpack.c.l.b16 %v7941
        %v7981 = vunpack.c.l.b16 %v7942
        %v7982 = vunpack.c.l.b16 %v7943
        %v7983 = vunpack.c.l.b16 %v7944
        %v7984 = vunpack.c.l.b16 %v7945
        %v7985 = vunpack.c.l.b16 %v7946
        %v7986 = vpack.c.b16 %v7971, %v7970
        %v7987 = vpack.c.b16 %v7973, %v7972
        %v7988 = vpack.c.b16 %v7975, %v7974
        %v7989 = vpack.c.b16 %v7977, %v7976
        %v7990 = vpack.c.b16 %v7979, %v7978
        %v7991 = vpack.c.b16 %v7981, %v7980
        %v7992 = vpack.c.b16 %v7983, %v7982
        %v7993 = vpack.c.b16 %v7985, %v7984
        %8002 = vmatprep.subr.bf16.mxu0 0
        %8003 = vmatpush1.bf16.msra.mxu0 %v7986
        %8004 = vmatprep.subr.bf16.mxu0 0
        %8005 = vmatpush1.bf16.msra.mxu0 %v7987
        %8006 = vmatprep.subr.bf16.mxu0 0
        %8007 = vmatpush1.bf16.msra.mxu0 %v7988
        %8008 = vmatprep.subr.bf16.mxu0 0
        %8009 = vmatpush1.bf16.msra.mxu0 %v7989
        %8010 = vmatprep.subr.bf16.mxu0 0
        %8011 = vmatpush1.bf16.msra.mxu0 %v7990
        %8012 = vmatprep.subr.bf16.mxu0 0
        %8013 = vmatpush1.bf16.msra.mxu0 %v7991
        %8014 = vmatprep.subr.bf16.mxu0 0
        %8015 = vmatpush1.bf16.msra.mxu0 %v7992
        %8016 = vmatprep.subr.bf16.mxu0 0
        %8017 = vmatpush1.bf16.msra.mxu0 %v7993
        %8018 = vmatprep.subr.bf16.mxu0 0
        %8019 = vmatpush1.bf16.msra.mxu0 0
        %8020 = vmatprep.subr.bf16.mxu0 0
        %8021 = vmatpush1.bf16.msra.mxu0 0
        %8022 = vmatprep.subr.bf16.mxu0 0
        %8023 = vmatpush1.bf16.msra.mxu0 0
        %8024 = vmatprep.subr.bf16.mxu0 0
        %8025 = vmatpush1.bf16.msra.mxu0 0
        %8026 = vmatprep.subr.bf16.mxu0 0
        %8027 = vmatpush1.bf16.msra.mxu0 0
        %8028 = vmatprep.subr.bf16.mxu0 0
        %8029 = vmatpush1.bf16.msra.mxu0 0
        %8030 = vmatprep.subr.bf16.mxu0 0
        %8031 = vmatpush1.bf16.msra.mxu0 0
        %8032 = vmatprep.subr.bf16.mxu0 0
        %8033 = vmatpush1.bf16.msra.mxu0 0
        %8034 = vmatprep.mubr.bf16.mxu0 0
        %8035 = vmatmul.mubr.bf16.gmra.mrb[0].mxu0 %v7915
        %v8036 = vpop.f32.mrb[0].mxu0
        %v8037 = vadd.f32 %v7952, %v8036
        %v8038 = vpop.f32.mrb[0].mxu0
        %v8039 = vpop.f32.mrb[0].mxu0
        %v8040 = vadd.f32 %v7952, %v8039
        %v8041 = vpop.f32.mrb[0].mxu0
        %8042 = vmatprep.mubr.bf16.mxu0 0
        %8043 = vmatmul.mubr.bf16.gmra.mrb[0].mxu0 %v7916
        %v8044 = vpop.f32.mrb[0].mxu0
        %v8045 = vadd.f32 %v7952, %v8044
        %v8046 = vpop.f32.mrb[0].mxu0
        %v8047 = vpop.f32.mrb[0].mxu0
        %v8048 = vadd.f32 %v7952, %v8047
        %v8049 = vpop.f32.mrb[0].mxu0
        %8050 = vmatprep.mubr.bf16.mxu0 0
        %8051 = vmatmul.mubr.bf16.gmra.mrb[0].mxu0 %v7917
        %v8052 = vpop.f32.mrb[0].mxu0
        %v8053 = vadd.f32 %v7952, %v8052
        %v8054 = vpop.f32.mrb[0].mxu0
        %v8055 = vpop.f32.mrb[0].mxu0
        %v8056 = vadd.f32 %v7952, %v8055
        %v8057 = vpop.f32.mrb[0].mxu0
        %8058 = vmatprep.mubr.bf16.mxu0 0
        %8059 = vmatmul.mubr.bf16.gmra.mrb[0].mxu0 %v7918
        %v8060 = vpop.f32.mrb[0].mxu0
        %v8061 = vadd.f32 %v7952, %v8060
        %v8062 = vpop.f32.mrb[0].mxu0
        %v8063 = vpop.f32.mrb[0].mxu0
        %v8064 = vadd.f32 %v7952, %v8063
        %v8065 = vpop.f32.mrb[0].mxu0
        %8066 = vmatprep.mubr.bf16.mxu0 0
        %8067 = vmatmul.mubr.bf16.gmra.mrb[0].mxu0 %v7919
        %v8068 = vpop.f32.mrb[0].mxu0
        %v8069 = vadd.f32 %v7952, %v8068
        %v8070 = vpop.f32.mrb[0].mxu0
        %v8071 = vpop.f32.mrb[0].mxu0
        %v8072 = vadd.f32 %v7952, %v8071
        %v8073 = vpop.f32.mrb[0].mxu0
        %8074 = vmatprep.mubr.bf16.mxu0 0
        %8075 = vmatmul.mubr.bf16.gmra.mrb[0].mxu0 %v7920
        %v8076 = vpop.f32.mrb[0].mxu0
        %v8077 = vadd.f32 %v7952, %v8076
        %v8078 = vpop.f32.mrb[0].mxu0
        %v8079 = vpop.f32.mrb[0].mxu0
        %v8080 = vadd.f32 %v7952, %v8079
        %v8081 = vpop.f32.mrb[0].mxu0
        %8082 = vmatprep.mubr.bf16.mxu0 0
        %8083 = vmatmul.mubr.bf16.gmra.mrb[0].mxu0 %v7921
        %v8084 = vpop.f32.mrb[0].mxu0
        %v8085 = vadd.f32 %v7952, %v8084
        %v8086 = vpop.f32.mrb[0].mxu0
        %v8087 = vpop.f32.mrb[0].mxu0
        %v8088 = vadd.f32 %v7952, %v8087
        %v8089 = vpop.f32.mrb[0].mxu0
        %8090 = vmatprep.mubr.bf16.mxu0 0
        %8091 = vmatmul.mubr.bf16.gmra.mrb[0].mxu0 %v7922
        %v8092 = vpop.f32.mrb[0].mxu0
        %v8093 = vadd.f32 %v7952, %v8092
        %v8094 = vpop.f32.mrb[0].mxu0
        %v8095 = vpop.f32.mrb[0].mxu0
        %v8096 = vadd.f32 %v7952, %v8095
        %v8097 = vpop.f32.mrb[0].mxu0
        %8098 = vmatprep.mubr.bf16.mxu0 0
        %8099 = vmatmul.mubr.bf16.gmra.mrb[0].mxu0 %v7923
        %v8100 = vpop.f32.mrb[0].mxu0
        %v8101 = vadd.f32 %v7952, %v8100
        %v8102 = vpop.f32.mrb[0].mxu0
        %v8103 = vpop.f32.mrb[0].mxu0
        %v8104 = vadd.f32 %v7952, %v8103
        %v8105 = vpop.f32.mrb[0].mxu0
        %8106 = vmatprep.mubr.bf16.mxu0 0
        %8107 = vmatmul.mubr.bf16.gmra.mrb[0].mxu0 %v7924
        %v8108 = vpop.f32.mrb[0].mxu0
        %v8109 = vadd.f32 %v7952, %v8108
        %v8110 = vpop.f32.mrb[0].mxu0
        %v8111 = vpop.f32.mrb[0].mxu0
        %v8112 = vadd.f32 %v7952, %v8111
        %v8113 = vpop.f32.mrb[0].mxu0
        %8114 = vmatprep.mubr.bf16.mxu0 0
        %8115 = vmatmul.mubr.bf16.gmra.mrb[0].mxu0 %v7925
        %v8116 = vpop.f32.mrb[0].mxu0
        %v8117 = vadd.f32 %v7952, %v8116
        %v8118 = vpop.f32.mrb[0].mxu0
        %v8119 = vpop.f32.mrb[0].mxu0
        %v8120 = vadd.f32 %v7952, %v8119
        %v8121 = vpop.f32.mrb[0].mxu0
        %8122 = vmatprep.mubr.bf16.mxu0 0
        %8123 = vmatmul.mubr.bf16.gmra.mrb[0].mxu0 %v7926
        %v8124 = vpop.f32.mrb[0].mxu0
        %v8125 = vadd.f32 %v7952, %v8124
        %v8126 = vpop.f32.mrb[0].mxu0
        %v8127 = vpop.f32.mrb[0].mxu0
        %v8128 = vadd.f32 %v7952, %v8127
        %v8129 = vpop.f32.mrb[0].mxu0
        %8130 = vmatprep.mubr.bf16.mxu0 0
        %8131 = vmatmul.mubr.bf16.gmra.mrb[0].mxu0 %v7927
        %v8132 = vpop.f32.mrb[0].mxu0
        %v8133 = vadd.f32 %v7952, %v8132
        %v8134 = vpop.f32.mrb[0].mxu0
        %v8135 = vpop.f32.mrb[0].mxu0
        %v8136 = vadd.f32 %v7952, %v8135
        %v8137 = vpop.f32.mrb[0].mxu0
        %8138 = vmatprep.mubr.bf16.mxu0 0
        %8139 = vmatmul.mubr.bf16.gmra.mrb[0].mxu0 %v7928
        %v8140 = vpop.f32.mrb[0].mxu0
        %v8141 = vadd.f32 %v7952, %v8140
        %v8142 = vpop.f32.mrb[0].mxu0
        %v8143 = vpop.f32.mrb[0].mxu0
        %v8144 = vadd.f32 %v7952, %v8143
        %v8145 = vpop.f32.mrb[0].mxu0
        %8146 = vmatprep.mubr.bf16.mxu0 0
        %8147 = vmatmul.mubr.bf16.gmra.mrb[0].mxu0 %v7929
        %v8148 = vpop.f32.mrb[0].mxu0
        %v8149 = vadd.f32 %v7952, %v8148
        %v8150 = vpop.f32.mrb[0].mxu0
        %v8151 = vpop.f32.mrb[0].mxu0
        %v8152 = vadd.f32 %v7952, %v8151
        %v8153 = vpop.f32.mrb[0].mxu0
        %8154 = vmatprep.mubr.bf16.mxu0 0
        %8155 = vmatmul.mubr.bf16.gmra.mrb[0].mxu0 %v7930
        %v8156 = vpop.f32.mrb[0].mxu0
        %v8157 = vadd.f32 %v7952, %v8156
        %v8158 = vpop.f32.mrb[0].mxu0
        %v8159 = vpop.f32.mrb[0].mxu0
        %v8160 = vadd.f32 %v7952, %v8159
        %v8161 = vpop.f32.mrb[0].mxu0
        %8162 = vdwg.mxu0
        %v8163 = vrot.slane %v8037, 7
        %v8164 = vrot.slane %v8040, 7
        %v8165 = vrot.slane %v8045, 7
        %v8166 = vrot.slane %v8048, 7
        %v8167 = vrot.slane %v8053, 7
        %v8168 = vrot.slane %v8056, 7
        %v8169 = vrot.slane %v8061, 7
        %v8170 = vrot.slane %v8064, 7
        %v8171 = vrot.slane %v8069, 7
        %v8172 = vrot.slane %v8072, 7
        %v8173 = vrot.slane %v8077, 7
        %v8174 = vrot.slane %v8080, 7
        %v8175 = vrot.slane %v8085, 7
        %v8176 = vrot.slane %v8088, 7
        %v8177 = vrot.slane %v8093, 7
        %v8178 = vrot.slane %v8096, 7
        %v8179 = vrot.slane %v8101, 7
        %v8180 = vrot.slane %v8104, 7
        %v8181 = vrot.slane %v8109, 7
        %v8182 = vrot.slane %v8112, 7
        %v8183 = vrot.slane %v8117, 7
        %v8184 = vrot.slane %v8120, 7
        %v8185 = vrot.slane %v8125, 7
        %v8186 = vrot.slane %v8128, 7
        %v8187 = vrot.slane %v8133, 7
        %v8188 = vrot.slane %v8136, 7
        %v8189 = vrot.slane %v8141, 7
        %v8190 = vrot.slane %v8144, 7
        %v8191 = vrot.slane %v8149, 7
        %v8192 = vrot.slane %v8152, 7
        %v8193 = vrot.slane %v8157, 7
        %v8194 = vrot.slane %v8160, 7
        %v8195 = vsel %vm1898, %v8193, %v8194
        %v8196 = vsel %vm1898, %v8192, %v8193
        %v8197 = vsel %vm1898, %v8191, %v8192
        %v8198 = vsel %vm1898, %v8190, %v8191
        %v8199 = vsel %vm1898, %v8189, %v8190
        %v8200 = vsel %vm1898, %v8188, %v8189
        %v8201 = vsel %vm1898, %v8187, %v8188
        %v8202 = vsel %vm1898, %v8186, %v8187
        %v8203 = vsel %vm1898, %v8185, %v8186
        %v8204 = vsel %vm1898, %v8184, %v8185
        %v8205 = vsel %vm1898, %v8183, %v8184
        %v8206 = vsel %vm1898, %v8182, %v8183
        %v8207 = vsel %vm1898, %v8181, %v8182
        %v8208 = vsel %vm1898, %v8180, %v8181
        %v8209 = vsel %vm1898, %v8179, %v8180
        %v8210 = vsel %vm1898, %v8178, %v8179
        %v8211 = vsel %vm1898, %v8177, %v8178
        %v8212 = vsel %vm1898, %v8176, %v8177
        %v8213 = vsel %vm1898, %v8175, %v8176
        %v8214 = vsel %vm1898, %v8174, %v8175
        %v8215 = vsel %vm1898, %v8173, %v8174
        %v8216 = vsel %vm1898, %v8172, %v8173
        %v8217 = vsel %vm1898, %v8171, %v8172
        %v8218 = vsel %vm1898, %v8170, %v8171
        %v8219 = vsel %vm1898, %v8169, %v8170
        %v8220 = vsel %vm1898, %v8168, %v8169
        %v8221 = vsel %vm1898, %v8167, %v8168
        %v8222 = vsel %vm1898, %v8166, %v8167
        %v8223 = vsel %vm1898, %v8165, %v8166
        %v8224 = vsel %vm1898, %v8164, %v8165
        %v8225 = vsel %vm1898, %v8163, %v8164
        %v8226 = vsel %vm1898, %v8194, %v8163
        %v8227 = vmul.f32 %v8226, %v966
        %v8228 = vmul.f32 %v8225, %v967
        %v8229 = vmul.f32 %v8224, %v968
        %v8230 = vmul.f32 %v8223, %v969
        %v8231 = vmul.f32 %v8222, %v970
        %v8232 = vmul.f32 %v8221, %v971
        %v8233 = vmul.f32 %v8220, %v972
        %v8234 = vmul.f32 %v8219, %v973
        %v8235 = vmul.f32 %v8218, %v966
        %v8236 = vmul.f32 %v8217, %v967
        %v8237 = vmul.f32 %v8216, %v968
        %v8238 = vmul.f32 %v8215, %v969
        %v8239 = vmul.f32 %v8214, %v970
        %v8240 = vmul.f32 %v8213, %v971
        %v8241 = vmul.f32 %v8212, %v972
        %v8242 = vmul.f32 %v8211, %v973
        %v8243 = vmul.f32 %v8210, %v966
        %v8244 = vmul.f32 %v8209, %v967
        %v8245 = vmul.f32 %v8208, %v968
        %v8246 = vmul.f32 %v8207, %v969
        %v8247 = vmul.f32 %v8206, %v970
        %v8248 = vmul.f32 %v8205, %v971
        %v8249 = vmul.f32 %v8204, %v972
        %v8250 = vmul.f32 %v8203, %v973
        %v8251 = vmul.f32 %v8202, %v966
        %v8252 = vmul.f32 %v8201, %v967
        %v8253 = vmul.f32 %v8200, %v968
        %v8254 = vmul.f32 %v8199, %v969
        %v8255 = vmul.f32 %v8198, %v970
        %v8256 = vmul.f32 %v8197, %v971
        %v8257 = vmul.f32 %v8196, %v972
        %v8258 = vmul.f32 %v8195, %v973
        %v8259 = vrot.slane %v8037, 1
        %v8260 = vrot.slane %v8040, 1
        %v8261 = vrot.slane %v8045, 1
        %v8262 = vrot.slane %v8048, 1
        %v8263 = vrot.slane %v8053, 1
        %v8264 = vrot.slane %v8056, 1
        %v8265 = vrot.slane %v8061, 1
        %v8266 = vrot.slane %v8064, 1
        %v8267 = vrot.slane %v8069, 1
        %v8268 = vrot.slane %v8072, 1
        %v8269 = vrot.slane %v8077, 1
        %v8270 = vrot.slane %v8080, 1
        %v8271 = vrot.slane %v8085, 1
        %v8272 = vrot.slane %v8088, 1
        %v8273 = vrot.slane %v8093, 1
        %v8274 = vrot.slane %v8096, 1
        %v8275 = vrot.slane %v8101, 1
        %v8276 = vrot.slane %v8104, 1
        %v8277 = vrot.slane %v8109, 1
        %v8278 = vrot.slane %v8112, 1
        %v8279 = vrot.slane %v8117, 1
        %v8280 = vrot.slane %v8120, 1
        %v8281 = vrot.slane %v8125, 1
        %v8282 = vrot.slane %v8128, 1
        %v8283 = vrot.slane %v8133, 1
        %v8284 = vrot.slane %v8136, 1
        %v8285 = vrot.slane %v8141, 1
        %v8286 = vrot.slane %v8144, 1
        %v8287 = vrot.slane %v8149, 1
        %v8288 = vrot.slane %v8152, 1
        %v8289 = vrot.slane %v8157, 1
        %v8290 = vrot.slane %v8160, 1
        %v8291 = vsel %vm2455, %v8289, %v8290
        %v8292 = vsel %vm2455, %v8288, %v8289
        %v8293 = vsel %vm2455, %v8287, %v8288
        %v8294 = vsel %vm2455, %v8286, %v8287
        %v8295 = vsel %vm2455, %v8285, %v8286
        %v8296 = vsel %vm2455, %v8284, %v8285
        %v8297 = vsel %vm2455, %v8283, %v8284
        %v8298 = vsel %vm2455, %v8282, %v8283
        %v8299 = vsel %vm2455, %v8281, %v8282
        %v8300 = vsel %vm2455, %v8280, %v8281
        %v8301 = vsel %vm2455, %v8279, %v8280
        %v8302 = vsel %vm2455, %v8278, %v8279
        %v8303 = vsel %vm2455, %v8277, %v8278
        %v8304 = vsel %vm2455, %v8276, %v8277
        %v8305 = vsel %vm2455, %v8275, %v8276
        %v8306 = vsel %vm2455, %v8274, %v8275
        %v8307 = vsel %vm2455, %v8273, %v8274
        %v8308 = vsel %vm2455, %v8272, %v8273
        %v8309 = vsel %vm2455, %v8271, %v8272
        %v8310 = vsel %vm2455, %v8270, %v8271
        %v8311 = vsel %vm2455, %v8269, %v8270
        %v8312 = vsel %vm2455, %v8268, %v8269
        %v8313 = vsel %vm2455, %v8267, %v8268
        %v8314 = vsel %vm2455, %v8266, %v8267
        %v8315 = vsel %vm2455, %v8265, %v8266
        %v8316 = vsel %vm2455, %v8264, %v8265
        %v8317 = vsel %vm2455, %v8263, %v8264
        %v8318 = vsel %vm2455, %v8262, %v8263
        %v8319 = vsel %vm2455, %v8261, %v8262
        %v8320 = vsel %vm2455, %v8260, %v8261
        %v8321 = vsel %vm2455, %v8259, %v8260
        %v8322 = vsel %vm2455, %v8290, %v8259
        %v8323 = vmul.f32 %v8321, %v1014
        %v8324 = vmul.f32 %v8320, %v1015
        %v8325 = vmul.f32 %v8319, %v1016
        %v8326 = vmul.f32 %v8318, %v1017
        %v8327 = vmul.f32 %v8317, %v1018
        %v8328 = vmul.f32 %v8316, %v1019
        %v8329 = vmul.f32 %v8315, %v1020
        %v8330 = vmul.f32 %v8314, %v1021
        %v8331 = vmul.f32 %v8313, %v1014
        %v8332 = vmul.f32 %v8312, %v1015
        %v8333 = vmul.f32 %v8311, %v1016
        %v8334 = vmul.f32 %v8310, %v1017
        %v8335 = vmul.f32 %v8309, %v1018
        %v8336 = vmul.f32 %v8308, %v1019
        %v8337 = vmul.f32 %v8307, %v1020
        %v8338 = vmul.f32 %v8306, %v1021
        %v8339 = vmul.f32 %v8305, %v1014
        %v8340 = vmul.f32 %v8304, %v1015
        %v8341 = vmul.f32 %v8303, %v1016
        %v8342 = vmul.f32 %v8302, %v1017
        %v8343 = vmul.f32 %v8301, %v1018
        %v8344 = vmul.f32 %v8300, %v1019
        %v8345 = vmul.f32 %v8299, %v1020
        %v8346 = vmul.f32 %v8298, %v1021
        %v8347 = vmul.f32 %v8297, %v1014
        %v8348 = vmul.f32 %v8296, %v1015
        %v8349 = vmul.f32 %v8295, %v1016
        %v8350 = vmul.f32 %v8294, %v1017
        %v8351 = vmul.f32 %v8293, %v1018
        %v8352 = vmul.f32 %v8292, %v1019
        %v8353 = vmul.f32 %v8291, %v1020
        %v8354 = vmul.f32 %v8322, %v1021
        %v8355 = vpack.c.bf16 %v8228, %v8227
        %v8356 = vpack.c.bf16 %v8040, %v8037
        %v8357 = vpack.c.bf16 %v8324, %v8323
        %v8358 = vpack.c.bf16 %v8230, %v8229
        %v8359 = vpack.c.bf16 %v8048, %v8045
        %v8360 = vpack.c.bf16 %v8326, %v8325
        %v8361 = vpack.c.bf16 %v8232, %v8231
        %v8362 = vpack.c.bf16 %v8056, %v8053
        %v8363 = vpack.c.bf16 %v8328, %v8327
        %v8364 = vpack.c.bf16 %v8234, %v8233
        %v8365 = vpack.c.bf16 %v8064, %v8061
        %v8366 = vpack.c.bf16 %v8330, %v8329
        %v8367 = vpack.c.bf16 %v8236, %v8235
        %v8368 = vpack.c.bf16 %v8072, %v8069
        %v8369 = vpack.c.bf16 %v8332, %v8331
        %v8370 = vpack.c.bf16 %v8238, %v8237
        %v8371 = vpack.c.bf16 %v8080, %v8077
        %v8372 = vpack.c.bf16 %v8334, %v8333
        %v8373 = vpack.c.bf16 %v8240, %v8239
        %v8374 = vpack.c.bf16 %v8088, %v8085
        %v8375 = vpack.c.bf16 %v8336, %v8335
        %v8376 = vpack.c.bf16 %v8242, %v8241
        %v8377 = vpack.c.bf16 %v8096, %v8093
        %v8378 = vpack.c.bf16 %v8338, %v8337
        %v8379 = vpack.c.bf16 %v8244, %v8243
        %v8380 = vpack.c.bf16 %v8104, %v8101
        %v8381 = vpack.c.bf16 %v8340, %v8339
        %v8382 = vpack.c.bf16 %v8246, %v8245
        %v8383 = vpack.c.bf16 %v8112, %v8109
        %v8384 = vpack.c.bf16 %v8342, %v8341
        %v8385 = vpack.c.bf16 %v8248, %v8247
        %v8386 = vpack.c.bf16 %v8120, %v8117
        %v8387 = vpack.c.bf16 %v8344, %v8343
        %v8388 = vpack.c.bf16 %v8250, %v8249
        %v8389 = vpack.c.bf16 %v8128, %v8125
        %v8390 = vpack.c.bf16 %v8346, %v8345
        %v8391 = vpack.c.bf16 %v8252, %v8251
        %v8392 = vpack.c.bf16 %v8136, %v8133
        %v8393 = vpack.c.bf16 %v8348, %v8347
        %v8394 = vpack.c.bf16 %v8254, %v8253
        %v8395 = vpack.c.bf16 %v8144, %v8141
        %v8396 = vpack.c.bf16 %v8350, %v8349
        %v8397 = vpack.c.bf16 %v8256, %v8255
        %v8398 = vpack.c.bf16 %v8152, %v8149
        %v8399 = vpack.c.bf16 %v8352, %v8351
        %v8400 = vpack.c.bf16 %v8258, %v8257
        %v8401 = vpack.c.bf16 %v8160, %v8157
        %v8402 = vpack.c.bf16 %v8354, %v8353
        %v8403 = vld [vmem:[%s14] sm:$0xf]
        %v8404 = vld [vmem:[%s14 + $0x4] sm:$0xf]
        %v8405 = vld [vmem:[%s14 + $0x8] sm:$0xf]
        %v8406 = vld [vmem:[%s14 + $0xc] sm:$0xf]
        %v8407 = vld [vmem:[%s14 + $0x10] sm:$0xf]
        %v8408 = vld [vmem:[%s14 + $0x14] sm:$0xf]
        %v8409 = vld [vmem:[%s14 + $0x18] sm:$0xf]
        %v8410 = vld [vmem:[%s14 + $0x1c] sm:$0xf]
        %v8411 = vld [vmem:[%s14 + $0x20] sm:$0xf]
        %v8412 = vld [vmem:[%s14 + $0x24] sm:$0xf]
        %v8413 = vld [vmem:[%s14 + $0x28] sm:$0xf]
        %v8414 = vld [vmem:[%s14 + $0x2c] sm:$0xf]
        %v8415 = vld [vmem:[%s14 + $0x30] sm:$0xf]
        %v8416 = vld [vmem:[%s14 + $0x34] sm:$0xf]
        %v8417 = vld [vmem:[%s14 + $0x38] sm:$0xf]
        %v8418 = vld [vmem:[%s14 + $0x3c] sm:$0xf]
        %v8419 = vld [vmem:[%s14 + $0x40] sm:$0xf]
        %v8420 = vld [vmem:[%s14 + $0x44] sm:$0xf]
        %v8421 = vld [vmem:[%s14 + $0x48] sm:$0xf]
        %v8422 = vld [vmem:[%s14 + $0x4c] sm:$0xf]
        %v8423 = vld [vmem:[%s14 + $0x50] sm:$0xf]
        %v8424 = vld [vmem:[%s14 + $0x54] sm:$0xf]
        %v8425 = vld [vmem:[%s14 + $0x58] sm:$0xf]
        %v8426 = vld [vmem:[%s14 + $0x5c] sm:$0xf]
        %v8427 = vld [vmem:[%s14 + $0x60] sm:$0xf]
        %v8428 = vld [vmem:[%s14 + $0x64] sm:$0xf]
        %v8429 = vld [vmem:[%s14 + $0x68] sm:$0xf]
        %v8430 = vld [vmem:[%s14 + $0x6c] sm:$0xf]
        %v8431 = vld [vmem:[%s14 + $0x70] sm:$0xf]
        %v8432 = vld [vmem:[%s14 + $0x74] sm:$0xf]
        %v8433 = vld [vmem:[%s14 + $0x78] sm:$0xf]
        %v8434 = vld [vmem:[%s14 + $0x7c] sm:$0xf]
        %v8435 = vld [vmem:[%s14 + $0x80] sm:$0xf]
        %v8436 = vld [vmem:[%s14 + $0x84] sm:$0xf]
        %v8437 = vld [vmem:[%s14 + $0x88] sm:$0xf]
        %v8438 = vld [vmem:[%s14 + $0x8c] sm:$0xf]
        %v8439 = vld [vmem:[%s14 + $0x90] sm:$0xf]
        %v8440 = vld [vmem:[%s14 + $0x94] sm:$0xf]
        %v8441 = vld [vmem:[%s14 + $0x98] sm:$0xf]
        %v8442 = vld [vmem:[%s14 + $0x9c] sm:$0xf]
        %v8443 = vld [vmem:[%s14 + $0xa0] sm:$0xf]
        %v8444 = vld [vmem:[%s14 + $0xa4] sm:$0xf]
        %v8445 = vld [vmem:[%s14 + $0xa8] sm:$0xf]
        %v8446 = vld [vmem:[%s14 + $0xac] sm:$0xf]
        %v8447 = vld [vmem:[%s14 + $0xb0] sm:$0xf]
        %v8448 = vld [vmem:[%s14 + $0xb4] sm:$0xf]
        %v8449 = vld [vmem:[%s14 + $0xb8] sm:$0xf]
        %v8450 = vld [vmem:[%s14 + $0xbc] sm:$0xf]
        %v8451 = vld [vmem:[#allocation13] sm:$0x1]
        %v8453 = vlaneseq
        %v8454 = vshrl.u32 %v8453, 7
        %v8455 = vsub.s32 0, %v8454
        %v8456 = vrot.slane %v8451, %v8455
        %v8506 = vunpack.c.l.b16 %v8403
        %v8507 = vunpack.c.l.b16 %v8404
        %v8508 = vunpack.c.l.b16 %v8405
        %v8509 = vunpack.c.l.b16 %v8406
        %v8510 = vunpack.c.l.b16 %v8407
        %v8511 = vunpack.c.l.b16 %v8408
        %v8512 = vunpack.c.l.b16 %v8409
        %v8513 = vunpack.c.l.b16 %v8410
        %v8514 = vunpack.c.l.b16 %v8411
        %v8515 = vunpack.c.l.b16 %v8412
        %v8516 = vunpack.c.l.b16 %v8413
        %v8517 = vunpack.c.l.b16 %v8414
        %v8518 = vunpack.c.l.b16 %v8415
        %v8519 = vunpack.c.l.b16 %v8416
        %v8520 = vunpack.c.l.b16 %v8417
        %v8521 = vunpack.c.l.b16 %v8418
        %v8522 = vunpack.c.l.b16 %v8419
        %v8523 = vunpack.c.l.b16 %v8420
        %v8524 = vunpack.c.l.b16 %v8421
        %v8525 = vunpack.c.l.b16 %v8422
        %v8526 = vunpack.c.l.b16 %v8423
        %v8527 = vunpack.c.l.b16 %v8424
        %v8528 = vunpack.c.l.b16 %v8425
        %v8529 = vunpack.c.l.b16 %v8426
        %v8530 = vunpack.c.l.b16 %v8427
        %v8531 = vunpack.c.l.b16 %v8428
        %v8532 = vunpack.c.l.b16 %v8429
        %v8533 = vunpack.c.l.b16 %v8430
        %v8534 = vunpack.c.l.b16 %v8431
        %v8535 = vunpack.c.l.b16 %v8432
        %v8536 = vunpack.c.l.b16 %v8433
        %v8537 = vunpack.c.l.b16 %v8434
        %v8538 = vunpack.c.l.b16 %v8435
        %v8539 = vunpack.c.l.b16 %v8436
        %v8540 = vunpack.c.l.b16 %v8437
        %v8541 = vunpack.c.l.b16 %v8438
        %v8542 = vunpack.c.l.b16 %v8439
        %v8543 = vunpack.c.l.b16 %v8440
        %v8544 = vunpack.c.l.b16 %v8441
        %v8545 = vunpack.c.l.b16 %v8442
        %v8546 = vunpack.c.l.b16 %v8443
        %v8547 = vunpack.c.l.b16 %v8444
        %v8548 = vunpack.c.l.b16 %v8445
        %v8549 = vunpack.c.l.b16 %v8446
        %v8550 = vunpack.c.l.b16 %v8447
        %v8551 = vunpack.c.l.b16 %v8448
        %v8552 = vunpack.c.l.b16 %v8449
        %v8553 = vunpack.c.l.b16 %v8450
        %v8554 = vpack.c.b16 %v8507, %v8506
        %v8555 = vpack.c.b16 %v8509, %v8508
        %v8556 = vpack.c.b16 %v8511, %v8510
        %v8557 = vpack.c.b16 %v8513, %v8512
        %v8558 = vpack.c.b16 %v8515, %v8514
        %v8559 = vpack.c.b16 %v8517, %v8516
        %v8560 = vpack.c.b16 %v8519, %v8518
        %v8561 = vpack.c.b16 %v8521, %v8520
        %v8562 = vpack.c.b16 %v8523, %v8522
        %v8563 = vpack.c.b16 %v8525, %v8524
        %v8564 = vpack.c.b16 %v8527, %v8526
        %v8565 = vpack.c.b16 %v8529, %v8528
        %v8566 = vpack.c.b16 %v8531, %v8530
        %v8567 = vpack.c.b16 %v8533, %v8532
        %v8568 = vpack.c.b16 %v8535, %v8534
        %v8569 = vpack.c.b16 %v8537, %v8536
        %v8570 = vpack.c.b16 %v8539, %v8538
        %v8571 = vpack.c.b16 %v8541, %v8540
        %v8572 = vpack.c.b16 %v8543, %v8542
        %v8573 = vpack.c.b16 %v8545, %v8544
        %v8574 = vpack.c.b16 %v8547, %v8546
        %v8575 = vpack.c.b16 %v8549, %v8548
        %v8576 = vpack.c.b16 %v8551, %v8550
        %v8577 = vpack.c.b16 %v8553, %v8552
        %8602 = vmatprep.subr.bf16.mxu0 0
        %8603 = vmatpush1.bf16.msra.mxu0 %v8554
        %8604 = vmatprep.subr.bf16.mxu0 0
        %8605 = vmatpush1.bf16.msra.mxu0 %v8555
        %8606 = vmatprep.subr.bf16.mxu0 0
        %8607 = vmatpush1.bf16.msra.mxu0 %v8556
        %8608 = vmatprep.subr.bf16.mxu0 0
        %8609 = vmatpush1.bf16.msra.mxu0 %v8557
        %8610 = vmatprep.subr.bf16.mxu0 0
        %8611 = vmatpush1.bf16.msra.mxu0 %v8558
        %8612 = vmatprep.subr.bf16.mxu0 0
        %8613 = vmatpush1.bf16.msra.mxu0 %v8559
        %8614 = vmatprep.subr.bf16.mxu0 0
        %8615 = vmatpush1.bf16.msra.mxu0 %v8560
        %8616 = vmatprep.subr.bf16.mxu0 0
        %8617 = vmatpush1.bf16.msra.mxu0 %v8561
        %8618 = vmatprep.subr.bf16.mxu0 0
        %8619 = vmatpush1.bf16.msra.mxu0 %v8562
        %8620 = vmatprep.subr.bf16.mxu0 0
        %8621 = vmatpush1.bf16.msra.mxu0 %v8563
        %8622 = vmatprep.subr.bf16.mxu0 0
        %8623 = vmatpush1.bf16.msra.mxu0 %v8564
        %8624 = vmatprep.subr.bf16.mxu0 0
        %8625 = vmatpush1.bf16.msra.mxu0 %v8565
        %8626 = vmatprep.subr.bf16.mxu0 0
        %8627 = vmatpush1.bf16.msra.mxu0 %v8566
        %8628 = vmatprep.subr.bf16.mxu0 0
        %8629 = vmatpush1.bf16.msra.mxu0 %v8567
        %8630 = vmatprep.subr.bf16.mxu0 0
        %8631 = vmatpush1.bf16.msra.mxu0 %v8568
        %8632 = vmatprep.subr.bf16.mxu0 0
        %8633 = vmatpush1.bf16.msra.mxu0 %v8569
        %8634 = vmatprep.mubr.bf16.mxu0 %v8356
        %8635 = vmatmul.mubr.bf16.gmra.mrb[0].mxu0 %v8355
        %v8636 = vpop.f32.mrb[0].mxu0
        %v8637 = vadd.f32 %v8456, %v8636
        %v8638 = vpop.f32.mrb[0].mxu0
        %v8639 = vpop.f32.mrb[0].mxu0
        %v8640 = vadd.f32 %v8456, %v8639
        %v8641 = vpop.f32.mrb[0].mxu0
        %8642 = vmatprep.mubr.bf16.mxu0 %v8359
        %8643 = vmatmul.mubr.bf16.gmra.mrb[0].mxu0 %v8358
        %v8644 = vpop.f32.mrb[0].mxu0
        %v8645 = vadd.f32 %v8456, %v8644
        %v8646 = vpop.f32.mrb[0].mxu0
        %v8647 = vpop.f32.mrb[0].mxu0
        %v8648 = vadd.f32 %v8456, %v8647
        %v8649 = vpop.f32.mrb[0].mxu0
        %8650 = vmatprep.mubr.bf16.mxu0 %v8362
        %8651 = vmatmul.mubr.bf16.gmra.mrb[0].mxu0 %v8361
        %v8652 = vpop.f32.mrb[0].mxu0
        %v8653 = vadd.f32 %v8456, %v8652
        %v8654 = vpop.f32.mrb[0].mxu0
        %v8655 = vpop.f32.mrb[0].mxu0
        %v8656 = vadd.f32 %v8456, %v8655
        %v8657 = vpop.f32.mrb[0].mxu0
        %8658 = vmatprep.mubr.bf16.mxu0 %v8365
        %8659 = vmatmul.mubr.bf16.gmra.mrb[0].mxu0 %v8364
        %v8660 = vpop.f32.mrb[0].mxu0
        %v8661 = vadd.f32 %v8456, %v8660
        %v8662 = vpop.f32.mrb[0].mxu0
        %v8663 = vpop.f32.mrb[0].mxu0
        %v8664 = vadd.f32 %v8456, %v8663
        %v8665 = vpop.f32.mrb[0].mxu0
        %8666 = vmatprep.mubr.bf16.mxu0 %v8368
        %8667 = vmatmul.mubr.bf16.gmra.mrb[0].mxu0 %v8367
        %v8668 = vpop.f32.mrb[0].mxu0
        %v8669 = vadd.f32 %v8456, %v8668
        %v8670 = vpop.f32.mrb[0].mxu0
        %v8671 = vpop.f32.mrb[0].mxu0
        %v8672 = vadd.f32 %v8456, %v8671
        %v8673 = vpop.f32.mrb[0].mxu0
        %8674 = vmatprep.mubr.bf16.mxu0 %v8371
        %8675 = vmatmul.mubr.bf16.gmra.mrb[0].mxu0 %v8370
        %v8676 = vpop.f32.mrb[0].mxu0
        %v8677 = vadd.f32 %v8456, %v8676
        %v8678 = vpop.f32.mrb[0].mxu0
        %v8679 = vpop.f32.mrb[0].mxu0
        %v8680 = vadd.f32 %v8456, %v8679
        %v8681 = vpop.f32.mrb[0].mxu0
        %8682 = vmatprep.mubr.bf16.mxu0 %v8374
        %8683 = vmatmul.mubr.bf16.gmra.mrb[0].mxu0 %v8373
        %v8684 = vpop.f32.mrb[0].mxu0
        %v8685 = vadd.f32 %v8456, %v8684
        %v8686 = vpop.f32.mrb[0].mxu0
        %v8687 = vpop.f32.mrb[0].mxu0
        %v8688 = vadd.f32 %v8456, %v8687
        %v8689 = vpop.f32.mrb[0].mxu0
        %8690 = vmatprep.mubr.bf16.mxu0 %v8377
        %8691 = vmatmul.mubr.bf16.gmra.mrb[0].mxu0 %v8376
        %v8692 = vpop.f32.mrb[0].mxu0
        %v8693 = vadd.f32 %v8456, %v8692
        %v8694 = vpop.f32.mrb[0].mxu0
        %v8695 = vpop.f32.mrb[0].mxu0
        %v8696 = vadd.f32 %v8456, %v8695
        %v8697 = vpop.f32.mrb[0].mxu0
        %8698 = vmatprep.mubr.bf16.mxu0 %v8380
        %8699 = vmatmul.mubr.bf16.gmra.mrb[0].mxu0 %v8379
        %v8700 = vpop.f32.mrb[0].mxu0
        %v8701 = vadd.f32 %v8456, %v8700
        %v8702 = vpop.f32.mrb[0].mxu0
        %v8703 = vpop.f32.mrb[0].mxu0
        %v8704 = vadd.f32 %v8456, %v8703
        %v8705 = vpop.f32.mrb[0].mxu0
        %8706 = vmatprep.mubr.bf16.mxu0 %v8383
        %8707 = vmatmul.mubr.bf16.gmra.mrb[0].mxu0 %v8382
        %v8708 = vpop.f32.mrb[0].mxu0
        %v8709 = vadd.f32 %v8456, %v8708
        %v8710 = vpop.f32.mrb[0].mxu0
        %v8711 = vpop.f32.mrb[0].mxu0
        %v8712 = vadd.f32 %v8456, %v8711
        %v8713 = vpop.f32.mrb[0].mxu0
        %8714 = vmatprep.mubr.bf16.mxu0 %v8386
        %8715 = vmatmul.mubr.bf16.gmra.mrb[0].mxu0 %v8385
        %v8716 = vpop.f32.mrb[0].mxu0
        %v8717 = vadd.f32 %v8456, %v8716
        %v8718 = vpop.f32.mrb[0].mxu0
        %v8719 = vpop.f32.mrb[0].mxu0
        %v8720 = vadd.f32 %v8456, %v8719
        %v8721 = vpop.f32.mrb[0].mxu0
        %8722 = vmatprep.mubr.bf16.mxu0 %v8389
        %8723 = vmatmul.mubr.bf16.gmra.mrb[0].mxu0 %v8388
        %v8724 = vpop.f32.mrb[0].mxu0
        %v8725 = vadd.f32 %v8456, %v8724
        %v8726 = vpop.f32.mrb[0].mxu0
        %v8727 = vpop.f32.mrb[0].mxu0
        %v8728 = vadd.f32 %v8456, %v8727
        %v8729 = vpop.f32.mrb[0].mxu0
        %8730 = vmatprep.mubr.bf16.mxu0 %v8392
        %8731 = vmatmul.mubr.bf16.gmra.mrb[0].mxu0 %v8391
        %v8732 = vpop.f32.mrb[0].mxu0
        %v8733 = vadd.f32 %v8456, %v8732
        %v8734 = vpop.f32.mrb[0].mxu0
        %v8735 = vpop.f32.mrb[0].mxu0
        %v8736 = vadd.f32 %v8456, %v8735
        %v8737 = vpop.f32.mrb[0].mxu0
        %8738 = vmatprep.mubr.bf16.mxu0 %v8395
        %8739 = vmatmul.mubr.bf16.gmra.mrb[0].mxu0 %v8394
        %v8740 = vpop.f32.mrb[0].mxu0
        %v8741 = vadd.f32 %v8456, %v8740
        %v8742 = vpop.f32.mrb[0].mxu0
        %v8743 = vpop.f32.mrb[0].mxu0
        %v8744 = vadd.f32 %v8456, %v8743
        %v8745 = vpop.f32.mrb[0].mxu0
        %8746 = vmatprep.mubr.bf16.mxu0 %v8398
        %8747 = vmatmul.mubr.bf16.gmra.mrb[0].mxu0 %v8397
        %v8748 = vpop.f32.mrb[0].mxu0
        %v8749 = vadd.f32 %v8456, %v8748
        %v8750 = vpop.f32.mrb[0].mxu0
        %v8751 = vpop.f32.mrb[0].mxu0
        %v8752 = vadd.f32 %v8456, %v8751
        %v8753 = vpop.f32.mrb[0].mxu0
        %8754 = vmatprep.mubr.bf16.mxu0 %v8401
        %8755 = vmatmul.mubr.bf16.gmra.mrb[0].mxu0 %v8400
        %v8756 = vpop.f32.mrb[0].mxu0
        %v8757 = vadd.f32 %v8456, %v8756
        %v8758 = vpop.f32.mrb[0].mxu0
        %v8759 = vpop.f32.mrb[0].mxu0
        %v8760 = vadd.f32 %v8456, %v8759
        %v8761 = vpop.f32.mrb[0].mxu0
        %8762 = vdwg.mxu0
        %8763 = vmatprep.subr.bf16.mxu0 0
        %8764 = vmatpush1.bf16.msra.mxu0 %v8570
        %8765 = vmatprep.subr.bf16.mxu0 0
        %8766 = vmatpush1.bf16.msra.mxu0 %v8571
        %8767 = vmatprep.subr.bf16.mxu0 0
        %8768 = vmatpush1.bf16.msra.mxu0 %v8572
        %8769 = vmatprep.subr.bf16.mxu0 0
        %8770 = vmatpush1.bf16.msra.mxu0 %v8573
        %8771 = vmatprep.subr.bf16.mxu0 0
        %8772 = vmatpush1.bf16.msra.mxu0 %v8574
        %8773 = vmatprep.subr.bf16.mxu0 0
        %8774 = vmatpush1.bf16.msra.mxu0 %v8575
        %8775 = vmatprep.subr.bf16.mxu0 0
        %8776 = vmatpush1.bf16.msra.mxu0 %v8576
        %8777 = vmatprep.subr.bf16.mxu0 0
        %8778 = vmatpush1.bf16.msra.mxu0 %v8577
        %8779 = vmatprep.subr.bf16.mxu0 0
        %8780 = vmatpush1.bf16.msra.mxu0 0
        %8781 = vmatprep.subr.bf16.mxu0 0
        %8782 = vmatpush1.bf16.msra.mxu0 0
        %8783 = vmatprep.subr.bf16.mxu0 0
        %8784 = vmatpush1.bf16.msra.mxu0 0
        %8785 = vmatprep.subr.bf16.mxu0 0
        %8786 = vmatpush1.bf16.msra.mxu0 0
        %8787 = vmatprep.subr.bf16.mxu0 0
        %8788 = vmatpush1.bf16.msra.mxu0 0
        %8789 = vmatprep.subr.bf16.mxu0 0
        %8790 = vmatpush1.bf16.msra.mxu0 0
        %8791 = vmatprep.subr.bf16.mxu0 0
        %8792 = vmatpush1.bf16.msra.mxu0 0
        %8793 = vmatprep.subr.bf16.mxu0 0
        %8794 = vmatpush1.bf16.msra.mxu0 0
        %8795 = vmatprep.mubr.bf16.mxu0 0
        %8796 = vmatmul.mubr.bf16.gmra.mrb[0].mxu0 %v8357
        %v8797 = vpop.f32.mrb[0].mxu0
        %v8798 = vadd.f32 %v8637, %v8797
        %v8799 = vpop.f32.mrb[0].mxu0
        %v8800 = vpop.f32.mrb[0].mxu0
        %v8801 = vadd.f32 %v8640, %v8800
        %v8802 = vpop.f32.mrb[0].mxu0
        %8803 = vmatprep.mubr.bf16.mxu0 0
        %8804 = vmatmul.mubr.bf16.gmra.mrb[0].mxu0 %v8360
        %v8805 = vpop.f32.mrb[0].mxu0
        %v8806 = vadd.f32 %v8645, %v8805
        %v8807 = vpop.f32.mrb[0].mxu0
        %v8808 = vpop.f32.mrb[0].mxu0
        %v8809 = vadd.f32 %v8648, %v8808
        %v8810 = vpop.f32.mrb[0].mxu0
        %8811 = vmatprep.mubr.bf16.mxu0 0
        %8812 = vmatmul.mubr.bf16.gmra.mrb[0].mxu0 %v8363
        %v8813 = vpop.f32.mrb[0].mxu0
        %v8814 = vadd.f32 %v8653, %v8813
        %v8815 = vpop.f32.mrb[0].mxu0
        %v8816 = vpop.f32.mrb[0].mxu0
        %v8817 = vadd.f32 %v8656, %v8816
        %v8818 = vpop.f32.mrb[0].mxu0
        %8819 = vmatprep.mubr.bf16.mxu0 0
        %8820 = vmatmul.mubr.bf16.gmra.mrb[0].mxu0 %v8366
        %v8821 = vpop.f32.mrb[0].mxu0
        %v8822 = vadd.f32 %v8661, %v8821
        %v8823 = vpop.f32.mrb[0].mxu0
        %v8824 = vpop.f32.mrb[0].mxu0
        %v8825 = vadd.f32 %v8664, %v8824
        %v8826 = vpop.f32.mrb[0].mxu0
        %8827 = vmatprep.mubr.bf16.mxu0 0
        %8828 = vmatmul.mubr.bf16.gmra.mrb[0].mxu0 %v8369
        %v8829 = vpop.f32.mrb[0].mxu0
        %v8830 = vadd.f32 %v8669, %v8829
        %v8831 = vpop.f32.mrb[0].mxu0
        %v8832 = vpop.f32.mrb[0].mxu0
        %v8833 = vadd.f32 %v8672, %v8832
        %v8834 = vpop.f32.mrb[0].mxu0
        %8835 = vmatprep.mubr.bf16.mxu0 0
        %8836 = vmatmul.mubr.bf16.gmra.mrb[0].mxu0 %v8372
        %v8837 = vpop.f32.mrb[0].mxu0
        %v8838 = vadd.f32 %v8677, %v8837
        %v8839 = vpop.f32.mrb[0].mxu0
        %v8840 = vpop.f32.mrb[0].mxu0
        %v8841 = vadd.f32 %v8680, %v8840
        %v8842 = vpop.f32.mrb[0].mxu0
        %8843 = vmatprep.mubr.bf16.mxu0 0
        %8844 = vmatmul.mubr.bf16.gmra.mrb[0].mxu0 %v8375
        %v8845 = vpop.f32.mrb[0].mxu0
        %v8846 = vadd.f32 %v8685, %v8845
        %v8847 = vpop.f32.mrb[0].mxu0
        %v8848 = vpop.f32.mrb[0].mxu0
        %v8849 = vadd.f32 %v8688, %v8848
        %v8850 = vpop.f32.mrb[0].mxu0
        %8851 = vmatprep.mubr.bf16.mxu0 0
        %8852 = vmatmul.mubr.bf16.gmra.mrb[0].mxu0 %v8378
        %v8853 = vpop.f32.mrb[0].mxu0
        %v8854 = vadd.f32 %v8693, %v8853
        %v8855 = vpop.f32.mrb[0].mxu0
        %v8856 = vpop.f32.mrb[0].mxu0
        %v8857 = vadd.f32 %v8696, %v8856
        %v8858 = vpop.f32.mrb[0].mxu0
        %8859 = vmatprep.mubr.bf16.mxu0 0
        %8860 = vmatmul.mubr.bf16.gmra.mrb[0].mxu0 %v8381
        %v8861 = vpop.f32.mrb[0].mxu0
        %v8862 = vadd.f32 %v8701, %v8861
        %v8863 = vpop.f32.mrb[0].mxu0
        %v8864 = vpop.f32.mrb[0].mxu0
        %v8865 = vadd.f32 %v8704, %v8864
        %v8866 = vpop.f32.mrb[0].mxu0
        %8867 = vmatprep.mubr.bf16.mxu0 0
        %8868 = vmatmul.mubr.bf16.gmra.mrb[0].mxu0 %v8384
        %v8869 = vpop.f32.mrb[0].mxu0
        %v8870 = vadd.f32 %v8709, %v8869
        %v8871 = vpop.f32.mrb[0].mxu0
        %v8872 = vpop.f32.mrb[0].mxu0
        %v8873 = vadd.f32 %v8712, %v8872
        %v8874 = vpop.f32.mrb[0].mxu0
        %8875 = vmatprep.mubr.bf16.mxu0 0
        %8876 = vmatmul.mubr.bf16.gmra.mrb[0].mxu0 %v8387
        %v8877 = vpop.f32.mrb[0].mxu0
        %v8878 = vadd.f32 %v8717, %v8877
        %v8879 = vpop.f32.mrb[0].mxu0
        %v8880 = vpop.f32.mrb[0].mxu0
        %v8881 = vadd.f32 %v8720, %v8880
        %v8882 = vpop.f32.mrb[0].mxu0
        %8883 = vmatprep.mubr.bf16.mxu0 0
        %8884 = vmatmul.mubr.bf16.gmra.mrb[0].mxu0 %v8390
        %v8885 = vpop.f32.mrb[0].mxu0
        %v8886 = vadd.f32 %v8725, %v8885
        %v8887 = vpop.f32.mrb[0].mxu0
        %v8888 = vpop.f32.mrb[0].mxu0
        %v8889 = vadd.f32 %v8728, %v8888
        %v8890 = vpop.f32.mrb[0].mxu0
        %8891 = vmatprep.mubr.bf16.mxu0 0
        %8892 = vmatmul.mubr.bf16.gmra.mrb[0].mxu0 %v8393
        %v8893 = vpop.f32.mrb[0].mxu0
        %v8894 = vadd.f32 %v8733, %v8893
        %v8895 = vpop.f32.mrb[0].mxu0
        %v8896 = vpop.f32.mrb[0].mxu0
        %v8897 = vadd.f32 %v8736, %v8896
        %v8898 = vpop.f32.mrb[0].mxu0
        %8899 = vmatprep.mubr.bf16.mxu0 0
        %8900 = vmatmul.mubr.bf16.gmra.mrb[0].mxu0 %v8396
        %v8901 = vpop.f32.mrb[0].mxu0
        %v8902 = vadd.f32 %v8741, %v8901
        %v8903 = vpop.f32.mrb[0].mxu0
        %v8904 = vpop.f32.mrb[0].mxu0
        %v8905 = vadd.f32 %v8744, %v8904
        %v8906 = vpop.f32.mrb[0].mxu0
        %8907 = vmatprep.mubr.bf16.mxu0 0
        %8908 = vmatmul.mubr.bf16.gmra.mrb[0].mxu0 %v8399
        %v8909 = vpop.f32.mrb[0].mxu0
        %v8910 = vadd.f32 %v8749, %v8909
        %v8911 = vpop.f32.mrb[0].mxu0
        %v8912 = vpop.f32.mrb[0].mxu0
        %v8913 = vadd.f32 %v8752, %v8912
        %v8914 = vpop.f32.mrb[0].mxu0
        %8915 = vmatprep.mubr.bf16.mxu0 0
        %8916 = vmatmul.mubr.bf16.gmra.mrb[0].mxu0 %v8402
        %v8917 = vpop.f32.mrb[0].mxu0
        %v8918 = vadd.f32 %v8757, %v8917
        %v8919 = vpop.f32.mrb[0].mxu0
        %v8920 = vpop.f32.mrb[0].mxu0
        %v8921 = vadd.f32 %v8760, %v8920
        %v8922 = vpop.f32.mrb[0].mxu0
        %8923 = vdwg.mxu0
        %v8924 = vadd.f32 %v8798, %v8037
        %v8925 = vadd.f32 %v8801, %v8040
        %v8926 = vadd.f32 %v8806, %v8045
        %v8927 = vadd.f32 %v8809, %v8048
        %v8928 = vadd.f32 %v8814, %v8053
        %v8929 = vadd.f32 %v8817, %v8056
        %v8930 = vadd.f32 %v8822, %v8061
        %v8931 = vadd.f32 %v8825, %v8064
        %v8932 = vadd.f32 %v8830, %v8069
        %v8933 = vadd.f32 %v8833, %v8072
        %v8934 = vadd.f32 %v8838, %v8077
        %v8935 = vadd.f32 %v8841, %v8080
        %v8936 = vadd.f32 %v8846, %v8085
        %v8937 = vadd.f32 %v8849, %v8088
        %v8938 = vadd.f32 %v8854, %v8093
        %v8939 = vadd.f32 %v8857, %v8096
        %v8940 = vadd.f32 %v8862, %v8101
        %v8941 = vadd.f32 %v8865, %v8104
        %v8942 = vadd.f32 %v8870, %v8109
        %v8943 = vadd.f32 %v8873, %v8112
        %v8944 = vadd.f32 %v8878, %v8117
        %v8945 = vadd.f32 %v8881, %v8120
        %v8946 = vadd.f32 %v8886, %v8125
        %v8947 = vadd.f32 %v8889, %v8128
        %v8948 = vadd.f32 %v8894, %v8133
        %v8949 = vadd.f32 %v8897, %v8136
        %v8950 = vadd.f32 %v8902, %v8141
        %v8951 = vadd.f32 %v8905, %v8144
        %v8952 = vadd.f32 %v8910, %v8149
        %v8953 = vadd.f32 %v8913, %v8152
        %v8954 = vadd.f32 %v8918, %v8157
        %v8955 = vadd.f32 %v8921, %v8160
        %v8956 = vmul.f32 %v8924, 0.2
        %v8957 = vmul.f32 %v8925, 0.2
        %v8958 = vmul.f32 %v8926, 0.2
        %v8959 = vmul.f32 %v8927, 0.2
        %v8960 = vmul.f32 %v8928, 0.2
        %v8961 = vmul.f32 %v8929, 0.2
        %v8962 = vmul.f32 %v8930, 0.2
        %v8963 = vmul.f32 %v8931, 0.2
        %v8964 = vmul.f32 %v8932, 0.2
        %v8965 = vmul.f32 %v8933, 0.2
        %v8966 = vmul.f32 %v8934, 0.2
        %v8967 = vmul.f32 %v8935, 0.2
        %v8968 = vmul.f32 %v8936, 0.2
        %v8969 = vmul.f32 %v8937, 0.2
        %v8970 = vmul.f32 %v8938, 0.2
        %v8971 = vmul.f32 %v8939, 0.2
        %v8972 = vmul.f32 %v8940, 0.2
        %v8973 = vmul.f32 %v8941, 0.2
        %v8974 = vmul.f32 %v8942, 0.2
        %v8975 = vmul.f32 %v8943, 0.2
        %v8976 = vmul.f32 %v8944, 0.2
        %v8977 = vmul.f32 %v8945, 0.2
        %v8978 = vmul.f32 %v8946, 0.2
        %v8979 = vmul.f32 %v8947, 0.2
        %v8980 = vmul.f32 %v8948, 0.2
        %v8981 = vmul.f32 %v8949, 0.2
        %v8982 = vmul.f32 %v8950, 0.2
        %v8983 = vmul.f32 %v8951, 0.2
        %v8984 = vmul.f32 %v8952, 0.2
        %v8985 = vmul.f32 %v8953, 0.2
        %v8986 = vmul.f32 %v8954, 0.2
        %v8987 = vmul.f32 %v8955, 0.2
        %v8988 = vmax.f32 %v8924, %v8956
        %v8989 = vmax.f32 %v8925, %v8957
        %v8990 = vmax.f32 %v8926, %v8958
        %v8991 = vmax.f32 %v8927, %v8959
        %v8992 = vmax.f32 %v8928, %v8960
        %v8993 = vmax.f32 %v8929, %v8961
        %v8994 = vmax.f32 %v8930, %v8962
        %v8995 = vmax.f32 %v8931, %v8963
        %v8996 = vmax.f32 %v8932, %v8964
        %v8997 = vmax.f32 %v8933, %v8965
        %v8998 = vmax.f32 %v8934, %v8966
        %v8999 = vmax.f32 %v8935, %v8967
        %v9000 = vmax.f32 %v8936, %v8968
        %v9001 = vmax.f32 %v8937, %v8969
        %v9002 = vmax.f32 %v8938, %v8970
        %v9003 = vmax.f32 %v8939, %v8971
        %v9004 = vmax.f32 %v8940, %v8972
        %v9005 = vmax.f32 %v8941, %v8973
        %v9006 = vmax.f32 %v8942, %v8974
        %v9007 = vmax.f32 %v8943, %v8975
        %v9008 = vmax.f32 %v8944, %v8976
        %v9009 = vmax.f32 %v8945, %v8977
        %v9010 = vmax.f32 %v8946, %v8978
        %v9011 = vmax.f32 %v8947, %v8979
        %v9012 = vmax.f32 %v8948, %v8980
        %v9013 = vmax.f32 %v8949, %v8981
        %v9014 = vmax.f32 %v8950, %v8982
        %v9015 = vmax.f32 %v8951, %v8983
        %v9016 = vmax.f32 %v8952, %v8984
        %v9017 = vmax.f32 %v8953, %v8985
        %v9018 = vmax.f32 %v8954, %v8986
        %v9019 = vmax.f32 %v8955, %v8987
        %v9020 = vrot.slane %v8988, 5
        %v9021 = vrot.slane %v8989, 5
        %v9022 = vrot.slane %v8990, 5
        %v9023 = vrot.slane %v8991, 5
        %v9024 = vrot.slane %v8992, 5
        %v9025 = vrot.slane %v8993, 5
        %v9026 = vrot.slane %v8994, 5
        %v9027 = vrot.slane %v8995, 5
        %v9028 = vrot.slane %v8996, 5
        %v9029 = vrot.slane %v8997, 5
        %v9030 = vrot.slane %v8998, 5
        %v9031 = vrot.slane %v8999, 5
        %v9032 = vrot.slane %v9000, 5
        %v9033 = vrot.slane %v9001, 5
        %v9034 = vrot.slane %v9002, 5
        %v9035 = vrot.slane %v9003, 5
        %v9036 = vrot.slane %v9004, 5
        %v9037 = vrot.slane %v9005, 5
        %v9038 = vrot.slane %v9006, 5
        %v9039 = vrot.slane %v9007, 5
        %v9040 = vrot.slane %v9008, 5
        %v9041 = vrot.slane %v9009, 5
        %v9042 = vrot.slane %v9010, 5
        %v9043 = vrot.slane %v9011, 5
        %v9044 = vrot.slane %v9012, 5
        %v9045 = vrot.slane %v9013, 5
        %v9046 = vrot.slane %v9014, 5
        %v9047 = vrot.slane %v9015, 5
        %v9048 = vrot.slane %v9016, 5
        %v9049 = vrot.slane %v9017, 5
        %v9050 = vrot.slane %v9018, 5
        %v9051 = vrot.slane %v9019, 5
        %v9052 = vsel %vm1238, %v9050, %v9051
        %v9053 = vsel %vm1238, %v9049, %v9050
        %v9054 = vsel %vm1238, %v9048, %v9049
        %v9055 = vsel %vm1238, %v9047, %v9048
        %v9056 = vsel %vm1238, %v9046, %v9047
        %v9057 = vsel %vm1238, %v9045, %v9046
        %v9058 = vsel %vm1238, %v9044, %v9045
        %v9059 = vsel %vm1238, %v9043, %v9044
        %v9060 = vsel %vm1238, %v9042, %v9043
        %v9061 = vsel %vm1238, %v9041, %v9042
        %v9062 = vsel %vm1238, %v9040, %v9041
        %v9063 = vsel %vm1238, %v9039, %v9040
        %v9064 = vsel %vm1238, %v9038, %v9039
        %v9065 = vsel %vm1238, %v9037, %v9038
        %v9066 = vsel %vm1238, %v9036, %v9037
        %v9067 = vsel %vm1238, %v9035, %v9036
        %v9068 = vsel %vm1238, %v9034, %v9035
        %v9069 = vsel %vm1238, %v9033, %v9034
        %v9070 = vsel %vm1238, %v9032, %v9033
        %v9071 = vsel %vm1238, %v9031, %v9032
        %v9072 = vsel %vm1238, %v9030, %v9031
        %v9073 = vsel %vm1238, %v9029, %v9030
        %v9074 = vsel %vm1238, %v9028, %v9029
        %v9075 = vsel %vm1238, %v9027, %v9028
        %v9076 = vsel %vm1238, %v9026, %v9027
        %v9077 = vsel %vm1238, %v9025, %v9026
        %v9078 = vsel %vm1238, %v9024, %v9025
        %v9079 = vsel %vm1238, %v9023, %v9024
        %v9080 = vsel %vm1238, %v9022, %v9023
        %v9081 = vsel %vm1238, %v9021, %v9022
        %v9082 = vsel %vm1238, %v9020, %v9021
        %v9083 = vsel %vm1238, %v9051, %v9020
        %v9084 = vmul.f32 %v9083, %v870
        %v9085 = vmul.f32 %v9082, %v871
        %v9086 = vmul.f32 %v9081, %v872
        %v9087 = vmul.f32 %v9080, %v873
        %v9088 = vmul.f32 %v9079, %v874
        %v9089 = vmul.f32 %v9078, %v875
        %v9090 = vmul.f32 %v9077, %v876
        %v9091 = vmul.f32 %v9076, %v877
        %v9092 = vmul.f32 %v9075, %v870
        %v9093 = vmul.f32 %v9074, %v871
        %v9094 = vmul.f32 %v9073, %v872
        %v9095 = vmul.f32 %v9072, %v873
        %v9096 = vmul.f32 %v9071, %v874
        %v9097 = vmul.f32 %v9070, %v875
        %v9098 = vmul.f32 %v9069, %v876
        %v9099 = vmul.f32 %v9068, %v877
        %v9100 = vmul.f32 %v9067, %v870
        %v9101 = vmul.f32 %v9066, %v871
        %v9102 = vmul.f32 %v9065, %v872
        %v9103 = vmul.f32 %v9064, %v873
        %v9104 = vmul.f32 %v9063, %v874
        %v9105 = vmul.f32 %v9062, %v875
        %v9106 = vmul.f32 %v9061, %v876
        %v9107 = vmul.f32 %v9060, %v877
        %v9108 = vmul.f32 %v9059, %v870
        %v9109 = vmul.f32 %v9058, %v871
        %v9110 = vmul.f32 %v9057, %v872
        %v9111 = vmul.f32 %v9056, %v873
        %v9112 = vmul.f32 %v9055, %v874
        %v9113 = vmul.f32 %v9054, %v875
        %v9114 = vmul.f32 %v9053, %v876
        %v9115 = vmul.f32 %v9052, %v877
        %v9116 = vrot.slane %v8988, 3
        %v9117 = vrot.slane %v8989, 3
        %v9118 = vrot.slane %v8990, 3
        %v9119 = vrot.slane %v8991, 3
        %v9120 = vrot.slane %v8992, 3
        %v9121 = vrot.slane %v8993, 3
        %v9122 = vrot.slane %v8994, 3
        %v9123 = vrot.slane %v8995, 3
        %v9124 = vrot.slane %v8996, 3
        %v9125 = vrot.slane %v8997, 3
        %v9126 = vrot.slane %v8998, 3
        %v9127 = vrot.slane %v8999, 3
        %v9128 = vrot.slane %v9000, 3
        %v9129 = vrot.slane %v9001, 3
        %v9130 = vrot.slane %v9002, 3
        %v9131 = vrot.slane %v9003, 3
        %v9132 = vrot.slane %v9004, 3
        %v9133 = vrot.slane %v9005, 3
        %v9134 = vrot.slane %v9006, 3
        %v9135 = vrot.slane %v9007, 3
        %v9136 = vrot.slane %v9008, 3
        %v9137 = vrot.slane %v9009, 3
        %v9138 = vrot.slane %v9010, 3
        %v9139 = vrot.slane %v9011, 3
        %v9140 = vrot.slane %v9012, 3
        %v9141 = vrot.slane %v9013, 3
        %v9142 = vrot.slane %v9014, 3
        %v9143 = vrot.slane %v9015, 3
        %v9144 = vrot.slane %v9016, 3
        %v9145 = vrot.slane %v9017, 3
        %v9146 = vrot.slane %v9018, 3
        %v9147 = vrot.slane %v9019, 3
        %v9148 = vsel %vm3109, %v9146, %v9147
        %v9149 = vsel %vm3109, %v9145, %v9146
        %v9150 = vsel %vm3109, %v9144, %v9145
        %v9151 = vsel %vm3109, %v9143, %v9144
        %v9152 = vsel %vm3109, %v9142, %v9143
        %v9153 = vsel %vm3109, %v9141, %v9142
        %v9154 = vsel %vm3109, %v9140, %v9141
        %v9155 = vsel %vm3109, %v9139, %v9140
        %v9156 = vsel %vm3109, %v9138, %v9139
        %v9157 = vsel %vm3109, %v9137, %v9138
        %v9158 = vsel %vm3109, %v9136, %v9137
        %v9159 = vsel %vm3109, %v9135, %v9136
        %v9160 = vsel %vm3109, %v9134, %v9135
        %v9161 = vsel %vm3109, %v9133, %v9134
        %v9162 = vsel %vm3109, %v9132, %v9133
        %v9163 = vsel %vm3109, %v9131, %v9132
        %v9164 = vsel %vm3109, %v9130, %v9131
        %v9165 = vsel %vm3109, %v9129, %v9130
        %v9166 = vsel %vm3109, %v9128, %v9129
        %v9167 = vsel %vm3109, %v9127, %v9128
        %v9168 = vsel %vm3109, %v9126, %v9127
        %v9169 = vsel %vm3109, %v9125, %v9126
        %v9170 = vsel %vm3109, %v9124, %v9125
        %v9171 = vsel %vm3109, %v9123, %v9124
        %v9172 = vsel %vm3109, %v9122, %v9123
        %v9173 = vsel %vm3109, %v9121, %v9122
        %v9174 = vsel %vm3109, %v9120, %v9121
        %v9175 = vsel %vm3109, %v9119, %v9120
        %v9176 = vsel %vm3109, %v9118, %v9119
        %v9177 = vsel %vm3109, %v9117, %v9118
        %v9178 = vsel %vm3109, %v9116, %v9117
        %v9179 = vsel %vm3109, %v9147, %v9116
        %v9180 = vmul.f32 %v9178, %v1110
        %v9181 = vmul.f32 %v9177, %v1111
        %v9182 = vmul.f32 %v9176, %v1112
        %v9183 = vmul.f32 %v9175, %v1113
        %v9184 = vmul.f32 %v9174, %v1114
        %v9185 = vmul.f32 %v9173, %v1115
        %v9186 = vmul.f32 %v9172, %v1116
        %v9187 = vmul.f32 %v9171, %v1117
        %v9188 = vmul.f32 %v9170, %v1110
        %v9189 = vmul.f32 %v9169, %v1111
        %v9190 = vmul.f32 %v9168, %v1112
        %v9191 = vmul.f32 %v9167, %v1113
        %v9192 = vmul.f32 %v9166, %v1114
        %v9193 = vmul.f32 %v9165, %v1115
        %v9194 = vmul.f32 %v9164, %v1116
        %v9195 = vmul.f32 %v9163, %v1117
        %v9196 = vmul.f32 %v9162, %v1110
        %v9197 = vmul.f32 %v9161, %v1111
        %v9198 = vmul.f32 %v9160, %v1112
        %v9199 = vmul.f32 %v9159, %v1113
        %v9200 = vmul.f32 %v9158, %v1114
        %v9201 = vmul.f32 %v9157, %v1115
        %v9202 = vmul.f32 %v9156, %v1116
        %v9203 = vmul.f32 %v9155, %v1117
        %v9204 = vmul.f32 %v9154, %v1110
        %v9205 = vmul.f32 %v9153, %v1111
        %v9206 = vmul.f32 %v9152, %v1112
        %v9207 = vmul.f32 %v9151, %v1113
        %v9208 = vmul.f32 %v9150, %v1114
        %v9209 = vmul.f32 %v9149, %v1115
        %v9210 = vmul.f32 %v9148, %v1116
        %v9211 = vmul.f32 %v9179, %v1117
        %v9212 = vpack.c.bf16 %v9085, %v9084
        %v9213 = vpack.c.bf16 %v8989, %v8988
        %v9214 = vpack.c.bf16 %v9181, %v9180
        %v9215 = vpack.c.bf16 %v9087, %v9086
        %v9216 = vpack.c.bf16 %v8991, %v8990
        %v9217 = vpack.c.bf16 %v9183, %v9182
        %v9218 = vpack.c.bf16 %v9089, %v9088
        %v9219 = vpack.c.bf16 %v8993, %v8992
        %v9220 = vpack.c.bf16 %v9185, %v9184
        %v9221 = vpack.c.bf16 %v9091, %v9090
        %v9222 = vpack.c.bf16 %v8995, %v8994
        %v9223 = vpack.c.bf16 %v9187, %v9186
        %v9224 = vpack.c.bf16 %v9093, %v9092
        %v9225 = vpack.c.bf16 %v8997, %v8996
        %v9226 = vpack.c.bf16 %v9189, %v9188
        %v9227 = vpack.c.bf16 %v9095, %v9094
        %v9228 = vpack.c.bf16 %v8999, %v8998
        %v9229 = vpack.c.bf16 %v9191, %v9190
        %v9230 = vpack.c.bf16 %v9097, %v9096
        %v9231 = vpack.c.bf16 %v9001, %v9000
        %v9232 = vpack.c.bf16 %v9193, %v9192
        %v9233 = vpack.c.bf16 %v9099, %v9098
        %v9234 = vpack.c.bf16 %v9003, %v9002
        %v9235 = vpack.c.bf16 %v9195, %v9194
        %v9236 = vpack.c.bf16 %v9101, %v9100
        %v9237 = vpack.c.bf16 %v9005, %v9004
        %v9238 = vpack.c.bf16 %v9197, %v9196
        %v9239 = vpack.c.bf16 %v9103, %v9102
        %v9240 = vpack.c.bf16 %v9007, %v9006
        %v9241 = vpack.c.bf16 %v9199, %v9198
        %v9242 = vpack.c.bf16 %v9105, %v9104
        %v9243 = vpack.c.bf16 %v9009, %v9008
        %v9244 = vpack.c.bf16 %v9201, %v9200
        %v9245 = vpack.c.bf16 %v9107, %v9106
        %v9246 = vpack.c.bf16 %v9011, %v9010
        %v9247 = vpack.c.bf16 %v9203, %v9202
        %v9248 = vpack.c.bf16 %v9109, %v9108
        %v9249 = vpack.c.bf16 %v9013, %v9012
        %v9250 = vpack.c.bf16 %v9205, %v9204
        %v9251 = vpack.c.bf16 %v9111, %v9110
        %v9252 = vpack.c.bf16 %v9015, %v9014
        %v9253 = vpack.c.bf16 %v9207, %v9206
        %v9254 = vpack.c.bf16 %v9113, %v9112
        %v9255 = vpack.c.bf16 %v9017, %v9016
        %v9256 = vpack.c.bf16 %v9209, %v9208
        %v9257 = vpack.c.bf16 %v9115, %v9114
        %v9258 = vpack.c.bf16 %v9019, %v9018
        %v9259 = vpack.c.bf16 %v9211, %v9210
        %v9260 = vld [vmem:[%s16] sm:$0xf]
        %v9261 = vld [vmem:[%s16 + $0x4] sm:$0xf]
        %v9262 = vld [vmem:[%s16 + $0x8] sm:$0xf]
        %v9263 = vld [vmem:[%s16 + $0xc] sm:$0xf]
        %v9264 = vld [vmem:[%s16 + $0x10] sm:$0xf]
        %v9265 = vld [vmem:[%s16 + $0x14] sm:$0xf]
        %v9266 = vld [vmem:[%s16 + $0x18] sm:$0xf]
        %v9267 = vld [vmem:[%s16 + $0x1c] sm:$0xf]
        %v9268 = vld [vmem:[%s16 + $0x20] sm:$0xf]
        %v9269 = vld [vmem:[%s16 + $0x24] sm:$0xf]
        %v9270 = vld [vmem:[%s16 + $0x28] sm:$0xf]
        %v9271 = vld [vmem:[%s16 + $0x2c] sm:$0xf]
        %v9272 = vld [vmem:[%s16 + $0x30] sm:$0xf]
        %v9273 = vld [vmem:[%s16 + $0x34] sm:$0xf]
        %v9274 = vld [vmem:[%s16 + $0x38] sm:$0xf]
        %v9275 = vld [vmem:[%s16 + $0x3c] sm:$0xf]
        %v9276 = vld [vmem:[%s16 + $0x40] sm:$0xf]
        %v9277 = vld [vmem:[%s16 + $0x44] sm:$0xf]
        %v9278 = vld [vmem:[%s16 + $0x48] sm:$0xf]
        %v9279 = vld [vmem:[%s16 + $0x4c] sm:$0xf]
        %v9280 = vld [vmem:[%s16 + $0x50] sm:$0xf]
        %v9281 = vld [vmem:[%s16 + $0x54] sm:$0xf]
        %v9282 = vld [vmem:[%s16 + $0x58] sm:$0xf]
        %v9283 = vld [vmem:[%s16 + $0x5c] sm:$0xf]
        %v9284 = vld [vmem:[%s16 + $0x60] sm:$0xf]
        %v9285 = vld [vmem:[%s16 + $0x64] sm:$0xf]
        %v9286 = vld [vmem:[%s16 + $0x68] sm:$0xf]
        %v9287 = vld [vmem:[%s16 + $0x6c] sm:$0xf]
        %v9288 = vld [vmem:[%s16 + $0x70] sm:$0xf]
        %v9289 = vld [vmem:[%s16 + $0x74] sm:$0xf]
        %v9290 = vld [vmem:[%s16 + $0x78] sm:$0xf]
        %v9291 = vld [vmem:[%s16 + $0x7c] sm:$0xf]
        %v9292 = vld [vmem:[%s16 + $0x80] sm:$0xf]
        %v9293 = vld [vmem:[%s16 + $0x84] sm:$0xf]
        %v9294 = vld [vmem:[%s16 + $0x88] sm:$0xf]
        %v9295 = vld [vmem:[%s16 + $0x8c] sm:$0xf]
        %v9296 = vld [vmem:[%s16 + $0x90] sm:$0xf]
        %v9297 = vld [vmem:[%s16 + $0x94] sm:$0xf]
        %v9298 = vld [vmem:[%s16 + $0x98] sm:$0xf]
        %v9299 = vld [vmem:[%s16 + $0x9c] sm:$0xf]
        %v9300 = vld [vmem:[%s16 + $0xa0] sm:$0xf]
        %v9301 = vld [vmem:[%s16 + $0xa4] sm:$0xf]
        %v9302 = vld [vmem:[%s16 + $0xa8] sm:$0xf]
        %v9303 = vld [vmem:[%s16 + $0xac] sm:$0xf]
        %v9304 = vld [vmem:[%s16 + $0xb0] sm:$0xf]
        %v9305 = vld [vmem:[%s16 + $0xb4] sm:$0xf]
        %v9306 = vld [vmem:[%s16 + $0xb8] sm:$0xf]
        %v9307 = vld [vmem:[%s16 + $0xbc] sm:$0xf]
        %v9308 = vld [vmem:[%s17] sm:$0x1]
        %v9310 = vlaneseq
        %v9311 = vshrl.u32 %v9310, 7
        %v9312 = vsub.s32 0, %v9311
        %v9313 = vrot.slane %v9308, %v9312
        %v9363 = vunpack.c.l.b16 %v9260
        %v9364 = vunpack.c.l.b16 %v9261
        %v9365 = vunpack.c.l.b16 %v9262
        %v9366 = vunpack.c.l.b16 %v9263
        %v9367 = vunpack.c.l.b16 %v9264
        %v9368 = vunpack.c.l.b16 %v9265
        %v9369 = vunpack.c.l.b16 %v9266
        %v9370 = vunpack.c.l.b16 %v9267
        %v9371 = vunpack.c.l.b16 %v9268
        %v9372 = vunpack.c.l.b16 %v9269
        %v9373 = vunpack.c.l.b16 %v9270
        %v9374 = vunpack.c.l.b16 %v9271
        %v9375 = vunpack.c.l.b16 %v9272
        %v9376 = vunpack.c.l.b16 %v9273
        %v9377 = vunpack.c.l.b16 %v9274
        %v9378 = vunpack.c.l.b16 %v9275
        %v9379 = vunpack.c.l.b16 %v9276
        %v9380 = vunpack.c.l.b16 %v9277
        %v9381 = vunpack.c.l.b16 %v9278
        %v9382 = vunpack.c.l.b16 %v9279
        %v9383 = vunpack.c.l.b16 %v9280
        %v9384 = vunpack.c.l.b16 %v9281
        %v9385 = vunpack.c.l.b16 %v9282
        %v9386 = vunpack.c.l.b16 %v9283
        %v9387 = vunpack.c.l.b16 %v9284
        %v9388 = vunpack.c.l.b16 %v9285
        %v9389 = vunpack.c.l.b16 %v9286
        %v9390 = vunpack.c.l.b16 %v9287
        %v9391 = vunpack.c.l.b16 %v9288
        %v9392 = vunpack.c.l.b16 %v9289
        %v9393 = vunpack.c.l.b16 %v9290
        %v9394 = vunpack.c.l.b16 %v9291
        %v9395 = vunpack.c.l.b16 %v9292
        %v9396 = vunpack.c.l.b16 %v9293
        %v9397 = vunpack.c.l.b16 %v9294
        %v9398 = vunpack.c.l.b16 %v9295
        %v9399 = vunpack.c.l.b16 %v9296
        %v9400 = vunpack.c.l.b16 %v9297
        %v9401 = vunpack.c.l.b16 %v9298
        %v9402 = vunpack.c.l.b16 %v9299
        %v9403 = vunpack.c.l.b16 %v9300
        %v9404 = vunpack.c.l.b16 %v9301
        %v9405 = vunpack.c.l.b16 %v9302
        %v9406 = vunpack.c.l.b16 %v9303
        %v9407 = vunpack.c.l.b16 %v9304
        %v9408 = vunpack.c.l.b16 %v9305
        %v9409 = vunpack.c.l.b16 %v9306
        %v9410 = vunpack.c.l.b16 %v9307
        %v9411 = vpack.c.b16 %v9364, %v9363
        %v9412 = vpack.c.b16 %v9366, %v9365
        %v9413 = vpack.c.b16 %v9368, %v9367
        %v9414 = vpack.c.b16 %v9370, %v9369
        %v9415 = vpack.c.b16 %v9372, %v9371
        %v9416 = vpack.c.b16 %v9374, %v9373
        %v9417 = vpack.c.b16 %v9376, %v9375
        %v9418 = vpack.c.b16 %v9378, %v9377
        %v9419 = vpack.c.b16 %v9380, %v9379
        %v9420 = vpack.c.b16 %v9382, %v9381
        %v9421 = vpack.c.b16 %v9384, %v9383
        %v9422 = vpack.c.b16 %v9386, %v9385
        %v9423 = vpack.c.b16 %v9388, %v9387
        %v9424 = vpack.c.b16 %v9390, %v9389
        %v9425 = vpack.c.b16 %v9392, %v9391
        %v9426 = vpack.c.b16 %v9394, %v9393
        %v9427 = vpack.c.b16 %v9396, %v9395
        %v9428 = vpack.c.b16 %v9398, %v9397
        %v9429 = vpack.c.b16 %v9400, %v9399
        %v9430 = vpack.c.b16 %v9402, %v9401
        %v9431 = vpack.c.b16 %v9404, %v9403
        %v9432 = vpack.c.b16 %v9406, %v9405
        %v9433 = vpack.c.b16 %v9408, %v9407
        %v9434 = vpack.c.b16 %v9410, %v9409
        %9459 = vmatprep.subr.bf16.mxu0 0
        %9460 = vmatpush1.bf16.msra.mxu0 %v9411
        %9461 = vmatprep.subr.bf16.mxu0 0
        %9462 = vmatpush1.bf16.msra.mxu0 %v9412
        %9463 = vmatprep.subr.bf16.mxu0 0
        %9464 = vmatpush1.bf16.msra.mxu0 %v9413
        %9465 = vmatprep.subr.bf16.mxu0 0
        %9466 = vmatpush1.bf16.msra.mxu0 %v9414
        %9467 = vmatprep.subr.bf16.mxu0 0
        %9468 = vmatpush1.bf16.msra.mxu0 %v9415
        %9469 = vmatprep.subr.bf16.mxu0 0
        %9470 = vmatpush1.bf16.msra.mxu0 %v9416
        %9471 = vmatprep.subr.bf16.mxu0 0
        %9472 = vmatpush1.bf16.msra.mxu0 %v9417
        %9473 = vmatprep.subr.bf16.mxu0 0
        %9474 = vmatpush1.bf16.msra.mxu0 %v9418
        %9475 = vmatprep.subr.bf16.mxu0 0
        %9476 = vmatpush1.bf16.msra.mxu0 %v9419
        %9477 = vmatprep.subr.bf16.mxu0 0
        %9478 = vmatpush1.bf16.msra.mxu0 %v9420
        %9479 = vmatprep.subr.bf16.mxu0 0
        %9480 = vmatpush1.bf16.msra.mxu0 %v9421
        %9481 = vmatprep.subr.bf16.mxu0 0
        %9482 = vmatpush1.bf16.msra.mxu0 %v9422
        %9483 = vmatprep.subr.bf16.mxu0 0
        %9484 = vmatpush1.bf16.msra.mxu0 %v9423
        %9485 = vmatprep.subr.bf16.mxu0 0
        %9486 = vmatpush1.bf16.msra.mxu0 %v9424
        %9487 = vmatprep.subr.bf16.mxu0 0
        %9488 = vmatpush1.bf16.msra.mxu0 %v9425
        %9489 = vmatprep.subr.bf16.mxu0 0
        %9490 = vmatpush1.bf16.msra.mxu0 %v9426
        %9491 = vmatprep.mubr.bf16.mxu0 %v9213
        %9492 = vmatmul.mubr.bf16.gmra.mrb[0].mxu0 %v9212
        %v9493 = vpop.f32.mrb[0].mxu0
        %v9494 = vadd.f32 %v9313, %v9493
        %v9495 = vpop.f32.mrb[0].mxu0
        %v9496 = vpop.f32.mrb[0].mxu0
        %v9497 = vadd.f32 %v9313, %v9496
        %v9498 = vpop.f32.mrb[0].mxu0
        %9499 = vmatprep.mubr.bf16.mxu0 %v9216
        %9500 = vmatmul.mubr.bf16.gmra.mrb[0].mxu0 %v9215
        %v9501 = vpop.f32.mrb[0].mxu0
        %v9502 = vadd.f32 %v9313, %v9501
        %v9503 = vpop.f32.mrb[0].mxu0
        %v9504 = vpop.f32.mrb[0].mxu0
        %v9505 = vadd.f32 %v9313, %v9504
        %v9506 = vpop.f32.mrb[0].mxu0
        %9507 = vmatprep.mubr.bf16.mxu0 %v9219
        %9508 = vmatmul.mubr.bf16.gmra.mrb[0].mxu0 %v9218
        %v9509 = vpop.f32.mrb[0].mxu0
        %v9510 = vadd.f32 %v9313, %v9509
        %v9511 = vpop.f32.mrb[0].mxu0
        %v9512 = vpop.f32.mrb[0].mxu0
        %v9513 = vadd.f32 %v9313, %v9512
        %v9514 = vpop.f32.mrb[0].mxu0
        %9515 = vmatprep.mubr.bf16.mxu0 %v9222
        %9516 = vmatmul.mubr.bf16.gmra.mrb[0].mxu0 %v9221
        %v9517 = vpop.f32.mrb[0].mxu0
        %v9518 = vadd.f32 %v9313, %v9517
        %v9519 = vpop.f32.mrb[0].mxu0
        %v9520 = vpop.f32.mrb[0].mxu0
        %v9521 = vadd.f32 %v9313, %v9520
        %v9522 = vpop.f32.mrb[0].mxu0
        %9523 = vmatprep.mubr.bf16.mxu0 %v9225
        %9524 = vmatmul.mubr.bf16.gmra.mrb[0].mxu0 %v9224
        %v9525 = vpop.f32.mrb[0].mxu0
        %v9526 = vadd.f32 %v9313, %v9525
        %v9527 = vpop.f32.mrb[0].mxu0
        %v9528 = vpop.f32.mrb[0].mxu0
        %v9529 = vadd.f32 %v9313, %v9528
        %v9530 = vpop.f32.mrb[0].mxu0
        %9531 = vmatprep.mubr.bf16.mxu0 %v9228
        %9532 = vmatmul.mubr.bf16.gmra.mrb[0].mxu0 %v9227
        %v9533 = vpop.f32.mrb[0].mxu0
        %v9534 = vadd.f32 %v9313, %v9533
        %v9535 = vpop.f32.mrb[0].mxu0
        %v9536 = vpop.f32.mrb[0].mxu0
        %v9537 = vadd.f32 %v9313, %v9536
        %v9538 = vpop.f32.mrb[0].mxu0
        %9539 = vmatprep.mubr.bf16.mxu0 %v9231
        %9540 = vmatmul.mubr.bf16.gmra.mrb[0].mxu0 %v9230
        %v9541 = vpop.f32.mrb[0].mxu0
        %v9542 = vadd.f32 %v9313, %v9541
        %v9543 = vpop.f32.mrb[0].mxu0
        %v9544 = vpop.f32.mrb[0].mxu0
        %v9545 = vadd.f32 %v9313, %v9544
        %v9546 = vpop.f32.mrb[0].mxu0
        %9547 = vmatprep.mubr.bf16.mxu0 %v9234
        %9548 = vmatmul.mubr.bf16.gmra.mrb[0].mxu0 %v9233
        %v9549 = vpop.f32.mrb[0].mxu0
        %v9550 = vadd.f32 %v9313, %v9549
        %v9551 = vpop.f32.mrb[0].mxu0
        %v9552 = vpop.f32.mrb[0].mxu0
        %v9553 = vadd.f32 %v9313, %v9552
        %v9554 = vpop.f32.mrb[0].mxu0
        %9555 = vmatprep.mubr.bf16.mxu0 %v9237
        %9556 = vmatmul.mubr.bf16.gmra.mrb[0].mxu0 %v9236
        %v9557 = vpop.f32.mrb[0].mxu0
        %v9558 = vadd.f32 %v9313, %v9557
        %v9559 = vpop.f32.mrb[0].mxu0
        %v9560 = vpop.f32.mrb[0].mxu0
        %v9561 = vadd.f32 %v9313, %v9560
        %v9562 = vpop.f32.mrb[0].mxu0
        %9563 = vmatprep.mubr.bf16.mxu0 %v9240
        %9564 = vmatmul.mubr.bf16.gmra.mrb[0].mxu0 %v9239
        %v9565 = vpop.f32.mrb[0].mxu0
        %v9566 = vadd.f32 %v9313, %v9565
        %v9567 = vpop.f32.mrb[0].mxu0
        %v9568 = vpop.f32.mrb[0].mxu0
        %v9569 = vadd.f32 %v9313, %v9568
        %v9570 = vpop.f32.mrb[0].mxu0
        %9571 = vmatprep.mubr.bf16.mxu0 %v9243
        %9572 = vmatmul.mubr.bf16.gmra.mrb[0].mxu0 %v9242
        %v9573 = vpop.f32.mrb[0].mxu0
        %v9574 = vadd.f32 %v9313, %v9573
        %v9575 = vpop.f32.mrb[0].mxu0
        %v9576 = vpop.f32.mrb[0].mxu0
        %v9577 = vadd.f32 %v9313, %v9576
        %v9578 = vpop.f32.mrb[0].mxu0
        %9579 = vmatprep.mubr.bf16.mxu0 %v9246
        %9580 = vmatmul.mubr.bf16.gmra.mrb[0].mxu0 %v9245
        %v9581 = vpop.f32.mrb[0].mxu0
        %v9582 = vadd.f32 %v9313, %v9581
        %v9583 = vpop.f32.mrb[0].mxu0
        %v9584 = vpop.f32.mrb[0].mxu0
        %v9585 = vadd.f32 %v9313, %v9584
        %v9586 = vpop.f32.mrb[0].mxu0
        %9587 = vmatprep.mubr.bf16.mxu0 %v9249
        %9588 = vmatmul.mubr.bf16.gmra.mrb[0].mxu0 %v9248
        %v9589 = vpop.f32.mrb[0].mxu0
        %v9590 = vadd.f32 %v9313, %v9589
        %v9591 = vpop.f32.mrb[0].mxu0
        %v9592 = vpop.f32.mrb[0].mxu0
        %v9593 = vadd.f32 %v9313, %v9592
        %v9594 = vpop.f32.mrb[0].mxu0
        %9595 = vmatprep.mubr.bf16.mxu0 %v9252
        %9596 = vmatmul.mubr.bf16.gmra.mrb[0].mxu0 %v9251
        %v9597 = vpop.f32.mrb[0].mxu0
        %v9598 = vadd.f32 %v9313, %v9597
        %v9599 = vpop.f32.mrb[0].mxu0
        %v9600 = vpop.f32.mrb[0].mxu0
        %v9601 = vadd.f32 %v9313, %v9600
        %v9602 = vpop.f32.mrb[0].mxu0
        %9603 = vmatprep.mubr.bf16.mxu0 %v9255
        %9604 = vmatmul.mubr.bf16.gmra.mrb[0].mxu0 %v9254
        %v9605 = vpop.f32.mrb[0].mxu0
        %v9606 = vadd.f32 %v9313, %v9605
        %v9607 = vpop.f32.mrb[0].mxu0
        %v9608 = vpop.f32.mrb[0].mxu0
        %v9609 = vadd.f32 %v9313, %v9608
        %v9610 = vpop.f32.mrb[0].mxu0
        %9611 = vmatprep.mubr.bf16.mxu0 %v9258
        %9612 = vmatmul.mubr.bf16.gmra.mrb[0].mxu0 %v9257
        %v9613 = vpop.f32.mrb[0].mxu0
        %v9614 = vadd.f32 %v9313, %v9613
        %v9615 = vpop.f32.mrb[0].mxu0
        %v9616 = vpop.f32.mrb[0].mxu0
        %v9617 = vadd.f32 %v9313, %v9616
        %v9618 = vpop.f32.mrb[0].mxu0
        %9619 = vdwg.mxu0
        %9620 = vmatprep.subr.bf16.mxu0 0
        %9621 = vmatpush1.bf16.msra.mxu0 %v9427
        %9622 = vmatprep.subr.bf16.mxu0 0
        %9623 = vmatpush1.bf16.msra.mxu0 %v9428
        %9624 = vmatprep.subr.bf16.mxu0 0
        %9625 = vmatpush1.bf16.msra.mxu0 %v9429
        %9626 = vmatprep.subr.bf16.mxu0 0
        %9627 = vmatpush1.bf16.msra.mxu0 %v9430
        %9628 = vmatprep.subr.bf16.mxu0 0
        %9629 = vmatpush1.bf16.msra.mxu0 %v9431
        %9630 = vmatprep.subr.bf16.mxu0 0
        %9631 = vmatpush1.bf16.msra.mxu0 %v9432
        %9632 = vmatprep.subr.bf16.mxu0 0
        %9633 = vmatpush1.bf16.msra.mxu0 %v9433
        %9634 = vmatprep.subr.bf16.mxu0 0
        %9635 = vmatpush1.bf16.msra.mxu0 %v9434
        %9636 = vmatprep.subr.bf16.mxu0 0
        %9637 = vmatpush1.bf16.msra.mxu0 0
        %9638 = vmatprep.subr.bf16.mxu0 0
        %9639 = vmatpush1.bf16.msra.mxu0 0
        %9640 = vmatprep.subr.bf16.mxu0 0
        %9641 = vmatpush1.bf16.msra.mxu0 0
        %9642 = vmatprep.subr.bf16.mxu0 0
        %9643 = vmatpush1.bf16.msra.mxu0 0
        %9644 = vmatprep.subr.bf16.mxu0 0
        %9645 = vmatpush1.bf16.msra.mxu0 0
        %9646 = vmatprep.subr.bf16.mxu0 0
        %9647 = vmatpush1.bf16.msra.mxu0 0
        %9648 = vmatprep.subr.bf16.mxu0 0
        %9649 = vmatpush1.bf16.msra.mxu0 0
        %9650 = vmatprep.subr.bf16.mxu0 0
        %9651 = vmatpush1.bf16.msra.mxu0 0
        %9652 = vmatprep.mubr.bf16.mxu0 0
        %9653 = vmatmul.mubr.bf16.gmra.mrb[0].mxu0 %v9214
        %v9654 = vpop.f32.mrb[0].mxu0
        %v9655 = vadd.f32 %v9494, %v9654
        %v9656 = vpop.f32.mrb[0].mxu0
        %v9657 = vpop.f32.mrb[0].mxu0
        %v9658 = vadd.f32 %v9497, %v9657
        %v9659 = vpop.f32.mrb[0].mxu0
        %9660 = vmatprep.mubr.bf16.mxu0 0
        %9661 = vmatmul.mubr.bf16.gmra.mrb[0].mxu0 %v9217
        %v9662 = vpop.f32.mrb[0].mxu0
        %v9663 = vadd.f32 %v9502, %v9662
        %v9664 = vpop.f32.mrb[0].mxu0
        %v9665 = vpop.f32.mrb[0].mxu0
        %v9666 = vadd.f32 %v9505, %v9665
        %v9667 = vpop.f32.mrb[0].mxu0
        %9668 = vmatprep.mubr.bf16.mxu0 0
        %9669 = vmatmul.mubr.bf16.gmra.mrb[0].mxu0 %v9220
        %v9670 = vpop.f32.mrb[0].mxu0
        %v9671 = vadd.f32 %v9510, %v9670
        %v9672 = vpop.f32.mrb[0].mxu0
        %v9673 = vpop.f32.mrb[0].mxu0
        %v9674 = vadd.f32 %v9513, %v9673
        %v9675 = vpop.f32.mrb[0].mxu0
        %9676 = vmatprep.mubr.bf16.mxu0 0
        %9677 = vmatmul.mubr.bf16.gmra.mrb[0].mxu0 %v9223
        %v9678 = vpop.f32.mrb[0].mxu0
        %v9679 = vadd.f32 %v9518, %v9678
        %v9680 = vpop.f32.mrb[0].mxu0
        %v9681 = vpop.f32.mrb[0].mxu0
        %v9682 = vadd.f32 %v9521, %v9681
        %v9683 = vpop.f32.mrb[0].mxu0
        %9684 = vmatprep.mubr.bf16.mxu0 0
        %9685 = vmatmul.mubr.bf16.gmra.mrb[0].mxu0 %v9226
        %v9686 = vpop.f32.mrb[0].mxu0
        %v9687 = vadd.f32 %v9526, %v9686
        %v9688 = vpop.f32.mrb[0].mxu0
        %v9689 = vpop.f32.mrb[0].mxu0
        %v9690 = vadd.f32 %v9529, %v9689
        %v9691 = vpop.f32.mrb[0].mxu0
        %9692 = vmatprep.mubr.bf16.mxu0 0
        %9693 = vmatmul.mubr.bf16.gmra.mrb[0].mxu0 %v9229
        %v9694 = vpop.f32.mrb[0].mxu0
        %v9695 = vadd.f32 %v9534, %v9694
        %v9696 = vpop.f32.mrb[0].mxu0
        %v9697 = vpop.f32.mrb[0].mxu0
        %v9698 = vadd.f32 %v9537, %v9697
        %v9699 = vpop.f32.mrb[0].mxu0
        %9700 = vmatprep.mubr.bf16.mxu0 0
        %9701 = vmatmul.mubr.bf16.gmra.mrb[0].mxu0 %v9232
        %v9702 = vpop.f32.mrb[0].mxu0
        %v9703 = vadd.f32 %v9542, %v9702
        %v9704 = vpop.f32.mrb[0].mxu0
        %v9705 = vpop.f32.mrb[0].mxu0
        %v9706 = vadd.f32 %v9545, %v9705
        %v9707 = vpop.f32.mrb[0].mxu0
        %9708 = vmatprep.mubr.bf16.mxu0 0
        %9709 = vmatmul.mubr.bf16.gmra.mrb[0].mxu0 %v9235
        %v9710 = vpop.f32.mrb[0].mxu0
        %v9711 = vadd.f32 %v9550, %v9710
        %v9712 = vpop.f32.mrb[0].mxu0
        %v9713 = vpop.f32.mrb[0].mxu0
        %v9714 = vadd.f32 %v9553, %v9713
        %v9715 = vpop.f32.mrb[0].mxu0
        %9716 = vmatprep.mubr.bf16.mxu0 0
        %9717 = vmatmul.mubr.bf16.gmra.mrb[0].mxu0 %v9238
        %v9718 = vpop.f32.mrb[0].mxu0
        %v9719 = vadd.f32 %v9558, %v9718
        %v9720 = vpop.f32.mrb[0].mxu0
        %v9721 = vpop.f32.mrb[0].mxu0
        %v9722 = vadd.f32 %v9561, %v9721
        %v9723 = vpop.f32.mrb[0].mxu0
        %9724 = vmatprep.mubr.bf16.mxu0 0
        %9725 = vmatmul.mubr.bf16.gmra.mrb[0].mxu0 %v9241
        %v9726 = vpop.f32.mrb[0].mxu0
        %v9727 = vadd.f32 %v9566, %v9726
        %v9728 = vpop.f32.mrb[0].mxu0
        %v9729 = vpop.f32.mrb[0].mxu0
        %v9730 = vadd.f32 %v9569, %v9729
        %v9731 = vpop.f32.mrb[0].mxu0
        %9732 = vmatprep.mubr.bf16.mxu0 0
        %9733 = vmatmul.mubr.bf16.gmra.mrb[0].mxu0 %v9244
        %v9734 = vpop.f32.mrb[0].mxu0
        %v9735 = vadd.f32 %v9574, %v9734
        %v9736 = vpop.f32.mrb[0].mxu0
        %v9737 = vpop.f32.mrb[0].mxu0
        %v9738 = vadd.f32 %v9577, %v9737
        %v9739 = vpop.f32.mrb[0].mxu0
        %9740 = vmatprep.mubr.bf16.mxu0 0
        %9741 = vmatmul.mubr.bf16.gmra.mrb[0].mxu0 %v9247
        %v9742 = vpop.f32.mrb[0].mxu0
        %v9743 = vadd.f32 %v9582, %v9742
        %v9744 = vpop.f32.mrb[0].mxu0
        %v9745 = vpop.f32.mrb[0].mxu0
        %v9746 = vadd.f32 %v9585, %v9745
        %v9747 = vpop.f32.mrb[0].mxu0
        %9748 = vmatprep.mubr.bf16.mxu0 0
        %9749 = vmatmul.mubr.bf16.gmra.mrb[0].mxu0 %v9250
        %v9750 = vpop.f32.mrb[0].mxu0
        %v9751 = vadd.f32 %v9590, %v9750
        %v9752 = vpop.f32.mrb[0].mxu0
        %v9753 = vpop.f32.mrb[0].mxu0
        %v9754 = vadd.f32 %v9593, %v9753
        %v9755 = vpop.f32.mrb[0].mxu0
        %9756 = vmatprep.mubr.bf16.mxu0 0
        %9757 = vmatmul.mubr.bf16.gmra.mrb[0].mxu0 %v9253
        %v9758 = vpop.f32.mrb[0].mxu0
        %v9759 = vadd.f32 %v9598, %v9758
        %v9760 = vpop.f32.mrb[0].mxu0
        %v9761 = vpop.f32.mrb[0].mxu0
        %v9762 = vadd.f32 %v9601, %v9761
        %v9763 = vpop.f32.mrb[0].mxu0
        %9764 = vmatprep.mubr.bf16.mxu0 0
        %9765 = vmatmul.mubr.bf16.gmra.mrb[0].mxu0 %v9256
        %v9766 = vpop.f32.mrb[0].mxu0
        %v9767 = vadd.f32 %v9606, %v9766
        %v9768 = vpop.f32.mrb[0].mxu0
        %v9769 = vpop.f32.mrb[0].mxu0
        %v9770 = vadd.f32 %v9609, %v9769
        %v9771 = vpop.f32.mrb[0].mxu0
        %9772 = vmatprep.mubr.bf16.mxu0 0
        %9773 = vmatmul.mubr.bf16.gmra.mrb[0].mxu0 %v9259
        %v9774 = vpop.f32.mrb[0].mxu0
        %v9775 = vadd.f32 %v9614, %v9774
        %v9776 = vpop.f32.mrb[0].mxu0
        %v9777 = vpop.f32.mrb[0].mxu0
        %v9778 = vadd.f32 %v9617, %v9777
        %v9779 = vpop.f32.mrb[0].mxu0
        %9780 = vdwg.mxu0
        %v9781 = vadd.f32 %v9655, %v8988
        %v9782 = vadd.f32 %v9658, %v8989
        %v9783 = vadd.f32 %v9663, %v8990
        %v9784 = vadd.f32 %v9666, %v8991
        %v9785 = vadd.f32 %v9671, %v8992
        %v9786 = vadd.f32 %v9674, %v8993
        %v9787 = vadd.f32 %v9679, %v8994
        %v9788 = vadd.f32 %v9682, %v8995
        %v9789 = vadd.f32 %v9687, %v8996
        %v9790 = vadd.f32 %v9690, %v8997
        %v9791 = vadd.f32 %v9695, %v8998
        %v9792 = vadd.f32 %v9698, %v8999
        %v9793 = vadd.f32 %v9703, %v9000
        %v9794 = vadd.f32 %v9706, %v9001
        %v9795 = vadd.f32 %v9711, %v9002
        %v9796 = vadd.f32 %v9714, %v9003
        %v9797 = vadd.f32 %v9719, %v9004
        %v9798 = vadd.f32 %v9722, %v9005
        %v9799 = vadd.f32 %v9727, %v9006
        %v9800 = vadd.f32 %v9730, %v9007
        %v9801 = vadd.f32 %v9735, %v9008
        %v9802 = vadd.f32 %v9738, %v9009
        %v9803 = vadd.f32 %v9743, %v9010
        %v9804 = vadd.f32 %v9746, %v9011
        %v9805 = vadd.f32 %v9751, %v9012
        %v9806 = vadd.f32 %v9754, %v9013
        %v9807 = vadd.f32 %v9759, %v9014
        %v9808 = vadd.f32 %v9762, %v9015
        %v9809 = vadd.f32 %v9767, %v9016
        %v9810 = vadd.f32 %v9770, %v9017
        %v9811 = vadd.f32 %v9775, %v9018
        %v9812 = vadd.f32 %v9778, %v9019
        %v9813 = vmul.f32 %v9781, 0.2
        %v9814 = vmul.f32 %v9782, 0.2
        %v9815 = vmul.f32 %v9783, 0.2
        %v9816 = vmul.f32 %v9784, 0.2
        %v9817 = vmul.f32 %v9785, 0.2
        %v9818 = vmul.f32 %v9786, 0.2
        %v9819 = vmul.f32 %v9787, 0.2
        %v9820 = vmul.f32 %v9788, 0.2
        %v9821 = vmul.f32 %v9789, 0.2
        %v9822 = vmul.f32 %v9790, 0.2
        %v9823 = vmul.f32 %v9791, 0.2
        %v9824 = vmul.f32 %v9792, 0.2
        %v9825 = vmul.f32 %v9793, 0.2
        %v9826 = vmul.f32 %v9794, 0.2
        %v9827 = vmul.f32 %v9795, 0.2
        %v9828 = vmul.f32 %v9796, 0.2
        %v9829 = vmul.f32 %v9797, 0.2
        %v9830 = vmul.f32 %v9798, 0.2
        %v9831 = vmul.f32 %v9799, 0.2
        %v9832 = vmul.f32 %v9800, 0.2
        %v9833 = vmul.f32 %v9801, 0.2
        %v9834 = vmul.f32 %v9802, 0.2
        %v9835 = vmul.f32 %v9803, 0.2
        %v9836 = vmul.f32 %v9804, 0.2
        %v9837 = vmul.f32 %v9805, 0.2
        %v9838 = vmul.f32 %v9806, 0.2
        %v9839 = vmul.f32 %v9807, 0.2
        %v9840 = vmul.f32 %v9808, 0.2
        %v9841 = vmul.f32 %v9809, 0.2
        %v9842 = vmul.f32 %v9810, 0.2
        %v9843 = vmul.f32 %v9811, 0.2
        %v9844 = vmul.f32 %v9812, 0.2
        %v9845 = vmax.f32 %v9781, %v9813
        %v9846 = vmax.f32 %v9782, %v9814
        %v9847 = vmax.f32 %v9783, %v9815
        %v9848 = vmax.f32 %v9784, %v9816
        %v9849 = vmax.f32 %v9785, %v9817
        %v9850 = vmax.f32 %v9786, %v9818
        %v9851 = vmax.f32 %v9787, %v9819
        %v9852 = vmax.f32 %v9788, %v9820
        %v9853 = vmax.f32 %v9789, %v9821
        %v9854 = vmax.f32 %v9790, %v9822
        %v9855 = vmax.f32 %v9791, %v9823
        %v9856 = vmax.f32 %v9792, %v9824
        %v9857 = vmax.f32 %v9793, %v9825
        %v9858 = vmax.f32 %v9794, %v9826
        %v9859 = vmax.f32 %v9795, %v9827
        %v9860 = vmax.f32 %v9796, %v9828
        %v9861 = vmax.f32 %v9797, %v9829
        %v9862 = vmax.f32 %v9798, %v9830
        %v9863 = vmax.f32 %v9799, %v9831
        %v9864 = vmax.f32 %v9800, %v9832
        %v9865 = vmax.f32 %v9801, %v9833
        %v9866 = vmax.f32 %v9802, %v9834
        %v9867 = vmax.f32 %v9803, %v9835
        %v9868 = vmax.f32 %v9804, %v9836
        %v9869 = vmax.f32 %v9805, %v9837
        %v9870 = vmax.f32 %v9806, %v9838
        %v9871 = vmax.f32 %v9807, %v9839
        %v9872 = vmax.f32 %v9808, %v9840
        %v9873 = vmax.f32 %v9809, %v9841
        %v9874 = vmax.f32 %v9810, %v9842
        %v9875 = vmax.f32 %v9811, %v9843
        %v9876 = vmax.f32 %v9812, %v9844
        %v9877 = vrot.slane %v9845, 7
        %v9878 = vrot.slane %v9846, 7
        %v9879 = vrot.slane %v9847, 7
        %v9880 = vrot.slane %v9848, 7
        %v9881 = vrot.slane %v9849, 7
        %v9882 = vrot.slane %v9850, 7
        %v9883 = vrot.slane %v9851, 7
        %v9884 = vrot.slane %v9852, 7
        %v9885 = vrot.slane %v9853, 7
        %v9886 = vrot.slane %v9854, 7
        %v9887 = vrot.slane %v9855, 7
        %v9888 = vrot.slane %v9856, 7
        %v9889 = vrot.slane %v9857, 7
        %v9890 = vrot.slane %v9858, 7
        %v9891 = vrot.slane %v9859, 7
        %v9892 = vrot.slane %v9860, 7
        %v9893 = vrot.slane %v9861, 7
        %v9894 = vrot.slane %v9862, 7
        %v9895 = vrot.slane %v9863, 7
        %v9896 = vrot.slane %v9864, 7
        %v9897 = vrot.slane %v9865, 7
        %v9898 = vrot.slane %v9866, 7
        %v9899 = vrot.slane %v9867, 7
        %v9900 = vrot.slane %v9868, 7
        %v9901 = vrot.slane %v9869, 7
        %v9902 = vrot.slane %v9870, 7
        %v9903 = vrot.slane %v9871, 7
        %v9904 = vrot.slane %v9872, 7
        %v9905 = vrot.slane %v9873, 7
        %v9906 = vrot.slane %v9874, 7
        %v9907 = vrot.slane %v9875, 7
        %v9908 = vrot.slane %v9876, 7
        %v9909 = vsel %vm1898, %v9907, %v9908
        %v9910 = vsel %vm1898, %v9906, %v9907
        %v9911 = vsel %vm1898, %v9905, %v9906
        %v9912 = vsel %vm1898, %v9904, %v9905
        %v9913 = vsel %vm1898, %v9903, %v9904
        %v9914 = vsel %vm1898, %v9902, %v9903
        %v9915 = vsel %vm1898, %v9901, %v9902
        %v9916 = vsel %vm1898, %v9900, %v9901
        %v9917 = vsel %vm1898, %v9899, %v9900
        %v9918 = vsel %vm1898, %v9898, %v9899
        %v9919 = vsel %vm1898, %v9897, %v9898
        %v9920 = vsel %vm1898, %v9896, %v9897
        %v9921 = vsel %vm1898, %v9895, %v9896
        %v9922 = vsel %vm1898, %v9894, %v9895
        %v9923 = vsel %vm1898, %v9893, %v9894
        %v9924 = vsel %vm1898, %v9892, %v9893
        %v9925 = vsel %vm1898, %v9891, %v9892
        %v9926 = vsel %vm1898, %v9890, %v9891
        %v9927 = vsel %vm1898, %v9889, %v9890
        %v9928 = vsel %vm1898, %v9888, %v9889
        %v9929 = vsel %vm1898, %v9887, %v9888
        %v9930 = vsel %vm1898, %v9886, %v9887
        %v9931 = vsel %vm1898, %v9885, %v9886
        %v9932 = vsel %vm1898, %v9884, %v9885
        %v9933 = vsel %vm1898, %v9883, %v9884
        %v9934 = vsel %vm1898, %v9882, %v9883
        %v9935 = vsel %vm1898, %v9881, %v9882
        %v9936 = vsel %vm1898, %v9880, %v9881
        %v9937 = vsel %vm1898, %v9879, %v9880
        %v9938 = vsel %vm1898, %v9878, %v9879
        %v9939 = vsel %vm1898, %v9877, %v9878
        %v9940 = vsel %vm1898, %v9908, %v9877
        %v9941 = vmul.f32 %v9909, %v822
        %v9942 = vmul.f32 %v9940, %v823
        %v9943 = vmul.f32 %v9939, %v824
        %v9944 = vmul.f32 %v9938, %v825
        %v9945 = vmul.f32 %v9937, %v826
        %v9946 = vmul.f32 %v9936, %v827
        %v9947 = vmul.f32 %v9935, %v828
        %v9948 = vmul.f32 %v9934, %v829
        %v9949 = vmul.f32 %v9933, %v822
        %v9950 = vmul.f32 %v9932, %v823
        %v9951 = vmul.f32 %v9931, %v824
        %v9952 = vmul.f32 %v9930, %v825
        %v9953 = vmul.f32 %v9929, %v826
        %v9954 = vmul.f32 %v9928, %v827
        %v9955 = vmul.f32 %v9927, %v828
        %v9956 = vmul.f32 %v9926, %v829
        %v9957 = vmul.f32 %v9925, %v822
        %v9958 = vmul.f32 %v9924, %v823
        %v9959 = vmul.f32 %v9923, %v824
        %v9960 = vmul.f32 %v9922, %v825
        %v9961 = vmul.f32 %v9921, %v826
        %v9962 = vmul.f32 %v9920, %v827
        %v9963 = vmul.f32 %v9919, %v828
        %v9964 = vmul.f32 %v9918, %v829
        %v9965 = vmul.f32 %v9917, %v822
        %v9966 = vmul.f32 %v9916, %v823
        %v9967 = vmul.f32 %v9915, %v824
        %v9968 = vmul.f32 %v9914, %v825
        %v9969 = vmul.f32 %v9913, %v826
        %v9970 = vmul.f32 %v9912, %v827
        %v9971 = vmul.f32 %v9911, %v828
        %v9972 = vmul.f32 %v9910, %v829
        %v9973 = vrot.slane %v9845, 1
        %v9974 = vrot.slane %v9846, 1
        %v9975 = vrot.slane %v9847, 1
        %v9976 = vrot.slane %v9848, 1
        %v9977 = vrot.slane %v9849, 1
        %v9978 = vrot.slane %v9850, 1
        %v9979 = vrot.slane %v9851, 1
        %v9980 = vrot.slane %v9852, 1
        %v9981 = vrot.slane %v9853, 1
        %v9982 = vrot.slane %v9854, 1
        %v9983 = vrot.slane %v9855, 1
        %v9984 = vrot.slane %v9856, 1
        %v9985 = vrot.slane %v9857, 1
        %v9986 = vrot.slane %v9858, 1
        %v9987 = vrot.slane %v9859, 1
        %v9988 = vrot.slane %v9860, 1
        %v9989 = vrot.slane %v9861, 1
        %v9990 = vrot.slane %v9862, 1
        %v9991 = vrot.slane %v9863, 1
        %v9992 = vrot.slane %v9864, 1
        %v9993 = vrot.slane %v9865, 1
        %v9994 = vrot.slane %v9866, 1
        %v9995 = vrot.slane %v9867, 1
        %v9996 = vrot.slane %v9868, 1
        %v9997 = vrot.slane %v9869, 1
        %v9998 = vrot.slane %v9870, 1
        %v9999 = vrot.slane %v9871, 1
        %v10000 = vrot.slane %v9872, 1
        %v10001 = vrot.slane %v9873, 1
        %v10002 = vrot.slane %v9874, 1
        %v10003 = vrot.slane %v9875, 1
        %v10004 = vrot.slane %v9876, 1
        %v10005 = vsel %vm2455, %v10003, %v10004
        %v10006 = vsel %vm2455, %v10002, %v10003
        %v10007 = vsel %vm2455, %v10001, %v10002
        %v10008 = vsel %vm2455, %v10000, %v10001
        %v10009 = vsel %vm2455, %v9999, %v10000
        %v10010 = vsel %vm2455, %v9998, %v9999
        %v10011 = vsel %vm2455, %v9997, %v9998
        %v10012 = vsel %vm2455, %v9996, %v9997
        %v10013 = vsel %vm2455, %v9995, %v9996
        %v10014 = vsel %vm2455, %v9994, %v9995
        %v10015 = vsel %vm2455, %v9993, %v9994
        %v10016 = vsel %vm2455, %v9992, %v9993
        %v10017 = vsel %vm2455, %v9991, %v9992
        %v10018 = vsel %vm2455, %v9990, %v9991
        %v10019 = vsel %vm2455, %v9989, %v9990
        %v10020 = vsel %vm2455, %v9988, %v9989
        %v10021 = vsel %vm2455, %v9987, %v9988
        %v10022 = vsel %vm2455, %v9986, %v9987
        %v10023 = vsel %vm2455, %v9985, %v9986
        %v10024 = vsel %vm2455, %v9984, %v9985
        %v10025 = vsel %vm2455, %v9983, %v9984
        %v10026 = vsel %vm2455, %v9982, %v9983
        %v10027 = vsel %vm2455, %v9981, %v9982
        %v10028 = vsel %vm2455, %v9980, %v9981
        %v10029 = vsel %vm2455, %v9979, %v9980
        %v10030 = vsel %vm2455, %v9978, %v9979
        %v10031 = vsel %vm2455, %v9977, %v9978
        %v10032 = vsel %vm2455, %v9976, %v9977
        %v10033 = vsel %vm2455, %v9975, %v9976
        %v10034 = vsel %vm2455, %v9974, %v9975
        %v10035 = vsel %vm2455, %v9973, %v9974
        %v10036 = vsel %vm2455, %v10004, %v9973
        %v10037 = vmul.f32 %v10034, %v1158
        %v10038 = vmul.f32 %v10033, %v1159
        %v10039 = vmul.f32 %v10032, %v1160
        %v10040 = vmul.f32 %v10031, %v1161
        %v10041 = vmul.f32 %v10030, %v1162
        %v10042 = vmul.f32 %v10029, %v1163
        %v10043 = vmul.f32 %v10028, %v1164
        %v10044 = vmul.f32 %v10027, %v1165
        %v10045 = vmul.f32 %v10026, %v1158
        %v10046 = vmul.f32 %v10025, %v1159
        %v10047 = vmul.f32 %v10024, %v1160
        %v10048 = vmul.f32 %v10023, %v1161
        %v10049 = vmul.f32 %v10022, %v1162
        %v10050 = vmul.f32 %v10021, %v1163
        %v10051 = vmul.f32 %v10020, %v1164
        %v10052 = vmul.f32 %v10019, %v1165
        %v10053 = vmul.f32 %v10018, %v1158
        %v10054 = vmul.f32 %v10017, %v1159
        %v10055 = vmul.f32 %v10016, %v1160
        %v10056 = vmul.f32 %v10015, %v1161
        %v10057 = vmul.f32 %v10014, %v1162
        %v10058 = vmul.f32 %v10013, %v1163
        %v10059 = vmul.f32 %v10012, %v1164
        %v10060 = vmul.f32 %v10011, %v1165
        %v10061 = vmul.f32 %v10010, %v1158
        %v10062 = vmul.f32 %v10009, %v1159
        %v10063 = vmul.f32 %v10008, %v1160
        %v10064 = vmul.f32 %v10007, %v1161
        %v10065 = vmul.f32 %v10006, %v1162
        %v10066 = vmul.f32 %v10005, %v1163
        %v10067 = vmul.f32 %v10036, %v1164
        %v10068 = vmul.f32 %v10035, %v1165
        %v10069 = vpack.c.bf16 %v9942, %v9941
        %v10070 = vpack.c.bf16 %v9846, %v9845
        %v10071 = vpack.c.bf16 %v10038, %v10037
        %v10072 = vpack.c.bf16 %v9944, %v9943
        %v10073 = vpack.c.bf16 %v9848, %v9847
        %v10074 = vpack.c.bf16 %v10040, %v10039
        %v10075 = vpack.c.bf16 %v9946, %v9945
        %v10076 = vpack.c.bf16 %v9850, %v9849
        %v10077 = vpack.c.bf16 %v10042, %v10041
        %v10078 = vpack.c.bf16 %v9948, %v9947
        %v10079 = vpack.c.bf16 %v9852, %v9851
        %v10080 = vpack.c.bf16 %v10044, %v10043
        %v10081 = vpack.c.bf16 %v9950, %v9949
        %v10082 = vpack.c.bf16 %v9854, %v9853
        %v10083 = vpack.c.bf16 %v10046, %v10045
        %v10084 = vpack.c.bf16 %v9952, %v9951
        %v10085 = vpack.c.bf16 %v9856, %v9855
        %v10086 = vpack.c.bf16 %v10048, %v10047
        %v10087 = vpack.c.bf16 %v9954, %v9953
        %v10088 = vpack.c.bf16 %v9858, %v9857
        %v10089 = vpack.c.bf16 %v10050, %v10049
        %v10090 = vpack.c.bf16 %v9956, %v9955
        %v10091 = vpack.c.bf16 %v9860, %v9859
        %v10092 = vpack.c.bf16 %v10052, %v10051
        %v10093 = vpack.c.bf16 %v9958, %v9957
        %v10094 = vpack.c.bf16 %v9862, %v9861
        %v10095 = vpack.c.bf16 %v10054, %v10053
        %v10096 = vpack.c.bf16 %v9960, %v9959
        %v10097 = vpack.c.bf16 %v9864, %v9863
        %v10098 = vpack.c.bf16 %v10056, %v10055
        %v10099 = vpack.c.bf16 %v9962, %v9961
        %v10100 = vpack.c.bf16 %v9866, %v9865
        %v10101 = vpack.c.bf16 %v10058, %v10057
        %v10102 = vpack.c.bf16 %v9964, %v9963
        %v10103 = vpack.c.bf16 %v9868, %v9867
        %v10104 = vpack.c.bf16 %v10060, %v10059
        %v10105 = vpack.c.bf16 %v9966, %v9965
        %v10106 = vpack.c.bf16 %v9870, %v9869
        %v10107 = vpack.c.bf16 %v10062, %v10061
        %v10108 = vpack.c.bf16 %v9968, %v9967
        %v10109 = vpack.c.bf16 %v9872, %v9871
        %v10110 = vpack.c.bf16 %v10064, %v10063
        %v10111 = vpack.c.bf16 %v9970, %v9969
        %v10112 = vpack.c.bf16 %v9874, %v9873
        %v10113 = vpack.c.bf16 %v10066, %v10065
        %v10114 = vpack.c.bf16 %v9972, %v9971
        %v10115 = vpack.c.bf16 %v9876, %v9875
        %v10116 = vpack.c.bf16 %v10068, %v10067
        %v10117 = vld [vmem:[#allocation14] sm:$0xf]
        %v10118 = vld [vmem:[#allocation14 + $0x4] sm:$0xf]
        %v10119 = vld [vmem:[#allocation14 + $0x8] sm:$0xf]
        %v10120 = vld [vmem:[#allocation14 + $0xc] sm:$0xf]
        %v10121 = vld [vmem:[#allocation14 + $0x10] sm:$0xf]
        %v10122 = vld [vmem:[#allocation14 + $0x14] sm:$0xf]
        %v10123 = vld [vmem:[#allocation14 + $0x18] sm:$0xf]
        %v10124 = vld [vmem:[#allocation14 + $0x1c] sm:$0xf]
        %v10125 = vld [vmem:[#allocation14 + $0x20] sm:$0xf]
        %v10126 = vld [vmem:[#allocation14 + $0x24] sm:$0xf]
        %v10127 = vld [vmem:[#allocation14 + $0x28] sm:$0xf]
        %v10128 = vld [vmem:[#allocation14 + $0x2c] sm:$0xf]
        %v10129 = vld [vmem:[#allocation14 + $0x30] sm:$0xf]
        %v10130 = vld [vmem:[#allocation14 + $0x34] sm:$0xf]
        %v10131 = vld [vmem:[#allocation14 + $0x38] sm:$0xf]
        %v10132 = vld [vmem:[#allocation14 + $0x3c] sm:$0xf]
        %v10133 = vld [vmem:[#allocation14 + $0x40] sm:$0xf]
        %v10134 = vld [vmem:[#allocation14 + $0x44] sm:$0xf]
        %v10135 = vld [vmem:[#allocation14 + $0x48] sm:$0xf]
        %v10136 = vld [vmem:[#allocation14 + $0x4c] sm:$0xf]
        %v10137 = vld [vmem:[#allocation14 + $0x50] sm:$0xf]
        %v10138 = vld [vmem:[#allocation14 + $0x54] sm:$0xf]
        %v10139 = vld [vmem:[#allocation14 + $0x58] sm:$0xf]
        %v10140 = vld [vmem:[#allocation14 + $0x5c] sm:$0xf]
        %v10141 = vld [vmem:[#allocation14 + $0x60] sm:$0xf]
        %v10142 = vld [vmem:[#allocation14 + $0x64] sm:$0xf]
        %v10143 = vld [vmem:[#allocation14 + $0x68] sm:$0xf]
        %v10144 = vld [vmem:[#allocation14 + $0x6c] sm:$0xf]
        %v10145 = vld [vmem:[#allocation14 + $0x70] sm:$0xf]
        %v10146 = vld [vmem:[#allocation14 + $0x74] sm:$0xf]
        %v10147 = vld [vmem:[#allocation14 + $0x78] sm:$0xf]
        %v10148 = vld [vmem:[#allocation14 + $0x7c] sm:$0xf]
        %v10149 = vld [vmem:[#allocation14 + $0x80] sm:$0xf]
        %v10150 = vld [vmem:[#allocation14 + $0x84] sm:$0xf]
        %v10151 = vld [vmem:[#allocation14 + $0x88] sm:$0xf]
        %v10152 = vld [vmem:[#allocation14 + $0x8c] sm:$0xf]
        %v10153 = vld [vmem:[#allocation14 + $0x90] sm:$0xf]
        %v10154 = vld [vmem:[#allocation14 + $0x94] sm:$0xf]
        %v10155 = vld [vmem:[#allocation14 + $0x98] sm:$0xf]
        %v10156 = vld [vmem:[#allocation14 + $0x9c] sm:$0xf]
        %v10157 = vld [vmem:[#allocation14 + $0xa0] sm:$0xf]
        %v10158 = vld [vmem:[#allocation14 + $0xa4] sm:$0xf]
        %v10159 = vld [vmem:[#allocation14 + $0xa8] sm:$0xf]
        %v10160 = vld [vmem:[#allocation14 + $0xac] sm:$0xf]
        %v10161 = vld [vmem:[#allocation14 + $0xb0] sm:$0xf]
        %v10162 = vld [vmem:[#allocation14 + $0xb4] sm:$0xf]
        %v10163 = vld [vmem:[#allocation14 + $0xb8] sm:$0xf]
        %v10164 = vld [vmem:[#allocation14 + $0xbc] sm:$0xf]
        %v10165 = vld [vmem:[%s19] sm:$0x1]
        %v10167 = vlaneseq
        %v10168 = vshrl.u32 %v10167, 7
        %v10169 = vsub.s32 0, %v10168
        %v10170 = vrot.slane %v10165, %v10169
        %v10220 = vunpack.c.l.b16 %v10117
        %v10221 = vunpack.c.l.b16 %v10118
        %v10222 = vunpack.c.l.b16 %v10119
        %v10223 = vunpack.c.l.b16 %v10120
        %v10224 = vunpack.c.l.b16 %v10121
        %v10225 = vunpack.c.l.b16 %v10122
        %v10226 = vunpack.c.l.b16 %v10123
        %v10227 = vunpack.c.l.b16 %v10124
        %v10228 = vunpack.c.l.b16 %v10125
        %v10229 = vunpack.c.l.b16 %v10126
        %v10230 = vunpack.c.l.b16 %v10127
        %v10231 = vunpack.c.l.b16 %v10128
        %v10232 = vunpack.c.l.b16 %v10129
        %v10233 = vunpack.c.l.b16 %v10130
        %v10234 = vunpack.c.l.b16 %v10131
        %v10235 = vunpack.c.l.b16 %v10132
        %v10236 = vunpack.c.l.b16 %v10133
        %v10237 = vunpack.c.l.b16 %v10134
        %v10238 = vunpack.c.l.b16 %v10135
        %v10239 = vunpack.c.l.b16 %v10136
        %v10240 = vunpack.c.l.b16 %v10137
        %v10241 = vunpack.c.l.b16 %v10138
        %v10242 = vunpack.c.l.b16 %v10139
        %v10243 = vunpack.c.l.b16 %v10140
        %v10244 = vunpack.c.l.b16 %v10141
        %v10245 = vunpack.c.l.b16 %v10142
        %v10246 = vunpack.c.l.b16 %v10143
        %v10247 = vunpack.c.l.b16 %v10144
        %v10248 = vunpack.c.l.b16 %v10145
        %v10249 = vunpack.c.l.b16 %v10146
        %v10250 = vunpack.c.l.b16 %v10147
        %v10251 = vunpack.c.l.b16 %v10148
        %v10252 = vunpack.c.l.b16 %v10149
        %v10253 = vunpack.c.l.b16 %v10150
        %v10254 = vunpack.c.l.b16 %v10151
        %v10255 = vunpack.c.l.b16 %v10152
        %v10256 = vunpack.c.l.b16 %v10153
        %v10257 = vunpack.c.l.b16 %v10154
        %v10258 = vunpack.c.l.b16 %v10155
        %v10259 = vunpack.c.l.b16 %v10156
        %v10260 = vunpack.c.l.b16 %v10157
        %v10261 = vunpack.c.l.b16 %v10158
        %v10262 = vunpack.c.l.b16 %v10159
        %v10263 = vunpack.c.l.b16 %v10160
        %v10264 = vunpack.c.l.b16 %v10161
        %v10265 = vunpack.c.l.b16 %v10162
        %v10266 = vunpack.c.l.b16 %v10163
        %v10267 = vunpack.c.l.b16 %v10164
        %v10268 = vpack.c.b16 %v10221, %v10220
        %v10269 = vpack.c.b16 %v10223, %v10222
        %v10270 = vpack.c.b16 %v10225, %v10224
        %v10271 = vpack.c.b16 %v10227, %v10226
        %v10272 = vpack.c.b16 %v10229, %v10228
        %v10273 = vpack.c.b16 %v10231, %v10230
        %v10274 = vpack.c.b16 %v10233, %v10232
        %v10275 = vpack.c.b16 %v10235, %v10234
        %v10276 = vpack.c.b16 %v10237, %v10236
        %v10277 = vpack.c.b16 %v10239, %v10238
        %v10278 = vpack.c.b16 %v10241, %v10240
        %v10279 = vpack.c.b16 %v10243, %v10242
        %v10280 = vpack.c.b16 %v10245, %v10244
        %v10281 = vpack.c.b16 %v10247, %v10246
        %v10282 = vpack.c.b16 %v10249, %v10248
        %v10283 = vpack.c.b16 %v10251, %v10250
        %v10284 = vpack.c.b16 %v10253, %v10252
        %v10285 = vpack.c.b16 %v10255, %v10254
        %v10286 = vpack.c.b16 %v10257, %v10256
        %v10287 = vpack.c.b16 %v10259, %v10258
        %v10288 = vpack.c.b16 %v10261, %v10260
        %v10289 = vpack.c.b16 %v10263, %v10262
        %v10290 = vpack.c.b16 %v10265, %v10264
        %v10291 = vpack.c.b16 %v10267, %v10266
        %10316 = vmatprep.subr.bf16.mxu0 0
        %10317 = vmatpush1.bf16.msra.mxu0 %v10268
        %10318 = vmatprep.subr.bf16.mxu0 0
        %10319 = vmatpush1.bf16.msra.mxu0 %v10269
        %10320 = vmatprep.subr.bf16.mxu0 0
        %10321 = vmatpush1.bf16.msra.mxu0 %v10270
        %10322 = vmatprep.subr.bf16.mxu0 0
        %10323 = vmatpush1.bf16.msra.mxu0 %v10271
        %10324 = vmatprep.subr.bf16.mxu0 0
        %10325 = vmatpush1.bf16.msra.mxu0 %v10272
        %10326 = vmatprep.subr.bf16.mxu0 0
        %10327 = vmatpush1.bf16.msra.mxu0 %v10273
        %10328 = vmatprep.subr.bf16.mxu0 0
        %10329 = vmatpush1.bf16.msra.mxu0 %v10274
        %10330 = vmatprep.subr.bf16.mxu0 0
        %10331 = vmatpush1.bf16.msra.mxu0 %v10275
        %10332 = vmatprep.subr.bf16.mxu0 0
        %10333 = vmatpush1.bf16.msra.mxu0 %v10276
        %10334 = vmatprep.subr.bf16.mxu0 0
        %10335 = vmatpush1.bf16.msra.mxu0 %v10277
        %10336 = vmatprep.subr.bf16.mxu0 0
        %10337 = vmatpush1.bf16.msra.mxu0 %v10278
        %10338 = vmatprep.subr.bf16.mxu0 0
        %10339 = vmatpush1.bf16.msra.mxu0 %v10279
        %10340 = vmatprep.subr.bf16.mxu0 0
        %10341 = vmatpush1.bf16.msra.mxu0 %v10280
        %10342 = vmatprep.subr.bf16.mxu0 0
        %10343 = vmatpush1.bf16.msra.mxu0 %v10281
        %10344 = vmatprep.subr.bf16.mxu0 0
        %10345 = vmatpush1.bf16.msra.mxu0 %v10282
        %10346 = vmatprep.subr.bf16.mxu0 0
        %10347 = vmatpush1.bf16.msra.mxu0 %v10283
        %10348 = vmatprep.mubr.bf16.mxu0 %v10070
        %10349 = vmatmul.mubr.bf16.gmra.mrb[0].mxu0 %v10069
        %v10350 = vpop.f32.mrb[0].mxu0
        %v10351 = vadd.f32 %v10170, %v10350
        %v10352 = vpop.f32.mrb[0].mxu0
        %v10353 = vpop.f32.mrb[0].mxu0
        %v10354 = vadd.f32 %v10170, %v10353
        %v10355 = vpop.f32.mrb[0].mxu0
        %10356 = vmatprep.mubr.bf16.mxu0 %v10073
        %10357 = vmatmul.mubr.bf16.gmra.mrb[0].mxu0 %v10072
        %v10358 = vpop.f32.mrb[0].mxu0
        %v10359 = vadd.f32 %v10170, %v10358
        %v10360 = vpop.f32.mrb[0].mxu0
        %v10361 = vpop.f32.mrb[0].mxu0
        %v10362 = vadd.f32 %v10170, %v10361
        %v10363 = vpop.f32.mrb[0].mxu0
        %10364 = vmatprep.mubr.bf16.mxu0 %v10076
        %10365 = vmatmul.mubr.bf16.gmra.mrb[0].mxu0 %v10075
        %v10366 = vpop.f32.mrb[0].mxu0
        %v10367 = vadd.f32 %v10170, %v10366
        %v10368 = vpop.f32.mrb[0].mxu0
        %v10369 = vpop.f32.mrb[0].mxu0
        %v10370 = vadd.f32 %v10170, %v10369
        %v10371 = vpop.f32.mrb[0].mxu0
        %10372 = vmatprep.mubr.bf16.mxu0 %v10079
        %10373 = vmatmul.mubr.bf16.gmra.mrb[0].mxu0 %v10078
        %v10374 = vpop.f32.mrb[0].mxu0
        %v10375 = vadd.f32 %v10170, %v10374
        %v10376 = vpop.f32.mrb[0].mxu0
        %v10377 = vpop.f32.mrb[0].mxu0
        %v10378 = vadd.f32 %v10170, %v10377
        %v10379 = vpop.f32.mrb[0].mxu0
        %10380 = vmatprep.mubr.bf16.mxu0 %v10082
        %10381 = vmatmul.mubr.bf16.gmra.mrb[0].mxu0 %v10081
        %v10382 = vpop.f32.mrb[0].mxu0
        %v10383 = vadd.f32 %v10170, %v10382
        %v10384 = vpop.f32.mrb[0].mxu0
        %v10385 = vpop.f32.mrb[0].mxu0
        %v10386 = vadd.f32 %v10170, %v10385
        %v10387 = vpop.f32.mrb[0].mxu0
        %10388 = vmatprep.mubr.bf16.mxu0 %v10085
        %10389 = vmatmul.mubr.bf16.gmra.mrb[0].mxu0 %v10084
        %v10390 = vpop.f32.mrb[0].mxu0
        %v10391 = vadd.f32 %v10170, %v10390
        %v10392 = vpop.f32.mrb[0].mxu0
        %v10393 = vpop.f32.mrb[0].mxu0
        %v10394 = vadd.f32 %v10170, %v10393
        %v10395 = vpop.f32.mrb[0].mxu0
        %10396 = vmatprep.mubr.bf16.mxu0 %v10088
        %10397 = vmatmul.mubr.bf16.gmra.mrb[0].mxu0 %v10087
        %v10398 = vpop.f32.mrb[0].mxu0
        %v10399 = vadd.f32 %v10170, %v10398
        %v10400 = vpop.f32.mrb[0].mxu0
        %v10401 = vpop.f32.mrb[0].mxu0
        %v10402 = vadd.f32 %v10170, %v10401
        %v10403 = vpop.f32.mrb[0].mxu0
        %10404 = vmatprep.mubr.bf16.mxu0 %v10091
        %10405 = vmatmul.mubr.bf16.gmra.mrb[0].mxu0 %v10090
        %v10406 = vpop.f32.mrb[0].mxu0
        %v10407 = vadd.f32 %v10170, %v10406
        %v10408 = vpop.f32.mrb[0].mxu0
        %v10409 = vpop.f32.mrb[0].mxu0
        %v10410 = vadd.f32 %v10170, %v10409
        %v10411 = vpop.f32.mrb[0].mxu0
        %10412 = vmatprep.mubr.bf16.mxu0 %v10094
        %10413 = vmatmul.mubr.bf16.gmra.mrb[0].mxu0 %v10093
        %v10414 = vpop.f32.mrb[0].mxu0
        %v10415 = vadd.f32 %v10170, %v10414
        %v10416 = vpop.f32.mrb[0].mxu0
        %v10417 = vpop.f32.mrb[0].mxu0
        %v10418 = vadd.f32 %v10170, %v10417
        %v10419 = vpop.f32.mrb[0].mxu0
        %10420 = vmatprep.mubr.bf16.mxu0 %v10097
        %10421 = vmatmul.mubr.bf16.gmra.mrb[0].mxu0 %v10096
        %v10422 = vpop.f32.mrb[0].mxu0
        %v10423 = vadd.f32 %v10170, %v10422
        %v10424 = vpop.f32.mrb[0].mxu0
        %v10425 = vpop.f32.mrb[0].mxu0
        %v10426 = vadd.f32 %v10170, %v10425
        %v10427 = vpop.f32.mrb[0].mxu0
        %10428 = vmatprep.mubr.bf16.mxu0 %v10100
        %10429 = vmatmul.mubr.bf16.gmra.mrb[0].mxu0 %v10099
        %v10430 = vpop.f32.mrb[0].mxu0
        %v10431 = vadd.f32 %v10170, %v10430
        %v10432 = vpop.f32.mrb[0].mxu0
        %v10433 = vpop.f32.mrb[0].mxu0
        %v10434 = vadd.f32 %v10170, %v10433
        %v10435 = vpop.f32.mrb[0].mxu0
        %10436 = vmatprep.mubr.bf16.mxu0 %v10103
        %10437 = vmatmul.mubr.bf16.gmra.mrb[0].mxu0 %v10102
        %v10438 = vpop.f32.mrb[0].mxu0
        %v10439 = vadd.f32 %v10170, %v10438
        %v10440 = vpop.f32.mrb[0].mxu0
        %v10441 = vpop.f32.mrb[0].mxu0
        %v10442 = vadd.f32 %v10170, %v10441
        %v10443 = vpop.f32.mrb[0].mxu0
        %10444 = vmatprep.mubr.bf16.mxu0 %v10106
        %10445 = vmatmul.mubr.bf16.gmra.mrb[0].mxu0 %v10105
        %v10446 = vpop.f32.mrb[0].mxu0
        %v10447 = vadd.f32 %v10170, %v10446
        %v10448 = vpop.f32.mrb[0].mxu0
        %v10449 = vpop.f32.mrb[0].mxu0
        %v10450 = vadd.f32 %v10170, %v10449
        %v10451 = vpop.f32.mrb[0].mxu0
        %10452 = vmatprep.mubr.bf16.mxu0 %v10109
        %10453 = vmatmul.mubr.bf16.gmra.mrb[0].mxu0 %v10108
        %v10454 = vpop.f32.mrb[0].mxu0
        %v10455 = vadd.f32 %v10170, %v10454
        %v10456 = vpop.f32.mrb[0].mxu0
        %v10457 = vpop.f32.mrb[0].mxu0
        %v10458 = vadd.f32 %v10170, %v10457
        %v10459 = vpop.f32.mrb[0].mxu0
        %10460 = vmatprep.mubr.bf16.mxu0 %v10112
        %10461 = vmatmul.mubr.bf16.gmra.mrb[0].mxu0 %v10111
        %v10462 = vpop.f32.mrb[0].mxu0
        %v10463 = vadd.f32 %v10170, %v10462
        %v10464 = vpop.f32.mrb[0].mxu0
        %v10465 = vpop.f32.mrb[0].mxu0
        %v10466 = vadd.f32 %v10170, %v10465
        %v10467 = vpop.f32.mrb[0].mxu0
        %10468 = vmatprep.mubr.bf16.mxu0 %v10115
        %10469 = vmatmul.mubr.bf16.gmra.mrb[0].mxu0 %v10114
        %v10470 = vpop.f32.mrb[0].mxu0
        %v10471 = vadd.f32 %v10170, %v10470
        %v10472 = vpop.f32.mrb[0].mxu0
        %v10473 = vpop.f32.mrb[0].mxu0
        %v10474 = vadd.f32 %v10170, %v10473
        %v10475 = vpop.f32.mrb[0].mxu0
        %10476 = vdwg.mxu0
        %10477 = vmatprep.subr.bf16.mxu0 0
        %10478 = vmatpush1.bf16.msra.mxu0 %v10284
        %10479 = vmatprep.subr.bf16.mxu0 0
        %10480 = vmatpush1.bf16.msra.mxu0 %v10285
        %10481 = vmatprep.subr.bf16.mxu0 0
        %10482 = vmatpush1.bf16.msra.mxu0 %v10286
        %10483 = vmatprep.subr.bf16.mxu0 0
        %10484 = vmatpush1.bf16.msra.mxu0 %v10287
        %10485 = vmatprep.subr.bf16.mxu0 0
        %10486 = vmatpush1.bf16.msra.mxu0 %v10288
        %10487 = vmatprep.subr.bf16.mxu0 0
        %10488 = vmatpush1.bf16.msra.mxu0 %v10289
        %10489 = vmatprep.subr.bf16.mxu0 0
        %10490 = vmatpush1.bf16.msra.mxu0 %v10290
        %10491 = vmatprep.subr.bf16.mxu0 0
        %10492 = vmatpush1.bf16.msra.mxu0 %v10291
        %10493 = vmatprep.subr.bf16.mxu0 0
        %10494 = vmatpush1.bf16.msra.mxu0 0
        %10495 = vmatprep.subr.bf16.mxu0 0
        %10496 = vmatpush1.bf16.msra.mxu0 0
        %10497 = vmatprep.subr.bf16.mxu0 0
        %10498 = vmatpush1.bf16.msra.mxu0 0
        %10499 = vmatprep.subr.bf16.mxu0 0
        %10500 = vmatpush1.bf16.msra.mxu0 0
        %10501 = vmatprep.subr.bf16.mxu0 0
        %10502 = vmatpush1.bf16.msra.mxu0 0
        %10503 = vmatprep.subr.bf16.mxu0 0
        %10504 = vmatpush1.bf16.msra.mxu0 0
        %10505 = vmatprep.subr.bf16.mxu0 0
        %10506 = vmatpush1.bf16.msra.mxu0 0
        %10507 = vmatprep.subr.bf16.mxu0 0
        %10508 = vmatpush1.bf16.msra.mxu0 0
        %10509 = vmatprep.mubr.bf16.mxu0 0
        %10510 = vmatmul.mubr.bf16.gmra.mrb[0].mxu0 %v10071
        %v10511 = vpop.f32.mrb[0].mxu0
        %v10512 = vadd.f32 %v10351, %v10511
        %v10513 = vpop.f32.mrb[0].mxu0
        %v10514 = vpop.f32.mrb[0].mxu0
        %v10515 = vadd.f32 %v10354, %v10514
        %v10516 = vpop.f32.mrb[0].mxu0
        %10517 = vmatprep.mubr.bf16.mxu0 0
        %10518 = vmatmul.mubr.bf16.gmra.mrb[0].mxu0 %v10074
        %v10519 = vpop.f32.mrb[0].mxu0
        %v10520 = vadd.f32 %v10359, %v10519
        %v10521 = vpop.f32.mrb[0].mxu0
        %v10522 = vpop.f32.mrb[0].mxu0
        %v10523 = vadd.f32 %v10362, %v10522
        %v10524 = vpop.f32.mrb[0].mxu0
        %10525 = vmatprep.mubr.bf16.mxu0 0
        %10526 = vmatmul.mubr.bf16.gmra.mrb[0].mxu0 %v10077
        %v10527 = vpop.f32.mrb[0].mxu0
        %v10528 = vadd.f32 %v10367, %v10527
        %v10529 = vpop.f32.mrb[0].mxu0
        %v10530 = vpop.f32.mrb[0].mxu0
        %v10531 = vadd.f32 %v10370, %v10530
        %v10532 = vpop.f32.mrb[0].mxu0
        %10533 = vmatprep.mubr.bf16.mxu0 0
        %10534 = vmatmul.mubr.bf16.gmra.mrb[0].mxu0 %v10080
        %v10535 = vpop.f32.mrb[0].mxu0
        %v10536 = vadd.f32 %v10375, %v10535
        %v10537 = vpop.f32.mrb[0].mxu0
        %v10538 = vpop.f32.mrb[0].mxu0
        %v10539 = vadd.f32 %v10378, %v10538
        %v10540 = vpop.f32.mrb[0].mxu0
        %10541 = vmatprep.mubr.bf16.mxu0 0
        %10542 = vmatmul.mubr.bf16.gmra.mrb[0].mxu0 %v10083
        %v10543 = vpop.f32.mrb[0].mxu0
        %v10544 = vadd.f32 %v10383, %v10543
        %v10545 = vpop.f32.mrb[0].mxu0
        %v10546 = vpop.f32.mrb[0].mxu0
        %v10547 = vadd.f32 %v10386, %v10546
        %v10548 = vpop.f32.mrb[0].mxu0
        %10549 = vmatprep.mubr.bf16.mxu0 0
        %10550 = vmatmul.mubr.bf16.gmra.mrb[0].mxu0 %v10086
        %v10551 = vpop.f32.mrb[0].mxu0
        %v10552 = vadd.f32 %v10391, %v10551
        %v10553 = vpop.f32.mrb[0].mxu0
        %v10554 = vpop.f32.mrb[0].mxu0
        %v10555 = vadd.f32 %v10394, %v10554
        %v10556 = vpop.f32.mrb[0].mxu0
        %10557 = vmatprep.mubr.bf16.mxu0 0
        %10558 = vmatmul.mubr.bf16.gmra.mrb[0].mxu0 %v10089
        %v10559 = vpop.f32.mrb[0].mxu0
        %v10560 = vadd.f32 %v10399, %v10559
        %v10561 = vpop.f32.mrb[0].mxu0
        %v10562 = vpop.f32.mrb[0].mxu0
        %v10563 = vadd.f32 %v10402, %v10562
        %v10564 = vpop.f32.mrb[0].mxu0
        %10565 = vmatprep.mubr.bf16.mxu0 0
        %10566 = vmatmul.mubr.bf16.gmra.mrb[0].mxu0 %v10092
        %v10567 = vpop.f32.mrb[0].mxu0
        %v10568 = vadd.f32 %v10407, %v10567
        %v10569 = vpop.f32.mrb[0].mxu0
        %v10570 = vpop.f32.mrb[0].mxu0
        %v10571 = vadd.f32 %v10410, %v10570
        %v10572 = vpop.f32.mrb[0].mxu0
        %10573 = vmatprep.mubr.bf16.mxu0 0
        %10574 = vmatmul.mubr.bf16.gmra.mrb[0].mxu0 %v10095
        %v10575 = vpop.f32.mrb[0].mxu0
        %v10576 = vadd.f32 %v10415, %v10575
        %v10577 = vpop.f32.mrb[0].mxu0
        %v10578 = vpop.f32.mrb[0].mxu0
        %v10579 = vadd.f32 %v10418, %v10578
        %v10580 = vpop.f32.mrb[0].mxu0
        %10581 = vmatprep.mubr.bf16.mxu0 0
        %10582 = vmatmul.mubr.bf16.gmra.mrb[0].mxu0 %v10098
        %v10583 = vpop.f32.mrb[0].mxu0
        %v10584 = vadd.f32 %v10423, %v10583
        %v10585 = vpop.f32.mrb[0].mxu0
        %v10586 = vpop.f32.mrb[0].mxu0
        %v10587 = vadd.f32 %v10426, %v10586
        %v10588 = vpop.f32.mrb[0].mxu0
        %10589 = vmatprep.mubr.bf16.mxu0 0
        %10590 = vmatmul.mubr.bf16.gmra.mrb[0].mxu0 %v10101
        %v10591 = vpop.f32.mrb[0].mxu0
        %v10592 = vadd.f32 %v10431, %v10591
        %v10593 = vpop.f32.mrb[0].mxu0
        %v10594 = vpop.f32.mrb[0].mxu0
        %v10595 = vadd.f32 %v10434, %v10594
        %v10596 = vpop.f32.mrb[0].mxu0
        %10597 = vmatprep.mubr.bf16.mxu0 0
        %10598 = vmatmul.mubr.bf16.gmra.mrb[0].mxu0 %v10104
        %v10599 = vpop.f32.mrb[0].mxu0
        %v10600 = vadd.f32 %v10439, %v10599
        %v10601 = vpop.f32.mrb[0].mxu0
        %v10602 = vpop.f32.mrb[0].mxu0
        %v10603 = vadd.f32 %v10442, %v10602
        %v10604 = vpop.f32.mrb[0].mxu0
        %10605 = vmatprep.mubr.bf16.mxu0 0
        %10606 = vmatmul.mubr.bf16.gmra.mrb[0].mxu0 %v10107
        %v10607 = vpop.f32.mrb[0].mxu0
        %v10608 = vadd.f32 %v10447, %v10607
        %v10609 = vpop.f32.mrb[0].mxu0
        %v10610 = vpop.f32.mrb[0].mxu0
        %v10611 = vadd.f32 %v10450, %v10610
        %v10612 = vpop.f32.mrb[0].mxu0
        %10613 = vmatprep.mubr.bf16.mxu0 0
        %10614 = vmatmul.mubr.bf16.gmra.mrb[0].mxu0 %v10110
        %v10615 = vpop.f32.mrb[0].mxu0
        %v10616 = vadd.f32 %v10455, %v10615
        %v10617 = vpop.f32.mrb[0].mxu0
        %v10618 = vpop.f32.mrb[0].mxu0
        %v10619 = vadd.f32 %v10458, %v10618
        %v10620 = vpop.f32.mrb[0].mxu0
        %10621 = vmatprep.mubr.bf16.mxu0 0
        %10622 = vmatmul.mubr.bf16.gmra.mrb[0].mxu0 %v10113
        %v10623 = vpop.f32.mrb[0].mxu0
        %v10624 = vadd.f32 %v10463, %v10623
        %v10625 = vpop.f32.mrb[0].mxu0
        %v10626 = vpop.f32.mrb[0].mxu0
        %v10627 = vadd.f32 %v10466, %v10626
        %v10628 = vpop.f32.mrb[0].mxu0
        %10629 = vmatprep.mubr.bf16.mxu0 0
        %10630 = vmatmul.mubr.bf16.gmra.mrb[0].mxu0 %v10116
        %v10631 = vpop.f32.mrb[0].mxu0
        %v10632 = vadd.f32 %v10471, %v10631
        %v10633 = vpop.f32.mrb[0].mxu0
        %v10634 = vpop.f32.mrb[0].mxu0
        %v10635 = vadd.f32 %v10474, %v10634
        %v10636 = vpop.f32.mrb[0].mxu0
        %10637 = vdwg.mxu0
        %v10638 = vadd.f32 %v10512, %v9845
        %v10639 = vadd.f32 %v10515, %v9846
        %v10640 = vadd.f32 %v10520, %v9847
        %v10641 = vadd.f32 %v10523, %v9848
        %v10642 = vadd.f32 %v10528, %v9849
        %v10643 = vadd.f32 %v10531, %v9850
        %v10644 = vadd.f32 %v10536, %v9851
        %v10645 = vadd.f32 %v10539, %v9852
        %v10646 = vadd.f32 %v10544, %v9853
        %v10647 = vadd.f32 %v10547, %v9854
        %v10648 = vadd.f32 %v10552, %v9855
        %v10649 = vadd.f32 %v10555, %v9856
        %v10650 = vadd.f32 %v10560, %v9857
        %v10651 = vadd.f32 %v10563, %v9858
        %v10652 = vadd.f32 %v10568, %v9859
        %v10653 = vadd.f32 %v10571, %v9860
        %v10654 = vadd.f32 %v10576, %v9861
        %v10655 = vadd.f32 %v10579, %v9862
        %v10656 = vadd.f32 %v10584, %v9863
        %v10657 = vadd.f32 %v10587, %v9864
        %v10658 = vadd.f32 %v10592, %v9865
        %v10659 = vadd.f32 %v10595, %v9866
        %v10660 = vadd.f32 %v10600, %v9867
        %v10661 = vadd.f32 %v10603, %v9868
        %v10662 = vadd.f32 %v10608, %v9869
        %v10663 = vadd.f32 %v10611, %v9870
        %v10664 = vadd.f32 %v10616, %v9871
        %v10665 = vadd.f32 %v10619, %v9872
        %v10666 = vadd.f32 %v10624, %v9873
        %v10667 = vadd.f32 %v10627, %v9874
        %v10668 = vadd.f32 %v10632, %v9875
        %v10669 = vadd.f32 %v10635, %v9876
        %v10670 = vmul.f32 %v10638, 0.2
        %v10671 = vmul.f32 %v10639, 0.2
        %v10672 = vmul.f32 %v10640, 0.2
        %v10673 = vmul.f32 %v10641, 0.2
        %v10674 = vmul.f32 %v10642, 0.2
        %v10675 = vmul.f32 %v10643, 0.2
        %v10676 = vmul.f32 %v10644, 0.2
        %v10677 = vmul.f32 %v10645, 0.2
        %v10678 = vmul.f32 %v10646, 0.2
        %v10679 = vmul.f32 %v10647, 0.2
        %v10680 = vmul.f32 %v10648, 0.2
        %v10681 = vmul.f32 %v10649, 0.2
        %v10682 = vmul.f32 %v10650, 0.2
        %v10683 = vmul.f32 %v10651, 0.2
        %v10684 = vmul.f32 %v10652, 0.2
        %v10685 = vmul.f32 %v10653, 0.2
        %v10686 = vmul.f32 %v10654, 0.2
        %v10687 = vmul.f32 %v10655, 0.2
        %v10688 = vmul.f32 %v10656, 0.2
        %v10689 = vmul.f32 %v10657, 0.2
        %v10690 = vmul.f32 %v10658, 0.2
        %v10691 = vmul.f32 %v10659, 0.2
        %v10692 = vmul.f32 %v10660, 0.2
        %v10693 = vmul.f32 %v10661, 0.2
        %v10694 = vmul.f32 %v10662, 0.2
        %v10695 = vmul.f32 %v10663, 0.2
        %v10696 = vmul.f32 %v10664, 0.2
        %v10697 = vmul.f32 %v10665, 0.2
        %v10698 = vmul.f32 %v10666, 0.2
        %v10699 = vmul.f32 %v10667, 0.2
        %v10700 = vmul.f32 %v10668, 0.2
        %v10701 = vmul.f32 %v10669, 0.2
        %v10702 = vmax.f32 %v10638, %v10670
        %v10703 = vmax.f32 %v10639, %v10671
        %v10704 = vmax.f32 %v10640, %v10672
        %v10705 = vmax.f32 %v10641, %v10673
        %v10706 = vmax.f32 %v10642, %v10674
        %v10707 = vmax.f32 %v10643, %v10675
        %v10708 = vmax.f32 %v10644, %v10676
        %v10709 = vmax.f32 %v10645, %v10677
        %v10710 = vmax.f32 %v10646, %v10678
        %v10711 = vmax.f32 %v10647, %v10679
        %v10712 = vmax.f32 %v10648, %v10680
        %v10713 = vmax.f32 %v10649, %v10681
        %v10714 = vmax.f32 %v10650, %v10682
        %v10715 = vmax.f32 %v10651, %v10683
        %v10716 = vmax.f32 %v10652, %v10684
        %v10717 = vmax.f32 %v10653, %v10685
        %v10718 = vmax.f32 %v10654, %v10686
        %v10719 = vmax.f32 %v10655, %v10687
        %v10720 = vmax.f32 %v10656, %v10688
        %v10721 = vmax.f32 %v10657, %v10689
        %v10722 = vmax.f32 %v10658, %v10690
        %v10723 = vmax.f32 %v10659, %v10691
        %v10724 = vmax.f32 %v10660, %v10692
        %v10725 = vmax.f32 %v10661, %v10693
        %v10726 = vmax.f32 %v10662, %v10694
        %v10727 = vmax.f32 %v10663, %v10695
        %v10728 = vmax.f32 %v10664, %v10696
        %v10729 = vmax.f32 %v10665, %v10697
        %v10730 = vmax.f32 %v10666, %v10698
        %v10731 = vmax.f32 %v10667, %v10699
        %v10732 = vmax.f32 %v10668, %v10700
        %v10733 = vmax.f32 %v10669, %v10701
        %10734 = vst [vmem:[%s756] sm:$0xff] %v10702
        %10735 = vst [vmem:[%s756 + $0x8] sm:$0xff] %v10703
        %10736 = vst [vmem:[%s756 + $0x10] sm:$0xff] %v10704
        %10737 = vst [vmem:[%s756 + $0x18] sm:$0xff] %v10705
        %10738 = vst [vmem:[%s756 + $0x20] sm:$0xff] %v10706
        %10739 = vst [vmem:[%s756 + $0x28] sm:$0xff] %v10707
        %10740 = vst [vmem:[%s756 + $0x30] sm:$0xff] %v10708
        %10741 = vst [vmem:[%s756 + $0x38] sm:$0xff] %v10709
        %10742 = vst [vmem:[%s756 + $0x40] sm:$0xff] %v10710
        %10743 = vst [vmem:[%s756 + $0x48] sm:$0xff] %v10711
        %10744 = vst [vmem:[%s756 + $0x50] sm:$0xff] %v10712
        %10745 = vst [vmem:[%s756 + $0x58] sm:$0xff] %v10713
        %10746 = vst [vmem:[%s756 + $0x60] sm:$0xff] %v10714
        %10747 = vst [vmem:[%s756 + $0x68] sm:$0xff] %v10715
        %10748 = vst [vmem:[%s756 + $0x70] sm:$0xff] %v10716
        %10749 = vst [vmem:[%s756 + $0x78] sm:$0xff] %v10717
        %10750 = vst [vmem:[%s756 + $0x80] sm:$0xff] %v10718
        %10751 = vst [vmem:[%s756 + $0x88] sm:$0xff] %v10719
        %10752 = vst [vmem:[%s756 + $0x90] sm:$0xff] %v10720
        %10753 = vst [vmem:[%s756 + $0x98] sm:$0xff] %v10721
        %10754 = vst [vmem:[%s756 + $0xa0] sm:$0xff] %v10722
        %10755 = vst [vmem:[%s756 + $0xa8] sm:$0xff] %v10723
        %10756 = vst [vmem:[%s756 + $0xb0] sm:$0xff] %v10724
        %10757 = vst [vmem:[%s756 + $0xb8] sm:$0xff] %v10725
        %10758 = vst [vmem:[%s756 + $0xc0] sm:$0xff] %v10726
        %10759 = vst [vmem:[%s756 + $0xc8] sm:$0xff] %v10727
        %10760 = vst [vmem:[%s756 + $0xd0] sm:$0xff] %v10728
        %10761 = vst [vmem:[%s756 + $0xd8] sm:$0xff] %v10729
        %10762 = vst [vmem:[%s756 + $0xe0] sm:$0xff] %v10730
        %10763 = vst [vmem:[%s756 + $0xe8] sm:$0xff] %v10731
        %10764 = vst [vmem:[%s756 + $0xf0] sm:$0xff] %v10732
        %10765 = vst [vmem:[%s756 + $0xf8] sm:$0xff] %v10733
        %s10766 = sand.u32 %s477, 1
        %s10767 = scalar_lea.sflag [#allocation4], %s10766
        %s10768 = sand.u32 %s477, 1
        %s10769 = smul.addr %s10768, 256
        %s10770 = scalar_lea.vmem [#allocation16], %s10769
        // Predicated region
        $region133: #{tpu_custom_call.1} parent=99 // pred_check
          %p10771 = pneg %p487
        $region134: #{tpu_custom_call.1} parent=99 // pred_check_branch
          %10773 = sbr.rel (%p10771) target = $region136
        $region135: #{tpu_custom_call.1} parent=99 // pred_region
          %s10774 = smul.u32 4, %s39
          %s10776 = ssub.s32 4096, 4096
          %10777 = vsyncadd %s10767, %s10776
          %s10778 = smul.addr %s10774, 8
          %s10779 = smul.addr %s10778, 128
          %s10780 = scalar_lea.hbm %s20, %s10779
          %s10781 = sshll.u32 %s10770, 4
          %s10782 = int_to_ptr.vmem [resolvable:$true] %s10781
          %10787 = dma.vmem_to_hbm [thread:$0]  %s10782, 4096, %s10780, %s10767, 128, 128, 8
        $region136: #{tpu_custom_call.1} parent=99 // pred_fallthru
          _
      $region100: #{tpu_custom_call.1} parent=5 // pred_fallthru
        _
      %p10788 = scmp.le.s32.totalorder 2, %s34
      // Predicated region
      $region137: #{tpu_custom_call.1} parent=5 // pred_check
        %p10789 = pneg %p10788
      $region138: #{tpu_custom_call.1} parent=5 // pred_check_branch
        %10791 = sbr.rel (%p10789) target = $region140
      $region139: #{tpu_custom_call.1} parent=5 // pred_region
        %s10792 = ssub.s32 %s34, 2
        // Predicated region
        $region141: #{tpu_custom_call.1} parent=139 // pred_check
          %p10793 = pneg %p493
        $region142: #{tpu_custom_call.1} parent=139 // pred_check_branch
          %10795 = sbr.rel (%p10793) target = $region144
        $region143: #{tpu_custom_call.1} parent=139 // pred_region
          %s10796 = sand.u32 %s478, 1
          %s10797 = scalar_lea.sflag [#allocation4], %s10796
          %s10798 = sand.u32 %s478, 1
          %s10799 = smul.addr %s10798, 256
          %s10800 = scalar_lea.vmem [#allocation16], %s10799
          %10801 = dma.done %s10797, 4096
        $region144: #{tpu_custom_call.1} parent=139 // pred_fallthru
          _
      $region140: #{tpu_custom_call.1} parent=5 // pred_fallthru
        _
    $region6: #{tpu_custom_call.1} parent=1 // loop_footer
      %s38 = sadd.s32 1, %s34
    $region7: #{tpu_custom_call.1} parent=1 // loop_footer_branch
      %33 = sbr.rel target = $region3
    $region8: #{tpu_custom_call.1} parent=1 // loop_exit
      _
    %10802 = vsyncpa [#allocation3], 1
    %s10803 = scalar_lea.sflag [#allocation3], 1
    %10804 = vsyncpa %s10803, 1
    %10805 = vsyncpa [#allocation6], 1
    %10806 = vsyncpa [#allocation9], 1
    %10807 = vsyncpa [#allocation12], 1
    %10808 = vsyncpa [#allocation15], 1
    %10809 = vsyncpa [#allocation4], 1
    %s10810 = scalar_lea.sflag [#allocation4], 1
    %10811 = vsyncpa %s10810, 1

</llo_original>
